<compile_context>
chip_gen: v7x
topology: tpu7x:2x2x1
jax: 0.10.0
libtpu: 0.0.40
codegen_flags: <defaults>
</compile_context>

<pallas_src>
import numpy as np
import jax
import jax.numpy as jnp
from jax.experimental import pallas as pl
from jax.experimental.pallas import tpu as pltpu

H_IN = 17                       # input spatial size
OUT_HW = 240                    # F.interpolate target
C = 128                         # channel count of conv0 / conv1 / bn128
P_OUT = OUT_HW * OUT_HW         # 57600 flattened output pixels
CHUNK = 9600                    # output pixels per grid step (mult of 128, divides 57600)
K9 = 9
NTAP = K9 * K9                  # 81 taps of the 9x9 conv
assert P_OUT % CHUNK == 0 and CHUNK % 128 == 0

# Static im2col index maps for the 1-channel 17x17 -> 9x9 "valid" 9x9 conv:
# patches[n, oy*9+ox, ky*9+kx] = x[n, oy+ky, ox+kx]
_oy, _ox, _ky, _kx = np.meshgrid(np.arange(K9), np.arange(K9),
                                 np.arange(K9), np.arange(K9), indexing="ij")
II = (_oy + _ky).reshape(NTAP, NTAP).astype(np.int32)
JJ = (_ox + _kx).reshape(NTAP, NTAP).astype(np.int32)


# ----------------------------------------------------------------------------
# Pallas kernel 1: 2-D matmul + bias + leaky_relu(0.01).  Used for both conv1
# applications after algebraic folding (operands are tiny; whole arrays live
# in VMEM, no grid).
# ----------------------------------------------------------------------------
def matmul_bias_leaky_kernel(x_ref, w_ref, b_ref, o_ref):
    acc = jnp.dot(x_ref[...], w_ref[...], preferred_element_type=jnp.float32)
    acc = acc + b_ref[...]
    o_ref[...] = jnp.where(acc > 0.0, acc, 0.01 * acc)


def matmul_bias_leaky(x, w, b):
    m = x.shape[0]
    c = w.shape[1]
    return pl.pallas_call(
        matmul_bias_leaky_kernel,
        out_shape=jax.ShapeDtypeStruct((m, c), jnp.float32),
    )(x, w, b.reshape(1, c))


# ----------------------------------------------------------------------------
# Pallas kernel 2 (dominant): fused xA path + residual broadcast add, written
# directly in NCHW layout:   out[n, c, p] = u[n, p] * scale[c] + add[n, c]
#   u     : bilinearly upsampled single input channel, flattened HW in lanes
#   scale : per-channel  bn128(conv0(.)) scale (sublane broadcast, (C,1))
#   add   : per-(n,c)    bn128 bias + small-branch result (sublane broadcast)
# Output blocks are (1, C, CHUNK): C=128 sublanes, CHUNK=9600 lanes -> fully
# lane-dense, unmasked stores; both grid axes parallel (v7x megacore-friendly).
# ----------------------------------------------------------------------------
def fused_output_kernel(u_ref, s_ref, a_ref, o_ref):
    # u_ref: (1,1,CHUNK), s_ref: (C,1), a_ref: (1,C,1), o_ref: (1,C,CHUNK)
    o_ref[0] = u_ref[0] * s_ref[...] + a_ref[0]


def fused_output(u_flat, scale_col, add_col):
    n, _, p = u_flat.shape
    t = p // CHUNK
    return pl.pallas_call(
        fused_output_kernel,
        out_shape=jax.ShapeDtypeStruct((n, C, p), jnp.float32),
        grid=(n, t),
        in_specs=[
            pl.BlockSpec((1, 1, CHUNK), lambda i, j: (i, 0, j)),
            pl.BlockSpec((C, 1), lambda i, j: (0, 0)),
            pl.BlockSpec((1, C, 1), lambda i, j: (i, 0, 0)),
        ],
        out_specs=pl.BlockSpec((1, C, CHUNK), lambda i, j: (i, 0, j)),
        compiler_params=pltpu.CompilerParams(
            dimension_semantics=("parallel", "parallel"),
            vmem_limit_bytes=32 * 1024 * 1024),   # ~10 MB footprint; explicit headroom
    )(u_flat, scale_col, add_col)


# ----------------------------------------------------------------------------
# Plain-JAX glue (tiny tensors only).
# TODO(synk): BatchNorm2d running_mean/running_var buffer updates (a training
# side effect that does not change the forward output) are not reproduced.
# ----------------------------------------------------------------------------
def bn_train(y, gamma, beta, axes, eps=1e-5):
    mu = jnp.mean(y, axis=axes, keepdims=True)
    var = jnp.mean((y - mu) ** 2, axis=axes, keepdims=True)   # biased, two-pass
    return (y - mu) / jnp.sqrt(var + eps) * gamma + beta


def bilinear_matrix(out_size, in_size):
    """1-D interpolation operator matching F.interpolate(align_corners=False)."""
    scale = in_size / out_size
    idx = np.arange(out_size, dtype=np.float64)
    src = np.maximum((idx + 0.5) * scale - 0.5, 0.0)
    i0 = np.minimum(np.floor(src).astype(np.int64), in_size - 1)
    i1 = np.minimum(i0 + 1, in_size - 1)
    frac = src - i0
    mat = np.zeros((out_size, in_size), dtype=np.float64)
    mat[np.arange(out_size), i0] += 1.0 - frac
    mat[np.arange(out_size), i1] += frac
    return mat.astype(np.float32)


# ----------------------------------------------------------------------------
# Full EncodeNet forward
# ----------------------------------------------------------------------------
def encode_net_forward(x_nchw, params, lh, lw):
    w0, b0 = params["w0"], params["b0"]
    w1, b1 = params["w1"], params["b1"]              # w1 is HWIO (9,9,C,C)
    gamma, beta = params["gamma"], params["beta"]
    n = x_nchw.shape[0]
    eps = 1e-5

    x2d = x_nchw[:, 0]                               # (N, 17, 17) single channel

    # -------- xA path: interp commutes with conv0 (affine, weights sum to 1) --
    # xA[n,c,h,w] = u[n,h,w]*w0[c] + b0[c];  bn128 folds into scale/bias.
    t_rows = jnp.einsum("ah,nhw->naw", lh, x2d)      # (N, 240, 17)   tiny
    u = jnp.einsum("naw,bw->nab", t_rows, lw)        # (N, 240, 240)  tiny
    mu_u = jnp.mean(u)
    var_u = jnp.mean((u - mu_u) ** 2)
    inv_std = 1.0 / jnp.sqrt(var_u * w0 * w0 + eps)  # (C,)
    scale = w0 * gamma * inv_std                     # (C,)
    bias = beta - mu_u * scale                       # (C,)   bn128(xA) = u*scale + bias

    # -------- small branch: conv0 folded into conv1 (both linear) -------------
    w_eff = jnp.einsum("hwcd,c->hwd", w1, w0).reshape(NTAP, C)   # (81, C)
    b_eff = b1 + jnp.einsum("hwcd,c->d", w1, b0)                 # (C,)

    patches = x2d[:, II, JJ]                         # (N, 81, 81) im2col (tiny)
    y1 = matmul_bias_leaky(patches.reshape(n * NTAP, NTAP), w_eff, b_eff)
    y1 = y1.reshape(n, NTAP, C)                      # == leaky(conv1(conv0(x)))
    y1 = y1 / (jnp.sqrt(jnp.sum(y1 * y1)) + 1e-6)    # x / (||x||_F + 1e-6)
    y1 = bn_train(y1, gamma, beta, axes=(0, 1))

    # second conv1: 9x9 input, 9x9 kernel -> 1x1 output == one flat contraction
    y2 = matmul_bias_leaky(y1.reshape(n, NTAP * C), w1.reshape(NTAP * C, C), b1)
    y2 = y2 / (jnp.sqrt(jnp.sum(y2 * y2)) + 1e-6)
    y2 = bn_train(y2, gamma, beta, axes=(0,))        # (N, C)

    # -------- fused final kernel: out = bn128(xA) + x_small (NCHW layout) -----
    add = (bias[None, :] + y2).reshape(n, C, 1)      # (N, C, 1)
    u_flat = u.reshape(n, 1, P_OUT)                  # (N, 1, 57600)
    out_flat = fused_output(u_flat, scale.reshape(C, 1), add)   # (N, C, 57600)
    return out_flat.reshape(n, C, OUT_HW, OUT_HW)    # free reshape, no transpose


if __name__ == "__main__":
    key = jax.random.PRNGKey(0)
    kx, kw0, kb0, kw1, kb1, kg, kbt = jax.random.split(key, 7)
    x = jax.random.normal(kx, (2, 1, H_IN, H_IN), jnp.float32)

    params = dict(
        w0=jax.random.normal(kw0, (C,), jnp.float32) * 0.5,          # conv0 (1->128, 1x1)
        b0=jax.random.normal(kb0, (C,), jnp.float32) * 0.1,
        w1=jax.random.normal(kw1, (9, 9, C, C), jnp.float32) * 0.01,  # conv1, HWIO
        b1=jax.random.normal(kb1, (C,), jnp.float32) * 0.01,
        gamma=1.0 + 0.1 * jax.random.normal(kg, (C,), jnp.float32),   # bn128 weight
        beta=0.1 * jax.random.normal(kbt, (C,), jnp.float32),         # bn128 bias
    )

    lh = jnp.asarray(bilinear_matrix(OUT_HW, H_IN))   # (240, 17)
    lw = jnp.asarray(bilinear_matrix(OUT_HW, H_IN))   # (240, 17)

    fwd = jax.jit(encode_net_forward)
    out = fwd(x, params, lh, lw)
    jax.block_until_ready(out)
    assert out.shape == (2, C, OUT_HW, OUT_HW), out.shape
    assert bool(jnp.all(jnp.isfinite(out)))
    print("KERNEL_OK")
</pallas_src>

<mosaic_0001>
module attributes {stable_mosaic.version = 11 : i64} {
  func.func @matmul_bias_leaky_kernel(%arg0: memref<162x81xf32, #tpu.memory_space<vmem>>, %arg1: memref<81x128xf32, #tpu.memory_space<vmem>>, %arg2: memref<1x128xf32, #tpu.memory_space<vmem>>, %arg3: memref<162x128xf32, #tpu.memory_space<vmem>>) attributes {dimension_semantics = [], scalar_prefetch = 0 : i64, scratch_operands = 0 : i64, tpu.core_type = #tpu.core_type<tc>} {
    %c0 = arith.constant 0 : index
    %c0_0 = arith.constant 0 : index
    %0 = vector.load %arg0[%c0, %c0_0] : memref<162x81xf32, #tpu.memory_space<vmem>>, vector<162x81xf32>
    %c0_1 = arith.constant 0 : index
    %c0_2 = arith.constant 0 : index
    %1 = vector.load %arg1[%c0_1, %c0_2] : memref<81x128xf32, #tpu.memory_space<vmem>>, vector<81x128xf32>
    %cst = arith.constant dense<0.000000e+00> : vector<162x128xf32>
    %2 = tpu.matmul %0, %1, %cst {dimension_numbers = #tpu.dot_dimension_numbers<[1], [0], [0], [1], [0, 0, 1, 1], [], []>} : vector<162x81xf32>, vector<81x128xf32>, vector<162x128xf32> -> vector<162x128xf32>
    %c0_3 = arith.constant 0 : index
    %c0_4 = arith.constant 0 : index
    %3 = vector.load %arg2[%c0_3, %c0_4] : memref<1x128xf32, #tpu.memory_space<vmem>>, vector<1x128xf32>
    %4 = vector.broadcast %3 : vector<1x128xf32> to vector<162x128xf32>
    %5 = arith.addf %2, %4 : vector<162x128xf32>
    %cst_5 = arith.constant 0.000000e+00 : f32
    %6 = vector.broadcast %cst_5 : f32 to vector<162x128xf32>
    %7 = arith.cmpf ogt, %5, %6 : vector<162x128xf32>
    %cst_6 = arith.constant 0.00999999977 : f32
    %8 = vector.broadcast %cst_6 : f32 to vector<162x128xf32>
    %9 = arith.mulf %8, %5 : vector<162x128xf32>
    %10 = arith.select %7, %5, %9 : vector<162x128xi1>, vector<162x128xf32>
    %c0_7 = arith.constant 0 : index
    %c0_8 = arith.constant 0 : index
    %11 = vector.load %arg3[%c0_7, %c0_8] : memref<162x128xf32, #tpu.memory_space<vmem>>, vector<162x128xf32>
    tpu.vector_store %arg3[%c0_7, %c0_8], %10 {strides = array<i32>} : memref<162x128xf32, #tpu.memory_space<vmem>>, vector<162x128xf32>,
    return
  }
}

module attributes {stable_mosaic.version = 11 : i64} {
  func.func @matmul_bias_leaky_kernel(%arg0: memref<2x10368xf32, #tpu.memory_space<vmem>>, %arg1: memref<10368x128xf32, #tpu.memory_space<vmem>>, %arg2: memref<1x128xf32, #tpu.memory_space<vmem>>, %arg3: memref<2x128xf32, #tpu.memory_space<vmem>>) attributes {dimension_semantics = [], scalar_prefetch = 0 : i64, scratch_operands = 0 : i64, tpu.core_type = #tpu.core_type<tc>} {
    %c0 = arith.constant 0 : index
    %c0_0 = arith.constant 0 : index
    %0 = vector.load %arg0[%c0, %c0_0] : memref<2x10368xf32, #tpu.memory_space<vmem>>, vector<2x10368xf32>
    %c0_1 = arith.constant 0 : index
    %c0_2 = arith.constant 0 : index
    %1 = vector.load %arg1[%c0_1, %c0_2] : memref<10368x128xf32, #tpu.memory_space<vmem>>, vector<10368x128xf32>
    %cst = arith.constant dense<0.000000e+00> : vector<2x128xf32>
    %2 = tpu.matmul %0, %1, %cst {dimension_numbers = #tpu.dot_dimension_numbers<[1], [0], [0], [1], [0, 0, 1, 1], [], []>} : vector<2x10368xf32>, vector<10368x128xf32>, vector<2x128xf32> -> vector<2x128xf32>
    %c0_3 = arith.constant 0 : index
    %c0_4 = arith.constant 0 : index
    %3 = vector.load %arg2[%c0_3, %c0_4] : memref<1x128xf32, #tpu.memory_space<vmem>>, vector<1x128xf32>
    %4 = vector.broadcast %3 : vector<1x128xf32> to vector<2x128xf32>
    %5 = arith.addf %2, %4 : vector<2x128xf32>
    %cst_5 = arith.constant 0.000000e+00 : f32
    %6 = vector.broadcast %cst_5 : f32 to vector<2x128xf32>
    %7 = arith.cmpf ogt, %5, %6 : vector<2x128xf32>
    %cst_6 = arith.constant 0.00999999977 : f32
    %8 = vector.broadcast %cst_6 : f32 to vector<2x128xf32>
    %9 = arith.mulf %8, %5 : vector<2x128xf32>
    %10 = arith.select %7, %5, %9 : vector<2x128xi1>, vector<2x128xf32>
    %c0_7 = arith.constant 0 : index
    %c0_8 = arith.constant 0 : index
    %11 = vector.load %arg3[%c0_7, %c0_8] : memref<2x128xf32, #tpu.memory_space<vmem>>, vector<2x128xf32>
    tpu.vector_store %arg3[%c0_7, %c0_8], %10 {strides = array<i32>} : memref<2x128xf32, #tpu.memory_space<vmem>>, vector<2x128xf32>,
    return
  }
}

module attributes {stable_mosaic.version = 11 : i64} {
  func.func @fused_output_kernel(%arg0: i32, %arg1: i32, %arg2: memref<1x1x9600xf32, #tpu.memory_space<vmem>>, %arg3: memref<128x1xf32, #tpu.memory_space<vmem>>, %arg4: memref<1x128x1xf32, #tpu.memory_space<vmem>>, %arg5: memref<1x128x9600xf32, #tpu.memory_space<vmem>>) attributes {dimension_semantics = [#tpu.dimension_semantics<parallel>, #tpu.dimension_semantics<parallel>], iteration_bounds = array<i64: 2, 6>, scalar_prefetch = 0 : i64, scratch_operands = 0 : i64, tpu.core_type = #tpu.core_type<tc>, window_params = [{transform_indices = @transform_0, window_bounds = array<i64: 1, 1, 9600>}, {pipeline_mode = #tpu.pipeline_mode<synchronous>, transform_indices = @transform_1, window_bounds = array<i64: 128, 1>}, {transform_indices = @transform_2, window_bounds = array<i64: 1, 128, 1>}, {transform_indices = @transform_3, window_bounds = array<i64: 1, 128, 9600>}]} {
    %c0 = arith.constant 0 : index
    %c0_0 = arith.constant 0 : index
    %c0_1 = arith.constant 0 : index
    %0 = vector.load %arg2[%c0, %c0_0, %c0_1] : memref<1x1x9600xf32, #tpu.memory_space<vmem>>, vector<1x1x9600xf32>
    %1 = vector.shape_cast %0 : vector<1x1x9600xf32> to vector<1x9600xf32>
    %c0_2 = arith.constant 0 : index
    %c0_3 = arith.constant 0 : index
    %2 = vector.load %arg3[%c0_2, %c0_3] : memref<128x1xf32, #tpu.memory_space<vmem>>, vector<128x1xf32>
    %3 = vector.broadcast %1 : vector<1x9600xf32> to vector<128x9600xf32>
    %4 = vector.broadcast %2 : vector<128x1xf32> to vector<128x9600xf32>
    %5 = arith.mulf %3, %4 : vector<128x9600xf32>
    %c0_4 = arith.constant 0 : index
    %c0_5 = arith.constant 0 : index
    %c0_6 = arith.constant 0 : index
    %6 = vector.load %arg4[%c0_4, %c0_5, %c0_6] : memref<1x128x1xf32, #tpu.memory_space<vmem>>, vector<1x128x1xf32>
    %7 = vector.shape_cast %6 : vector<1x128x1xf32> to vector<128x1xf32>
    %8 = vector.broadcast %7 : vector<128x1xf32> to vector<128x9600xf32>
    %9 = arith.addf %5, %8 : vector<128x9600xf32>
    %c0_7 = arith.constant 0 : index
    %c0_8 = arith.constant 0 : index
    %c0_9 = arith.constant 0 : index
    %10 = vector.load %arg5[%c0_7, %c0_8, %c0_9] : memref<1x128x9600xf32, #tpu.memory_space<vmem>>, vector<1x128x9600xf32>
    %11 = vector.shape_cast %10 : vector<1x128x9600xf32> to vector<128x9600xf32>
    %12 = vector.shape_cast %9 : vector<128x9600xf32> to vector<1x128x9600xf32>
    tpu.vector_store %arg5[%c0_7, %c0_8, %c0_9], %12 {strides = array<i32>} : memref<1x128x9600xf32, #tpu.memory_space<vmem>>, vector<1x128x9600xf32>,
    return
  }
  func.func @transform_0(%arg0: i32, %arg1: i32) -> (i32, i32, i32) {
    %c0_i32 = arith.constant 0 : i32
    %c0_i32_0 = arith.constant 0 : i32
    return %arg0, %c0_i32, %arg1 : i32, i32, i32
  }
  func.func @transform_1(%arg0: i32, %arg1: i32) -> (i32, i32) {
    %c0_i32 = arith.constant 0 : i32
    %c0_i32_0 = arith.constant 0 : i32
    %c0_i32_1 = arith.constant 0 : i32
    return %c0_i32, %c0_i32_0 : i32, i32
  }
  func.func @transform_2(%arg0: i32, %arg1: i32) -> (i32, i32, i32) {
    %c0_i32 = arith.constant 0 : i32
    %c0_i32_0 = arith.constant 0 : i32
    %c0_i32_1 = arith.constant 0 : i32
    return %arg0, %c0_i32, %c0_i32_0 : i32, i32, i32
  }
  func.func @transform_3(%arg0: i32, %arg1: i32) -> (i32, i32, i32) {
    %c0_i32 = arith.constant 0 : i32
    %c0_i32_0 = arith.constant 0 : i32
    return %arg0, %c0_i32, %arg1 : i32, i32, i32
  }
}

</mosaic_0001>

<llo_original>
// kernel: encode_net_forward.3
$region0: #{encode_net_forward.3}
  #allocation0 [shape = 'u32[]', space=smem, size = 0x4, offset = 0x4, fixed_abs, tag = 'smem constant byte address 0x4 - core index']
  #allocation1 [shape = 'u32[144,128]{1,0:T(1,128)}', space=vmem, size = 0x12000, scoped, tag = 'internal scratch']
  %s0 = inlined_call_operand.vmem [shape: f32[162,81], index: 0, kind: input, shape index: {}]
  %s1 = inlined_call_operand.vmem [shape: f32[81,128], index: 1, kind: input, shape index: {}]
  %s2 = inlined_call_operand.vmem [shape: f32[1,128], index: 2, kind: input, shape index: {}]
  %s3 = inlined_call_operand.vmem [shape: f32[162,128], index: 3, kind: output, shape index: {}]
  %s4 = sld [smem:[#allocation0]]
  $region22: #{encode_net_forward.3} parent=0
    _
  %s6 = ssub.s32 1, %s4
  %s7 = scalar_select 0, %s6, %s4
  // Predicated region
  $region2: #{encode_net_forward.3} parent=0 // pred_check
    _
  $region3: #{encode_net_forward.3} parent=0 // pred_check_branch
    %9 = sbr.rel (0) target = $region5
  $region4: #{encode_net_forward.3} parent=0 // pred_region
    _
  $region5: #{encode_net_forward.3} parent=0 // pred_fallthru
    _
  // Predicated region
  $region6: #{encode_net_forward.3} parent=0 // pred_check
    _
  $region7: #{encode_net_forward.3} parent=0 // pred_check_branch
    %11 = sbr.rel (0) target = $region9
  $region8: #{encode_net_forward.3} parent=0 // pred_region
    _
  $region9: #{encode_net_forward.3} parent=0 // pred_fallthru
    _
  // Predicated region
  $region10: #{encode_net_forward.3} parent=0 // pred_check
    _
  $region11: #{encode_net_forward.3} parent=0 // pred_check_branch
    %13 = sbr.rel (0) target = $region13
  $region12: #{encode_net_forward.3} parent=0 // pred_region
    _
  $region13: #{encode_net_forward.3} parent=0 // pred_fallthru
    _
  %v14 = vld [vmem:[%s0] sm:$0xff]
  %v15 = vld [vmem:[%s0 + $0x8] sm:$0xff]
  %v16 = vld [vmem:[%s0 + $0x10] sm:$0xff]
  %v17 = vld [vmem:[%s0 + $0x18] sm:$0xff]
  %v18 = vld [vmem:[%s0 + $0x20] sm:$0xff]
  %v19 = vld [vmem:[%s0 + $0x28] sm:$0xff]
  %v20 = vld [vmem:[%s0 + $0x30] sm:$0xff]
  %v21 = vld [vmem:[%s0 + $0x38] sm:$0xff]
  %v22 = vld [vmem:[%s0 + $0x40] sm:$0xff]
  %v23 = vld [vmem:[%s0 + $0x48] sm:$0xff]
  %v24 = vld [vmem:[%s0 + $0x50] sm:$0xff]
  %v25 = vld [vmem:[%s0 + $0x58] sm:$0xff]
  %v26 = vld [vmem:[%s0 + $0x60] sm:$0xff]
  %v27 = vld [vmem:[%s0 + $0x68] sm:$0xff]
  %v28 = vld [vmem:[%s0 + $0x70] sm:$0xff]
  %v29 = vld [vmem:[%s0 + $0x78] sm:$0xff]
  %v30 = vld [vmem:[%s0 + $0x80] sm:$0xff]
  %v31 = vld [vmem:[%s0 + $0x88] sm:$0xff]
  %v32 = vld [vmem:[%s0 + $0x90] sm:$0xff]
  %v33 = vld [vmem:[%s0 + $0x98] sm:$0xff]
  %v34 = vld [vmem:[%s0 + $0xa0] sm:$0x3]
  %v35 = vld [vmem:[%s1] sm:$0xff]
  %v36 = vld [vmem:[%s1 + $0x8] sm:$0xff]
  %v37 = vld [vmem:[%s1 + $0x10] sm:$0xff]
  %v38 = vld [vmem:[%s1 + $0x18] sm:$0xff]
  %v39 = vld [vmem:[%s1 + $0x20] sm:$0xff]
  %v40 = vld [vmem:[%s1 + $0x28] sm:$0xff]
  %v41 = vld [vmem:[%s1 + $0x30] sm:$0xff]
  %v42 = vld [vmem:[%s1 + $0x38] sm:$0xff]
  %v43 = vld [vmem:[%s1 + $0x40] sm:$0xff]
  %v44 = vld [vmem:[%s1 + $0x48] sm:$0xff]
  %v45 = vld [vmem:[%s1 + $0x50] sm:$0x1]
  %v46 = vld [vmem:[%s2] sm:$0x1]
  %v48 = vlaneseq
  %v49 = vshrl.u32 %v48, 7
  %v50 = vsub.s32 0, %v49
  %v51 = vrot.slane %v46, %v50
  %vm53 = vcmask 662528
  %v55 = vsel %vm53, %v14, 0
  %v58 = vsel %vm53, %v15, 0
  %v61 = vsel %vm53, %v16, 0
  %v64 = vsel %vm53, %v17, 0
  %v67 = vsel %vm53, %v18, 0
  %v70 = vsel %vm53, %v19, 0
  %v73 = vsel %vm53, %v20, 0
  %v76 = vsel %vm53, %v21, 0
  %v79 = vsel %vm53, %v22, 0
  %v82 = vsel %vm53, %v23, 0
  %v85 = vsel %vm53, %v24, 0
  %v88 = vsel %vm53, %v25, 0
  %v91 = vsel %vm53, %v26, 0
  %v94 = vsel %vm53, %v27, 0
  %v97 = vsel %vm53, %v28, 0
  %v100 = vsel %vm53, %v29, 0
  %v103 = vsel %vm53, %v30, 0
  %v106 = vsel %vm53, %v31, 0
  %v109 = vsel %vm53, %v32, 0
  %v112 = vsel %vm53, %v33, 0
  %v115 = vsel %vm53, %v34, 0
  %vm117 = vcmask 1040384
  %v119 = vsel %vm117, %v45, 0
  %121 = vmatprep.subr.mxu0 0.0
  %122 = vmatpush1.msra.mxu0 %v35
  %123 = vmatprep.subr.mxu0 0.0
  %124 = vmatpush1.msra.mxu0 %v36
  %125 = vmatprep.subr.mxu0 0.0
  %126 = vmatpush1.msra.mxu0 %v37
  %127 = vmatprep.subr.mxu0 0.0
  %128 = vmatpush1.msra.mxu0 %v38
  %129 = vmatprep.subr.mxu0 0.0
  %130 = vmatpush1.msra.mxu0 %v39
  %131 = vmatprep.subr.mxu0 0.0
  %132 = vmatpush1.msra.mxu0 %v40
  %133 = vmatprep.subr.mxu0 0.0
  %134 = vmatpush1.msra.mxu0 %v41
  %135 = vmatprep.subr.mxu0 0.0
  %136 = vmatpush1.msra.mxu0 %v42
  %137 = vmatprep.subr.mxu0 0.0
  %138 = vmatpush1.msra.mxu0 %v43
  %139 = vmatprep.subr.mxu0 0.0
  %140 = vmatpush1.msra.mxu0 %v44
  %141 = vmatprep.subr.mxu0 0.0
  %142 = vmatpush1.msra.mxu0 %v119
  %143 = vmatprep.subr.mxu0 0.0
  %144 = vmatpush1.msra.mxu0 0.0
  %145 = vmatprep.subr.mxu0 0.0
  %146 = vmatpush1.msra.mxu0 0.0
  %147 = vmatprep.subr.mxu0 0.0
  %148 = vmatpush1.msra.mxu0 0.0
  %149 = vmatprep.subr.mxu0 0.0
  %150 = vmatpush1.msra.mxu0 0.0
  %151 = vmatprep.subr.mxu0 0.0
  %152 = vmatpush1.msra.mxu0 0.0
  %153 = vmatprep.subr.mxu0 0.0
  %154 = vmatpush1.msra.mxu0 0.0
  %155 = vmatprep.subr.mxu0 0.0
  %156 = vmatpush1.msra.mxu0 0.0
  %157 = vmatprep.subr.mxu0 0.0
  %158 = vmatpush1.msra.mxu0 0.0
  %159 = vmatprep.subr.mxu0 0.0
  %160 = vmatpush1.msra.mxu0 0.0
  %161 = vmatprep.subr.mxu0 0.0
  %162 = vmatpush1.msra.mxu0 0.0
  %163 = vmatprep.subr.mxu0 0.0
  %164 = vmatpush1.msra.mxu0 0.0
  %165 = vmatprep.subr.mxu0 0.0
  %166 = vmatpush1.msra.mxu0 0.0
  %167 = vmatprep.subr.mxu0 0.0
  %168 = vmatpush1.msra.mxu0 0.0
  %169 = vmatprep.subr.mxu0 0.0
  %170 = vmatpush1.msra.mxu0 0.0
  %171 = vmatprep.subr.mxu0 0.0
  %172 = vmatpush1.msra.mxu0 0.0
  %173 = vmatprep.subr.mxu0 0.0
  %174 = vmatpush1.msra.mxu0 0.0
  %175 = vmatprep.subr.mxu0 0.0
  %176 = vmatpush1.msra.mxu0 0.0
  %177 = vmatprep.subr.mxu0 0.0
  %178 = vmatpush1.msra.mxu0 0.0
  %179 = vmatprep.subr.mxu0 0.0
  %180 = vmatpush1.msra.mxu0 0.0
  %181 = vmatprep.subr.mxu0 0.0
  %182 = vmatpush1.msra.mxu0 0.0
  %183 = vmatprep.subr.mxu0 0.0
  %184 = vmatpush1.msra.mxu0 0.0
  %185 = vmatprep.mubr.f32.mxu0 0.0
  %186 = vmatmul.mubr.f32.gmra.mrb[0].mxu0 %v55
  %v187 = vpop.f32.mrb[0].mxu0
  %v188 = vadd.f32 %v51, %v187
  %v189 = vpop.f32.mrb[0].mxu0
  %190 = vmatprep.mubr.f32.mxu0 0.0
  %191 = vmatmul.mubr.f32.gmra.mrb[0].mxu0 %v58
  %v192 = vpop.f32.mrb[0].mxu0
  %v193 = vadd.f32 %v51, %v192
  %v194 = vpop.f32.mrb[0].mxu0
  %195 = vmatprep.mubr.f32.mxu0 0.0
  %196 = vmatmul.mubr.f32.gmra.mrb[0].mxu0 %v61
  %v197 = vpop.f32.mrb[0].mxu0
  %v198 = vadd.f32 %v51, %v197
  %v199 = vpop.f32.mrb[0].mxu0
  %200 = vmatprep.mubr.f32.mxu0 0.0
  %201 = vmatmul.mubr.f32.gmra.mrb[0].mxu0 %v64
  %v202 = vpop.f32.mrb[0].mxu0
  %v203 = vadd.f32 %v51, %v202
  %v204 = vpop.f32.mrb[0].mxu0
  %205 = vmatprep.mubr.f32.mxu0 0.0
  %206 = vmatmul.mubr.f32.gmra.mrb[0].mxu0 %v67
  %v207 = vpop.f32.mrb[0].mxu0
  %v208 = vadd.f32 %v51, %v207
  %v209 = vpop.f32.mrb[0].mxu0
  %210 = vmatprep.mubr.f32.mxu0 0.0
  %211 = vmatmul.mubr.f32.gmra.mrb[0].mxu0 %v70
  %v212 = vpop.f32.mrb[0].mxu0
  %v213 = vadd.f32 %v51, %v212
  %v214 = vpop.f32.mrb[0].mxu0
  %215 = vmatprep.mubr.f32.mxu0 0.0
  %216 = vmatmul.mubr.f32.gmra.mrb[0].mxu0 %v73
  %v217 = vpop.f32.mrb[0].mxu0
  %v218 = vadd.f32 %v51, %v217
  %v219 = vpop.f32.mrb[0].mxu0
  %220 = vmatprep.mubr.f32.mxu0 0.0
  %221 = vmatmul.mubr.f32.gmra.mrb[0].mxu0 %v76
  %v222 = vpop.f32.mrb[0].mxu0
  %v223 = vadd.f32 %v51, %v222
  %v224 = vpop.f32.mrb[0].mxu0
  %225 = vmatprep.mubr.f32.mxu0 0.0
  %226 = vmatmul.mubr.f32.gmra.mrb[0].mxu0 %v79
  %v227 = vpop.f32.mrb[0].mxu0
  %v228 = vadd.f32 %v51, %v227
  %v229 = vpop.f32.mrb[0].mxu0
  %230 = vmatprep.mubr.f32.mxu0 0.0
  %231 = vmatmul.mubr.f32.gmra.mrb[0].mxu0 %v82
  %v232 = vpop.f32.mrb[0].mxu0
  %v233 = vadd.f32 %v51, %v232
  %v234 = vpop.f32.mrb[0].mxu0
  %235 = vmatprep.mubr.f32.mxu0 0.0
  %236 = vmatmul.mubr.f32.gmra.mrb[0].mxu0 %v85
  %v237 = vpop.f32.mrb[0].mxu0
  %v238 = vadd.f32 %v51, %v237
  %v239 = vpop.f32.mrb[0].mxu0
  %240 = vmatprep.mubr.f32.mxu0 0.0
  %241 = vmatmul.mubr.f32.gmra.mrb[0].mxu0 %v88
  %v242 = vpop.f32.mrb[0].mxu0
  %v243 = vadd.f32 %v51, %v242
  %v244 = vpop.f32.mrb[0].mxu0
  %245 = vmatprep.mubr.f32.mxu0 0.0
  %246 = vmatmul.mubr.f32.gmra.mrb[0].mxu0 %v91
  %v247 = vpop.f32.mrb[0].mxu0
  %v248 = vadd.f32 %v51, %v247
  %v249 = vpop.f32.mrb[0].mxu0
  %250 = vmatprep.mubr.f32.mxu0 0.0
  %251 = vmatmul.mubr.f32.gmra.mrb[0].mxu0 %v94
  %v252 = vpop.f32.mrb[0].mxu0
  %v253 = vadd.f32 %v51, %v252
  %v254 = vpop.f32.mrb[0].mxu0
  %255 = vmatprep.mubr.f32.mxu0 0.0
  %256 = vmatmul.mubr.f32.gmra.mrb[0].mxu0 %v97
  %v257 = vpop.f32.mrb[0].mxu0
  %v258 = vadd.f32 %v51, %v257
  %v259 = vpop.f32.mrb[0].mxu0
  %260 = vmatprep.mubr.f32.mxu0 0.0
  %261 = vmatmul.mubr.f32.gmra.mrb[0].mxu0 %v100
  %v262 = vpop.f32.mrb[0].mxu0
  %v263 = vadd.f32 %v51, %v262
  %v264 = vpop.f32.mrb[0].mxu0
  %265 = vmatprep.mubr.f32.mxu0 0.0
  %266 = vmatmul.mubr.f32.gmra.mrb[0].mxu0 %v103
  %v267 = vpop.f32.mrb[0].mxu0
  %v268 = vadd.f32 %v51, %v267
  %v269 = vpop.f32.mrb[0].mxu0
  %270 = vmatprep.mubr.f32.mxu0 0.0
  %271 = vmatmul.mubr.f32.gmra.mrb[0].mxu0 %v106
  %v272 = vpop.f32.mrb[0].mxu0
  %v273 = vadd.f32 %v51, %v272
  %v274 = vpop.f32.mrb[0].mxu0
  %275 = vmatprep.mubr.f32.mxu0 0.0
  %276 = vmatmul.mubr.f32.gmra.mrb[0].mxu0 %v109
  %v277 = vpop.f32.mrb[0].mxu0
  %v278 = vadd.f32 %v51, %v277
  %v279 = vpop.f32.mrb[0].mxu0
  %280 = vmatprep.mubr.f32.mxu0 0.0
  %281 = vmatmul.mubr.f32.gmra.mrb[0].mxu0 %v112
  %v282 = vpop.f32.mrb[0].mxu0
  %v283 = vadd.f32 %v51, %v282
  %v284 = vpop.f32.mrb[0].mxu0
  %285 = vmatprep.mubr.f32.mxu0 0.0
  %286 = vmatmul.mubr.f32.gmra.mrb[0].mxu0 %v115
  %v287 = vpop.f32.mrb[0].mxu0
  %v288 = vadd.f32 %v51, %v287
  %v289 = vpop.f32.mrb[0].mxu0
  %290 = vdwg.mxu0
  %vm291 = vcmp.gt.f32.partialorder %v188, 0.0
  %vm292 = vcmp.gt.f32.partialorder %v193, 0.0
  %vm293 = vcmp.gt.f32.partialorder %v198, 0.0
  %vm294 = vcmp.gt.f32.partialorder %v203, 0.0
  %vm295 = vcmp.gt.f32.partialorder %v208, 0.0
  %vm296 = vcmp.gt.f32.partialorder %v213, 0.0
  %vm297 = vcmp.gt.f32.partialorder %v218, 0.0
  %vm298 = vcmp.gt.f32.partialorder %v223, 0.0
  %vm299 = vcmp.gt.f32.partialorder %v228, 0.0
  %vm300 = vcmp.gt.f32.partialorder %v233, 0.0
  %vm301 = vcmp.gt.f32.partialorder %v238, 0.0
  %vm302 = vcmp.gt.f32.partialorder %v243, 0.0
  %vm303 = vcmp.gt.f32.partialorder %v248, 0.0
  %vm304 = vcmp.gt.f32.partialorder %v253, 0.0
  %vm305 = vcmp.gt.f32.partialorder %v258, 0.0
  %vm306 = vcmp.gt.f32.partialorder %v263, 0.0
  %vm307 = vcmp.gt.f32.partialorder %v268, 0.0
  %vm308 = vcmp.gt.f32.partialorder %v273, 0.0
  %vm309 = vcmp.gt.f32.partialorder %v278, 0.0
  %vm310 = vcmp.gt.f32.partialorder %v283, 0.0
  %vm311 = vcmp.gt.f32.partialorder %v288, 0.0
  %v312 = vmul.f32 %v188, 0.01
  %v313 = vmul.f32 %v193, 0.01
  %v314 = vmul.f32 %v198, 0.01
  %v315 = vmul.f32 %v203, 0.01
  %v316 = vmul.f32 %v208, 0.01
  %v317 = vmul.f32 %v213, 0.01
  %v318 = vmul.f32 %v218, 0.01
  %v319 = vmul.f32 %v223, 0.01
  %v320 = vmul.f32 %v228, 0.01
  %v321 = vmul.f32 %v233, 0.01
  %v322 = vmul.f32 %v238, 0.01
  %v323 = vmul.f32 %v243, 0.01
  %v324 = vmul.f32 %v248, 0.01
  %v325 = vmul.f32 %v253, 0.01
  %v326 = vmul.f32 %v258, 0.01
  %v327 = vmul.f32 %v263, 0.01
  %v328 = vmul.f32 %v268, 0.01
  %v329 = vmul.f32 %v273, 0.01
  %v330 = vmul.f32 %v278, 0.01
  %v331 = vmul.f32 %v283, 0.01
  %v332 = vmul.f32 %v288, 0.01
  %v333 = vsel %vm291, %v188, %v312
  %v334 = vsel %vm292, %v193, %v313
  %v335 = vsel %vm293, %v198, %v314
  %v336 = vsel %vm294, %v203, %v315
  %v337 = vsel %vm295, %v208, %v316
  %v338 = vsel %vm296, %v213, %v317
  %v339 = vsel %vm297, %v218, %v318
  %v340 = vsel %vm298, %v223, %v319
  %v341 = vsel %vm299, %v228, %v320
  %v342 = vsel %vm300, %v233, %v321
  %v343 = vsel %vm301, %v238, %v322
  %v344 = vsel %vm302, %v243, %v323
  %v345 = vsel %vm303, %v248, %v324
  %v346 = vsel %vm304, %v253, %v325
  %v347 = vsel %vm305, %v258, %v326
  %v348 = vsel %vm306, %v263, %v327
  %v349 = vsel %vm307, %v268, %v328
  %v350 = vsel %vm308, %v273, %v329
  %v351 = vsel %vm309, %v278, %v330
  %v352 = vsel %vm310, %v283, %v331
  %v353 = vsel %vm311, %v288, %v332
  %354 = vst [vmem:[%s3] sm:$0xff] %v333
  %355 = vst [vmem:[%s3 + $0x8] sm:$0xff] %v334
  %356 = vst [vmem:[%s3 + $0x10] sm:$0xff] %v335
  %357 = vst [vmem:[%s3 + $0x18] sm:$0xff] %v336
  %358 = vst [vmem:[%s3 + $0x20] sm:$0xff] %v337
  %359 = vst [vmem:[%s3 + $0x28] sm:$0xff] %v338
  %360 = vst [vmem:[%s3 + $0x30] sm:$0xff] %v339
  %361 = vst [vmem:[%s3 + $0x38] sm:$0xff] %v340
  %362 = vst [vmem:[%s3 + $0x40] sm:$0xff] %v341
  %363 = vst [vmem:[%s3 + $0x48] sm:$0xff] %v342
  %364 = vst [vmem:[%s3 + $0x50] sm:$0xff] %v343
  %365 = vst [vmem:[%s3 + $0x58] sm:$0xff] %v344
  %366 = vst [vmem:[%s3 + $0x60] sm:$0xff] %v345
  %367 = vst [vmem:[%s3 + $0x68] sm:$0xff] %v346
  %368 = vst [vmem:[%s3 + $0x70] sm:$0xff] %v347
  %369 = vst [vmem:[%s3 + $0x78] sm:$0xff] %v348
  %370 = vst [vmem:[%s3 + $0x80] sm:$0xff] %v349
  %371 = vst [vmem:[%s3 + $0x88] sm:$0xff] %v350
  %372 = vst [vmem:[%s3 + $0x90] sm:$0xff] %v351
  %373 = vst [vmem:[%s3 + $0x98] sm:$0xff] %v352
  %374 = vst [vmem:[%s3 + $0xa0] sm:$0x3] %v353
  // Predicated region
  $region14: #{encode_net_forward.3} parent=0 // pred_check
    _
  $region15: #{encode_net_forward.3} parent=0 // pred_check_branch
    %376 = sbr.rel (0) target = $region17
  $region16: #{encode_net_forward.3} parent=0 // pred_region
    _
  $region17: #{encode_net_forward.3} parent=0 // pred_fallthru
    _
  // Predicated region
  $region18: #{encode_net_forward.3} parent=0 // pred_check
    _
  $region19: #{encode_net_forward.3} parent=0 // pred_check_branch
    %378 = sbr.rel (0) target = $region21
  $region20: #{encode_net_forward.3} parent=0 // pred_region
    _
  $region21: #{encode_net_forward.3} parent=0 // pred_fallthru
    _

// kernel: encode_net_forward.4
$region0: #{encode_net_forward.4}
  #allocation0 [shape = 'u32[]', space=smem, size = 0x4, offset = 0x4, fixed_abs, tag = 'smem constant byte address 0x4 - core index']
  #allocation1 [shape = 'u32[144,128]{1,0:T(1,128)}', space=vmem, size = 0x12000, scoped, tag = 'internal scratch']
  %s0 = inlined_call_operand.vmem [shape: f32[2,10368], index: 0, kind: input, shape index: {}]
  %s1 = inlined_call_operand.vmem [shape: f32[10368,128], index: 1, kind: input, shape index: {}]
  %s2 = inlined_call_operand.vmem [shape: f32[1,128], index: 2, kind: input, shape index: {}]
  %s3 = inlined_call_operand.vmem [shape: f32[2,128], index: 3, kind: output, shape index: {}]
  %s4 = sld [smem:[#allocation0]]
  $region22: #{encode_net_forward.4} parent=0
    _
  %s6 = ssub.s32 1, %s4
  %s7 = scalar_select 0, %s6, %s4
  // Predicated region
  $region2: #{encode_net_forward.4} parent=0 // pred_check
    _
  $region3: #{encode_net_forward.4} parent=0 // pred_check_branch
    %9 = sbr.rel (0) target = $region5
  $region4: #{encode_net_forward.4} parent=0 // pred_region
    _
  $region5: #{encode_net_forward.4} parent=0 // pred_fallthru
    _
  // Predicated region
  $region6: #{encode_net_forward.4} parent=0 // pred_check
    _
  $region7: #{encode_net_forward.4} parent=0 // pred_check_branch
    %11 = sbr.rel (0) target = $region9
  $region8: #{encode_net_forward.4} parent=0 // pred_region
    _
  $region9: #{encode_net_forward.4} parent=0 // pred_fallthru
    _
  // Predicated region
  $region10: #{encode_net_forward.4} parent=0 // pred_check
    _
  $region11: #{encode_net_forward.4} parent=0 // pred_check_branch
    %13 = sbr.rel (0) target = $region13
  $region12: #{encode_net_forward.4} parent=0 // pred_region
    _
  $region13: #{encode_net_forward.4} parent=0 // pred_fallthru
    _
  %v14 = vld [vmem:[%s0] sm:$0xff]
  %v15 = vld [vmem:[%s0 + $0x8] sm:$0xff]
  %v16 = vld [vmem:[%s0 + $0x10] sm:$0xff]
  %v17 = vld [vmem:[%s0 + $0x18] sm:$0xff]
  %v18 = vld [vmem:[%s0 + $0x20] sm:$0xff]
  %v19 = vld [vmem:[%s0 + $0x28] sm:$0xff]
  %v20 = vld [vmem:[%s0 + $0x30] sm:$0xff]
  %v21 = vld [vmem:[%s0 + $0x38] sm:$0xff]
  %v22 = vld [vmem:[%s0 + $0x40] sm:$0xff]
  %v23 = vld [vmem:[%s0 + $0x48] sm:$0xff]
  %v24 = vld [vmem:[%s0 + $0x50] sm:$0xff]
  %v25 = vld [vmem:[%s0 + $0x58] sm:$0xff]
  %v26 = vld [vmem:[%s0 + $0x60] sm:$0xff]
  %v27 = vld [vmem:[%s0 + $0x68] sm:$0xff]
  %v28 = vld [vmem:[%s0 + $0x70] sm:$0xff]
  %v29 = vld [vmem:[%s0 + $0x78] sm:$0xff]
  %v30 = vld [vmem:[%s0 + $0x80] sm:$0xff]
  %v31 = vld [vmem:[%s0 + $0x88] sm:$0xff]
  %v32 = vld [vmem:[%s0 + $0x90] sm:$0xff]
  %v33 = vld [vmem:[%s0 + $0x98] sm:$0xff]
  %v34 = vld [vmem:[%s0 + $0xa0] sm:$0x3]
  %v35 = vld [vmem:[%s1] sm:$0xff]
  %v36 = vld [vmem:[%s1 + $0x8] sm:$0xff]
  %v37 = vld [vmem:[%s1 + $0x10] sm:$0xff]
  %v38 = vld [vmem:[%s1 + $0x18] sm:$0xff]
  %v39 = vld [vmem:[%s1 + $0x20] sm:$0xff]
  %v40 = vld [vmem:[%s1 + $0x28] sm:$0xff]
  %v41 = vld [vmem:[%s1 + $0x30] sm:$0xff]
  %v42 = vld [vmem:[%s1 + $0x38] sm:$0xff]
  %v43 = vld [vmem:[%s1 + $0x40] sm:$0xff]
  %v44 = vld [vmem:[%s1 + $0x48] sm:$0xff]
  %v45 = vld [vmem:[%s1 + $0x50] sm:$0xff]
  %v46 = vld [vmem:[%s1 + $0x58] sm:$0xff]
  %v47 = vld [vmem:[%s1 + $0x60] sm:$0xff]
  %v48 = vld [vmem:[%s1 + $0x68] sm:$0xff]
  %v49 = vld [vmem:[%s1 + $0x70] sm:$0xff]
  %v50 = vld [vmem:[%s1 + $0x78] sm:$0xff]
  %v51 = vld [vmem:[%s1 + $0x80] sm:$0xff]
  %v52 = vld [vmem:[%s1 + $0x88] sm:$0xff]
  %v53 = vld [vmem:[%s1 + $0x90] sm:$0xff]
  %v54 = vld [vmem:[%s1 + $0x98] sm:$0xff]
  %v55 = vld [vmem:[%s1 + $0xa0] sm:$0xff]
  %v56 = vld [vmem:[%s1 + $0xa8] sm:$0xff]
  %v57 = vld [vmem:[%s1 + $0xb0] sm:$0xff]
  %v58 = vld [vmem:[%s1 + $0xb8] sm:$0xff]
  %v59 = vld [vmem:[%s1 + $0xc0] sm:$0xff]
  %v60 = vld [vmem:[%s1 + $0xc8] sm:$0xff]
  %v61 = vld [vmem:[%s1 + $0xd0] sm:$0xff]
  %v62 = vld [vmem:[%s1 + $0xd8] sm:$0xff]
  %v63 = vld [vmem:[%s1 + $0xe0] sm:$0xff]
  %v64 = vld [vmem:[%s1 + $0xe8] sm:$0xff]
  %v65 = vld [vmem:[%s1 + $0xf0] sm:$0xff]
  %v66 = vld [vmem:[%s1 + $0xf8] sm:$0xff]
  %v67 = vld [vmem:[%s1 + $0x100] sm:$0xff]
  %v68 = vld [vmem:[%s1 + $0x108] sm:$0xff]
  %v69 = vld [vmem:[%s1 + $0x110] sm:$0xff]
  %v70 = vld [vmem:[%s1 + $0x118] sm:$0xff]
  %v71 = vld [vmem:[%s1 + $0x120] sm:$0xff]
  %v72 = vld [vmem:[%s1 + $0x128] sm:$0xff]
  %v73 = vld [vmem:[%s1 + $0x130] sm:$0xff]
  %v74 = vld [vmem:[%s1 + $0x138] sm:$0xff]
  %v75 = vld [vmem:[%s1 + $0x140] sm:$0xff]
  %v76 = vld [vmem:[%s1 + $0x148] sm:$0xff]
  %v77 = vld [vmem:[%s1 + $0x150] sm:$0xff]
  %v78 = vld [vmem:[%s1 + $0x158] sm:$0xff]
  %v79 = vld [vmem:[%s1 + $0x160] sm:$0xff]
  %v80 = vld [vmem:[%s1 + $0x168] sm:$0xff]
  %v81 = vld [vmem:[%s1 + $0x170] sm:$0xff]
  %v82 = vld [vmem:[%s1 + $0x178] sm:$0xff]
  %v83 = vld [vmem:[%s1 + $0x180] sm:$0xff]
  %v84 = vld [vmem:[%s1 + $0x188] sm:$0xff]
  %v85 = vld [vmem:[%s1 + $0x190] sm:$0xff]
  %v86 = vld [vmem:[%s1 + $0x198] sm:$0xff]
  %v87 = vld [vmem:[%s1 + $0x1a0] sm:$0xff]
  %v88 = vld [vmem:[%s1 + $0x1a8] sm:$0xff]
  %v89 = vld [vmem:[%s1 + $0x1b0] sm:$0xff]
  %v90 = vld [vmem:[%s1 + $0x1b8] sm:$0xff]
  %v91 = vld [vmem:[%s1 + $0x1c0] sm:$0xff]
  %v92 = vld [vmem:[%s1 + $0x1c8] sm:$0xff]
  %v93 = vld [vmem:[%s1 + $0x1d0] sm:$0xff]
  %v94 = vld [vmem:[%s1 + $0x1d8] sm:$0xff]
  %v95 = vld [vmem:[%s1 + $0x1e0] sm:$0xff]
  %v96 = vld [vmem:[%s1 + $0x1e8] sm:$0xff]
  %v97 = vld [vmem:[%s1 + $0x1f0] sm:$0xff]
  %v98 = vld [vmem:[%s1 + $0x1f8] sm:$0xff]
  %v99 = vld [vmem:[%s1 + $0x200] sm:$0xff]
  %v100 = vld [vmem:[%s1 + $0x208] sm:$0xff]
  %v101 = vld [vmem:[%s1 + $0x210] sm:$0xff]
  %v102 = vld [vmem:[%s1 + $0x218] sm:$0xff]
  %v103 = vld [vmem:[%s1 + $0x220] sm:$0xff]
  %v104 = vld [vmem:[%s1 + $0x228] sm:$0xff]
  %v105 = vld [vmem:[%s1 + $0x230] sm:$0xff]
  %v106 = vld [vmem:[%s1 + $0x238] sm:$0xff]
  %v107 = vld [vmem:[%s1 + $0x240] sm:$0xff]
  %v108 = vld [vmem:[%s1 + $0x248] sm:$0xff]
  %v109 = vld [vmem:[%s1 + $0x250] sm:$0xff]
  %v110 = vld [vmem:[%s1 + $0x258] sm:$0xff]
  %v111 = vld [vmem:[%s1 + $0x260] sm:$0xff]
  %v112 = vld [vmem:[%s1 + $0x268] sm:$0xff]
  %v113 = vld [vmem:[%s1 + $0x270] sm:$0xff]
  %v114 = vld [vmem:[%s1 + $0x278] sm:$0xff]
  %v115 = vld [vmem:[%s1 + $0x280] sm:$0xff]
  %v116 = vld [vmem:[%s1 + $0x288] sm:$0xff]
  %v117 = vld [vmem:[%s1 + $0x290] sm:$0xff]
  %v118 = vld [vmem:[%s1 + $0x298] sm:$0xff]
  %v119 = vld [vmem:[%s1 + $0x2a0] sm:$0xff]
  %v120 = vld [vmem:[%s1 + $0x2a8] sm:$0xff]
  %v121 = vld [vmem:[%s1 + $0x2b0] sm:$0xff]
  %v122 = vld [vmem:[%s1 + $0x2b8] sm:$0xff]
  %v123 = vld [vmem:[%s1 + $0x2c0] sm:$0xff]
  %v124 = vld [vmem:[%s1 + $0x2c8] sm:$0xff]
  %v125 = vld [vmem:[%s1 + $0x2d0] sm:$0xff]
  %v126 = vld [vmem:[%s1 + $0x2d8] sm:$0xff]
  %v127 = vld [vmem:[%s1 + $0x2e0] sm:$0xff]
  %v128 = vld [vmem:[%s1 + $0x2e8] sm:$0xff]
  %v129 = vld [vmem:[%s1 + $0x2f0] sm:$0xff]
  %v130 = vld [vmem:[%s1 + $0x2f8] sm:$0xff]
  %v131 = vld [vmem:[%s1 + $0x300] sm:$0xff]
  %v132 = vld [vmem:[%s1 + $0x308] sm:$0xff]
  %v133 = vld [vmem:[%s1 + $0x310] sm:$0xff]
  %v134 = vld [vmem:[%s1 + $0x318] sm:$0xff]
  %v135 = vld [vmem:[%s1 + $0x320] sm:$0xff]
  %v136 = vld [vmem:[%s1 + $0x328] sm:$0xff]
  %v137 = vld [vmem:[%s1 + $0x330] sm:$0xff]
  %v138 = vld [vmem:[%s1 + $0x338] sm:$0xff]
  %v139 = vld [vmem:[%s1 + $0x340] sm:$0xff]
  %v140 = vld [vmem:[%s1 + $0x348] sm:$0xff]
  %v141 = vld [vmem:[%s1 + $0x350] sm:$0xff]
  %v142 = vld [vmem:[%s1 + $0x358] sm:$0xff]
  %v143 = vld [vmem:[%s1 + $0x360] sm:$0xff]
  %v144 = vld [vmem:[%s1 + $0x368] sm:$0xff]
  %v145 = vld [vmem:[%s1 + $0x370] sm:$0xff]
  %v146 = vld [vmem:[%s1 + $0x378] sm:$0xff]
  %v147 = vld [vmem:[%s1 + $0x380] sm:$0xff]
  %v148 = vld [vmem:[%s1 + $0x388] sm:$0xff]
  %v149 = vld [vmem:[%s1 + $0x390] sm:$0xff]
  %v150 = vld [vmem:[%s1 + $0x398] sm:$0xff]
  %v151 = vld [vmem:[%s1 + $0x3a0] sm:$0xff]
  %v152 = vld [vmem:[%s1 + $0x3a8] sm:$0xff]
  %v153 = vld [vmem:[%s1 + $0x3b0] sm:$0xff]
  %v154 = vld [vmem:[%s1 + $0x3b8] sm:$0xff]
  %v155 = vld [vmem:[%s1 + $0x3c0] sm:$0xff]
  %v156 = vld [vmem:[%s1 + $0x3c8] sm:$0xff]
  %v157 = vld [vmem:[%s1 + $0x3d0] sm:$0xff]
  %v158 = vld [vmem:[%s1 + $0x3d8] sm:$0xff]
  %v159 = vld [vmem:[%s1 + $0x3e0] sm:$0xff]
  %v160 = vld [vmem:[%s1 + $0x3e8] sm:$0xff]
  %v161 = vld [vmem:[%s1 + $0x3f0] sm:$0xff]
  %v162 = vld [vmem:[%s1 + $0x3f8] sm:$0xff]
  %v163 = vld [vmem:[%s1 + $0x400] sm:$0xff]
  %v164 = vld [vmem:[%s1 + $0x408] sm:$0xff]
  %v165 = vld [vmem:[%s1 + $0x410] sm:$0xff]
  %v166 = vld [vmem:[%s1 + $0x418] sm:$0xff]
  %v167 = vld [vmem:[%s1 + $0x420] sm:$0xff]
  %v168 = vld [vmem:[%s1 + $0x428] sm:$0xff]
  %v169 = vld [vmem:[%s1 + $0x430] sm:$0xff]
  %v170 = vld [vmem:[%s1 + $0x438] sm:$0xff]
  %v171 = vld [vmem:[%s1 + $0x440] sm:$0xff]
  %v172 = vld [vmem:[%s1 + $0x448] sm:$0xff]
  %v173 = vld [vmem:[%s1 + $0x450] sm:$0xff]
  %v174 = vld [vmem:[%s1 + $0x458] sm:$0xff]
  %v175 = vld [vmem:[%s1 + $0x460] sm:$0xff]
  %v176 = vld [vmem:[%s1 + $0x468] sm:$0xff]
  %v177 = vld [vmem:[%s1 + $0x470] sm:$0xff]
  %v178 = vld [vmem:[%s1 + $0x478] sm:$0xff]
  %v179 = vld [vmem:[%s1 + $0x480] sm:$0xff]
  %v180 = vld [vmem:[%s1 + $0x488] sm:$0xff]
  %v181 = vld [vmem:[%s1 + $0x490] sm:$0xff]
  %v182 = vld [vmem:[%s1 + $0x498] sm:$0xff]
  %v183 = vld [vmem:[%s1 + $0x4a0] sm:$0xff]
  %v184 = vld [vmem:[%s1 + $0x4a8] sm:$0xff]
  %v185 = vld [vmem:[%s1 + $0x4b0] sm:$0xff]
  %v186 = vld [vmem:[%s1 + $0x4b8] sm:$0xff]
  %v187 = vld [vmem:[%s1 + $0x4c0] sm:$0xff]
  %v188 = vld [vmem:[%s1 + $0x4c8] sm:$0xff]
  %v189 = vld [vmem:[%s1 + $0x4d0] sm:$0xff]
  %v190 = vld [vmem:[%s1 + $0x4d8] sm:$0xff]
  %v191 = vld [vmem:[%s1 + $0x4e0] sm:$0xff]
  %v192 = vld [vmem:[%s1 + $0x4e8] sm:$0xff]
  %v193 = vld [vmem:[%s1 + $0x4f0] sm:$0xff]
  %v194 = vld [vmem:[%s1 + $0x4f8] sm:$0xff]
  %v195 = vld [vmem:[%s1 + $0x500] sm:$0xff]
  %v196 = vld [vmem:[%s1 + $0x508] sm:$0xff]
  %v197 = vld [vmem:[%s1 + $0x510] sm:$0xff]
  %v198 = vld [vmem:[%s1 + $0x518] sm:$0xff]
  %v199 = vld [vmem:[%s1 + $0x520] sm:$0xff]
  %v200 = vld [vmem:[%s1 + $0x528] sm:$0xff]
  %v201 = vld [vmem:[%s1 + $0x530] sm:$0xff]
  %v202 = vld [vmem:[%s1 + $0x538] sm:$0xff]
  %v203 = vld [vmem:[%s1 + $0x540] sm:$0xff]
  %v204 = vld [vmem:[%s1 + $0x548] sm:$0xff]
  %v205 = vld [vmem:[%s1 + $0x550] sm:$0xff]
  %v206 = vld [vmem:[%s1 + $0x558] sm:$0xff]
  %v207 = vld [vmem:[%s1 + $0x560] sm:$0xff]
  %v208 = vld [vmem:[%s1 + $0x568] sm:$0xff]
  %v209 = vld [vmem:[%s1 + $0x570] sm:$0xff]
  %v210 = vld [vmem:[%s1 + $0x578] sm:$0xff]
  %v211 = vld [vmem:[%s1 + $0x580] sm:$0xff]
  %v212 = vld [vmem:[%s1 + $0x588] sm:$0xff]
  %v213 = vld [vmem:[%s1 + $0x590] sm:$0xff]
  %v214 = vld [vmem:[%s1 + $0x598] sm:$0xff]
  %v215 = vld [vmem:[%s1 + $0x5a0] sm:$0xff]
  %v216 = vld [vmem:[%s1 + $0x5a8] sm:$0xff]
  %v217 = vld [vmem:[%s1 + $0x5b0] sm:$0xff]
  %v218 = vld [vmem:[%s1 + $0x5b8] sm:$0xff]
  %v219 = vld [vmem:[%s1 + $0x5c0] sm:$0xff]
  %v220 = vld [vmem:[%s1 + $0x5c8] sm:$0xff]
  %v221 = vld [vmem:[%s1 + $0x5d0] sm:$0xff]
  %v222 = vld [vmem:[%s1 + $0x5d8] sm:$0xff]
  %v223 = vld [vmem:[%s1 + $0x5e0] sm:$0xff]
  %v224 = vld [vmem:[%s1 + $0x5e8] sm:$0xff]
  %v225 = vld [vmem:[%s1 + $0x5f0] sm:$0xff]
  %v226 = vld [vmem:[%s1 + $0x5f8] sm:$0xff]
  %v227 = vld [vmem:[%s1 + $0x600] sm:$0xff]
  %v228 = vld [vmem:[%s1 + $0x608] sm:$0xff]
  %v229 = vld [vmem:[%s1 + $0x610] sm:$0xff]
  %v230 = vld [vmem:[%s1 + $0x618] sm:$0xff]
  %v231 = vld [vmem:[%s1 + $0x620] sm:$0xff]
  %v232 = vld [vmem:[%s1 + $0x628] sm:$0xff]
  %v233 = vld [vmem:[%s1 + $0x630] sm:$0xff]
  %v234 = vld [vmem:[%s1 + $0x638] sm:$0xff]
  %v235 = vld [vmem:[%s1 + $0x640] sm:$0xff]
  %v236 = vld [vmem:[%s1 + $0x648] sm:$0xff]
  %v237 = vld [vmem:[%s1 + $0x650] sm:$0xff]
  %v238 = vld [vmem:[%s1 + $0x658] sm:$0xff]
  %v239 = vld [vmem:[%s1 + $0x660] sm:$0xff]
  %v240 = vld [vmem:[%s1 + $0x668] sm:$0xff]
  %v241 = vld [vmem:[%s1 + $0x670] sm:$0xff]
  %v242 = vld [vmem:[%s1 + $0x678] sm:$0xff]
  %v243 = vld [vmem:[%s1 + $0x680] sm:$0xff]
  %v244 = vld [vmem:[%s1 + $0x688] sm:$0xff]
  %v245 = vld [vmem:[%s1 + $0x690] sm:$0xff]
  %v246 = vld [vmem:[%s1 + $0x698] sm:$0xff]
  %v247 = vld [vmem:[%s1 + $0x6a0] sm:$0xff]
  %v248 = vld [vmem:[%s1 + $0x6a8] sm:$0xff]
  %v249 = vld [vmem:[%s1 + $0x6b0] sm:$0xff]
  %v250 = vld [vmem:[%s1 + $0x6b8] sm:$0xff]
  %v251 = vld [vmem:[%s1 + $0x6c0] sm:$0xff]
  %v252 = vld [vmem:[%s1 + $0x6c8] sm:$0xff]
  %v253 = vld [vmem:[%s1 + $0x6d0] sm:$0xff]
  %v254 = vld [vmem:[%s1 + $0x6d8] sm:$0xff]
  %v255 = vld [vmem:[%s1 + $0x6e0] sm:$0xff]
  %v256 = vld [vmem:[%s1 + $0x6e8] sm:$0xff]
  %v257 = vld [vmem:[%s1 + $0x6f0] sm:$0xff]
  %v258 = vld [vmem:[%s1 + $0x6f8] sm:$0xff]
  %v259 = vld [vmem:[%s1 + $0x700] sm:$0xff]
  %v260 = vld [vmem:[%s1 + $0x708] sm:$0xff]
  %v261 = vld [vmem:[%s1 + $0x710] sm:$0xff]
  %v262 = vld [vmem:[%s1 + $0x718] sm:$0xff]
  %v263 = vld [vmem:[%s1 + $0x720] sm:$0xff]
  %v264 = vld [vmem:[%s1 + $0x728] sm:$0xff]
  %v265 = vld [vmem:[%s1 + $0x730] sm:$0xff]
  %v266 = vld [vmem:[%s1 + $0x738] sm:$0xff]
  %v267 = vld [vmem:[%s1 + $0x740] sm:$0xff]
  %v268 = vld [vmem:[%s1 + $0x748] sm:$0xff]
  %v269 = vld [vmem:[%s1 + $0x750] sm:$0xff]
  %v270 = vld [vmem:[%s1 + $0x758] sm:$0xff]
  %v271 = vld [vmem:[%s1 + $0x760] sm:$0xff]
  %v272 = vld [vmem:[%s1 + $0x768] sm:$0xff]
  %v273 = vld [vmem:[%s1 + $0x770] sm:$0xff]
  %v274 = vld [vmem:[%s1 + $0x778] sm:$0xff]
  %v275 = vld [vmem:[%s1 + $0x780] sm:$0xff]
  %v276 = vld [vmem:[%s1 + $0x788] sm:$0xff]
  %v277 = vld [vmem:[%s1 + $0x790] sm:$0xff]
  %v278 = vld [vmem:[%s1 + $0x798] sm:$0xff]
  %v279 = vld [vmem:[%s1 + $0x7a0] sm:$0xff]
  %v280 = vld [vmem:[%s1 + $0x7a8] sm:$0xff]
  %v281 = vld [vmem:[%s1 + $0x7b0] sm:$0xff]
  %v282 = vld [vmem:[%s1 + $0x7b8] sm:$0xff]
  %v283 = vld [vmem:[%s1 + $0x7c0] sm:$0xff]
  %v284 = vld [vmem:[%s1 + $0x7c8] sm:$0xff]
  %v285 = vld [vmem:[%s1 + $0x7d0] sm:$0xff]
  %v286 = vld [vmem:[%s1 + $0x7d8] sm:$0xff]
  %v287 = vld [vmem:[%s1 + $0x7e0] sm:$0xff]
  %v288 = vld [vmem:[%s1 + $0x7e8] sm:$0xff]
  %v289 = vld [vmem:[%s1 + $0x7f0] sm:$0xff]
  %v290 = vld [vmem:[%s1 + $0x7f8] sm:$0xff]
  %v291 = vld [vmem:[%s1 + $0x800] sm:$0xff]
  %v292 = vld [vmem:[%s1 + $0x808] sm:$0xff]
  %v293 = vld [vmem:[%s1 + $0x810] sm:$0xff]
  %v294 = vld [vmem:[%s1 + $0x818] sm:$0xff]
  %v295 = vld [vmem:[%s1 + $0x820] sm:$0xff]
  %v296 = vld [vmem:[%s1 + $0x828] sm:$0xff]
  %v297 = vld [vmem:[%s1 + $0x830] sm:$0xff]
  %v298 = vld [vmem:[%s1 + $0x838] sm:$0xff]
  %v299 = vld [vmem:[%s1 + $0x840] sm:$0xff]
  %v300 = vld [vmem:[%s1 + $0x848] sm:$0xff]
  %v301 = vld [vmem:[%s1 + $0x850] sm:$0xff]
  %v302 = vld [vmem:[%s1 + $0x858] sm:$0xff]
  %v303 = vld [vmem:[%s1 + $0x860] sm:$0xff]
  %v304 = vld [vmem:[%s1 + $0x868] sm:$0xff]
  %v305 = vld [vmem:[%s1 + $0x870] sm:$0xff]
  %v306 = vld [vmem:[%s1 + $0x878] sm:$0xff]
  %v307 = vld [vmem:[%s1 + $0x880] sm:$0xff]
  %v308 = vld [vmem:[%s1 + $0x888] sm:$0xff]
  %v309 = vld [vmem:[%s1 + $0x890] sm:$0xff]
  %v310 = vld [vmem:[%s1 + $0x898] sm:$0xff]
  %v311 = vld [vmem:[%s1 + $0x8a0] sm:$0xff]
  %v312 = vld [vmem:[%s1 + $0x8a8] sm:$0xff]
  %v313 = vld [vmem:[%s1 + $0x8b0] sm:$0xff]
  %v314 = vld [vmem:[%s1 + $0x8b8] sm:$0xff]
  %v315 = vld [vmem:[%s1 + $0x8c0] sm:$0xff]
  %v316 = vld [vmem:[%s1 + $0x8c8] sm:$0xff]
  %v317 = vld [vmem:[%s1 + $0x8d0] sm:$0xff]
  %v318 = vld [vmem:[%s1 + $0x8d8] sm:$0xff]
  %v319 = vld [vmem:[%s1 + $0x8e0] sm:$0xff]
  %v320 = vld [vmem:[%s1 + $0x8e8] sm:$0xff]
  %v321 = vld [vmem:[%s1 + $0x8f0] sm:$0xff]
  %v322 = vld [vmem:[%s1 + $0x8f8] sm:$0xff]
  %v323 = vld [vmem:[%s1 + $0x900] sm:$0xff]
  %v324 = vld [vmem:[%s1 + $0x908] sm:$0xff]
  %v325 = vld [vmem:[%s1 + $0x910] sm:$0xff]
  %v326 = vld [vmem:[%s1 + $0x918] sm:$0xff]
  %v327 = vld [vmem:[%s1 + $0x920] sm:$0xff]
  %v328 = vld [vmem:[%s1 + $0x928] sm:$0xff]
  %v329 = vld [vmem:[%s1 + $0x930] sm:$0xff]
  %v330 = vld [vmem:[%s1 + $0x938] sm:$0xff]
  %v331 = vld [vmem:[%s1 + $0x940] sm:$0xff]
  %v332 = vld [vmem:[%s1 + $0x948] sm:$0xff]
  %v333 = vld [vmem:[%s1 + $0x950] sm:$0xff]
  %v334 = vld [vmem:[%s1 + $0x958] sm:$0xff]
  %v335 = vld [vmem:[%s1 + $0x960] sm:$0xff]
  %v336 = vld [vmem:[%s1 + $0x968] sm:$0xff]
  %v337 = vld [vmem:[%s1 + $0x970] sm:$0xff]
  %v338 = vld [vmem:[%s1 + $0x978] sm:$0xff]
  %v339 = vld [vmem:[%s1 + $0x980] sm:$0xff]
  %v340 = vld [vmem:[%s1 + $0x988] sm:$0xff]
  %v341 = vld [vmem:[%s1 + $0x990] sm:$0xff]
  %v342 = vld [vmem:[%s1 + $0x998] sm:$0xff]
  %v343 = vld [vmem:[%s1 + $0x9a0] sm:$0xff]
  %v344 = vld [vmem:[%s1 + $0x9a8] sm:$0xff]
  %v345 = vld [vmem:[%s1 + $0x9b0] sm:$0xff]
  %v346 = vld [vmem:[%s1 + $0x9b8] sm:$0xff]
  %v347 = vld [vmem:[%s1 + $0x9c0] sm:$0xff]
  %v348 = vld [vmem:[%s1 + $0x9c8] sm:$0xff]
  %v349 = vld [vmem:[%s1 + $0x9d0] sm:$0xff]
  %v350 = vld [vmem:[%s1 + $0x9d8] sm:$0xff]
  %v351 = vld [vmem:[%s1 + $0x9e0] sm:$0xff]
  %v352 = vld [vmem:[%s1 + $0x9e8] sm:$0xff]
  %v353 = vld [vmem:[%s1 + $0x9f0] sm:$0xff]
  %v354 = vld [vmem:[%s1 + $0x9f8] sm:$0xff]
  %v355 = vld [vmem:[%s1 + $0xa00] sm:$0xff]
  %v356 = vld [vmem:[%s1 + $0xa08] sm:$0xff]
  %v357 = vld [vmem:[%s1 + $0xa10] sm:$0xff]
  %v358 = vld [vmem:[%s1 + $0xa18] sm:$0xff]
  %v359 = vld [vmem:[%s1 + $0xa20] sm:$0xff]
  %v360 = vld [vmem:[%s1 + $0xa28] sm:$0xff]
  %v361 = vld [vmem:[%s1 + $0xa30] sm:$0xff]
  %v362 = vld [vmem:[%s1 + $0xa38] sm:$0xff]
  %v363 = vld [vmem:[%s1 + $0xa40] sm:$0xff]
  %v364 = vld [vmem:[%s1 + $0xa48] sm:$0xff]
  %v365 = vld [vmem:[%s1 + $0xa50] sm:$0xff]
  %v366 = vld [vmem:[%s1 + $0xa58] sm:$0xff]
  %v367 = vld [vmem:[%s1 + $0xa60] sm:$0xff]
  %v368 = vld [vmem:[%s1 + $0xa68] sm:$0xff]
  %v369 = vld [vmem:[%s1 + $0xa70] sm:$0xff]
  %v370 = vld [vmem:[%s1 + $0xa78] sm:$0xff]
  %v371 = vld [vmem:[%s1 + $0xa80] sm:$0xff]
  %v372 = vld [vmem:[%s1 + $0xa88] sm:$0xff]
  %v373 = vld [vmem:[%s1 + $0xa90] sm:$0xff]
  %v374 = vld [vmem:[%s1 + $0xa98] sm:$0xff]
  %v375 = vld [vmem:[%s1 + $0xaa0] sm:$0xff]
  %v376 = vld [vmem:[%s1 + $0xaa8] sm:$0xff]
  %v377 = vld [vmem:[%s1 + $0xab0] sm:$0xff]
  %v378 = vld [vmem:[%s1 + $0xab8] sm:$0xff]
  %v379 = vld [vmem:[%s1 + $0xac0] sm:$0xff]
  %v380 = vld [vmem:[%s1 + $0xac8] sm:$0xff]
  %v381 = vld [vmem:[%s1 + $0xad0] sm:$0xff]
  %v382 = vld [vmem:[%s1 + $0xad8] sm:$0xff]
  %v383 = vld [vmem:[%s1 + $0xae0] sm:$0xff]
  %v384 = vld [vmem:[%s1 + $0xae8] sm:$0xff]
  %v385 = vld [vmem:[%s1 + $0xaf0] sm:$0xff]
  %v386 = vld [vmem:[%s1 + $0xaf8] sm:$0xff]
  %v387 = vld [vmem:[%s1 + $0xb00] sm:$0xff]
  %v388 = vld [vmem:[%s1 + $0xb08] sm:$0xff]
  %v389 = vld [vmem:[%s1 + $0xb10] sm:$0xff]
  %v390 = vld [vmem:[%s1 + $0xb18] sm:$0xff]
  %v391 = vld [vmem:[%s1 + $0xb20] sm:$0xff]
  %v392 = vld [vmem:[%s1 + $0xb28] sm:$0xff]
  %v393 = vld [vmem:[%s1 + $0xb30] sm:$0xff]
  %v394 = vld [vmem:[%s1 + $0xb38] sm:$0xff]
  %v395 = vld [vmem:[%s1 + $0xb40] sm:$0xff]
  %v396 = vld [vmem:[%s1 + $0xb48] sm:$0xff]
  %v397 = vld [vmem:[%s1 + $0xb50] sm:$0xff]
  %v398 = vld [vmem:[%s1 + $0xb58] sm:$0xff]
  %v399 = vld [vmem:[%s1 + $0xb60] sm:$0xff]
  %v400 = vld [vmem:[%s1 + $0xb68] sm:$0xff]
  %v401 = vld [vmem:[%s1 + $0xb70] sm:$0xff]
  %v402 = vld [vmem:[%s1 + $0xb78] sm:$0xff]
  %v403 = vld [vmem:[%s1 + $0xb80] sm:$0xff]
  %v404 = vld [vmem:[%s1 + $0xb88] sm:$0xff]
  %v405 = vld [vmem:[%s1 + $0xb90] sm:$0xff]
  %v406 = vld [vmem:[%s1 + $0xb98] sm:$0xff]
  %v407 = vld [vmem:[%s1 + $0xba0] sm:$0xff]
  %v408 = vld [vmem:[%s1 + $0xba8] sm:$0xff]
  %v409 = vld [vmem:[%s1 + $0xbb0] sm:$0xff]
  %v410 = vld [vmem:[%s1 + $0xbb8] sm:$0xff]
  %v411 = vld [vmem:[%s1 + $0xbc0] sm:$0xff]
  %v412 = vld [vmem:[%s1 + $0xbc8] sm:$0xff]
  %v413 = vld [vmem:[%s1 + $0xbd0] sm:$0xff]
  %v414 = vld [vmem:[%s1 + $0xbd8] sm:$0xff]
  %v415 = vld [vmem:[%s1 + $0xbe0] sm:$0xff]
  %v416 = vld [vmem:[%s1 + $0xbe8] sm:$0xff]
  %v417 = vld [vmem:[%s1 + $0xbf0] sm:$0xff]
  %v418 = vld [vmem:[%s1 + $0xbf8] sm:$0xff]
  %v419 = vld [vmem:[%s1 + $0xc00] sm:$0xff]
  %v420 = vld [vmem:[%s1 + $0xc08] sm:$0xff]
  %v421 = vld [vmem:[%s1 + $0xc10] sm:$0xff]
  %v422 = vld [vmem:[%s1 + $0xc18] sm:$0xff]
  %v423 = vld [vmem:[%s1 + $0xc20] sm:$0xff]
  %v424 = vld [vmem:[%s1 + $0xc28] sm:$0xff]
  %v425 = vld [vmem:[%s1 + $0xc30] sm:$0xff]
  %v426 = vld [vmem:[%s1 + $0xc38] sm:$0xff]
  %v427 = vld [vmem:[%s1 + $0xc40] sm:$0xff]
  %v428 = vld [vmem:[%s1 + $0xc48] sm:$0xff]
  %v429 = vld [vmem:[%s1 + $0xc50] sm:$0xff]
  %v430 = vld [vmem:[%s1 + $0xc58] sm:$0xff]
  %v431 = vld [vmem:[%s1 + $0xc60] sm:$0xff]
  %v432 = vld [vmem:[%s1 + $0xc68] sm:$0xff]
  %v433 = vld [vmem:[%s1 + $0xc70] sm:$0xff]
  %v434 = vld [vmem:[%s1 + $0xc78] sm:$0xff]
  %v435 = vld [vmem:[%s1 + $0xc80] sm:$0xff]
  %v436 = vld [vmem:[%s1 + $0xc88] sm:$0xff]
  %v437 = vld [vmem:[%s1 + $0xc90] sm:$0xff]
  %v438 = vld [vmem:[%s1 + $0xc98] sm:$0xff]
  %v439 = vld [vmem:[%s1 + $0xca0] sm:$0xff]
  %v440 = vld [vmem:[%s1 + $0xca8] sm:$0xff]
  %v441 = vld [vmem:[%s1 + $0xcb0] sm:$0xff]
  %v442 = vld [vmem:[%s1 + $0xcb8] sm:$0xff]
  %v443 = vld [vmem:[%s1 + $0xcc0] sm:$0xff]
  %v444 = vld [vmem:[%s1 + $0xcc8] sm:$0xff]
  %v445 = vld [vmem:[%s1 + $0xcd0] sm:$0xff]
  %v446 = vld [vmem:[%s1 + $0xcd8] sm:$0xff]
  %v447 = vld [vmem:[%s1 + $0xce0] sm:$0xff]
  %v448 = vld [vmem:[%s1 + $0xce8] sm:$0xff]
  %v449 = vld [vmem:[%s1 + $0xcf0] sm:$0xff]
  %v450 = vld [vmem:[%s1 + $0xcf8] sm:$0xff]
  %v451 = vld [vmem:[%s1 + $0xd00] sm:$0xff]
  %v452 = vld [vmem:[%s1 + $0xd08] sm:$0xff]
  %v453 = vld [vmem:[%s1 + $0xd10] sm:$0xff]
  %v454 = vld [vmem:[%s1 + $0xd18] sm:$0xff]
  %v455 = vld [vmem:[%s1 + $0xd20] sm:$0xff]
  %v456 = vld [vmem:[%s1 + $0xd28] sm:$0xff]
  %v457 = vld [vmem:[%s1 + $0xd30] sm:$0xff]
  %v458 = vld [vmem:[%s1 + $0xd38] sm:$0xff]
  %v459 = vld [vmem:[%s1 + $0xd40] sm:$0xff]
  %v460 = vld [vmem:[%s1 + $0xd48] sm:$0xff]
  %v461 = vld [vmem:[%s1 + $0xd50] sm:$0xff]
  %v462 = vld [vmem:[%s1 + $0xd58] sm:$0xff]
  %v463 = vld [vmem:[%s1 + $0xd60] sm:$0xff]
  %v464 = vld [vmem:[%s1 + $0xd68] sm:$0xff]
  %v465 = vld [vmem:[%s1 + $0xd70] sm:$0xff]
  %v466 = vld [vmem:[%s1 + $0xd78] sm:$0xff]
  %v467 = vld [vmem:[%s1 + $0xd80] sm:$0xff]
  %v468 = vld [vmem:[%s1 + $0xd88] sm:$0xff]
  %v469 = vld [vmem:[%s1 + $0xd90] sm:$0xff]
  %v470 = vld [vmem:[%s1 + $0xd98] sm:$0xff]
  %v471 = vld [vmem:[%s1 + $0xda0] sm:$0xff]
  %v472 = vld [vmem:[%s1 + $0xda8] sm:$0xff]
  %v473 = vld [vmem:[%s1 + $0xdb0] sm:$0xff]
  %v474 = vld [vmem:[%s1 + $0xdb8] sm:$0xff]
  %v475 = vld [vmem:[%s1 + $0xdc0] sm:$0xff]
  %v476 = vld [vmem:[%s1 + $0xdc8] sm:$0xff]
  %v477 = vld [vmem:[%s1 + $0xdd0] sm:$0xff]
  %v478 = vld [vmem:[%s1 + $0xdd8] sm:$0xff]
  %v479 = vld [vmem:[%s1 + $0xde0] sm:$0xff]
  %v480 = vld [vmem:[%s1 + $0xde8] sm:$0xff]
  %v481 = vld [vmem:[%s1 + $0xdf0] sm:$0xff]
  %v482 = vld [vmem:[%s1 + $0xdf8] sm:$0xff]
  %v483 = vld [vmem:[%s1 + $0xe00] sm:$0xff]
  %v484 = vld [vmem:[%s1 + $0xe08] sm:$0xff]
  %v485 = vld [vmem:[%s1 + $0xe10] sm:$0xff]
  %v486 = vld [vmem:[%s1 + $0xe18] sm:$0xff]
  %v487 = vld [vmem:[%s1 + $0xe20] sm:$0xff]
  %v488 = vld [vmem:[%s1 + $0xe28] sm:$0xff]
  %v489 = vld [vmem:[%s1 + $0xe30] sm:$0xff]
  %v490 = vld [vmem:[%s1 + $0xe38] sm:$0xff]
  %v491 = vld [vmem:[%s1 + $0xe40] sm:$0xff]
  %v492 = vld [vmem:[%s1 + $0xe48] sm:$0xff]
  %v493 = vld [vmem:[%s1 + $0xe50] sm:$0xff]
  %v494 = vld [vmem:[%s1 + $0xe58] sm:$0xff]
  %v495 = vld [vmem:[%s1 + $0xe60] sm:$0xff]
  %v496 = vld [vmem:[%s1 + $0xe68] sm:$0xff]
  %v497 = vld [vmem:[%s1 + $0xe70] sm:$0xff]
  %v498 = vld [vmem:[%s1 + $0xe78] sm:$0xff]
  %v499 = vld [vmem:[%s1 + $0xe80] sm:$0xff]
  %v500 = vld [vmem:[%s1 + $0xe88] sm:$0xff]
  %v501 = vld [vmem:[%s1 + $0xe90] sm:$0xff]
  %v502 = vld [vmem:[%s1 + $0xe98] sm:$0xff]
  %v503 = vld [vmem:[%s1 + $0xea0] sm:$0xff]
  %v504 = vld [vmem:[%s1 + $0xea8] sm:$0xff]
  %v505 = vld [vmem:[%s1 + $0xeb0] sm:$0xff]
  %v506 = vld [vmem:[%s1 + $0xeb8] sm:$0xff]
  %v507 = vld [vmem:[%s1 + $0xec0] sm:$0xff]
  %v508 = vld [vmem:[%s1 + $0xec8] sm:$0xff]
  %v509 = vld [vmem:[%s1 + $0xed0] sm:$0xff]
  %v510 = vld [vmem:[%s1 + $0xed8] sm:$0xff]
  %v511 = vld [vmem:[%s1 + $0xee0] sm:$0xff]
  %v512 = vld [vmem:[%s1 + $0xee8] sm:$0xff]
  %v513 = vld [vmem:[%s1 + $0xef0] sm:$0xff]
  %v514 = vld [vmem:[%s1 + $0xef8] sm:$0xff]
  %v515 = vld [vmem:[%s1 + $0xf00] sm:$0xff]
  %v516 = vld [vmem:[%s1 + $0xf08] sm:$0xff]
  %v517 = vld [vmem:[%s1 + $0xf10] sm:$0xff]
  %v518 = vld [vmem:[%s1 + $0xf18] sm:$0xff]
  %v519 = vld [vmem:[%s1 + $0xf20] sm:$0xff]
  %v520 = vld [vmem:[%s1 + $0xf28] sm:$0xff]
  %v521 = vld [vmem:[%s1 + $0xf30] sm:$0xff]
  %v522 = vld [vmem:[%s1 + $0xf38] sm:$0xff]
  %v523 = vld [vmem:[%s1 + $0xf40] sm:$0xff]
  %v524 = vld [vmem:[%s1 + $0xf48] sm:$0xff]
  %v525 = vld [vmem:[%s1 + $0xf50] sm:$0xff]
  %v526 = vld [vmem:[%s1 + $0xf58] sm:$0xff]
  %v527 = vld [vmem:[%s1 + $0xf60] sm:$0xff]
  %v528 = vld [vmem:[%s1 + $0xf68] sm:$0xff]
  %v529 = vld [vmem:[%s1 + $0xf70] sm:$0xff]
  %v530 = vld [vmem:[%s1 + $0xf78] sm:$0xff]
  %v531 = vld [vmem:[%s1 + $0xf80] sm:$0xff]
  %v532 = vld [vmem:[%s1 + $0xf88] sm:$0xff]
  %v533 = vld [vmem:[%s1 + $0xf90] sm:$0xff]
  %v534 = vld [vmem:[%s1 + $0xf98] sm:$0xff]
  %v535 = vld [vmem:[%s1 + $0xfa0] sm:$0xff]
  %v536 = vld [vmem:[%s1 + $0xfa8] sm:$0xff]
  %v537 = vld [vmem:[%s1 + $0xfb0] sm:$0xff]
  %v538 = vld [vmem:[%s1 + $0xfb8] sm:$0xff]
  %v539 = vld [vmem:[%s1 + $0xfc0] sm:$0xff]
  %v540 = vld [vmem:[%s1 + $0xfc8] sm:$0xff]
  %v541 = vld [vmem:[%s1 + $0xfd0] sm:$0xff]
  %v542 = vld [vmem:[%s1 + $0xfd8] sm:$0xff]
  %v543 = vld [vmem:[%s1 + $0xfe0] sm:$0xff]
  %v544 = vld [vmem:[%s1 + $0xfe8] sm:$0xff]
  %v545 = vld [vmem:[%s1 + $0xff0] sm:$0xff]
  %v546 = vld [vmem:[%s1 + $0xff8] sm:$0xff]
  %v547 = vld [vmem:[%s1 + $0x1000] sm:$0xff]
  %v548 = vld [vmem:[%s1 + $0x1008] sm:$0xff]
  %v549 = vld [vmem:[%s1 + $0x1010] sm:$0xff]
  %v550 = vld [vmem:[%s1 + $0x1018] sm:$0xff]
  %v551 = vld [vmem:[%s1 + $0x1020] sm:$0xff]
  %v552 = vld [vmem:[%s1 + $0x1028] sm:$0xff]
  %v553 = vld [vmem:[%s1 + $0x1030] sm:$0xff]
  %v554 = vld [vmem:[%s1 + $0x1038] sm:$0xff]
  %v555 = vld [vmem:[%s1 + $0x1040] sm:$0xff]
  %v556 = vld [vmem:[%s1 + $0x1048] sm:$0xff]
  %v557 = vld [vmem:[%s1 + $0x1050] sm:$0xff]
  %v558 = vld [vmem:[%s1 + $0x1058] sm:$0xff]
  %v559 = vld [vmem:[%s1 + $0x1060] sm:$0xff]
  %v560 = vld [vmem:[%s1 + $0x1068] sm:$0xff]
  %v561 = vld [vmem:[%s1 + $0x1070] sm:$0xff]
  %v562 = vld [vmem:[%s1 + $0x1078] sm:$0xff]
  %v563 = vld [vmem:[%s1 + $0x1080] sm:$0xff]
  %v564 = vld [vmem:[%s1 + $0x1088] sm:$0xff]
  %v565 = vld [vmem:[%s1 + $0x1090] sm:$0xff]
  %v566 = vld [vmem:[%s1 + $0x1098] sm:$0xff]
  %v567 = vld [vmem:[%s1 + $0x10a0] sm:$0xff]
  %v568 = vld [vmem:[%s1 + $0x10a8] sm:$0xff]
  %v569 = vld [vmem:[%s1 + $0x10b0] sm:$0xff]
  %v570 = vld [vmem:[%s1 + $0x10b8] sm:$0xff]
  %v571 = vld [vmem:[%s1 + $0x10c0] sm:$0xff]
  %v572 = vld [vmem:[%s1 + $0x10c8] sm:$0xff]
  %v573 = vld [vmem:[%s1 + $0x10d0] sm:$0xff]
  %v574 = vld [vmem:[%s1 + $0x10d8] sm:$0xff]
  %v575 = vld [vmem:[%s1 + $0x10e0] sm:$0xff]
  %v576 = vld [vmem:[%s1 + $0x10e8] sm:$0xff]
  %v577 = vld [vmem:[%s1 + $0x10f0] sm:$0xff]
  %v578 = vld [vmem:[%s1 + $0x10f8] sm:$0xff]
  %v579 = vld [vmem:[%s1 + $0x1100] sm:$0xff]
  %v580 = vld [vmem:[%s1 + $0x1108] sm:$0xff]
  %v581 = vld [vmem:[%s1 + $0x1110] sm:$0xff]
  %v582 = vld [vmem:[%s1 + $0x1118] sm:$0xff]
  %v583 = vld [vmem:[%s1 + $0x1120] sm:$0xff]
  %v584 = vld [vmem:[%s1 + $0x1128] sm:$0xff]
  %v585 = vld [vmem:[%s1 + $0x1130] sm:$0xff]
  %v586 = vld [vmem:[%s1 + $0x1138] sm:$0xff]
  %v587 = vld [vmem:[%s1 + $0x1140] sm:$0xff]
  %v588 = vld [vmem:[%s1 + $0x1148] sm:$0xff]
  %v589 = vld [vmem:[%s1 + $0x1150] sm:$0xff]
  %v590 = vld [vmem:[%s1 + $0x1158] sm:$0xff]
  %v591 = vld [vmem:[%s1 + $0x1160] sm:$0xff]
  %v592 = vld [vmem:[%s1 + $0x1168] sm:$0xff]
  %v593 = vld [vmem:[%s1 + $0x1170] sm:$0xff]
  %v594 = vld [vmem:[%s1 + $0x1178] sm:$0xff]
  %v595 = vld [vmem:[%s1 + $0x1180] sm:$0xff]
  %v596 = vld [vmem:[%s1 + $0x1188] sm:$0xff]
  %v597 = vld [vmem:[%s1 + $0x1190] sm:$0xff]
  %v598 = vld [vmem:[%s1 + $0x1198] sm:$0xff]
  %v599 = vld [vmem:[%s1 + $0x11a0] sm:$0xff]
  %v600 = vld [vmem:[%s1 + $0x11a8] sm:$0xff]
  %v601 = vld [vmem:[%s1 + $0x11b0] sm:$0xff]
  %v602 = vld [vmem:[%s1 + $0x11b8] sm:$0xff]
  %v603 = vld [vmem:[%s1 + $0x11c0] sm:$0xff]
  %v604 = vld [vmem:[%s1 + $0x11c8] sm:$0xff]
  %v605 = vld [vmem:[%s1 + $0x11d0] sm:$0xff]
  %v606 = vld [vmem:[%s1 + $0x11d8] sm:$0xff]
  %v607 = vld [vmem:[%s1 + $0x11e0] sm:$0xff]
  %v608 = vld [vmem:[%s1 + $0x11e8] sm:$0xff]
  %v609 = vld [vmem:[%s1 + $0x11f0] sm:$0xff]
  %v610 = vld [vmem:[%s1 + $0x11f8] sm:$0xff]
  %v611 = vld [vmem:[%s1 + $0x1200] sm:$0xff]
  %v612 = vld [vmem:[%s1 + $0x1208] sm:$0xff]
  %v613 = vld [vmem:[%s1 + $0x1210] sm:$0xff]
  %v614 = vld [vmem:[%s1 + $0x1218] sm:$0xff]
  %v615 = vld [vmem:[%s1 + $0x1220] sm:$0xff]
  %v616 = vld [vmem:[%s1 + $0x1228] sm:$0xff]
  %v617 = vld [vmem:[%s1 + $0x1230] sm:$0xff]
  %v618 = vld [vmem:[%s1 + $0x1238] sm:$0xff]
  %v619 = vld [vmem:[%s1 + $0x1240] sm:$0xff]
  %v620 = vld [vmem:[%s1 + $0x1248] sm:$0xff]
  %v621 = vld [vmem:[%s1 + $0x1250] sm:$0xff]
  %v622 = vld [vmem:[%s1 + $0x1258] sm:$0xff]
  %v623 = vld [vmem:[%s1 + $0x1260] sm:$0xff]
  %v624 = vld [vmem:[%s1 + $0x1268] sm:$0xff]
  %v625 = vld [vmem:[%s1 + $0x1270] sm:$0xff]
  %v626 = vld [vmem:[%s1 + $0x1278] sm:$0xff]
  %v627 = vld [vmem:[%s1 + $0x1280] sm:$0xff]
  %v628 = vld [vmem:[%s1 + $0x1288] sm:$0xff]
  %v629 = vld [vmem:[%s1 + $0x1290] sm:$0xff]
  %v630 = vld [vmem:[%s1 + $0x1298] sm:$0xff]
  %v631 = vld [vmem:[%s1 + $0x12a0] sm:$0xff]
  %v632 = vld [vmem:[%s1 + $0x12a8] sm:$0xff]
  %v633 = vld [vmem:[%s1 + $0x12b0] sm:$0xff]
  %v634 = vld [vmem:[%s1 + $0x12b8] sm:$0xff]
  %v635 = vld [vmem:[%s1 + $0x12c0] sm:$0xff]
  %v636 = vld [vmem:[%s1 + $0x12c8] sm:$0xff]
  %v637 = vld [vmem:[%s1 + $0x12d0] sm:$0xff]
  %v638 = vld [vmem:[%s1 + $0x12d8] sm:$0xff]
  %v639 = vld [vmem:[%s1 + $0x12e0] sm:$0xff]
  %v640 = vld [vmem:[%s1 + $0x12e8] sm:$0xff]
  %v641 = vld [vmem:[%s1 + $0x12f0] sm:$0xff]
  %v642 = vld [vmem:[%s1 + $0x12f8] sm:$0xff]
  %v643 = vld [vmem:[%s1 + $0x1300] sm:$0xff]
  %v644 = vld [vmem:[%s1 + $0x1308] sm:$0xff]
  %v645 = vld [vmem:[%s1 + $0x1310] sm:$0xff]
  %v646 = vld [vmem:[%s1 + $0x1318] sm:$0xff]
  %v647 = vld [vmem:[%s1 + $0x1320] sm:$0xff]
  %v648 = vld [vmem:[%s1 + $0x1328] sm:$0xff]
  %v649 = vld [vmem:[%s1 + $0x1330] sm:$0xff]
  %v650 = vld [vmem:[%s1 + $0x1338] sm:$0xff]
  %v651 = vld [vmem:[%s1 + $0x1340] sm:$0xff]
  %v652 = vld [vmem:[%s1 + $0x1348] sm:$0xff]
  %v653 = vld [vmem:[%s1 + $0x1350] sm:$0xff]
  %v654 = vld [vmem:[%s1 + $0x1358] sm:$0xff]
  %v655 = vld [vmem:[%s1 + $0x1360] sm:$0xff]
  %v656 = vld [vmem:[%s1 + $0x1368] sm:$0xff]
  %v657 = vld [vmem:[%s1 + $0x1370] sm:$0xff]
  %v658 = vld [vmem:[%s1 + $0x1378] sm:$0xff]
  %v659 = vld [vmem:[%s1 + $0x1380] sm:$0xff]
  %v660 = vld [vmem:[%s1 + $0x1388] sm:$0xff]
  %v661 = vld [vmem:[%s1 + $0x1390] sm:$0xff]
  %v662 = vld [vmem:[%s1 + $0x1398] sm:$0xff]
  %v663 = vld [vmem:[%s1 + $0x13a0] sm:$0xff]
  %v664 = vld [vmem:[%s1 + $0x13a8] sm:$0xff]
  %v665 = vld [vmem:[%s1 + $0x13b0] sm:$0xff]
  %v666 = vld [vmem:[%s1 + $0x13b8] sm:$0xff]
  %v667 = vld [vmem:[%s1 + $0x13c0] sm:$0xff]
  %v668 = vld [vmem:[%s1 + $0x13c8] sm:$0xff]
  %v669 = vld [vmem:[%s1 + $0x13d0] sm:$0xff]
  %v670 = vld [vmem:[%s1 + $0x13d8] sm:$0xff]
  %v671 = vld [vmem:[%s1 + $0x13e0] sm:$0xff]
  %v672 = vld [vmem:[%s1 + $0x13e8] sm:$0xff]
  %v673 = vld [vmem:[%s1 + $0x13f0] sm:$0xff]
  %v674 = vld [vmem:[%s1 + $0x13f8] sm:$0xff]
  %v675 = vld [vmem:[%s1 + $0x1400] sm:$0xff]
  %v676 = vld [vmem:[%s1 + $0x1408] sm:$0xff]
  %v677 = vld [vmem:[%s1 + $0x1410] sm:$0xff]
  %v678 = vld [vmem:[%s1 + $0x1418] sm:$0xff]
  %v679 = vld [vmem:[%s1 + $0x1420] sm:$0xff]
  %v680 = vld [vmem:[%s1 + $0x1428] sm:$0xff]
  %v681 = vld [vmem:[%s1 + $0x1430] sm:$0xff]
  %v682 = vld [vmem:[%s1 + $0x1438] sm:$0xff]
  %v683 = vld [vmem:[%s1 + $0x1440] sm:$0xff]
  %v684 = vld [vmem:[%s1 + $0x1448] sm:$0xff]
  %v685 = vld [vmem:[%s1 + $0x1450] sm:$0xff]
  %v686 = vld [vmem:[%s1 + $0x1458] sm:$0xff]
  %v687 = vld [vmem:[%s1 + $0x1460] sm:$0xff]
  %v688 = vld [vmem:[%s1 + $0x1468] sm:$0xff]
  %v689 = vld [vmem:[%s1 + $0x1470] sm:$0xff]
  %v690 = vld [vmem:[%s1 + $0x1478] sm:$0xff]
  %v691 = vld [vmem:[%s1 + $0x1480] sm:$0xff]
  %v692 = vld [vmem:[%s1 + $0x1488] sm:$0xff]
  %v693 = vld [vmem:[%s1 + $0x1490] sm:$0xff]
  %v694 = vld [vmem:[%s1 + $0x1498] sm:$0xff]
  %v695 = vld [vmem:[%s1 + $0x14a0] sm:$0xff]
  %v696 = vld [vmem:[%s1 + $0x14a8] sm:$0xff]
  %v697 = vld [vmem:[%s1 + $0x14b0] sm:$0xff]
  %v698 = vld [vmem:[%s1 + $0x14b8] sm:$0xff]
  %v699 = vld [vmem:[%s1 + $0x14c0] sm:$0xff]
  %v700 = vld [vmem:[%s1 + $0x14c8] sm:$0xff]
  %v701 = vld [vmem:[%s1 + $0x14d0] sm:$0xff]
  %v702 = vld [vmem:[%s1 + $0x14d8] sm:$0xff]
  %v703 = vld [vmem:[%s1 + $0x14e0] sm:$0xff]
  %v704 = vld [vmem:[%s1 + $0x14e8] sm:$0xff]
  %v705 = vld [vmem:[%s1 + $0x14f0] sm:$0xff]
  %v706 = vld [vmem:[%s1 + $0x14f8] sm:$0xff]
  %v707 = vld [vmem:[%s1 + $0x1500] sm:$0xff]
  %v708 = vld [vmem:[%s1 + $0x1508] sm:$0xff]
  %v709 = vld [vmem:[%s1 + $0x1510] sm:$0xff]
  %v710 = vld [vmem:[%s1 + $0x1518] sm:$0xff]
  %v711 = vld [vmem:[%s1 + $0x1520] sm:$0xff]
  %v712 = vld [vmem:[%s1 + $0x1528] sm:$0xff]
  %v713 = vld [vmem:[%s1 + $0x1530] sm:$0xff]
  %v714 = vld [vmem:[%s1 + $0x1538] sm:$0xff]
  %v715 = vld [vmem:[%s1 + $0x1540] sm:$0xff]
  %v716 = vld [vmem:[%s1 + $0x1548] sm:$0xff]
  %v717 = vld [vmem:[%s1 + $0x1550] sm:$0xff]
  %v718 = vld [vmem:[%s1 + $0x1558] sm:$0xff]
  %v719 = vld [vmem:[%s1 + $0x1560] sm:$0xff]
  %v720 = vld [vmem:[%s1 + $0x1568] sm:$0xff]
  %v721 = vld [vmem:[%s1 + $0x1570] sm:$0xff]
  %v722 = vld [vmem:[%s1 + $0x1578] sm:$0xff]
  %v723 = vld [vmem:[%s1 + $0x1580] sm:$0xff]
  %v724 = vld [vmem:[%s1 + $0x1588] sm:$0xff]
  %v725 = vld [vmem:[%s1 + $0x1590] sm:$0xff]
  %v726 = vld [vmem:[%s1 + $0x1598] sm:$0xff]
  %v727 = vld [vmem:[%s1 + $0x15a0] sm:$0xff]
  %v728 = vld [vmem:[%s1 + $0x15a8] sm:$0xff]
  %v729 = vld [vmem:[%s1 + $0x15b0] sm:$0xff]
  %v730 = vld [vmem:[%s1 + $0x15b8] sm:$0xff]
  %v731 = vld [vmem:[%s1 + $0x15c0] sm:$0xff]
  %v732 = vld [vmem:[%s1 + $0x15c8] sm:$0xff]
  %v733 = vld [vmem:[%s1 + $0x15d0] sm:$0xff]
  %v734 = vld [vmem:[%s1 + $0x15d8] sm:$0xff]
  %v735 = vld [vmem:[%s1 + $0x15e0] sm:$0xff]
  %v736 = vld [vmem:[%s1 + $0x15e8] sm:$0xff]
  %v737 = vld [vmem:[%s1 + $0x15f0] sm:$0xff]
  %v738 = vld [vmem:[%s1 + $0x15f8] sm:$0xff]
  %v739 = vld [vmem:[%s1 + $0x1600] sm:$0xff]
  %v740 = vld [vmem:[%s1 + $0x1608] sm:$0xff]
  %v741 = vld [vmem:[%s1 + $0x1610] sm:$0xff]
  %v742 = vld [vmem:[%s1 + $0x1618] sm:$0xff]
  %v743 = vld [vmem:[%s1 + $0x1620] sm:$0xff]
  %v744 = vld [vmem:[%s1 + $0x1628] sm:$0xff]
  %v745 = vld [vmem:[%s1 + $0x1630] sm:$0xff]
  %v746 = vld [vmem:[%s1 + $0x1638] sm:$0xff]
  %v747 = vld [vmem:[%s1 + $0x1640] sm:$0xff]
  %v748 = vld [vmem:[%s1 + $0x1648] sm:$0xff]
  %v749 = vld [vmem:[%s1 + $0x1650] sm:$0xff]
  %v750 = vld [vmem:[%s1 + $0x1658] sm:$0xff]
  %v751 = vld [vmem:[%s1 + $0x1660] sm:$0xff]
  %v752 = vld [vmem:[%s1 + $0x1668] sm:$0xff]
  %v753 = vld [vmem:[%s1 + $0x1670] sm:$0xff]
  %v754 = vld [vmem:[%s1 + $0x1678] sm:$0xff]
  %v755 = vld [vmem:[%s1 + $0x1680] sm:$0xff]
  %v756 = vld [vmem:[%s1 + $0x1688] sm:$0xff]
  %v757 = vld [vmem:[%s1 + $0x1690] sm:$0xff]
  %v758 = vld [vmem:[%s1 + $0x1698] sm:$0xff]
  %v759 = vld [vmem:[%s1 + $0x16a0] sm:$0xff]
  %v760 = vld [vmem:[%s1 + $0x16a8] sm:$0xff]
  %v761 = vld [vmem:[%s1 + $0x16b0] sm:$0xff]
  %v762 = vld [vmem:[%s1 + $0x16b8] sm:$0xff]
  %v763 = vld [vmem:[%s1 + $0x16c0] sm:$0xff]
  %v764 = vld [vmem:[%s1 + $0x16c8] sm:$0xff]
  %v765 = vld [vmem:[%s1 + $0x16d0] sm:$0xff]
  %v766 = vld [vmem:[%s1 + $0x16d8] sm:$0xff]
  %v767 = vld [vmem:[%s1 + $0x16e0] sm:$0xff]
  %v768 = vld [vmem:[%s1 + $0x16e8] sm:$0xff]
  %v769 = vld [vmem:[%s1 + $0x16f0] sm:$0xff]
  %v770 = vld [vmem:[%s1 + $0x16f8] sm:$0xff]
  %v771 = vld [vmem:[%s1 + $0x1700] sm:$0xff]
  %v772 = vld [vmem:[%s1 + $0x1708] sm:$0xff]
  %v773 = vld [vmem:[%s1 + $0x1710] sm:$0xff]
  %v774 = vld [vmem:[%s1 + $0x1718] sm:$0xff]
  %v775 = vld [vmem:[%s1 + $0x1720] sm:$0xff]
  %v776 = vld [vmem:[%s1 + $0x1728] sm:$0xff]
  %v777 = vld [vmem:[%s1 + $0x1730] sm:$0xff]
  %v778 = vld [vmem:[%s1 + $0x1738] sm:$0xff]
  %v779 = vld [vmem:[%s1 + $0x1740] sm:$0xff]
  %v780 = vld [vmem:[%s1 + $0x1748] sm:$0xff]
  %v781 = vld [vmem:[%s1 + $0x1750] sm:$0xff]
  %v782 = vld [vmem:[%s1 + $0x1758] sm:$0xff]
  %v783 = vld [vmem:[%s1 + $0x1760] sm:$0xff]
  %v784 = vld [vmem:[%s1 + $0x1768] sm:$0xff]
  %v785 = vld [vmem:[%s1 + $0x1770] sm:$0xff]
  %v786 = vld [vmem:[%s1 + $0x1778] sm:$0xff]
  %v787 = vld [vmem:[%s1 + $0x1780] sm:$0xff]
  %v788 = vld [vmem:[%s1 + $0x1788] sm:$0xff]
  %v789 = vld [vmem:[%s1 + $0x1790] sm:$0xff]
  %v790 = vld [vmem:[%s1 + $0x1798] sm:$0xff]
  %v791 = vld [vmem:[%s1 + $0x17a0] sm:$0xff]
  %v792 = vld [vmem:[%s1 + $0x17a8] sm:$0xff]
  %v793 = vld [vmem:[%s1 + $0x17b0] sm:$0xff]
  %v794 = vld [vmem:[%s1 + $0x17b8] sm:$0xff]
  %v795 = vld [vmem:[%s1 + $0x17c0] sm:$0xff]
  %v796 = vld [vmem:[%s1 + $0x17c8] sm:$0xff]
  %v797 = vld [vmem:[%s1 + $0x17d0] sm:$0xff]
  %v798 = vld [vmem:[%s1 + $0x17d8] sm:$0xff]
  %v799 = vld [vmem:[%s1 + $0x17e0] sm:$0xff]
  %v800 = vld [vmem:[%s1 + $0x17e8] sm:$0xff]
  %v801 = vld [vmem:[%s1 + $0x17f0] sm:$0xff]
  %v802 = vld [vmem:[%s1 + $0x17f8] sm:$0xff]
  %v803 = vld [vmem:[%s1 + $0x1800] sm:$0xff]
  %v804 = vld [vmem:[%s1 + $0x1808] sm:$0xff]
  %v805 = vld [vmem:[%s1 + $0x1810] sm:$0xff]
  %v806 = vld [vmem:[%s1 + $0x1818] sm:$0xff]
  %v807 = vld [vmem:[%s1 + $0x1820] sm:$0xff]
  %v808 = vld [vmem:[%s1 + $0x1828] sm:$0xff]
  %v809 = vld [vmem:[%s1 + $0x1830] sm:$0xff]
  %v810 = vld [vmem:[%s1 + $0x1838] sm:$0xff]
  %v811 = vld [vmem:[%s1 + $0x1840] sm:$0xff]
  %v812 = vld [vmem:[%s1 + $0x1848] sm:$0xff]
  %v813 = vld [vmem:[%s1 + $0x1850] sm:$0xff]
  %v814 = vld [vmem:[%s1 + $0x1858] sm:$0xff]
  %v815 = vld [vmem:[%s1 + $0x1860] sm:$0xff]
  %v816 = vld [vmem:[%s1 + $0x1868] sm:$0xff]
  %v817 = vld [vmem:[%s1 + $0x1870] sm:$0xff]
  %v818 = vld [vmem:[%s1 + $0x1878] sm:$0xff]
  %v819 = vld [vmem:[%s1 + $0x1880] sm:$0xff]
  %v820 = vld [vmem:[%s1 + $0x1888] sm:$0xff]
  %v821 = vld [vmem:[%s1 + $0x1890] sm:$0xff]
  %v822 = vld [vmem:[%s1 + $0x1898] sm:$0xff]
  %v823 = vld [vmem:[%s1 + $0x18a0] sm:$0xff]
  %v824 = vld [vmem:[%s1 + $0x18a8] sm:$0xff]
  %v825 = vld [vmem:[%s1 + $0x18b0] sm:$0xff]
  %v826 = vld [vmem:[%s1 + $0x18b8] sm:$0xff]
  %v827 = vld [vmem:[%s1 + $0x18c0] sm:$0xff]
  %v828 = vld [vmem:[%s1 + $0x18c8] sm:$0xff]
  %v829 = vld [vmem:[%s1 + $0x18d0] sm:$0xff]
  %v830 = vld [vmem:[%s1 + $0x18d8] sm:$0xff]
  %v831 = vld [vmem:[%s1 + $0x18e0] sm:$0xff]
  %v832 = vld [vmem:[%s1 + $0x18e8] sm:$0xff]
  %v833 = vld [vmem:[%s1 + $0x18f0] sm:$0xff]
  %v834 = vld [vmem:[%s1 + $0x18f8] sm:$0xff]
  %v835 = vld [vmem:[%s1 + $0x1900] sm:$0xff]
  %v836 = vld [vmem:[%s1 + $0x1908] sm:$0xff]
  %v837 = vld [vmem:[%s1 + $0x1910] sm:$0xff]
  %v838 = vld [vmem:[%s1 + $0x1918] sm:$0xff]
  %v839 = vld [vmem:[%s1 + $0x1920] sm:$0xff]
  %v840 = vld [vmem:[%s1 + $0x1928] sm:$0xff]
  %v841 = vld [vmem:[%s1 + $0x1930] sm:$0xff]
  %v842 = vld [vmem:[%s1 + $0x1938] sm:$0xff]
  %v843 = vld [vmem:[%s1 + $0x1940] sm:$0xff]
  %v844 = vld [vmem:[%s1 + $0x1948] sm:$0xff]
  %v845 = vld [vmem:[%s1 + $0x1950] sm:$0xff]
  %v846 = vld [vmem:[%s1 + $0x1958] sm:$0xff]
  %v847 = vld [vmem:[%s1 + $0x1960] sm:$0xff]
  %v848 = vld [vmem:[%s1 + $0x1968] sm:$0xff]
  %v849 = vld [vmem:[%s1 + $0x1970] sm:$0xff]
  %v850 = vld [vmem:[%s1 + $0x1978] sm:$0xff]
  %v851 = vld [vmem:[%s1 + $0x1980] sm:$0xff]
  %v852 = vld [vmem:[%s1 + $0x1988] sm:$0xff]
  %v853 = vld [vmem:[%s1 + $0x1990] sm:$0xff]
  %v854 = vld [vmem:[%s1 + $0x1998] sm:$0xff]
  %v855 = vld [vmem:[%s1 + $0x19a0] sm:$0xff]
  %v856 = vld [vmem:[%s1 + $0x19a8] sm:$0xff]
  %v857 = vld [vmem:[%s1 + $0x19b0] sm:$0xff]
  %v858 = vld [vmem:[%s1 + $0x19b8] sm:$0xff]
  %v859 = vld [vmem:[%s1 + $0x19c0] sm:$0xff]
  %v860 = vld [vmem:[%s1 + $0x19c8] sm:$0xff]
  %v861 = vld [vmem:[%s1 + $0x19d0] sm:$0xff]
  %v862 = vld [vmem:[%s1 + $0x19d8] sm:$0xff]
  %v863 = vld [vmem:[%s1 + $0x19e0] sm:$0xff]
  %v864 = vld [vmem:[%s1 + $0x19e8] sm:$0xff]
  %v865 = vld [vmem:[%s1 + $0x19f0] sm:$0xff]
  %v866 = vld [vmem:[%s1 + $0x19f8] sm:$0xff]
  %v867 = vld [vmem:[%s1 + $0x1a00] sm:$0xff]
  %v868 = vld [vmem:[%s1 + $0x1a08] sm:$0xff]
  %v869 = vld [vmem:[%s1 + $0x1a10] sm:$0xff]
  %v870 = vld [vmem:[%s1 + $0x1a18] sm:$0xff]
  %v871 = vld [vmem:[%s1 + $0x1a20] sm:$0xff]
  %v872 = vld [vmem:[%s1 + $0x1a28] sm:$0xff]
  %v873 = vld [vmem:[%s1 + $0x1a30] sm:$0xff]
  %v874 = vld [vmem:[%s1 + $0x1a38] sm:$0xff]
  %v875 = vld [vmem:[%s1 + $0x1a40] sm:$0xff]
  %v876 = vld [vmem:[%s1 + $0x1a48] sm:$0xff]
  %v877 = vld [vmem:[%s1 + $0x1a50] sm:$0xff]
  %v878 = vld [vmem:[%s1 + $0x1a58] sm:$0xff]
  %v879 = vld [vmem:[%s1 + $0x1a60] sm:$0xff]
  %v880 = vld [vmem:[%s1 + $0x1a68] sm:$0xff]
  %v881 = vld [vmem:[%s1 + $0x1a70] sm:$0xff]
  %v882 = vld [vmem:[%s1 + $0x1a78] sm:$0xff]
  %v883 = vld [vmem:[%s1 + $0x1a80] sm:$0xff]
  %v884 = vld [vmem:[%s1 + $0x1a88] sm:$0xff]
  %v885 = vld [vmem:[%s1 + $0x1a90] sm:$0xff]
  %v886 = vld [vmem:[%s1 + $0x1a98] sm:$0xff]
  %v887 = vld [vmem:[%s1 + $0x1aa0] sm:$0xff]
  %v888 = vld [vmem:[%s1 + $0x1aa8] sm:$0xff]
  %v889 = vld [vmem:[%s1 + $0x1ab0] sm:$0xff]
  %v890 = vld [vmem:[%s1 + $0x1ab8] sm:$0xff]
  %v891 = vld [vmem:[%s1 + $0x1ac0] sm:$0xff]
  %v892 = vld [vmem:[%s1 + $0x1ac8] sm:$0xff]
  %v893 = vld [vmem:[%s1 + $0x1ad0] sm:$0xff]
  %v894 = vld [vmem:[%s1 + $0x1ad8] sm:$0xff]
  %v895 = vld [vmem:[%s1 + $0x1ae0] sm:$0xff]
  %v896 = vld [vmem:[%s1 + $0x1ae8] sm:$0xff]
  %v897 = vld [vmem:[%s1 + $0x1af0] sm:$0xff]
  %v898 = vld [vmem:[%s1 + $0x1af8] sm:$0xff]
  %v899 = vld [vmem:[%s1 + $0x1b00] sm:$0xff]
  %v900 = vld [vmem:[%s1 + $0x1b08] sm:$0xff]
  %v901 = vld [vmem:[%s1 + $0x1b10] sm:$0xff]
  %v902 = vld [vmem:[%s1 + $0x1b18] sm:$0xff]
  %v903 = vld [vmem:[%s1 + $0x1b20] sm:$0xff]
  %v904 = vld [vmem:[%s1 + $0x1b28] sm:$0xff]
  %v905 = vld [vmem:[%s1 + $0x1b30] sm:$0xff]
  %v906 = vld [vmem:[%s1 + $0x1b38] sm:$0xff]
  %v907 = vld [vmem:[%s1 + $0x1b40] sm:$0xff]
  %v908 = vld [vmem:[%s1 + $0x1b48] sm:$0xff]
  %v909 = vld [vmem:[%s1 + $0x1b50] sm:$0xff]
  %v910 = vld [vmem:[%s1 + $0x1b58] sm:$0xff]
  %v911 = vld [vmem:[%s1 + $0x1b60] sm:$0xff]
  %v912 = vld [vmem:[%s1 + $0x1b68] sm:$0xff]
  %v913 = vld [vmem:[%s1 + $0x1b70] sm:$0xff]
  %v914 = vld [vmem:[%s1 + $0x1b78] sm:$0xff]
  %v915 = vld [vmem:[%s1 + $0x1b80] sm:$0xff]
  %v916 = vld [vmem:[%s1 + $0x1b88] sm:$0xff]
  %v917 = vld [vmem:[%s1 + $0x1b90] sm:$0xff]
  %v918 = vld [vmem:[%s1 + $0x1b98] sm:$0xff]
  %v919 = vld [vmem:[%s1 + $0x1ba0] sm:$0xff]
  %v920 = vld [vmem:[%s1 + $0x1ba8] sm:$0xff]
  %v921 = vld [vmem:[%s1 + $0x1bb0] sm:$0xff]
  %v922 = vld [vmem:[%s1 + $0x1bb8] sm:$0xff]
  %v923 = vld [vmem:[%s1 + $0x1bc0] sm:$0xff]
  %v924 = vld [vmem:[%s1 + $0x1bc8] sm:$0xff]
  %v925 = vld [vmem:[%s1 + $0x1bd0] sm:$0xff]
  %v926 = vld [vmem:[%s1 + $0x1bd8] sm:$0xff]
  %v927 = vld [vmem:[%s1 + $0x1be0] sm:$0xff]
  %v928 = vld [vmem:[%s1 + $0x1be8] sm:$0xff]
  %v929 = vld [vmem:[%s1 + $0x1bf0] sm:$0xff]
  %v930 = vld [vmem:[%s1 + $0x1bf8] sm:$0xff]
  %v931 = vld [vmem:[%s1 + $0x1c00] sm:$0xff]
  %v932 = vld [vmem:[%s1 + $0x1c08] sm:$0xff]
  %v933 = vld [vmem:[%s1 + $0x1c10] sm:$0xff]
  %v934 = vld [vmem:[%s1 + $0x1c18] sm:$0xff]
  %v935 = vld [vmem:[%s1 + $0x1c20] sm:$0xff]
  %v936 = vld [vmem:[%s1 + $0x1c28] sm:$0xff]
  %v937 = vld [vmem:[%s1 + $0x1c30] sm:$0xff]
  %v938 = vld [vmem:[%s1 + $0x1c38] sm:$0xff]
  %v939 = vld [vmem:[%s1 + $0x1c40] sm:$0xff]
  %v940 = vld [vmem:[%s1 + $0x1c48] sm:$0xff]
  %v941 = vld [vmem:[%s1 + $0x1c50] sm:$0xff]
  %v942 = vld [vmem:[%s1 + $0x1c58] sm:$0xff]
  %v943 = vld [vmem:[%s1 + $0x1c60] sm:$0xff]
  %v944 = vld [vmem:[%s1 + $0x1c68] sm:$0xff]
  %v945 = vld [vmem:[%s1 + $0x1c70] sm:$0xff]
  %v946 = vld [vmem:[%s1 + $0x1c78] sm:$0xff]
  %v947 = vld [vmem:[%s1 + $0x1c80] sm:$0xff]
  %v948 = vld [vmem:[%s1 + $0x1c88] sm:$0xff]
  %v949 = vld [vmem:[%s1 + $0x1c90] sm:$0xff]
  %v950 = vld [vmem:[%s1 + $0x1c98] sm:$0xff]
  %v951 = vld [vmem:[%s1 + $0x1ca0] sm:$0xff]
  %v952 = vld [vmem:[%s1 + $0x1ca8] sm:$0xff]
  %v953 = vld [vmem:[%s1 + $0x1cb0] sm:$0xff]
  %v954 = vld [vmem:[%s1 + $0x1cb8] sm:$0xff]
  %v955 = vld [vmem:[%s1 + $0x1cc0] sm:$0xff]
  %v956 = vld [vmem:[%s1 + $0x1cc8] sm:$0xff]
  %v957 = vld [vmem:[%s1 + $0x1cd0] sm:$0xff]
  %v958 = vld [vmem:[%s1 + $0x1cd8] sm:$0xff]
  %v959 = vld [vmem:[%s1 + $0x1ce0] sm:$0xff]
  %v960 = vld [vmem:[%s1 + $0x1ce8] sm:$0xff]
  %v961 = vld [vmem:[%s1 + $0x1cf0] sm:$0xff]
  %v962 = vld [vmem:[%s1 + $0x1cf8] sm:$0xff]
  %v963 = vld [vmem:[%s1 + $0x1d00] sm:$0xff]
  %v964 = vld [vmem:[%s1 + $0x1d08] sm:$0xff]
  %v965 = vld [vmem:[%s1 + $0x1d10] sm:$0xff]
  %v966 = vld [vmem:[%s1 + $0x1d18] sm:$0xff]
  %v967 = vld [vmem:[%s1 + $0x1d20] sm:$0xff]
  %v968 = vld [vmem:[%s1 + $0x1d28] sm:$0xff]
  %v969 = vld [vmem:[%s1 + $0x1d30] sm:$0xff]
  %v970 = vld [vmem:[%s1 + $0x1d38] sm:$0xff]
  %v971 = vld [vmem:[%s1 + $0x1d40] sm:$0xff]
  %v972 = vld [vmem:[%s1 + $0x1d48] sm:$0xff]
  %v973 = vld [vmem:[%s1 + $0x1d50] sm:$0xff]
  %v974 = vld [vmem:[%s1 + $0x1d58] sm:$0xff]
  %v975 = vld [vmem:[%s1 + $0x1d60] sm:$0xff]
  %v976 = vld [vmem:[%s1 + $0x1d68] sm:$0xff]
  %v977 = vld [vmem:[%s1 + $0x1d70] sm:$0xff]
  %v978 = vld [vmem:[%s1 + $0x1d78] sm:$0xff]
  %v979 = vld [vmem:[%s1 + $0x1d80] sm:$0xff]
  %v980 = vld [vmem:[%s1 + $0x1d88] sm:$0xff]
  %v981 = vld [vmem:[%s1 + $0x1d90] sm:$0xff]
  %v982 = vld [vmem:[%s1 + $0x1d98] sm:$0xff]
  %v983 = vld [vmem:[%s1 + $0x1da0] sm:$0xff]
  %v984 = vld [vmem:[%s1 + $0x1da8] sm:$0xff]
  %v985 = vld [vmem:[%s1 + $0x1db0] sm:$0xff]
  %v986 = vld [vmem:[%s1 + $0x1db8] sm:$0xff]
  %v987 = vld [vmem:[%s1 + $0x1dc0] sm:$0xff]
  %v988 = vld [vmem:[%s1 + $0x1dc8] sm:$0xff]
  %v989 = vld [vmem:[%s1 + $0x1dd0] sm:$0xff]
  %v990 = vld [vmem:[%s1 + $0x1dd8] sm:$0xff]
  %v991 = vld [vmem:[%s1 + $0x1de0] sm:$0xff]
  %v992 = vld [vmem:[%s1 + $0x1de8] sm:$0xff]
  %v993 = vld [vmem:[%s1 + $0x1df0] sm:$0xff]
  %v994 = vld [vmem:[%s1 + $0x1df8] sm:$0xff]
  %v995 = vld [vmem:[%s1 + $0x1e00] sm:$0xff]
  %v996 = vld [vmem:[%s1 + $0x1e08] sm:$0xff]
  %v997 = vld [vmem:[%s1 + $0x1e10] sm:$0xff]
  %v998 = vld [vmem:[%s1 + $0x1e18] sm:$0xff]
  %v999 = vld [vmem:[%s1 + $0x1e20] sm:$0xff]
  %v1000 = vld [vmem:[%s1 + $0x1e28] sm:$0xff]
  %v1001 = vld [vmem:[%s1 + $0x1e30] sm:$0xff]
  %v1002 = vld [vmem:[%s1 + $0x1e38] sm:$0xff]
  %v1003 = vld [vmem:[%s1 + $0x1e40] sm:$0xff]
  %v1004 = vld [vmem:[%s1 + $0x1e48] sm:$0xff]
  %v1005 = vld [vmem:[%s1 + $0x1e50] sm:$0xff]
  %v1006 = vld [vmem:[%s1 + $0x1e58] sm:$0xff]
  %v1007 = vld [vmem:[%s1 + $0x1e60] sm:$0xff]
  %v1008 = vld [vmem:[%s1 + $0x1e68] sm:$0xff]
  %v1009 = vld [vmem:[%s1 + $0x1e70] sm:$0xff]
  %v1010 = vld [vmem:[%s1 + $0x1e78] sm:$0xff]
  %v1011 = vld [vmem:[%s1 + $0x1e80] sm:$0xff]
  %v1012 = vld [vmem:[%s1 + $0x1e88] sm:$0xff]
  %v1013 = vld [vmem:[%s1 + $0x1e90] sm:$0xff]
  %v1014 = vld [vmem:[%s1 + $0x1e98] sm:$0xff]
  %v1015 = vld [vmem:[%s1 + $0x1ea0] sm:$0xff]
  %v1016 = vld [vmem:[%s1 + $0x1ea8] sm:$0xff]
  %v1017 = vld [vmem:[%s1 + $0x1eb0] sm:$0xff]
  %v1018 = vld [vmem:[%s1 + $0x1eb8] sm:$0xff]
  %v1019 = vld [vmem:[%s1 + $0x1ec0] sm:$0xff]
  %v1020 = vld [vmem:[%s1 + $0x1ec8] sm:$0xff]
  %v1021 = vld [vmem:[%s1 + $0x1ed0] sm:$0xff]
  %v1022 = vld [vmem:[%s1 + $0x1ed8] sm:$0xff]
  %v1023 = vld [vmem:[%s1 + $0x1ee0] sm:$0xff]
  %v1024 = vld [vmem:[%s1 + $0x1ee8] sm:$0xff]
  %v1025 = vld [vmem:[%s1 + $0x1ef0] sm:$0xff]
  %v1026 = vld [vmem:[%s1 + $0x1ef8] sm:$0xff]
  %v1027 = vld [vmem:[%s1 + $0x1f00] sm:$0xff]
  %v1028 = vld [vmem:[%s1 + $0x1f08] sm:$0xff]
  %v1029 = vld [vmem:[%s1 + $0x1f10] sm:$0xff]
  %v1030 = vld [vmem:[%s1 + $0x1f18] sm:$0xff]
  %v1031 = vld [vmem:[%s1 + $0x1f20] sm:$0xff]
  %v1032 = vld [vmem:[%s1 + $0x1f28] sm:$0xff]
  %v1033 = vld [vmem:[%s1 + $0x1f30] sm:$0xff]
  %v1034 = vld [vmem:[%s1 + $0x1f38] sm:$0xff]
  %v1035 = vld [vmem:[%s1 + $0x1f40] sm:$0xff]
  %v1036 = vld [vmem:[%s1 + $0x1f48] sm:$0xff]
  %v1037 = vld [vmem:[%s1 + $0x1f50] sm:$0xff]
  %v1038 = vld [vmem:[%s1 + $0x1f58] sm:$0xff]
  %v1039 = vld [vmem:[%s1 + $0x1f60] sm:$0xff]
  %v1040 = vld [vmem:[%s1 + $0x1f68] sm:$0xff]
  %v1041 = vld [vmem:[%s1 + $0x1f70] sm:$0xff]
  %v1042 = vld [vmem:[%s1 + $0x1f78] sm:$0xff]
  %v1043 = vld [vmem:[%s1 + $0x1f80] sm:$0xff]
  %v1044 = vld [vmem:[%s1 + $0x1f88] sm:$0xff]
  %v1045 = vld [vmem:[%s1 + $0x1f90] sm:$0xff]
  %v1046 = vld [vmem:[%s1 + $0x1f98] sm:$0xff]
  %v1047 = vld [vmem:[%s1 + $0x1fa0] sm:$0xff]
  %v1048 = vld [vmem:[%s1 + $0x1fa8] sm:$0xff]
  %v1049 = vld [vmem:[%s1 + $0x1fb0] sm:$0xff]
  %v1050 = vld [vmem:[%s1 + $0x1fb8] sm:$0xff]
  %v1051 = vld [vmem:[%s1 + $0x1fc0] sm:$0xff]
  %v1052 = vld [vmem:[%s1 + $0x1fc8] sm:$0xff]
  %v1053 = vld [vmem:[%s1 + $0x1fd0] sm:$0xff]
  %v1054 = vld [vmem:[%s1 + $0x1fd8] sm:$0xff]
  %v1055 = vld [vmem:[%s1 + $0x1fe0] sm:$0xff]
  %v1056 = vld [vmem:[%s1 + $0x1fe8] sm:$0xff]
  %v1057 = vld [vmem:[%s1 + $0x1ff0] sm:$0xff]
  %v1058 = vld [vmem:[%s1 + $0x1ff8] sm:$0xff]
  %v1059 = vld [vmem:[%s1 + $0x2000] sm:$0xff]
  %v1060 = vld [vmem:[%s1 + $0x2008] sm:$0xff]
  %v1061 = vld [vmem:[%s1 + $0x2010] sm:$0xff]
  %v1062 = vld [vmem:[%s1 + $0x2018] sm:$0xff]
  %v1063 = vld [vmem:[%s1 + $0x2020] sm:$0xff]
  %v1064 = vld [vmem:[%s1 + $0x2028] sm:$0xff]
  %v1065 = vld [vmem:[%s1 + $0x2030] sm:$0xff]
  %v1066 = vld [vmem:[%s1 + $0x2038] sm:$0xff]
  %v1067 = vld [vmem:[%s1 + $0x2040] sm:$0xff]
  %v1068 = vld [vmem:[%s1 + $0x2048] sm:$0xff]
  %v1069 = vld [vmem:[%s1 + $0x2050] sm:$0xff]
  %v1070 = vld [vmem:[%s1 + $0x2058] sm:$0xff]
  %v1071 = vld [vmem:[%s1 + $0x2060] sm:$0xff]
  %v1072 = vld [vmem:[%s1 + $0x2068] sm:$0xff]
  %v1073 = vld [vmem:[%s1 + $0x2070] sm:$0xff]
  %v1074 = vld [vmem:[%s1 + $0x2078] sm:$0xff]
  %v1075 = vld [vmem:[%s1 + $0x2080] sm:$0xff]
  %v1076 = vld [vmem:[%s1 + $0x2088] sm:$0xff]
  %v1077 = vld [vmem:[%s1 + $0x2090] sm:$0xff]
  %v1078 = vld [vmem:[%s1 + $0x2098] sm:$0xff]
  %v1079 = vld [vmem:[%s1 + $0x20a0] sm:$0xff]
  %v1080 = vld [vmem:[%s1 + $0x20a8] sm:$0xff]
  %v1081 = vld [vmem:[%s1 + $0x20b0] sm:$0xff]
  %v1082 = vld [vmem:[%s1 + $0x20b8] sm:$0xff]
  %v1083 = vld [vmem:[%s1 + $0x20c0] sm:$0xff]
  %v1084 = vld [vmem:[%s1 + $0x20c8] sm:$0xff]
  %v1085 = vld [vmem:[%s1 + $0x20d0] sm:$0xff]
  %v1086 = vld [vmem:[%s1 + $0x20d8] sm:$0xff]
  %v1087 = vld [vmem:[%s1 + $0x20e0] sm:$0xff]
  %v1088 = vld [vmem:[%s1 + $0x20e8] sm:$0xff]
  %v1089 = vld [vmem:[%s1 + $0x20f0] sm:$0xff]
  %v1090 = vld [vmem:[%s1 + $0x20f8] sm:$0xff]
  %v1091 = vld [vmem:[%s1 + $0x2100] sm:$0xff]
  %v1092 = vld [vmem:[%s1 + $0x2108] sm:$0xff]
  %v1093 = vld [vmem:[%s1 + $0x2110] sm:$0xff]
  %v1094 = vld [vmem:[%s1 + $0x2118] sm:$0xff]
  %v1095 = vld [vmem:[%s1 + $0x2120] sm:$0xff]
  %v1096 = vld [vmem:[%s1 + $0x2128] sm:$0xff]
  %v1097 = vld [vmem:[%s1 + $0x2130] sm:$0xff]
  %v1098 = vld [vmem:[%s1 + $0x2138] sm:$0xff]
  %v1099 = vld [vmem:[%s1 + $0x2140] sm:$0xff]
  %v1100 = vld [vmem:[%s1 + $0x2148] sm:$0xff]
  %v1101 = vld [vmem:[%s1 + $0x2150] sm:$0xff]
  %v1102 = vld [vmem:[%s1 + $0x2158] sm:$0xff]
  %v1103 = vld [vmem:[%s1 + $0x2160] sm:$0xff]
  %v1104 = vld [vmem:[%s1 + $0x2168] sm:$0xff]
  %v1105 = vld [vmem:[%s1 + $0x2170] sm:$0xff]
  %v1106 = vld [vmem:[%s1 + $0x2178] sm:$0xff]
  %v1107 = vld [vmem:[%s1 + $0x2180] sm:$0xff]
  %v1108 = vld [vmem:[%s1 + $0x2188] sm:$0xff]
  %v1109 = vld [vmem:[%s1 + $0x2190] sm:$0xff]
  %v1110 = vld [vmem:[%s1 + $0x2198] sm:$0xff]
  %v1111 = vld [vmem:[%s1 + $0x21a0] sm:$0xff]
  %v1112 = vld [vmem:[%s1 + $0x21a8] sm:$0xff]
  %v1113 = vld [vmem:[%s1 + $0x21b0] sm:$0xff]
  %v1114 = vld [vmem:[%s1 + $0x21b8] sm:$0xff]
  %v1115 = vld [vmem:[%s1 + $0x21c0] sm:$0xff]
  %v1116 = vld [vmem:[%s1 + $0x21c8] sm:$0xff]
  %v1117 = vld [vmem:[%s1 + $0x21d0] sm:$0xff]
  %v1118 = vld [vmem:[%s1 + $0x21d8] sm:$0xff]
  %v1119 = vld [vmem:[%s1 + $0x21e0] sm:$0xff]
  %v1120 = vld [vmem:[%s1 + $0x21e8] sm:$0xff]
  %v1121 = vld [vmem:[%s1 + $0x21f0] sm:$0xff]
  %v1122 = vld [vmem:[%s1 + $0x21f8] sm:$0xff]
  %v1123 = vld [vmem:[%s1 + $0x2200] sm:$0xff]
  %v1124 = vld [vmem:[%s1 + $0x2208] sm:$0xff]
  %v1125 = vld [vmem:[%s1 + $0x2210] sm:$0xff]
  %v1126 = vld [vmem:[%s1 + $0x2218] sm:$0xff]
  %v1127 = vld [vmem:[%s1 + $0x2220] sm:$0xff]
  %v1128 = vld [vmem:[%s1 + $0x2228] sm:$0xff]
  %v1129 = vld [vmem:[%s1 + $0x2230] sm:$0xff]
  %v1130 = vld [vmem:[%s1 + $0x2238] sm:$0xff]
  %v1131 = vld [vmem:[%s1 + $0x2240] sm:$0xff]
  %v1132 = vld [vmem:[%s1 + $0x2248] sm:$0xff]
  %v1133 = vld [vmem:[%s1 + $0x2250] sm:$0xff]
  %v1134 = vld [vmem:[%s1 + $0x2258] sm:$0xff]
  %v1135 = vld [vmem:[%s1 + $0x2260] sm:$0xff]
  %v1136 = vld [vmem:[%s1 + $0x2268] sm:$0xff]
  %v1137 = vld [vmem:[%s1 + $0x2270] sm:$0xff]
  %v1138 = vld [vmem:[%s1 + $0x2278] sm:$0xff]
  %v1139 = vld [vmem:[%s1 + $0x2280] sm:$0xff]
  %v1140 = vld [vmem:[%s1 + $0x2288] sm:$0xff]
  %v1141 = vld [vmem:[%s1 + $0x2290] sm:$0xff]
  %v1142 = vld [vmem:[%s1 + $0x2298] sm:$0xff]
  %v1143 = vld [vmem:[%s1 + $0x22a0] sm:$0xff]
  %v1144 = vld [vmem:[%s1 + $0x22a8] sm:$0xff]
  %v1145 = vld [vmem:[%s1 + $0x22b0] sm:$0xff]
  %v1146 = vld [vmem:[%s1 + $0x22b8] sm:$0xff]
  %v1147 = vld [vmem:[%s1 + $0x22c0] sm:$0xff]
  %v1148 = vld [vmem:[%s1 + $0x22c8] sm:$0xff]
  %v1149 = vld [vmem:[%s1 + $0x22d0] sm:$0xff]
  %v1150 = vld [vmem:[%s1 + $0x22d8] sm:$0xff]
  %v1151 = vld [vmem:[%s1 + $0x22e0] sm:$0xff]
  %v1152 = vld [vmem:[%s1 + $0x22e8] sm:$0xff]
  %v1153 = vld [vmem:[%s1 + $0x22f0] sm:$0xff]
  %v1154 = vld [vmem:[%s1 + $0x22f8] sm:$0xff]
  %v1155 = vld [vmem:[%s1 + $0x2300] sm:$0xff]
  %v1156 = vld [vmem:[%s1 + $0x2308] sm:$0xff]
  %v1157 = vld [vmem:[%s1 + $0x2310] sm:$0xff]
  %v1158 = vld [vmem:[%s1 + $0x2318] sm:$0xff]
  %v1159 = vld [vmem:[%s1 + $0x2320] sm:$0xff]
  %v1160 = vld [vmem:[%s1 + $0x2328] sm:$0xff]
  %v1161 = vld [vmem:[%s1 + $0x2330] sm:$0xff]
  %v1162 = vld [vmem:[%s1 + $0x2338] sm:$0xff]
  %v1163 = vld [vmem:[%s1 + $0x2340] sm:$0xff]
  %v1164 = vld [vmem:[%s1 + $0x2348] sm:$0xff]
  %v1165 = vld [vmem:[%s1 + $0x2350] sm:$0xff]
  %v1166 = vld [vmem:[%s1 + $0x2358] sm:$0xff]
  %v1167 = vld [vmem:[%s1 + $0x2360] sm:$0xff]
  %v1168 = vld [vmem:[%s1 + $0x2368] sm:$0xff]
  %v1169 = vld [vmem:[%s1 + $0x2370] sm:$0xff]
  %v1170 = vld [vmem:[%s1 + $0x2378] sm:$0xff]
  %v1171 = vld [vmem:[%s1 + $0x2380] sm:$0xff]
  %v1172 = vld [vmem:[%s1 + $0x2388] sm:$0xff]
  %v1173 = vld [vmem:[%s1 + $0x2390] sm:$0xff]
  %v1174 = vld [vmem:[%s1 + $0x2398] sm:$0xff]
  %v1175 = vld [vmem:[%s1 + $0x23a0] sm:$0xff]
  %v1176 = vld [vmem:[%s1 + $0x23a8] sm:$0xff]
  %v1177 = vld [vmem:[%s1 + $0x23b0] sm:$0xff]
  %v1178 = vld [vmem:[%s1 + $0x23b8] sm:$0xff]
  %v1179 = vld [vmem:[%s1 + $0x23c0] sm:$0xff]
  %v1180 = vld [vmem:[%s1 + $0x23c8] sm:$0xff]
  %v1181 = vld [vmem:[%s1 + $0x23d0] sm:$0xff]
  %v1182 = vld [vmem:[%s1 + $0x23d8] sm:$0xff]
  %v1183 = vld [vmem:[%s1 + $0x23e0] sm:$0xff]
  %v1184 = vld [vmem:[%s1 + $0x23e8] sm:$0xff]
  %v1185 = vld [vmem:[%s1 + $0x23f0] sm:$0xff]
  %v1186 = vld [vmem:[%s1 + $0x23f8] sm:$0xff]
  %v1187 = vld [vmem:[%s1 + $0x2400] sm:$0xff]
  %v1188 = vld [vmem:[%s1 + $0x2408] sm:$0xff]
  %v1189 = vld [vmem:[%s1 + $0x2410] sm:$0xff]
  %v1190 = vld [vmem:[%s1 + $0x2418] sm:$0xff]
  %v1191 = vld [vmem:[%s1 + $0x2420] sm:$0xff]
  %v1192 = vld [vmem:[%s1 + $0x2428] sm:$0xff]
  %v1193 = vld [vmem:[%s1 + $0x2430] sm:$0xff]
  %v1194 = vld [vmem:[%s1 + $0x2438] sm:$0xff]
  %v1195 = vld [vmem:[%s1 + $0x2440] sm:$0xff]
  %v1196 = vld [vmem:[%s1 + $0x2448] sm:$0xff]
  %v1197 = vld [vmem:[%s1 + $0x2450] sm:$0xff]
  %v1198 = vld [vmem:[%s1 + $0x2458] sm:$0xff]
  %v1199 = vld [vmem:[%s1 + $0x2460] sm:$0xff]
  %v1200 = vld [vmem:[%s1 + $0x2468] sm:$0xff]
  %v1201 = vld [vmem:[%s1 + $0x2470] sm:$0xff]
  %v1202 = vld [vmem:[%s1 + $0x2478] sm:$0xff]
  %v1203 = vld [vmem:[%s1 + $0x2480] sm:$0xff]
  %v1204 = vld [vmem:[%s1 + $0x2488] sm:$0xff]
  %v1205 = vld [vmem:[%s1 + $0x2490] sm:$0xff]
  %v1206 = vld [vmem:[%s1 + $0x2498] sm:$0xff]
  %v1207 = vld [vmem:[%s1 + $0x24a0] sm:$0xff]
  %v1208 = vld [vmem:[%s1 + $0x24a8] sm:$0xff]
  %v1209 = vld [vmem:[%s1 + $0x24b0] sm:$0xff]
  %v1210 = vld [vmem:[%s1 + $0x24b8] sm:$0xff]
  %v1211 = vld [vmem:[%s1 + $0x24c0] sm:$0xff]
  %v1212 = vld [vmem:[%s1 + $0x24c8] sm:$0xff]
  %v1213 = vld [vmem:[%s1 + $0x24d0] sm:$0xff]
  %v1214 = vld [vmem:[%s1 + $0x24d8] sm:$0xff]
  %v1215 = vld [vmem:[%s1 + $0x24e0] sm:$0xff]
  %v1216 = vld [vmem:[%s1 + $0x24e8] sm:$0xff]
  %v1217 = vld [vmem:[%s1 + $0x24f0] sm:$0xff]
  %v1218 = vld [vmem:[%s1 + $0x24f8] sm:$0xff]
  %v1219 = vld [vmem:[%s1 + $0x2500] sm:$0xff]
  %v1220 = vld [vmem:[%s1 + $0x2508] sm:$0xff]
  %v1221 = vld [vmem:[%s1 + $0x2510] sm:$0xff]
  %v1222 = vld [vmem:[%s1 + $0x2518] sm:$0xff]
  %v1223 = vld [vmem:[%s1 + $0x2520] sm:$0xff]
  %v1224 = vld [vmem:[%s1 + $0x2528] sm:$0xff]
  %v1225 = vld [vmem:[%s1 + $0x2530] sm:$0xff]
  %v1226 = vld [vmem:[%s1 + $0x2538] sm:$0xff]
  %v1227 = vld [vmem:[%s1 + $0x2540] sm:$0xff]
  %v1228 = vld [vmem:[%s1 + $0x2548] sm:$0xff]
  %v1229 = vld [vmem:[%s1 + $0x2550] sm:$0xff]
  %v1230 = vld [vmem:[%s1 + $0x2558] sm:$0xff]
  %v1231 = vld [vmem:[%s1 + $0x2560] sm:$0xff]
  %v1232 = vld [vmem:[%s1 + $0x2568] sm:$0xff]
  %v1233 = vld [vmem:[%s1 + $0x2570] sm:$0xff]
  %v1234 = vld [vmem:[%s1 + $0x2578] sm:$0xff]
  %v1235 = vld [vmem:[%s1 + $0x2580] sm:$0xff]
  %v1236 = vld [vmem:[%s1 + $0x2588] sm:$0xff]
  %v1237 = vld [vmem:[%s1 + $0x2590] sm:$0xff]
  %v1238 = vld [vmem:[%s1 + $0x2598] sm:$0xff]
  %v1239 = vld [vmem:[%s1 + $0x25a0] sm:$0xff]
  %v1240 = vld [vmem:[%s1 + $0x25a8] sm:$0xff]
  %v1241 = vld [vmem:[%s1 + $0x25b0] sm:$0xff]
  %v1242 = vld [vmem:[%s1 + $0x25b8] sm:$0xff]
  %v1243 = vld [vmem:[%s1 + $0x25c0] sm:$0xff]
  %v1244 = vld [vmem:[%s1 + $0x25c8] sm:$0xff]
  %v1245 = vld [vmem:[%s1 + $0x25d0] sm:$0xff]
  %v1246 = vld [vmem:[%s1 + $0x25d8] sm:$0xff]
  %v1247 = vld [vmem:[%s1 + $0x25e0] sm:$0xff]
  %v1248 = vld [vmem:[%s1 + $0x25e8] sm:$0xff]
  %v1249 = vld [vmem:[%s1 + $0x25f0] sm:$0xff]
  %v1250 = vld [vmem:[%s1 + $0x25f8] sm:$0xff]
  %v1251 = vld [vmem:[%s1 + $0x2600] sm:$0xff]
  %v1252 = vld [vmem:[%s1 + $0x2608] sm:$0xff]
  %v1253 = vld [vmem:[%s1 + $0x2610] sm:$0xff]
  %v1254 = vld [vmem:[%s1 + $0x2618] sm:$0xff]
  %v1255 = vld [vmem:[%s1 + $0x2620] sm:$0xff]
  %v1256 = vld [vmem:[%s1 + $0x2628] sm:$0xff]
  %v1257 = vld [vmem:[%s1 + $0x2630] sm:$0xff]
  %v1258 = vld [vmem:[%s1 + $0x2638] sm:$0xff]
  %v1259 = vld [vmem:[%s1 + $0x2640] sm:$0xff]
  %v1260 = vld [vmem:[%s1 + $0x2648] sm:$0xff]
  %v1261 = vld [vmem:[%s1 + $0x2650] sm:$0xff]
  %v1262 = vld [vmem:[%s1 + $0x2658] sm:$0xff]
  %v1263 = vld [vmem:[%s1 + $0x2660] sm:$0xff]
  %v1264 = vld [vmem:[%s1 + $0x2668] sm:$0xff]
  %v1265 = vld [vmem:[%s1 + $0x2670] sm:$0xff]
  %v1266 = vld [vmem:[%s1 + $0x2678] sm:$0xff]
  %v1267 = vld [vmem:[%s1 + $0x2680] sm:$0xff]
  %v1268 = vld [vmem:[%s1 + $0x2688] sm:$0xff]
  %v1269 = vld [vmem:[%s1 + $0x2690] sm:$0xff]
  %v1270 = vld [vmem:[%s1 + $0x2698] sm:$0xff]
  %v1271 = vld [vmem:[%s1 + $0x26a0] sm:$0xff]
  %v1272 = vld [vmem:[%s1 + $0x26a8] sm:$0xff]
  %v1273 = vld [vmem:[%s1 + $0x26b0] sm:$0xff]
  %v1274 = vld [vmem:[%s1 + $0x26b8] sm:$0xff]
  %v1275 = vld [vmem:[%s1 + $0x26c0] sm:$0xff]
  %v1276 = vld [vmem:[%s1 + $0x26c8] sm:$0xff]
  %v1277 = vld [vmem:[%s1 + $0x26d0] sm:$0xff]
  %v1278 = vld [vmem:[%s1 + $0x26d8] sm:$0xff]
  %v1279 = vld [vmem:[%s1 + $0x26e0] sm:$0xff]
  %v1280 = vld [vmem:[%s1 + $0x26e8] sm:$0xff]
  %v1281 = vld [vmem:[%s1 + $0x26f0] sm:$0xff]
  %v1282 = vld [vmem:[%s1 + $0x26f8] sm:$0xff]
  %v1283 = vld [vmem:[%s1 + $0x2700] sm:$0xff]
  %v1284 = vld [vmem:[%s1 + $0x2708] sm:$0xff]
  %v1285 = vld [vmem:[%s1 + $0x2710] sm:$0xff]
  %v1286 = vld [vmem:[%s1 + $0x2718] sm:$0xff]
  %v1287 = vld [vmem:[%s1 + $0x2720] sm:$0xff]
  %v1288 = vld [vmem:[%s1 + $0x2728] sm:$0xff]
  %v1289 = vld [vmem:[%s1 + $0x2730] sm:$0xff]
  %v1290 = vld [vmem:[%s1 + $0x2738] sm:$0xff]
  %v1291 = vld [vmem:[%s1 + $0x2740] sm:$0xff]
  %v1292 = vld [vmem:[%s1 + $0x2748] sm:$0xff]
  %v1293 = vld [vmem:[%s1 + $0x2750] sm:$0xff]
  %v1294 = vld [vmem:[%s1 + $0x2758] sm:$0xff]
  %v1295 = vld [vmem:[%s1 + $0x2760] sm:$0xff]
  %v1296 = vld [vmem:[%s1 + $0x2768] sm:$0xff]
  %v1297 = vld [vmem:[%s1 + $0x2770] sm:$0xff]
  %v1298 = vld [vmem:[%s1 + $0x2778] sm:$0xff]
  %v1299 = vld [vmem:[%s1 + $0x2780] sm:$0xff]
  %v1300 = vld [vmem:[%s1 + $0x2788] sm:$0xff]
  %v1301 = vld [vmem:[%s1 + $0x2790] sm:$0xff]
  %v1302 = vld [vmem:[%s1 + $0x2798] sm:$0xff]
  %v1303 = vld [vmem:[%s1 + $0x27a0] sm:$0xff]
  %v1304 = vld [vmem:[%s1 + $0x27a8] sm:$0xff]
  %v1305 = vld [vmem:[%s1 + $0x27b0] sm:$0xff]
  %v1306 = vld [vmem:[%s1 + $0x27b8] sm:$0xff]
  %v1307 = vld [vmem:[%s1 + $0x27c0] sm:$0xff]
  %v1308 = vld [vmem:[%s1 + $0x27c8] sm:$0xff]
  %v1309 = vld [vmem:[%s1 + $0x27d0] sm:$0xff]
  %v1310 = vld [vmem:[%s1 + $0x27d8] sm:$0xff]
  %v1311 = vld [vmem:[%s1 + $0x27e0] sm:$0xff]
  %v1312 = vld [vmem:[%s1 + $0x27e8] sm:$0xff]
  %v1313 = vld [vmem:[%s1 + $0x27f0] sm:$0xff]
  %v1314 = vld [vmem:[%s1 + $0x27f8] sm:$0xff]
  %v1315 = vld [vmem:[%s1 + $0x2800] sm:$0xff]
  %v1316 = vld [vmem:[%s1 + $0x2808] sm:$0xff]
  %v1317 = vld [vmem:[%s1 + $0x2810] sm:$0xff]
  %v1318 = vld [vmem:[%s1 + $0x2818] sm:$0xff]
  %v1319 = vld [vmem:[%s1 + $0x2820] sm:$0xff]
  %v1320 = vld [vmem:[%s1 + $0x2828] sm:$0xff]
  %v1321 = vld [vmem:[%s1 + $0x2830] sm:$0xff]
  %v1322 = vld [vmem:[%s1 + $0x2838] sm:$0xff]
  %v1323 = vld [vmem:[%s1 + $0x2840] sm:$0xff]
  %v1324 = vld [vmem:[%s1 + $0x2848] sm:$0xff]
  %v1325 = vld [vmem:[%s1 + $0x2850] sm:$0xff]
  %v1326 = vld [vmem:[%s1 + $0x2858] sm:$0xff]
  %v1327 = vld [vmem:[%s1 + $0x2860] sm:$0xff]
  %v1328 = vld [vmem:[%s1 + $0x2868] sm:$0xff]
  %v1329 = vld [vmem:[%s1 + $0x2870] sm:$0xff]
  %v1330 = vld [vmem:[%s1 + $0x2878] sm:$0xff]
  %v1331 = vld [vmem:[%s2] sm:$0x1]
  %v1333 = vlaneseq
  %v1334 = vshrl.u32 %v1333, 7
  %v1335 = vsub.s32 0, %v1334
  %v1336 = vrot.slane %v1331, %v1335
  %v1359 = vcombine.high %v14, %v14
  %v1361 = vunpack.c.l.s4 1983009808
  %v1362 = vunpack.c.0.s8 %v1361
  %v1363 = vlaneseq
  %v1364 = vshrl.u32 %v1363, 7
  %v1365 = vsub.s32 %v1362, %v1364
  %v1366 = vrot.slane %v14, %v1365
  %v1368 = vunpack.c.l.s4 1983009808
  %v1369 = vunpack.c.0.s8 %v1368
  %v1370 = vlaneseq
  %v1371 = vshrl.u32 %v1370, 7
  %v1372 = vsub.s32 %v1369, %v1371
  %v1373 = vrot.slane %v1359, %v1372
  %v1374 = vcombine.high %v1366, %v1366
  %v1375 = vcombine.high %v1373, %v1373
  %v1376 = vcombine.high %v15, %v15
  %v1378 = vunpack.c.l.s4 1983009808
  %v1379 = vunpack.c.0.s8 %v1378
  %v1380 = vlaneseq
  %v1381 = vshrl.u32 %v1380, 7
  %v1382 = vsub.s32 %v1379, %v1381
  %v1383 = vrot.slane %v15, %v1382
  %v1385 = vunpack.c.l.s4 1983009808
  %v1386 = vunpack.c.0.s8 %v1385
  %v1387 = vlaneseq
  %v1388 = vshrl.u32 %v1387, 7
  %v1389 = vsub.s32 %v1386, %v1388
  %v1390 = vrot.slane %v1376, %v1389
  %v1391 = vcombine.high %v1383, %v1383
  %v1392 = vcombine.high %v1390, %v1390
  %v1393 = vcombine.high %v16, %v16
  %v1395 = vunpack.c.l.s4 1983009808
  %v1396 = vunpack.c.0.s8 %v1395
  %v1397 = vlaneseq
  %v1398 = vshrl.u32 %v1397, 7
  %v1399 = vsub.s32 %v1396, %v1398
  %v1400 = vrot.slane %v16, %v1399
  %v1402 = vunpack.c.l.s4 1983009808
  %v1403 = vunpack.c.0.s8 %v1402
  %v1404 = vlaneseq
  %v1405 = vshrl.u32 %v1404, 7
  %v1406 = vsub.s32 %v1403, %v1405
  %v1407 = vrot.slane %v1393, %v1406
  %v1408 = vcombine.high %v1400, %v1400
  %v1409 = vcombine.high %v1407, %v1407
  %v1410 = vcombine.high %v17, %v17
  %v1412 = vunpack.c.l.s4 1983009808
  %v1413 = vunpack.c.0.s8 %v1412
  %v1414 = vlaneseq
  %v1415 = vshrl.u32 %v1414, 7
  %v1416 = vsub.s32 %v1413, %v1415
  %v1417 = vrot.slane %v17, %v1416
  %v1419 = vunpack.c.l.s4 1983009808
  %v1420 = vunpack.c.0.s8 %v1419
  %v1421 = vlaneseq
  %v1422 = vshrl.u32 %v1421, 7
  %v1423 = vsub.s32 %v1420, %v1422
  %v1424 = vrot.slane %v1410, %v1423
  %v1425 = vcombine.high %v1417, %v1417
  %v1426 = vcombine.high %v1424, %v1424
  %v1427 = vcombine.high %v18, %v18
  %v1429 = vunpack.c.l.s4 1983009808
  %v1430 = vunpack.c.0.s8 %v1429
  %v1431 = vlaneseq
  %v1432 = vshrl.u32 %v1431, 7
  %v1433 = vsub.s32 %v1430, %v1432
  %v1434 = vrot.slane %v18, %v1433
  %v1436 = vunpack.c.l.s4 1983009808
  %v1437 = vunpack.c.0.s8 %v1436
  %v1438 = vlaneseq
  %v1439 = vshrl.u32 %v1438, 7
  %v1440 = vsub.s32 %v1437, %v1439
  %v1441 = vrot.slane %v1427, %v1440
  %v1442 = vcombine.high %v1434, %v1434
  %v1443 = vcombine.high %v1441, %v1441
  %v1444 = vcombine.high %v19, %v19
  %v1446 = vunpack.c.l.s4 1983009808
  %v1447 = vunpack.c.0.s8 %v1446
  %v1448 = vlaneseq
  %v1449 = vshrl.u32 %v1448, 7
  %v1450 = vsub.s32 %v1447, %v1449
  %v1451 = vrot.slane %v19, %v1450
  %v1453 = vunpack.c.l.s4 1983009808
  %v1454 = vunpack.c.0.s8 %v1453
  %v1455 = vlaneseq
  %v1456 = vshrl.u32 %v1455, 7
  %v1457 = vsub.s32 %v1454, %v1456
  %v1458 = vrot.slane %v1444, %v1457
  %v1459 = vcombine.high %v1451, %v1451
  %v1460 = vcombine.high %v1458, %v1458
  %v1461 = vcombine.high %v20, %v20
  %v1463 = vunpack.c.l.s4 1983009808
  %v1464 = vunpack.c.0.s8 %v1463
  %v1465 = vlaneseq
  %v1466 = vshrl.u32 %v1465, 7
  %v1467 = vsub.s32 %v1464, %v1466
  %v1468 = vrot.slane %v20, %v1467
  %v1470 = vunpack.c.l.s4 1983009808
  %v1471 = vunpack.c.0.s8 %v1470
  %v1472 = vlaneseq
  %v1473 = vshrl.u32 %v1472, 7
  %v1474 = vsub.s32 %v1471, %v1473
  %v1475 = vrot.slane %v1461, %v1474
  %v1476 = vcombine.high %v1468, %v1468
  %v1477 = vcombine.high %v1475, %v1475
  %v1478 = vcombine.high %v21, %v21
  %v1480 = vunpack.c.l.s4 1983009808
  %v1481 = vunpack.c.0.s8 %v1480
  %v1482 = vlaneseq
  %v1483 = vshrl.u32 %v1482, 7
  %v1484 = vsub.s32 %v1481, %v1483
  %v1485 = vrot.slane %v21, %v1484
  %v1487 = vunpack.c.l.s4 1983009808
  %v1488 = vunpack.c.0.s8 %v1487
  %v1489 = vlaneseq
  %v1490 = vshrl.u32 %v1489, 7
  %v1491 = vsub.s32 %v1488, %v1490
  %v1492 = vrot.slane %v1478, %v1491
  %v1493 = vcombine.high %v1485, %v1485
  %v1494 = vcombine.high %v1492, %v1492
  %v1495 = vcombine.high %v22, %v22
  %v1497 = vunpack.c.l.s4 1983009808
  %v1498 = vunpack.c.0.s8 %v1497
  %v1499 = vlaneseq
  %v1500 = vshrl.u32 %v1499, 7
  %v1501 = vsub.s32 %v1498, %v1500
  %v1502 = vrot.slane %v22, %v1501
  %v1504 = vunpack.c.l.s4 1983009808
  %v1505 = vunpack.c.0.s8 %v1504
  %v1506 = vlaneseq
  %v1507 = vshrl.u32 %v1506, 7
  %v1508 = vsub.s32 %v1505, %v1507
  %v1509 = vrot.slane %v1495, %v1508
  %v1510 = vcombine.high %v1502, %v1502
  %v1511 = vcombine.high %v1509, %v1509
  %v1512 = vcombine.high %v23, %v23
  %v1514 = vunpack.c.l.s4 1983009808
  %v1515 = vunpack.c.0.s8 %v1514
  %v1516 = vlaneseq
  %v1517 = vshrl.u32 %v1516, 7
  %v1518 = vsub.s32 %v1515, %v1517
  %v1519 = vrot.slane %v23, %v1518
  %v1521 = vunpack.c.l.s4 1983009808
  %v1522 = vunpack.c.0.s8 %v1521
  %v1523 = vlaneseq
  %v1524 = vshrl.u32 %v1523, 7
  %v1525 = vsub.s32 %v1522, %v1524
  %v1526 = vrot.slane %v1512, %v1525
  %v1527 = vcombine.high %v1519, %v1519
  %v1528 = vcombine.high %v1526, %v1526
  %v1529 = vcombine.high %v24, %v24
  %v1531 = vunpack.c.l.s4 1983009808
  %v1532 = vunpack.c.0.s8 %v1531
  %v1533 = vlaneseq
  %v1534 = vshrl.u32 %v1533, 7
  %v1535 = vsub.s32 %v1532, %v1534
  %v1536 = vrot.slane %v24, %v1535
  %v1538 = vunpack.c.l.s4 1983009808
  %v1539 = vunpack.c.0.s8 %v1538
  %v1540 = vlaneseq
  %v1541 = vshrl.u32 %v1540, 7
  %v1542 = vsub.s32 %v1539, %v1541
  %v1543 = vrot.slane %v1529, %v1542
  %v1544 = vcombine.high %v1536, %v1536
  %v1545 = vcombine.high %v1543, %v1543
  %v1546 = vcombine.high %v25, %v25
  %v1548 = vunpack.c.l.s4 1983009808
  %v1549 = vunpack.c.0.s8 %v1548
  %v1550 = vlaneseq
  %v1551 = vshrl.u32 %v1550, 7
  %v1552 = vsub.s32 %v1549, %v1551
  %v1553 = vrot.slane %v25, %v1552
  %v1555 = vunpack.c.l.s4 1983009808
  %v1556 = vunpack.c.0.s8 %v1555
  %v1557 = vlaneseq
  %v1558 = vshrl.u32 %v1557, 7
  %v1559 = vsub.s32 %v1556, %v1558
  %v1560 = vrot.slane %v1546, %v1559
  %v1561 = vcombine.high %v1553, %v1553
  %v1562 = vcombine.high %v1560, %v1560
  %v1563 = vcombine.high %v26, %v26
  %v1565 = vunpack.c.l.s4 1983009808
  %v1566 = vunpack.c.0.s8 %v1565
  %v1567 = vlaneseq
  %v1568 = vshrl.u32 %v1567, 7
  %v1569 = vsub.s32 %v1566, %v1568
  %v1570 = vrot.slane %v26, %v1569
  %v1572 = vunpack.c.l.s4 1983009808
  %v1573 = vunpack.c.0.s8 %v1572
  %v1574 = vlaneseq
  %v1575 = vshrl.u32 %v1574, 7
  %v1576 = vsub.s32 %v1573, %v1575
  %v1577 = vrot.slane %v1563, %v1576
  %v1578 = vcombine.high %v1570, %v1570
  %v1579 = vcombine.high %v1577, %v1577
  %v1580 = vcombine.high %v27, %v27
  %v1582 = vunpack.c.l.s4 1983009808
  %v1583 = vunpack.c.0.s8 %v1582
  %v1584 = vlaneseq
  %v1585 = vshrl.u32 %v1584, 7
  %v1586 = vsub.s32 %v1583, %v1585
  %v1587 = vrot.slane %v27, %v1586
  %v1589 = vunpack.c.l.s4 1983009808
  %v1590 = vunpack.c.0.s8 %v1589
  %v1591 = vlaneseq
  %v1592 = vshrl.u32 %v1591, 7
  %v1593 = vsub.s32 %v1590, %v1592
  %v1594 = vrot.slane %v1580, %v1593
  %v1595 = vcombine.high %v1587, %v1587
  %v1596 = vcombine.high %v1594, %v1594
  %v1597 = vcombine.high %v28, %v28
  %v1599 = vunpack.c.l.s4 1983009808
  %v1600 = vunpack.c.0.s8 %v1599
  %v1601 = vlaneseq
  %v1602 = vshrl.u32 %v1601, 7
  %v1603 = vsub.s32 %v1600, %v1602
  %v1604 = vrot.slane %v28, %v1603
  %v1606 = vunpack.c.l.s4 1983009808
  %v1607 = vunpack.c.0.s8 %v1606
  %v1608 = vlaneseq
  %v1609 = vshrl.u32 %v1608, 7
  %v1610 = vsub.s32 %v1607, %v1609
  %v1611 = vrot.slane %v1597, %v1610
  %v1612 = vcombine.high %v1604, %v1604
  %v1613 = vcombine.high %v1611, %v1611
  %v1614 = vcombine.high %v29, %v29
  %v1616 = vunpack.c.l.s4 1983009808
  %v1617 = vunpack.c.0.s8 %v1616
  %v1618 = vlaneseq
  %v1619 = vshrl.u32 %v1618, 7
  %v1620 = vsub.s32 %v1617, %v1619
  %v1621 = vrot.slane %v29, %v1620
  %v1623 = vunpack.c.l.s4 1983009808
  %v1624 = vunpack.c.0.s8 %v1623
  %v1625 = vlaneseq
  %v1626 = vshrl.u32 %v1625, 7
  %v1627 = vsub.s32 %v1624, %v1626
  %v1628 = vrot.slane %v1614, %v1627
  %v1629 = vcombine.high %v1621, %v1621
  %v1630 = vcombine.high %v1628, %v1628
  %v1631 = vcombine.high %v30, %v30
  %v1633 = vunpack.c.l.s4 1983009808
  %v1634 = vunpack.c.0.s8 %v1633
  %v1635 = vlaneseq
  %v1636 = vshrl.u32 %v1635, 7
  %v1637 = vsub.s32 %v1634, %v1636
  %v1638 = vrot.slane %v30, %v1637
  %v1640 = vunpack.c.l.s4 1983009808
  %v1641 = vunpack.c.0.s8 %v1640
  %v1642 = vlaneseq
  %v1643 = vshrl.u32 %v1642, 7
  %v1644 = vsub.s32 %v1641, %v1643
  %v1645 = vrot.slane %v1631, %v1644
  %v1646 = vcombine.high %v1638, %v1638
  %v1647 = vcombine.high %v1645, %v1645
  %v1648 = vcombine.high %v31, %v31
  %v1650 = vunpack.c.l.s4 1983009808
  %v1651 = vunpack.c.0.s8 %v1650
  %v1652 = vlaneseq
  %v1653 = vshrl.u32 %v1652, 7
  %v1654 = vsub.s32 %v1651, %v1653
  %v1655 = vrot.slane %v31, %v1654
  %v1657 = vunpack.c.l.s4 1983009808
  %v1658 = vunpack.c.0.s8 %v1657
  %v1659 = vlaneseq
  %v1660 = vshrl.u32 %v1659, 7
  %v1661 = vsub.s32 %v1658, %v1660
  %v1662 = vrot.slane %v1648, %v1661
  %v1663 = vcombine.high %v1655, %v1655
  %v1664 = vcombine.high %v1662, %v1662
  %v1665 = vcombine.high %v32, %v32
  %v1667 = vunpack.c.l.s4 1983009808
  %v1668 = vunpack.c.0.s8 %v1667
  %v1669 = vlaneseq
  %v1670 = vshrl.u32 %v1669, 7
  %v1671 = vsub.s32 %v1668, %v1670
  %v1672 = vrot.slane %v32, %v1671
  %v1674 = vunpack.c.l.s4 1983009808
  %v1675 = vunpack.c.0.s8 %v1674
  %v1676 = vlaneseq
  %v1677 = vshrl.u32 %v1676, 7
  %v1678 = vsub.s32 %v1675, %v1677
  %v1679 = vrot.slane %v1665, %v1678
  %v1680 = vcombine.high %v1672, %v1672
  %v1681 = vcombine.high %v1679, %v1679
  %v1682 = vcombine.high %v33, %v33
  %v1684 = vunpack.c.l.s4 1983009808
  %v1685 = vunpack.c.0.s8 %v1684
  %v1686 = vlaneseq
  %v1687 = vshrl.u32 %v1686, 7
  %v1688 = vsub.s32 %v1685, %v1687
  %v1689 = vrot.slane %v33, %v1688
  %v1691 = vunpack.c.l.s4 1983009808
  %v1692 = vunpack.c.0.s8 %v1691
  %v1693 = vlaneseq
  %v1694 = vshrl.u32 %v1693, 7
  %v1695 = vsub.s32 %v1692, %v1694
  %v1696 = vrot.slane %v1682, %v1695
  %v1697 = vcombine.high %v1689, %v1689
  %v1698 = vcombine.high %v1696, %v1696
  %v1700 = vunpack.c.l.s4 1983009808
  %v1701 = vunpack.c.0.s8 %v1700
  %v1702 = vlaneseq
  %v1703 = vshrl.u32 %v1702, 7
  %v1704 = vsub.s32 %v1701, %v1703
  %v1705 = vrot.slane %v34, %v1704
  %1787 = vmatprep.subr.mxu0 0.0
  %1788 = vmatpush1.msra.mxu0 %v35
  %1789 = vmatprep.subr.mxu0 0.0
  %1790 = vmatpush1.msra.mxu0 %v36
  %1791 = vmatprep.subr.mxu0 0.0
  %1792 = vmatpush1.msra.mxu0 %v37
  %1793 = vmatprep.subr.mxu0 0.0
  %1794 = vmatpush1.msra.mxu0 %v38
  %1795 = vmatprep.subr.mxu0 0.0
  %1796 = vmatpush1.msra.mxu0 %v39
  %1797 = vmatprep.subr.mxu0 0.0
  %1798 = vmatpush1.msra.mxu0 %v40
  %1799 = vmatprep.subr.mxu0 0.0
  %1800 = vmatpush1.msra.mxu0 %v41
  %1801 = vmatprep.subr.mxu0 0.0
  %1802 = vmatpush1.msra.mxu0 %v42
  %1803 = vmatprep.subr.mxu0 0.0
  %1804 = vmatpush1.msra.mxu0 %v43
  %1805 = vmatprep.subr.mxu0 0.0
  %1806 = vmatpush1.msra.mxu0 %v44
  %1807 = vmatprep.subr.mxu0 0.0
  %1808 = vmatpush1.msra.mxu0 %v45
  %1809 = vmatprep.subr.mxu0 0.0
  %1810 = vmatpush1.msra.mxu0 %v46
  %1811 = vmatprep.subr.mxu0 0.0
  %1812 = vmatpush1.msra.mxu0 %v47
  %1813 = vmatprep.subr.mxu0 0.0
  %1814 = vmatpush1.msra.mxu0 %v48
  %1815 = vmatprep.subr.mxu0 0.0
  %1816 = vmatpush1.msra.mxu0 %v49
  %1817 = vmatprep.subr.mxu0 0.0
  %1818 = vmatpush1.msra.mxu0 %v50
  %1819 = vmatprep.subr.mxu0 0.0
  %1820 = vmatpush1.msra.mxu0 %v51
  %1821 = vmatprep.subr.mxu0 0.0
  %1822 = vmatpush1.msra.mxu0 %v52
  %1823 = vmatprep.subr.mxu0 0.0
  %1824 = vmatpush1.msra.mxu0 %v53
  %1825 = vmatprep.subr.mxu0 0.0
  %1826 = vmatpush1.msra.mxu0 %v54
  %1827 = vmatprep.subr.mxu0 0.0
  %1828 = vmatpush1.msra.mxu0 %v55
  %1829 = vmatprep.subr.mxu0 0.0
  %1830 = vmatpush1.msra.mxu0 %v56
  %1831 = vmatprep.subr.mxu0 0.0
  %1832 = vmatpush1.msra.mxu0 %v57
  %1833 = vmatprep.subr.mxu0 0.0
  %1834 = vmatpush1.msra.mxu0 %v58
  %1835 = vmatprep.subr.mxu0 0.0
  %1836 = vmatpush1.msra.mxu0 %v59
  %1837 = vmatprep.subr.mxu0 0.0
  %1838 = vmatpush1.msra.mxu0 %v60
  %1839 = vmatprep.subr.mxu0 0.0
  %1840 = vmatpush1.msra.mxu0 %v61
  %1841 = vmatprep.subr.mxu0 0.0
  %1842 = vmatpush1.msra.mxu0 %v62
  %1843 = vmatprep.subr.mxu0 0.0
  %1844 = vmatpush1.msra.mxu0 %v63
  %1845 = vmatprep.subr.mxu0 0.0
  %1846 = vmatpush1.msra.mxu0 %v64
  %1847 = vmatprep.subr.mxu0 0.0
  %1848 = vmatpush1.msra.mxu0 %v65
  %1849 = vmatprep.subr.mxu0 0.0
  %1850 = vmatpush1.msra.mxu0 %v66
  %1851 = vmatprep.mubr.f32.mxu0 %v1374
  %1852 = vmatmul.mubr.f32.gmra.mrb[0].mxu0 %v1366
  %v1853 = vpop.f32.mrb[0].mxu0
  %v1854 = vadd.f32 %v1336, %v1853
  %v1855 = vpop.f32.mrb[0].mxu0
  %1856 = vdwg.mxu0
  %1857 = vmatprep.subr.mxu0 0.0
  %1858 = vmatpush1.msra.mxu0 %v67
  %1859 = vmatprep.subr.mxu0 0.0
  %1860 = vmatpush1.msra.mxu0 %v68
  %1861 = vmatprep.subr.mxu0 0.0
  %1862 = vmatpush1.msra.mxu0 %v69
  %1863 = vmatprep.subr.mxu0 0.0
  %1864 = vmatpush1.msra.mxu0 %v70
  %1865 = vmatprep.subr.mxu0 0.0
  %1866 = vmatpush1.msra.mxu0 %v71
  %1867 = vmatprep.subr.mxu0 0.0
  %1868 = vmatpush1.msra.mxu0 %v72
  %1869 = vmatprep.subr.mxu0 0.0
  %1870 = vmatpush1.msra.mxu0 %v73
  %1871 = vmatprep.subr.mxu0 0.0
  %1872 = vmatpush1.msra.mxu0 %v74
  %1873 = vmatprep.subr.mxu0 0.0
  %1874 = vmatpush1.msra.mxu0 %v75
  %1875 = vmatprep.subr.mxu0 0.0
  %1876 = vmatpush1.msra.mxu0 %v76
  %1877 = vmatprep.subr.mxu0 0.0
  %1878 = vmatpush1.msra.mxu0 %v77
  %1879 = vmatprep.subr.mxu0 0.0
  %1880 = vmatpush1.msra.mxu0 %v78
  %1881 = vmatprep.subr.mxu0 0.0
  %1882 = vmatpush1.msra.mxu0 %v79
  %1883 = vmatprep.subr.mxu0 0.0
  %1884 = vmatpush1.msra.mxu0 %v80
  %1885 = vmatprep.subr.mxu0 0.0
  %1886 = vmatpush1.msra.mxu0 %v81
  %1887 = vmatprep.subr.mxu0 0.0
  %1888 = vmatpush1.msra.mxu0 %v82
  %1889 = vmatprep.subr.mxu0 0.0
  %1890 = vmatpush1.msra.mxu0 %v83
  %1891 = vmatprep.subr.mxu0 0.0
  %1892 = vmatpush1.msra.mxu0 %v84
  %1893 = vmatprep.subr.mxu0 0.0
  %1894 = vmatpush1.msra.mxu0 %v85
  %1895 = vmatprep.subr.mxu0 0.0
  %1896 = vmatpush1.msra.mxu0 %v86
  %1897 = vmatprep.subr.mxu0 0.0
  %1898 = vmatpush1.msra.mxu0 %v87
  %1899 = vmatprep.subr.mxu0 0.0
  %1900 = vmatpush1.msra.mxu0 %v88
  %1901 = vmatprep.subr.mxu0 0.0
  %1902 = vmatpush1.msra.mxu0 %v89
  %1903 = vmatprep.subr.mxu0 0.0
  %1904 = vmatpush1.msra.mxu0 %v90
  %1905 = vmatprep.subr.mxu0 0.0
  %1906 = vmatpush1.msra.mxu0 %v91
  %1907 = vmatprep.subr.mxu0 0.0
  %1908 = vmatpush1.msra.mxu0 %v92
  %1909 = vmatprep.subr.mxu0 0.0
  %1910 = vmatpush1.msra.mxu0 %v93
  %1911 = vmatprep.subr.mxu0 0.0
  %1912 = vmatpush1.msra.mxu0 %v94
  %1913 = vmatprep.subr.mxu0 0.0
  %1914 = vmatpush1.msra.mxu0 %v95
  %1915 = vmatprep.subr.mxu0 0.0
  %1916 = vmatpush1.msra.mxu0 %v96
  %1917 = vmatprep.subr.mxu0 0.0
  %1918 = vmatpush1.msra.mxu0 %v97
  %1919 = vmatprep.subr.mxu0 0.0
  %1920 = vmatpush1.msra.mxu0 %v98
  %1921 = vmatprep.mubr.f32.mxu0 %v1375
  %1922 = vmatmul.mubr.f32.gmra.mrb[0].mxu0 %v1373
  %v1923 = vpop.f32.mrb[0].mxu0
  %v1924 = vadd.f32 %v1854, %v1923
  %v1925 = vpop.f32.mrb[0].mxu0
  %1926 = vdwg.mxu0
  %1927 = vmatprep.subr.mxu0 0.0
  %1928 = vmatpush1.msra.mxu0 %v99
  %1929 = vmatprep.subr.mxu0 0.0
  %1930 = vmatpush1.msra.mxu0 %v100
  %1931 = vmatprep.subr.mxu0 0.0
  %1932 = vmatpush1.msra.mxu0 %v101
  %1933 = vmatprep.subr.mxu0 0.0
  %1934 = vmatpush1.msra.mxu0 %v102
  %1935 = vmatprep.subr.mxu0 0.0
  %1936 = vmatpush1.msra.mxu0 %v103
  %1937 = vmatprep.subr.mxu0 0.0
  %1938 = vmatpush1.msra.mxu0 %v104
  %1939 = vmatprep.subr.mxu0 0.0
  %1940 = vmatpush1.msra.mxu0 %v105
  %1941 = vmatprep.subr.mxu0 0.0
  %1942 = vmatpush1.msra.mxu0 %v106
  %1943 = vmatprep.subr.mxu0 0.0
  %1944 = vmatpush1.msra.mxu0 %v107
  %1945 = vmatprep.subr.mxu0 0.0
  %1946 = vmatpush1.msra.mxu0 %v108
  %1947 = vmatprep.subr.mxu0 0.0
  %1948 = vmatpush1.msra.mxu0 %v109
  %1949 = vmatprep.subr.mxu0 0.0
  %1950 = vmatpush1.msra.mxu0 %v110
  %1951 = vmatprep.subr.mxu0 0.0
  %1952 = vmatpush1.msra.mxu0 %v111
  %1953 = vmatprep.subr.mxu0 0.0
  %1954 = vmatpush1.msra.mxu0 %v112
  %1955 = vmatprep.subr.mxu0 0.0
  %1956 = vmatpush1.msra.mxu0 %v113
  %1957 = vmatprep.subr.mxu0 0.0
  %1958 = vmatpush1.msra.mxu0 %v114
  %1959 = vmatprep.subr.mxu0 0.0
  %1960 = vmatpush1.msra.mxu0 %v115
  %1961 = vmatprep.subr.mxu0 0.0
  %1962 = vmatpush1.msra.mxu0 %v116
  %1963 = vmatprep.subr.mxu0 0.0
  %1964 = vmatpush1.msra.mxu0 %v117
  %1965 = vmatprep.subr.mxu0 0.0
  %1966 = vmatpush1.msra.mxu0 %v118
  %1967 = vmatprep.subr.mxu0 0.0
  %1968 = vmatpush1.msra.mxu0 %v119
  %1969 = vmatprep.subr.mxu0 0.0
  %1970 = vmatpush1.msra.mxu0 %v120
  %1971 = vmatprep.subr.mxu0 0.0
  %1972 = vmatpush1.msra.mxu0 %v121
  %1973 = vmatprep.subr.mxu0 0.0
  %1974 = vmatpush1.msra.mxu0 %v122
  %1975 = vmatprep.subr.mxu0 0.0
  %1976 = vmatpush1.msra.mxu0 %v123
  %1977 = vmatprep.subr.mxu0 0.0
  %1978 = vmatpush1.msra.mxu0 %v124
  %1979 = vmatprep.subr.mxu0 0.0
  %1980 = vmatpush1.msra.mxu0 %v125
  %1981 = vmatprep.subr.mxu0 0.0
  %1982 = vmatpush1.msra.mxu0 %v126
  %1983 = vmatprep.subr.mxu0 0.0
  %1984 = vmatpush1.msra.mxu0 %v127
  %1985 = vmatprep.subr.mxu0 0.0
  %1986 = vmatpush1.msra.mxu0 %v128
  %1987 = vmatprep.subr.mxu0 0.0
  %1988 = vmatpush1.msra.mxu0 %v129
  %1989 = vmatprep.subr.mxu0 0.0
  %1990 = vmatpush1.msra.mxu0 %v130
  %1991 = vmatprep.mubr.f32.mxu0 %v1391
  %1992 = vmatmul.mubr.f32.gmra.mrb[0].mxu0 %v1383
  %v1993 = vpop.f32.mrb[0].mxu0
  %v1994 = vadd.f32 %v1924, %v1993
  %v1995 = vpop.f32.mrb[0].mxu0
  %1996 = vdwg.mxu0
  %1997 = vmatprep.subr.mxu0 0.0
  %1998 = vmatpush1.msra.mxu0 %v131
  %1999 = vmatprep.subr.mxu0 0.0
  %2000 = vmatpush1.msra.mxu0 %v132
  %2001 = vmatprep.subr.mxu0 0.0
  %2002 = vmatpush1.msra.mxu0 %v133
  %2003 = vmatprep.subr.mxu0 0.0
  %2004 = vmatpush1.msra.mxu0 %v134
  %2005 = vmatprep.subr.mxu0 0.0
  %2006 = vmatpush1.msra.mxu0 %v135
  %2007 = vmatprep.subr.mxu0 0.0
  %2008 = vmatpush1.msra.mxu0 %v136
  %2009 = vmatprep.subr.mxu0 0.0
  %2010 = vmatpush1.msra.mxu0 %v137
  %2011 = vmatprep.subr.mxu0 0.0
  %2012 = vmatpush1.msra.mxu0 %v138
  %2013 = vmatprep.subr.mxu0 0.0
  %2014 = vmatpush1.msra.mxu0 %v139
  %2015 = vmatprep.subr.mxu0 0.0
  %2016 = vmatpush1.msra.mxu0 %v140
  %2017 = vmatprep.subr.mxu0 0.0
  %2018 = vmatpush1.msra.mxu0 %v141
  %2019 = vmatprep.subr.mxu0 0.0
  %2020 = vmatpush1.msra.mxu0 %v142
  %2021 = vmatprep.subr.mxu0 0.0
  %2022 = vmatpush1.msra.mxu0 %v143
  %2023 = vmatprep.subr.mxu0 0.0
  %2024 = vmatpush1.msra.mxu0 %v144
  %2025 = vmatprep.subr.mxu0 0.0
  %2026 = vmatpush1.msra.mxu0 %v145
  %2027 = vmatprep.subr.mxu0 0.0
  %2028 = vmatpush1.msra.mxu0 %v146
  %2029 = vmatprep.subr.mxu0 0.0
  %2030 = vmatpush1.msra.mxu0 %v147
  %2031 = vmatprep.subr.mxu0 0.0
  %2032 = vmatpush1.msra.mxu0 %v148
  %2033 = vmatprep.subr.mxu0 0.0
  %2034 = vmatpush1.msra.mxu0 %v149
  %2035 = vmatprep.subr.mxu0 0.0
  %2036 = vmatpush1.msra.mxu0 %v150
  %2037 = vmatprep.subr.mxu0 0.0
  %2038 = vmatpush1.msra.mxu0 %v151
  %2039 = vmatprep.subr.mxu0 0.0
  %2040 = vmatpush1.msra.mxu0 %v152
  %2041 = vmatprep.subr.mxu0 0.0
  %2042 = vmatpush1.msra.mxu0 %v153
  %2043 = vmatprep.subr.mxu0 0.0
  %2044 = vmatpush1.msra.mxu0 %v154
  %2045 = vmatprep.subr.mxu0 0.0
  %2046 = vmatpush1.msra.mxu0 %v155
  %2047 = vmatprep.subr.mxu0 0.0
  %2048 = vmatpush1.msra.mxu0 %v156
  %2049 = vmatprep.subr.mxu0 0.0
  %2050 = vmatpush1.msra.mxu0 %v157
  %2051 = vmatprep.subr.mxu0 0.0
  %2052 = vmatpush1.msra.mxu0 %v158
  %2053 = vmatprep.subr.mxu0 0.0
  %2054 = vmatpush1.msra.mxu0 %v159
  %2055 = vmatprep.subr.mxu0 0.0
  %2056 = vmatpush1.msra.mxu0 %v160
  %2057 = vmatprep.subr.mxu0 0.0
  %2058 = vmatpush1.msra.mxu0 %v161
  %2059 = vmatprep.subr.mxu0 0.0
  %2060 = vmatpush1.msra.mxu0 %v162
  %2061 = vmatprep.mubr.f32.mxu0 %v1392
  %2062 = vmatmul.mubr.f32.gmra.mrb[0].mxu0 %v1390
  %v2063 = vpop.f32.mrb[0].mxu0
  %v2064 = vadd.f32 %v1994, %v2063
  %v2065 = vpop.f32.mrb[0].mxu0
  %2066 = vdwg.mxu0
  %2067 = vmatprep.subr.mxu0 0.0
  %2068 = vmatpush1.msra.mxu0 %v163
  %2069 = vmatprep.subr.mxu0 0.0
  %2070 = vmatpush1.msra.mxu0 %v164
  %2071 = vmatprep.subr.mxu0 0.0
  %2072 = vmatpush1.msra.mxu0 %v165
  %2073 = vmatprep.subr.mxu0 0.0
  %2074 = vmatpush1.msra.mxu0 %v166
  %2075 = vmatprep.subr.mxu0 0.0
  %2076 = vmatpush1.msra.mxu0 %v167
  %2077 = vmatprep.subr.mxu0 0.0
  %2078 = vmatpush1.msra.mxu0 %v168
  %2079 = vmatprep.subr.mxu0 0.0
  %2080 = vmatpush1.msra.mxu0 %v169
  %2081 = vmatprep.subr.mxu0 0.0
  %2082 = vmatpush1.msra.mxu0 %v170
  %2083 = vmatprep.subr.mxu0 0.0
  %2084 = vmatpush1.msra.mxu0 %v171
  %2085 = vmatprep.subr.mxu0 0.0
  %2086 = vmatpush1.msra.mxu0 %v172
  %2087 = vmatprep.subr.mxu0 0.0
  %2088 = vmatpush1.msra.mxu0 %v173
  %2089 = vmatprep.subr.mxu0 0.0
  %2090 = vmatpush1.msra.mxu0 %v174
  %2091 = vmatprep.subr.mxu0 0.0
  %2092 = vmatpush1.msra.mxu0 %v175
  %2093 = vmatprep.subr.mxu0 0.0
  %2094 = vmatpush1.msra.mxu0 %v176
  %2095 = vmatprep.subr.mxu0 0.0
  %2096 = vmatpush1.msra.mxu0 %v177
  %2097 = vmatprep.subr.mxu0 0.0
  %2098 = vmatpush1.msra.mxu0 %v178
  %2099 = vmatprep.subr.mxu0 0.0
  %2100 = vmatpush1.msra.mxu0 %v179
  %2101 = vmatprep.subr.mxu0 0.0
  %2102 = vmatpush1.msra.mxu0 %v180
  %2103 = vmatprep.subr.mxu0 0.0
  %2104 = vmatpush1.msra.mxu0 %v181
  %2105 = vmatprep.subr.mxu0 0.0
  %2106 = vmatpush1.msra.mxu0 %v182
  %2107 = vmatprep.subr.mxu0 0.0
  %2108 = vmatpush1.msra.mxu0 %v183
  %2109 = vmatprep.subr.mxu0 0.0
  %2110 = vmatpush1.msra.mxu0 %v184
  %2111 = vmatprep.subr.mxu0 0.0
  %2112 = vmatpush1.msra.mxu0 %v185
  %2113 = vmatprep.subr.mxu0 0.0
  %2114 = vmatpush1.msra.mxu0 %v186
  %2115 = vmatprep.subr.mxu0 0.0
  %2116 = vmatpush1.msra.mxu0 %v187
  %2117 = vmatprep.subr.mxu0 0.0
  %2118 = vmatpush1.msra.mxu0 %v188
  %2119 = vmatprep.subr.mxu0 0.0
  %2120 = vmatpush1.msra.mxu0 %v189
  %2121 = vmatprep.subr.mxu0 0.0
  %2122 = vmatpush1.msra.mxu0 %v190
  %2123 = vmatprep.subr.mxu0 0.0
  %2124 = vmatpush1.msra.mxu0 %v191
  %2125 = vmatprep.subr.mxu0 0.0
  %2126 = vmatpush1.msra.mxu0 %v192
  %2127 = vmatprep.subr.mxu0 0.0
  %2128 = vmatpush1.msra.mxu0 %v193
  %2129 = vmatprep.subr.mxu0 0.0
  %2130 = vmatpush1.msra.mxu0 %v194
  %2131 = vmatprep.mubr.f32.mxu0 %v1408
  %2132 = vmatmul.mubr.f32.gmra.mrb[0].mxu0 %v1400
  %v2133 = vpop.f32.mrb[0].mxu0
  %v2134 = vadd.f32 %v2064, %v2133
  %v2135 = vpop.f32.mrb[0].mxu0
  %2136 = vdwg.mxu0
  %2137 = vmatprep.subr.mxu0 0.0
  %2138 = vmatpush1.msra.mxu0 %v195
  %2139 = vmatprep.subr.mxu0 0.0
  %2140 = vmatpush1.msra.mxu0 %v196
  %2141 = vmatprep.subr.mxu0 0.0
  %2142 = vmatpush1.msra.mxu0 %v197
  %2143 = vmatprep.subr.mxu0 0.0
  %2144 = vmatpush1.msra.mxu0 %v198
  %2145 = vmatprep.subr.mxu0 0.0
  %2146 = vmatpush1.msra.mxu0 %v199
  %2147 = vmatprep.subr.mxu0 0.0
  %2148 = vmatpush1.msra.mxu0 %v200
  %2149 = vmatprep.subr.mxu0 0.0
  %2150 = vmatpush1.msra.mxu0 %v201
  %2151 = vmatprep.subr.mxu0 0.0
  %2152 = vmatpush1.msra.mxu0 %v202
  %2153 = vmatprep.subr.mxu0 0.0
  %2154 = vmatpush1.msra.mxu0 %v203
  %2155 = vmatprep.subr.mxu0 0.0
  %2156 = vmatpush1.msra.mxu0 %v204
  %2157 = vmatprep.subr.mxu0 0.0
  %2158 = vmatpush1.msra.mxu0 %v205
  %2159 = vmatprep.subr.mxu0 0.0
  %2160 = vmatpush1.msra.mxu0 %v206
  %2161 = vmatprep.subr.mxu0 0.0
  %2162 = vmatpush1.msra.mxu0 %v207
  %2163 = vmatprep.subr.mxu0 0.0
  %2164 = vmatpush1.msra.mxu0 %v208
  %2165 = vmatprep.subr.mxu0 0.0
  %2166 = vmatpush1.msra.mxu0 %v209
  %2167 = vmatprep.subr.mxu0 0.0
  %2168 = vmatpush1.msra.mxu0 %v210
  %2169 = vmatprep.subr.mxu0 0.0
  %2170 = vmatpush1.msra.mxu0 %v211
  %2171 = vmatprep.subr.mxu0 0.0
  %2172 = vmatpush1.msra.mxu0 %v212
  %2173 = vmatprep.subr.mxu0 0.0
  %2174 = vmatpush1.msra.mxu0 %v213
  %2175 = vmatprep.subr.mxu0 0.0
  %2176 = vmatpush1.msra.mxu0 %v214
  %2177 = vmatprep.subr.mxu0 0.0
  %2178 = vmatpush1.msra.mxu0 %v215
  %2179 = vmatprep.subr.mxu0 0.0
  %2180 = vmatpush1.msra.mxu0 %v216
  %2181 = vmatprep.subr.mxu0 0.0
  %2182 = vmatpush1.msra.mxu0 %v217
  %2183 = vmatprep.subr.mxu0 0.0
  %2184 = vmatpush1.msra.mxu0 %v218
  %2185 = vmatprep.subr.mxu0 0.0
  %2186 = vmatpush1.msra.mxu0 %v219
  %2187 = vmatprep.subr.mxu0 0.0
  %2188 = vmatpush1.msra.mxu0 %v220
  %2189 = vmatprep.subr.mxu0 0.0
  %2190 = vmatpush1.msra.mxu0 %v221
  %2191 = vmatprep.subr.mxu0 0.0
  %2192 = vmatpush1.msra.mxu0 %v222
  %2193 = vmatprep.subr.mxu0 0.0
  %2194 = vmatpush1.msra.mxu0 %v223
  %2195 = vmatprep.subr.mxu0 0.0
  %2196 = vmatpush1.msra.mxu0 %v224
  %2197 = vmatprep.subr.mxu0 0.0
  %2198 = vmatpush1.msra.mxu0 %v225
  %2199 = vmatprep.subr.mxu0 0.0
  %2200 = vmatpush1.msra.mxu0 %v226
  %2201 = vmatprep.mubr.f32.mxu0 %v1409
  %2202 = vmatmul.mubr.f32.gmra.mrb[0].mxu0 %v1407
  %v2203 = vpop.f32.mrb[0].mxu0
  %v2204 = vadd.f32 %v2134, %v2203
  %v2205 = vpop.f32.mrb[0].mxu0
  %2206 = vdwg.mxu0
  %2207 = vmatprep.subr.mxu0 0.0
  %2208 = vmatpush1.msra.mxu0 %v227
  %2209 = vmatprep.subr.mxu0 0.0
  %2210 = vmatpush1.msra.mxu0 %v228
  %2211 = vmatprep.subr.mxu0 0.0
  %2212 = vmatpush1.msra.mxu0 %v229
  %2213 = vmatprep.subr.mxu0 0.0
  %2214 = vmatpush1.msra.mxu0 %v230
  %2215 = vmatprep.subr.mxu0 0.0
  %2216 = vmatpush1.msra.mxu0 %v231
  %2217 = vmatprep.subr.mxu0 0.0
  %2218 = vmatpush1.msra.mxu0 %v232
  %2219 = vmatprep.subr.mxu0 0.0
  %2220 = vmatpush1.msra.mxu0 %v233
  %2221 = vmatprep.subr.mxu0 0.0
  %2222 = vmatpush1.msra.mxu0 %v234
  %2223 = vmatprep.subr.mxu0 0.0
  %2224 = vmatpush1.msra.mxu0 %v235
  %2225 = vmatprep.subr.mxu0 0.0
  %2226 = vmatpush1.msra.mxu0 %v236
  %2227 = vmatprep.subr.mxu0 0.0
  %2228 = vmatpush1.msra.mxu0 %v237
  %2229 = vmatprep.subr.mxu0 0.0
  %2230 = vmatpush1.msra.mxu0 %v238
  %2231 = vmatprep.subr.mxu0 0.0
  %2232 = vmatpush1.msra.mxu0 %v239
  %2233 = vmatprep.subr.mxu0 0.0
  %2234 = vmatpush1.msra.mxu0 %v240
  %2235 = vmatprep.subr.mxu0 0.0
  %2236 = vmatpush1.msra.mxu0 %v241
  %2237 = vmatprep.subr.mxu0 0.0
  %2238 = vmatpush1.msra.mxu0 %v242
  %2239 = vmatprep.subr.mxu0 0.0
  %2240 = vmatpush1.msra.mxu0 %v243
  %2241 = vmatprep.subr.mxu0 0.0
  %2242 = vmatpush1.msra.mxu0 %v244
  %2243 = vmatprep.subr.mxu0 0.0
  %2244 = vmatpush1.msra.mxu0 %v245
  %2245 = vmatprep.subr.mxu0 0.0
  %2246 = vmatpush1.msra.mxu0 %v246
  %2247 = vmatprep.subr.mxu0 0.0
  %2248 = vmatpush1.msra.mxu0 %v247
  %2249 = vmatprep.subr.mxu0 0.0
  %2250 = vmatpush1.msra.mxu0 %v248
  %2251 = vmatprep.subr.mxu0 0.0
  %2252 = vmatpush1.msra.mxu0 %v249
  %2253 = vmatprep.subr.mxu0 0.0
  %2254 = vmatpush1.msra.mxu0 %v250
  %2255 = vmatprep.subr.mxu0 0.0
  %2256 = vmatpush1.msra.mxu0 %v251
  %2257 = vmatprep.subr.mxu0 0.0
  %2258 = vmatpush1.msra.mxu0 %v252
  %2259 = vmatprep.subr.mxu0 0.0
  %2260 = vmatpush1.msra.mxu0 %v253
  %2261 = vmatprep.subr.mxu0 0.0
  %2262 = vmatpush1.msra.mxu0 %v254
  %2263 = vmatprep.subr.mxu0 0.0
  %2264 = vmatpush1.msra.mxu0 %v255
  %2265 = vmatprep.subr.mxu0 0.0
  %2266 = vmatpush1.msra.mxu0 %v256
  %2267 = vmatprep.subr.mxu0 0.0
  %2268 = vmatpush1.msra.mxu0 %v257
  %2269 = vmatprep.subr.mxu0 0.0
  %2270 = vmatpush1.msra.mxu0 %v258
  %2271 = vmatprep.mubr.f32.mxu0 %v1425
  %2272 = vmatmul.mubr.f32.gmra.mrb[0].mxu0 %v1417
  %v2273 = vpop.f32.mrb[0].mxu0
  %v2274 = vadd.f32 %v2204, %v2273
  %v2275 = vpop.f32.mrb[0].mxu0
  %2276 = vdwg.mxu0
  %2277 = vmatprep.subr.mxu0 0.0
  %2278 = vmatpush1.msra.mxu0 %v259
  %2279 = vmatprep.subr.mxu0 0.0
  %2280 = vmatpush1.msra.mxu0 %v260
  %2281 = vmatprep.subr.mxu0 0.0
  %2282 = vmatpush1.msra.mxu0 %v261
  %2283 = vmatprep.subr.mxu0 0.0
  %2284 = vmatpush1.msra.mxu0 %v262
  %2285 = vmatprep.subr.mxu0 0.0
  %2286 = vmatpush1.msra.mxu0 %v263
  %2287 = vmatprep.subr.mxu0 0.0
  %2288 = vmatpush1.msra.mxu0 %v264
  %2289 = vmatprep.subr.mxu0 0.0
  %2290 = vmatpush1.msra.mxu0 %v265
  %2291 = vmatprep.subr.mxu0 0.0
  %2292 = vmatpush1.msra.mxu0 %v266
  %2293 = vmatprep.subr.mxu0 0.0
  %2294 = vmatpush1.msra.mxu0 %v267
  %2295 = vmatprep.subr.mxu0 0.0
  %2296 = vmatpush1.msra.mxu0 %v268
  %2297 = vmatprep.subr.mxu0 0.0
  %2298 = vmatpush1.msra.mxu0 %v269
  %2299 = vmatprep.subr.mxu0 0.0
  %2300 = vmatpush1.msra.mxu0 %v270
  %2301 = vmatprep.subr.mxu0 0.0
  %2302 = vmatpush1.msra.mxu0 %v271
  %2303 = vmatprep.subr.mxu0 0.0
  %2304 = vmatpush1.msra.mxu0 %v272
  %2305 = vmatprep.subr.mxu0 0.0
  %2306 = vmatpush1.msra.mxu0 %v273
  %2307 = vmatprep.subr.mxu0 0.0
  %2308 = vmatpush1.msra.mxu0 %v274
  %2309 = vmatprep.subr.mxu0 0.0
  %2310 = vmatpush1.msra.mxu0 %v275
  %2311 = vmatprep.subr.mxu0 0.0
  %2312 = vmatpush1.msra.mxu0 %v276
  %2313 = vmatprep.subr.mxu0 0.0
  %2314 = vmatpush1.msra.mxu0 %v277
  %2315 = vmatprep.subr.mxu0 0.0
  %2316 = vmatpush1.msra.mxu0 %v278
  %2317 = vmatprep.subr.mxu0 0.0
  %2318 = vmatpush1.msra.mxu0 %v279
  %2319 = vmatprep.subr.mxu0 0.0
  %2320 = vmatpush1.msra.mxu0 %v280
  %2321 = vmatprep.subr.mxu0 0.0
  %2322 = vmatpush1.msra.mxu0 %v281
  %2323 = vmatprep.subr.mxu0 0.0
  %2324 = vmatpush1.msra.mxu0 %v282
  %2325 = vmatprep.subr.mxu0 0.0
  %2326 = vmatpush1.msra.mxu0 %v283
  %2327 = vmatprep.subr.mxu0 0.0
  %2328 = vmatpush1.msra.mxu0 %v284
  %2329 = vmatprep.subr.mxu0 0.0
  %2330 = vmatpush1.msra.mxu0 %v285
  %2331 = vmatprep.subr.mxu0 0.0
  %2332 = vmatpush1.msra.mxu0 %v286
  %2333 = vmatprep.subr.mxu0 0.0
  %2334 = vmatpush1.msra.mxu0 %v287
  %2335 = vmatprep.subr.mxu0 0.0
  %2336 = vmatpush1.msra.mxu0 %v288
  %2337 = vmatprep.subr.mxu0 0.0
  %2338 = vmatpush1.msra.mxu0 %v289
  %2339 = vmatprep.subr.mxu0 0.0
  %2340 = vmatpush1.msra.mxu0 %v290
  %2341 = vmatprep.mubr.f32.mxu0 %v1426
  %2342 = vmatmul.mubr.f32.gmra.mrb[0].mxu0 %v1424
  %v2343 = vpop.f32.mrb[0].mxu0
  %v2344 = vadd.f32 %v2274, %v2343
  %v2345 = vpop.f32.mrb[0].mxu0
  %2346 = vdwg.mxu0
  %2347 = vmatprep.subr.mxu0 0.0
  %2348 = vmatpush1.msra.mxu0 %v291
  %2349 = vmatprep.subr.mxu0 0.0
  %2350 = vmatpush1.msra.mxu0 %v292
  %2351 = vmatprep.subr.mxu0 0.0
  %2352 = vmatpush1.msra.mxu0 %v293
  %2353 = vmatprep.subr.mxu0 0.0
  %2354 = vmatpush1.msra.mxu0 %v294
  %2355 = vmatprep.subr.mxu0 0.0
  %2356 = vmatpush1.msra.mxu0 %v295
  %2357 = vmatprep.subr.mxu0 0.0
  %2358 = vmatpush1.msra.mxu0 %v296
  %2359 = vmatprep.subr.mxu0 0.0
  %2360 = vmatpush1.msra.mxu0 %v297
  %2361 = vmatprep.subr.mxu0 0.0
  %2362 = vmatpush1.msra.mxu0 %v298
  %2363 = vmatprep.subr.mxu0 0.0
  %2364 = vmatpush1.msra.mxu0 %v299
  %2365 = vmatprep.subr.mxu0 0.0
  %2366 = vmatpush1.msra.mxu0 %v300
  %2367 = vmatprep.subr.mxu0 0.0
  %2368 = vmatpush1.msra.mxu0 %v301
  %2369 = vmatprep.subr.mxu0 0.0
  %2370 = vmatpush1.msra.mxu0 %v302
  %2371 = vmatprep.subr.mxu0 0.0
  %2372 = vmatpush1.msra.mxu0 %v303
  %2373 = vmatprep.subr.mxu0 0.0
  %2374 = vmatpush1.msra.mxu0 %v304
  %2375 = vmatprep.subr.mxu0 0.0
  %2376 = vmatpush1.msra.mxu0 %v305
  %2377 = vmatprep.subr.mxu0 0.0
  %2378 = vmatpush1.msra.mxu0 %v306
  %2379 = vmatprep.subr.mxu0 0.0
  %2380 = vmatpush1.msra.mxu0 %v307
  %2381 = vmatprep.subr.mxu0 0.0
  %2382 = vmatpush1.msra.mxu0 %v308
  %2383 = vmatprep.subr.mxu0 0.0
  %2384 = vmatpush1.msra.mxu0 %v309
  %2385 = vmatprep.subr.mxu0 0.0
  %2386 = vmatpush1.msra.mxu0 %v310
  %2387 = vmatprep.subr.mxu0 0.0
  %2388 = vmatpush1.msra.mxu0 %v311
  %2389 = vmatprep.subr.mxu0 0.0
  %2390 = vmatpush1.msra.mxu0 %v312
  %2391 = vmatprep.subr.mxu0 0.0
  %2392 = vmatpush1.msra.mxu0 %v313
  %2393 = vmatprep.subr.mxu0 0.0
  %2394 = vmatpush1.msra.mxu0 %v314
  %2395 = vmatprep.subr.mxu0 0.0
  %2396 = vmatpush1.msra.mxu0 %v315
  %2397 = vmatprep.subr.mxu0 0.0
  %2398 = vmatpush1.msra.mxu0 %v316
  %2399 = vmatprep.subr.mxu0 0.0
  %2400 = vmatpush1.msra.mxu0 %v317
  %2401 = vmatprep.subr.mxu0 0.0
  %2402 = vmatpush1.msra.mxu0 %v318
  %2403 = vmatprep.subr.mxu0 0.0
  %2404 = vmatpush1.msra.mxu0 %v319
  %2405 = vmatprep.subr.mxu0 0.0
  %2406 = vmatpush1.msra.mxu0 %v320
  %2407 = vmatprep.subr.mxu0 0.0
  %2408 = vmatpush1.msra.mxu0 %v321
  %2409 = vmatprep.subr.mxu0 0.0
  %2410 = vmatpush1.msra.mxu0 %v322
  %2411 = vmatprep.mubr.f32.mxu0 %v1442
  %2412 = vmatmul.mubr.f32.gmra.mrb[0].mxu0 %v1434
  %v2413 = vpop.f32.mrb[0].mxu0
  %v2414 = vadd.f32 %v2344, %v2413
  %v2415 = vpop.f32.mrb[0].mxu0
  %2416 = vdwg.mxu0
  %2417 = vmatprep.subr.mxu0 0.0
  %2418 = vmatpush1.msra.mxu0 %v323
  %2419 = vmatprep.subr.mxu0 0.0
  %2420 = vmatpush1.msra.mxu0 %v324
  %2421 = vmatprep.subr.mxu0 0.0
  %2422 = vmatpush1.msra.mxu0 %v325
  %2423 = vmatprep.subr.mxu0 0.0
  %2424 = vmatpush1.msra.mxu0 %v326
  %2425 = vmatprep.subr.mxu0 0.0
  %2426 = vmatpush1.msra.mxu0 %v327
  %2427 = vmatprep.subr.mxu0 0.0
  %2428 = vmatpush1.msra.mxu0 %v328
  %2429 = vmatprep.subr.mxu0 0.0
  %2430 = vmatpush1.msra.mxu0 %v329
  %2431 = vmatprep.subr.mxu0 0.0
  %2432 = vmatpush1.msra.mxu0 %v330
  %2433 = vmatprep.subr.mxu0 0.0
  %2434 = vmatpush1.msra.mxu0 %v331
  %2435 = vmatprep.subr.mxu0 0.0
  %2436 = vmatpush1.msra.mxu0 %v332
  %2437 = vmatprep.subr.mxu0 0.0
  %2438 = vmatpush1.msra.mxu0 %v333
  %2439 = vmatprep.subr.mxu0 0.0
  %2440 = vmatpush1.msra.mxu0 %v334
  %2441 = vmatprep.subr.mxu0 0.0
  %2442 = vmatpush1.msra.mxu0 %v335
  %2443 = vmatprep.subr.mxu0 0.0
  %2444 = vmatpush1.msra.mxu0 %v336
  %2445 = vmatprep.subr.mxu0 0.0
  %2446 = vmatpush1.msra.mxu0 %v337
  %2447 = vmatprep.subr.mxu0 0.0
  %2448 = vmatpush1.msra.mxu0 %v338
  %2449 = vmatprep.subr.mxu0 0.0
  %2450 = vmatpush1.msra.mxu0 %v339
  %2451 = vmatprep.subr.mxu0 0.0
  %2452 = vmatpush1.msra.mxu0 %v340
  %2453 = vmatprep.subr.mxu0 0.0
  %2454 = vmatpush1.msra.mxu0 %v341
  %2455 = vmatprep.subr.mxu0 0.0
  %2456 = vmatpush1.msra.mxu0 %v342
  %2457 = vmatprep.subr.mxu0 0.0
  %2458 = vmatpush1.msra.mxu0 %v343
  %2459 = vmatprep.subr.mxu0 0.0
  %2460 = vmatpush1.msra.mxu0 %v344
  %2461 = vmatprep.subr.mxu0 0.0
  %2462 = vmatpush1.msra.mxu0 %v345
  %2463 = vmatprep.subr.mxu0 0.0
  %2464 = vmatpush1.msra.mxu0 %v346
  %2465 = vmatprep.subr.mxu0 0.0
  %2466 = vmatpush1.msra.mxu0 %v347
  %2467 = vmatprep.subr.mxu0 0.0
  %2468 = vmatpush1.msra.mxu0 %v348
  %2469 = vmatprep.subr.mxu0 0.0
  %2470 = vmatpush1.msra.mxu0 %v349
  %2471 = vmatprep.subr.mxu0 0.0
  %2472 = vmatpush1.msra.mxu0 %v350
  %2473 = vmatprep.subr.mxu0 0.0
  %2474 = vmatpush1.msra.mxu0 %v351
  %2475 = vmatprep.subr.mxu0 0.0
  %2476 = vmatpush1.msra.mxu0 %v352
  %2477 = vmatprep.subr.mxu0 0.0
  %2478 = vmatpush1.msra.mxu0 %v353
  %2479 = vmatprep.subr.mxu0 0.0
  %2480 = vmatpush1.msra.mxu0 %v354
  %2481 = vmatprep.mubr.f32.mxu0 %v1443
  %2482 = vmatmul.mubr.f32.gmra.mrb[0].mxu0 %v1441
  %v2483 = vpop.f32.mrb[0].mxu0
  %v2484 = vadd.f32 %v2414, %v2483
  %v2485 = vpop.f32.mrb[0].mxu0
  %2486 = vdwg.mxu0
  %2487 = vmatprep.subr.mxu0 0.0
  %2488 = vmatpush1.msra.mxu0 %v355
  %2489 = vmatprep.subr.mxu0 0.0
  %2490 = vmatpush1.msra.mxu0 %v356
  %2491 = vmatprep.subr.mxu0 0.0
  %2492 = vmatpush1.msra.mxu0 %v357
  %2493 = vmatprep.subr.mxu0 0.0
  %2494 = vmatpush1.msra.mxu0 %v358
  %2495 = vmatprep.subr.mxu0 0.0
  %2496 = vmatpush1.msra.mxu0 %v359
  %2497 = vmatprep.subr.mxu0 0.0
  %2498 = vmatpush1.msra.mxu0 %v360
  %2499 = vmatprep.subr.mxu0 0.0
  %2500 = vmatpush1.msra.mxu0 %v361
  %2501 = vmatprep.subr.mxu0 0.0
  %2502 = vmatpush1.msra.mxu0 %v362
  %2503 = vmatprep.subr.mxu0 0.0
  %2504 = vmatpush1.msra.mxu0 %v363
  %2505 = vmatprep.subr.mxu0 0.0
  %2506 = vmatpush1.msra.mxu0 %v364
  %2507 = vmatprep.subr.mxu0 0.0
  %2508 = vmatpush1.msra.mxu0 %v365
  %2509 = vmatprep.subr.mxu0 0.0
  %2510 = vmatpush1.msra.mxu0 %v366
  %2511 = vmatprep.subr.mxu0 0.0
  %2512 = vmatpush1.msra.mxu0 %v367
  %2513 = vmatprep.subr.mxu0 0.0
  %2514 = vmatpush1.msra.mxu0 %v368
  %2515 = vmatprep.subr.mxu0 0.0
  %2516 = vmatpush1.msra.mxu0 %v369
  %2517 = vmatprep.subr.mxu0 0.0
  %2518 = vmatpush1.msra.mxu0 %v370
  %2519 = vmatprep.subr.mxu0 0.0
  %2520 = vmatpush1.msra.mxu0 %v371
  %2521 = vmatprep.subr.mxu0 0.0
  %2522 = vmatpush1.msra.mxu0 %v372
  %2523 = vmatprep.subr.mxu0 0.0
  %2524 = vmatpush1.msra.mxu0 %v373
  %2525 = vmatprep.subr.mxu0 0.0
  %2526 = vmatpush1.msra.mxu0 %v374
  %2527 = vmatprep.subr.mxu0 0.0
  %2528 = vmatpush1.msra.mxu0 %v375
  %2529 = vmatprep.subr.mxu0 0.0
  %2530 = vmatpush1.msra.mxu0 %v376
  %2531 = vmatprep.subr.mxu0 0.0
  %2532 = vmatpush1.msra.mxu0 %v377
  %2533 = vmatprep.subr.mxu0 0.0
  %2534 = vmatpush1.msra.mxu0 %v378
  %2535 = vmatprep.subr.mxu0 0.0
  %2536 = vmatpush1.msra.mxu0 %v379
  %2537 = vmatprep.subr.mxu0 0.0
  %2538 = vmatpush1.msra.mxu0 %v380
  %2539 = vmatprep.subr.mxu0 0.0
  %2540 = vmatpush1.msra.mxu0 %v381
  %2541 = vmatprep.subr.mxu0 0.0
  %2542 = vmatpush1.msra.mxu0 %v382
  %2543 = vmatprep.subr.mxu0 0.0
  %2544 = vmatpush1.msra.mxu0 %v383
  %2545 = vmatprep.subr.mxu0 0.0
  %2546 = vmatpush1.msra.mxu0 %v384
  %2547 = vmatprep.subr.mxu0 0.0
  %2548 = vmatpush1.msra.mxu0 %v385
  %2549 = vmatprep.subr.mxu0 0.0
  %2550 = vmatpush1.msra.mxu0 %v386
  %2551 = vmatprep.mubr.f32.mxu0 %v1459
  %2552 = vmatmul.mubr.f32.gmra.mrb[0].mxu0 %v1451
  %v2553 = vpop.f32.mrb[0].mxu0
  %v2554 = vadd.f32 %v2484, %v2553
  %v2555 = vpop.f32.mrb[0].mxu0
  %2556 = vdwg.mxu0
  %2557 = vmatprep.subr.mxu0 0.0
  %2558 = vmatpush1.msra.mxu0 %v387
  %2559 = vmatprep.subr.mxu0 0.0
  %2560 = vmatpush1.msra.mxu0 %v388
  %2561 = vmatprep.subr.mxu0 0.0
  %2562 = vmatpush1.msra.mxu0 %v389
  %2563 = vmatprep.subr.mxu0 0.0
  %2564 = vmatpush1.msra.mxu0 %v390
  %2565 = vmatprep.subr.mxu0 0.0
  %2566 = vmatpush1.msra.mxu0 %v391
  %2567 = vmatprep.subr.mxu0 0.0
  %2568 = vmatpush1.msra.mxu0 %v392
  %2569 = vmatprep.subr.mxu0 0.0
  %2570 = vmatpush1.msra.mxu0 %v393
  %2571 = vmatprep.subr.mxu0 0.0
  %2572 = vmatpush1.msra.mxu0 %v394
  %2573 = vmatprep.subr.mxu0 0.0
  %2574 = vmatpush1.msra.mxu0 %v395
  %2575 = vmatprep.subr.mxu0 0.0
  %2576 = vmatpush1.msra.mxu0 %v396
  %2577 = vmatprep.subr.mxu0 0.0
  %2578 = vmatpush1.msra.mxu0 %v397
  %2579 = vmatprep.subr.mxu0 0.0
  %2580 = vmatpush1.msra.mxu0 %v398
  %2581 = vmatprep.subr.mxu0 0.0
  %2582 = vmatpush1.msra.mxu0 %v399
  %2583 = vmatprep.subr.mxu0 0.0
  %2584 = vmatpush1.msra.mxu0 %v400
  %2585 = vmatprep.subr.mxu0 0.0
  %2586 = vmatpush1.msra.mxu0 %v401
  %2587 = vmatprep.subr.mxu0 0.0
  %2588 = vmatpush1.msra.mxu0 %v402
  %2589 = vmatprep.subr.mxu0 0.0
  %2590 = vmatpush1.msra.mxu0 %v403
  %2591 = vmatprep.subr.mxu0 0.0
  %2592 = vmatpush1.msra.mxu0 %v404
  %2593 = vmatprep.subr.mxu0 0.0
  %2594 = vmatpush1.msra.mxu0 %v405
  %2595 = vmatprep.subr.mxu0 0.0
  %2596 = vmatpush1.msra.mxu0 %v406
  %2597 = vmatprep.subr.mxu0 0.0
  %2598 = vmatpush1.msra.mxu0 %v407
  %2599 = vmatprep.subr.mxu0 0.0
  %2600 = vmatpush1.msra.mxu0 %v408
  %2601 = vmatprep.subr.mxu0 0.0
  %2602 = vmatpush1.msra.mxu0 %v409
  %2603 = vmatprep.subr.mxu0 0.0
  %2604 = vmatpush1.msra.mxu0 %v410
  %2605 = vmatprep.subr.mxu0 0.0
  %2606 = vmatpush1.msra.mxu0 %v411
  %2607 = vmatprep.subr.mxu0 0.0
  %2608 = vmatpush1.msra.mxu0 %v412
  %2609 = vmatprep.subr.mxu0 0.0
  %2610 = vmatpush1.msra.mxu0 %v413
  %2611 = vmatprep.subr.mxu0 0.0
  %2612 = vmatpush1.msra.mxu0 %v414
  %2613 = vmatprep.subr.mxu0 0.0
  %2614 = vmatpush1.msra.mxu0 %v415
  %2615 = vmatprep.subr.mxu0 0.0
  %2616 = vmatpush1.msra.mxu0 %v416
  %2617 = vmatprep.subr.mxu0 0.0
  %2618 = vmatpush1.msra.mxu0 %v417
  %2619 = vmatprep.subr.mxu0 0.0
  %2620 = vmatpush1.msra.mxu0 %v418
  %2621 = vmatprep.mubr.f32.mxu0 %v1460
  %2622 = vmatmul.mubr.f32.gmra.mrb[0].mxu0 %v1458
  %v2623 = vpop.f32.mrb[0].mxu0
  %v2624 = vadd.f32 %v2554, %v2623
  %v2625 = vpop.f32.mrb[0].mxu0
  %2626 = vdwg.mxu0
  %2627 = vmatprep.subr.mxu0 0.0
  %2628 = vmatpush1.msra.mxu0 %v419
  %2629 = vmatprep.subr.mxu0 0.0
  %2630 = vmatpush1.msra.mxu0 %v420
  %2631 = vmatprep.subr.mxu0 0.0
  %2632 = vmatpush1.msra.mxu0 %v421
  %2633 = vmatprep.subr.mxu0 0.0
  %2634 = vmatpush1.msra.mxu0 %v422
  %2635 = vmatprep.subr.mxu0 0.0
  %2636 = vmatpush1.msra.mxu0 %v423
  %2637 = vmatprep.subr.mxu0 0.0
  %2638 = vmatpush1.msra.mxu0 %v424
  %2639 = vmatprep.subr.mxu0 0.0
  %2640 = vmatpush1.msra.mxu0 %v425
  %2641 = vmatprep.subr.mxu0 0.0
  %2642 = vmatpush1.msra.mxu0 %v426
  %2643 = vmatprep.subr.mxu0 0.0
  %2644 = vmatpush1.msra.mxu0 %v427
  %2645 = vmatprep.subr.mxu0 0.0
  %2646 = vmatpush1.msra.mxu0 %v428
  %2647 = vmatprep.subr.mxu0 0.0
  %2648 = vmatpush1.msra.mxu0 %v429
  %2649 = vmatprep.subr.mxu0 0.0
  %2650 = vmatpush1.msra.mxu0 %v430
  %2651 = vmatprep.subr.mxu0 0.0
  %2652 = vmatpush1.msra.mxu0 %v431
  %2653 = vmatprep.subr.mxu0 0.0
  %2654 = vmatpush1.msra.mxu0 %v432
  %2655 = vmatprep.subr.mxu0 0.0
  %2656 = vmatpush1.msra.mxu0 %v433
  %2657 = vmatprep.subr.mxu0 0.0
  %2658 = vmatpush1.msra.mxu0 %v434
  %2659 = vmatprep.subr.mxu0 0.0
  %2660 = vmatpush1.msra.mxu0 %v435
  %2661 = vmatprep.subr.mxu0 0.0
  %2662 = vmatpush1.msra.mxu0 %v436
  %2663 = vmatprep.subr.mxu0 0.0
  %2664 = vmatpush1.msra.mxu0 %v437
  %2665 = vmatprep.subr.mxu0 0.0
  %2666 = vmatpush1.msra.mxu0 %v438
  %2667 = vmatprep.subr.mxu0 0.0
  %2668 = vmatpush1.msra.mxu0 %v439
  %2669 = vmatprep.subr.mxu0 0.0
  %2670 = vmatpush1.msra.mxu0 %v440
  %2671 = vmatprep.subr.mxu0 0.0
  %2672 = vmatpush1.msra.mxu0 %v441
  %2673 = vmatprep.subr.mxu0 0.0
  %2674 = vmatpush1.msra.mxu0 %v442
  %2675 = vmatprep.subr.mxu0 0.0
  %2676 = vmatpush1.msra.mxu0 %v443
  %2677 = vmatprep.subr.mxu0 0.0
  %2678 = vmatpush1.msra.mxu0 %v444
  %2679 = vmatprep.subr.mxu0 0.0
  %2680 = vmatpush1.msra.mxu0 %v445
  %2681 = vmatprep.subr.mxu0 0.0
  %2682 = vmatpush1.msra.mxu0 %v446
  %2683 = vmatprep.subr.mxu0 0.0
  %2684 = vmatpush1.msra.mxu0 %v447
  %2685 = vmatprep.subr.mxu0 0.0
  %2686 = vmatpush1.msra.mxu0 %v448
  %2687 = vmatprep.subr.mxu0 0.0
  %2688 = vmatpush1.msra.mxu0 %v449
  %2689 = vmatprep.subr.mxu0 0.0
  %2690 = vmatpush1.msra.mxu0 %v450
  %2691 = vmatprep.mubr.f32.mxu0 %v1476
  %2692 = vmatmul.mubr.f32.gmra.mrb[0].mxu0 %v1468
  %v2693 = vpop.f32.mrb[0].mxu0
  %v2694 = vadd.f32 %v2624, %v2693
  %v2695 = vpop.f32.mrb[0].mxu0
  %2696 = vdwg.mxu0
  %2697 = vmatprep.subr.mxu0 0.0
  %2698 = vmatpush1.msra.mxu0 %v451
  %2699 = vmatprep.subr.mxu0 0.0
  %2700 = vmatpush1.msra.mxu0 %v452
  %2701 = vmatprep.subr.mxu0 0.0
  %2702 = vmatpush1.msra.mxu0 %v453
  %2703 = vmatprep.subr.mxu0 0.0
  %2704 = vmatpush1.msra.mxu0 %v454
  %2705 = vmatprep.subr.mxu0 0.0
  %2706 = vmatpush1.msra.mxu0 %v455
  %2707 = vmatprep.subr.mxu0 0.0
  %2708 = vmatpush1.msra.mxu0 %v456
  %2709 = vmatprep.subr.mxu0 0.0
  %2710 = vmatpush1.msra.mxu0 %v457
  %2711 = vmatprep.subr.mxu0 0.0
  %2712 = vmatpush1.msra.mxu0 %v458
  %2713 = vmatprep.subr.mxu0 0.0
  %2714 = vmatpush1.msra.mxu0 %v459
  %2715 = vmatprep.subr.mxu0 0.0
  %2716 = vmatpush1.msra.mxu0 %v460
  %2717 = vmatprep.subr.mxu0 0.0
  %2718 = vmatpush1.msra.mxu0 %v461
  %2719 = vmatprep.subr.mxu0 0.0
  %2720 = vmatpush1.msra.mxu0 %v462
  %2721 = vmatprep.subr.mxu0 0.0
  %2722 = vmatpush1.msra.mxu0 %v463
  %2723 = vmatprep.subr.mxu0 0.0
  %2724 = vmatpush1.msra.mxu0 %v464
  %2725 = vmatprep.subr.mxu0 0.0
  %2726 = vmatpush1.msra.mxu0 %v465
  %2727 = vmatprep.subr.mxu0 0.0
  %2728 = vmatpush1.msra.mxu0 %v466
  %2729 = vmatprep.subr.mxu0 0.0
  %2730 = vmatpush1.msra.mxu0 %v467
  %2731 = vmatprep.subr.mxu0 0.0
  %2732 = vmatpush1.msra.mxu0 %v468
  %2733 = vmatprep.subr.mxu0 0.0
  %2734 = vmatpush1.msra.mxu0 %v469
  %2735 = vmatprep.subr.mxu0 0.0
  %2736 = vmatpush1.msra.mxu0 %v470
  %2737 = vmatprep.subr.mxu0 0.0
  %2738 = vmatpush1.msra.mxu0 %v471
  %2739 = vmatprep.subr.mxu0 0.0
  %2740 = vmatpush1.msra.mxu0 %v472
  %2741 = vmatprep.subr.mxu0 0.0
  %2742 = vmatpush1.msra.mxu0 %v473
  %2743 = vmatprep.subr.mxu0 0.0
  %2744 = vmatpush1.msra.mxu0 %v474
  %2745 = vmatprep.subr.mxu0 0.0
  %2746 = vmatpush1.msra.mxu0 %v475
  %2747 = vmatprep.subr.mxu0 0.0
  %2748 = vmatpush1.msra.mxu0 %v476
  %2749 = vmatprep.subr.mxu0 0.0
  %2750 = vmatpush1.msra.mxu0 %v477
  %2751 = vmatprep.subr.mxu0 0.0
  %2752 = vmatpush1.msra.mxu0 %v478
  %2753 = vmatprep.subr.mxu0 0.0
  %2754 = vmatpush1.msra.mxu0 %v479
  %2755 = vmatprep.subr.mxu0 0.0
  %2756 = vmatpush1.msra.mxu0 %v480
  %2757 = vmatprep.subr.mxu0 0.0
  %2758 = vmatpush1.msra.mxu0 %v481
  %2759 = vmatprep.subr.mxu0 0.0
  %2760 = vmatpush1.msra.mxu0 %v482
  %2761 = vmatprep.mubr.f32.mxu0 %v1477
  %2762 = vmatmul.mubr.f32.gmra.mrb[0].mxu0 %v1475
  %v2763 = vpop.f32.mrb[0].mxu0
  %v2764 = vadd.f32 %v2694, %v2763
  %v2765 = vpop.f32.mrb[0].mxu0
  %2766 = vdwg.mxu0
  %2767 = vmatprep.subr.mxu0 0.0
  %2768 = vmatpush1.msra.mxu0 %v483
  %2769 = vmatprep.subr.mxu0 0.0
  %2770 = vmatpush1.msra.mxu0 %v484
  %2771 = vmatprep.subr.mxu0 0.0
  %2772 = vmatpush1.msra.mxu0 %v485
  %2773 = vmatprep.subr.mxu0 0.0
  %2774 = vmatpush1.msra.mxu0 %v486
  %2775 = vmatprep.subr.mxu0 0.0
  %2776 = vmatpush1.msra.mxu0 %v487
  %2777 = vmatprep.subr.mxu0 0.0
  %2778 = vmatpush1.msra.mxu0 %v488
  %2779 = vmatprep.subr.mxu0 0.0
  %2780 = vmatpush1.msra.mxu0 %v489
  %2781 = vmatprep.subr.mxu0 0.0
  %2782 = vmatpush1.msra.mxu0 %v490
  %2783 = vmatprep.subr.mxu0 0.0
  %2784 = vmatpush1.msra.mxu0 %v491
  %2785 = vmatprep.subr.mxu0 0.0
  %2786 = vmatpush1.msra.mxu0 %v492
  %2787 = vmatprep.subr.mxu0 0.0
  %2788 = vmatpush1.msra.mxu0 %v493
  %2789 = vmatprep.subr.mxu0 0.0
  %2790 = vmatpush1.msra.mxu0 %v494
  %2791 = vmatprep.subr.mxu0 0.0
  %2792 = vmatpush1.msra.mxu0 %v495
  %2793 = vmatprep.subr.mxu0 0.0
  %2794 = vmatpush1.msra.mxu0 %v496
  %2795 = vmatprep.subr.mxu0 0.0
  %2796 = vmatpush1.msra.mxu0 %v497
  %2797 = vmatprep.subr.mxu0 0.0
  %2798 = vmatpush1.msra.mxu0 %v498
  %2799 = vmatprep.subr.mxu0 0.0
  %2800 = vmatpush1.msra.mxu0 %v499
  %2801 = vmatprep.subr.mxu0 0.0
  %2802 = vmatpush1.msra.mxu0 %v500
  %2803 = vmatprep.subr.mxu0 0.0
  %2804 = vmatpush1.msra.mxu0 %v501
  %2805 = vmatprep.subr.mxu0 0.0
  %2806 = vmatpush1.msra.mxu0 %v502
  %2807 = vmatprep.subr.mxu0 0.0
  %2808 = vmatpush1.msra.mxu0 %v503
  %2809 = vmatprep.subr.mxu0 0.0
  %2810 = vmatpush1.msra.mxu0 %v504
  %2811 = vmatprep.subr.mxu0 0.0
  %2812 = vmatpush1.msra.mxu0 %v505
  %2813 = vmatprep.subr.mxu0 0.0
  %2814 = vmatpush1.msra.mxu0 %v506
  %2815 = vmatprep.subr.mxu0 0.0
  %2816 = vmatpush1.msra.mxu0 %v507
  %2817 = vmatprep.subr.mxu0 0.0
  %2818 = vmatpush1.msra.mxu0 %v508
  %2819 = vmatprep.subr.mxu0 0.0
  %2820 = vmatpush1.msra.mxu0 %v509
  %2821 = vmatprep.subr.mxu0 0.0
  %2822 = vmatpush1.msra.mxu0 %v510
  %2823 = vmatprep.subr.mxu0 0.0
  %2824 = vmatpush1.msra.mxu0 %v511
  %2825 = vmatprep.subr.mxu0 0.0
  %2826 = vmatpush1.msra.mxu0 %v512
  %2827 = vmatprep.subr.mxu0 0.0
  %2828 = vmatpush1.msra.mxu0 %v513
  %2829 = vmatprep.subr.mxu0 0.0
  %2830 = vmatpush1.msra.mxu0 %v514
  %2831 = vmatprep.mubr.f32.mxu0 %v1493
  %2832 = vmatmul.mubr.f32.gmra.mrb[0].mxu0 %v1485
  %v2833 = vpop.f32.mrb[0].mxu0
  %v2834 = vadd.f32 %v2764, %v2833
  %v2835 = vpop.f32.mrb[0].mxu0
  %2836 = vdwg.mxu0
  %2837 = vmatprep.subr.mxu0 0.0
  %2838 = vmatpush1.msra.mxu0 %v515
  %2839 = vmatprep.subr.mxu0 0.0
  %2840 = vmatpush1.msra.mxu0 %v516
  %2841 = vmatprep.subr.mxu0 0.0
  %2842 = vmatpush1.msra.mxu0 %v517
  %2843 = vmatprep.subr.mxu0 0.0
  %2844 = vmatpush1.msra.mxu0 %v518
  %2845 = vmatprep.subr.mxu0 0.0
  %2846 = vmatpush1.msra.mxu0 %v519
  %2847 = vmatprep.subr.mxu0 0.0
  %2848 = vmatpush1.msra.mxu0 %v520
  %2849 = vmatprep.subr.mxu0 0.0
  %2850 = vmatpush1.msra.mxu0 %v521
  %2851 = vmatprep.subr.mxu0 0.0
  %2852 = vmatpush1.msra.mxu0 %v522
  %2853 = vmatprep.subr.mxu0 0.0
  %2854 = vmatpush1.msra.mxu0 %v523
  %2855 = vmatprep.subr.mxu0 0.0
  %2856 = vmatpush1.msra.mxu0 %v524
  %2857 = vmatprep.subr.mxu0 0.0
  %2858 = vmatpush1.msra.mxu0 %v525
  %2859 = vmatprep.subr.mxu0 0.0
  %2860 = vmatpush1.msra.mxu0 %v526
  %2861 = vmatprep.subr.mxu0 0.0
  %2862 = vmatpush1.msra.mxu0 %v527
  %2863 = vmatprep.subr.mxu0 0.0
  %2864 = vmatpush1.msra.mxu0 %v528
  %2865 = vmatprep.subr.mxu0 0.0
  %2866 = vmatpush1.msra.mxu0 %v529
  %2867 = vmatprep.subr.mxu0 0.0
  %2868 = vmatpush1.msra.mxu0 %v530
  %2869 = vmatprep.subr.mxu0 0.0
  %2870 = vmatpush1.msra.mxu0 %v531
  %2871 = vmatprep.subr.mxu0 0.0
  %2872 = vmatpush1.msra.mxu0 %v532
  %2873 = vmatprep.subr.mxu0 0.0
  %2874 = vmatpush1.msra.mxu0 %v533
  %2875 = vmatprep.subr.mxu0 0.0
  %2876 = vmatpush1.msra.mxu0 %v534
  %2877 = vmatprep.subr.mxu0 0.0
  %2878 = vmatpush1.msra.mxu0 %v535
  %2879 = vmatprep.subr.mxu0 0.0
  %2880 = vmatpush1.msra.mxu0 %v536
  %2881 = vmatprep.subr.mxu0 0.0
  %2882 = vmatpush1.msra.mxu0 %v537
  %2883 = vmatprep.subr.mxu0 0.0
  %2884 = vmatpush1.msra.mxu0 %v538
  %2885 = vmatprep.subr.mxu0 0.0
  %2886 = vmatpush1.msra.mxu0 %v539
  %2887 = vmatprep.subr.mxu0 0.0
  %2888 = vmatpush1.msra.mxu0 %v540
  %2889 = vmatprep.subr.mxu0 0.0
  %2890 = vmatpush1.msra.mxu0 %v541
  %2891 = vmatprep.subr.mxu0 0.0
  %2892 = vmatpush1.msra.mxu0 %v542
  %2893 = vmatprep.subr.mxu0 0.0
  %2894 = vmatpush1.msra.mxu0 %v543
  %2895 = vmatprep.subr.mxu0 0.0
  %2896 = vmatpush1.msra.mxu0 %v544
  %2897 = vmatprep.subr.mxu0 0.0
  %2898 = vmatpush1.msra.mxu0 %v545
  %2899 = vmatprep.subr.mxu0 0.0
  %2900 = vmatpush1.msra.mxu0 %v546
  %2901 = vmatprep.mubr.f32.mxu0 %v1494
  %2902 = vmatmul.mubr.f32.gmra.mrb[0].mxu0 %v1492
  %v2903 = vpop.f32.mrb[0].mxu0
  %v2904 = vadd.f32 %v2834, %v2903
  %v2905 = vpop.f32.mrb[0].mxu0
  %2906 = vdwg.mxu0
  %2907 = vmatprep.subr.mxu0 0.0
  %2908 = vmatpush1.msra.mxu0 %v547
  %2909 = vmatprep.subr.mxu0 0.0
  %2910 = vmatpush1.msra.mxu0 %v548
  %2911 = vmatprep.subr.mxu0 0.0
  %2912 = vmatpush1.msra.mxu0 %v549
  %2913 = vmatprep.subr.mxu0 0.0
  %2914 = vmatpush1.msra.mxu0 %v550
  %2915 = vmatprep.subr.mxu0 0.0
  %2916 = vmatpush1.msra.mxu0 %v551
  %2917 = vmatprep.subr.mxu0 0.0
  %2918 = vmatpush1.msra.mxu0 %v552
  %2919 = vmatprep.subr.mxu0 0.0
  %2920 = vmatpush1.msra.mxu0 %v553
  %2921 = vmatprep.subr.mxu0 0.0
  %2922 = vmatpush1.msra.mxu0 %v554
  %2923 = vmatprep.subr.mxu0 0.0
  %2924 = vmatpush1.msra.mxu0 %v555
  %2925 = vmatprep.subr.mxu0 0.0
  %2926 = vmatpush1.msra.mxu0 %v556
  %2927 = vmatprep.subr.mxu0 0.0
  %2928 = vmatpush1.msra.mxu0 %v557
  %2929 = vmatprep.subr.mxu0 0.0
  %2930 = vmatpush1.msra.mxu0 %v558
  %2931 = vmatprep.subr.mxu0 0.0
  %2932 = vmatpush1.msra.mxu0 %v559
  %2933 = vmatprep.subr.mxu0 0.0
  %2934 = vmatpush1.msra.mxu0 %v560
  %2935 = vmatprep.subr.mxu0 0.0
  %2936 = vmatpush1.msra.mxu0 %v561
  %2937 = vmatprep.subr.mxu0 0.0
  %2938 = vmatpush1.msra.mxu0 %v562
  %2939 = vmatprep.subr.mxu0 0.0
  %2940 = vmatpush1.msra.mxu0 %v563
  %2941 = vmatprep.subr.mxu0 0.0
  %2942 = vmatpush1.msra.mxu0 %v564
  %2943 = vmatprep.subr.mxu0 0.0
  %2944 = vmatpush1.msra.mxu0 %v565
  %2945 = vmatprep.subr.mxu0 0.0
  %2946 = vmatpush1.msra.mxu0 %v566
  %2947 = vmatprep.subr.mxu0 0.0
  %2948 = vmatpush1.msra.mxu0 %v567
  %2949 = vmatprep.subr.mxu0 0.0
  %2950 = vmatpush1.msra.mxu0 %v568
  %2951 = vmatprep.subr.mxu0 0.0
  %2952 = vmatpush1.msra.mxu0 %v569
  %2953 = vmatprep.subr.mxu0 0.0
  %2954 = vmatpush1.msra.mxu0 %v570
  %2955 = vmatprep.subr.mxu0 0.0
  %2956 = vmatpush1.msra.mxu0 %v571
  %2957 = vmatprep.subr.mxu0 0.0
  %2958 = vmatpush1.msra.mxu0 %v572
  %2959 = vmatprep.subr.mxu0 0.0
  %2960 = vmatpush1.msra.mxu0 %v573
  %2961 = vmatprep.subr.mxu0 0.0
  %2962 = vmatpush1.msra.mxu0 %v574
  %2963 = vmatprep.subr.mxu0 0.0
  %2964 = vmatpush1.msra.mxu0 %v575
  %2965 = vmatprep.subr.mxu0 0.0
  %2966 = vmatpush1.msra.mxu0 %v576
  %2967 = vmatprep.subr.mxu0 0.0
  %2968 = vmatpush1.msra.mxu0 %v577
  %2969 = vmatprep.subr.mxu0 0.0
  %2970 = vmatpush1.msra.mxu0 %v578
  %2971 = vmatprep.mubr.f32.mxu0 %v1510
  %2972 = vmatmul.mubr.f32.gmra.mrb[0].mxu0 %v1502
  %v2973 = vpop.f32.mrb[0].mxu0
  %v2974 = vadd.f32 %v2904, %v2973
  %v2975 = vpop.f32.mrb[0].mxu0
  %2976 = vdwg.mxu0
  %2977 = vmatprep.subr.mxu0 0.0
  %2978 = vmatpush1.msra.mxu0 %v579
  %2979 = vmatprep.subr.mxu0 0.0
  %2980 = vmatpush1.msra.mxu0 %v580
  %2981 = vmatprep.subr.mxu0 0.0
  %2982 = vmatpush1.msra.mxu0 %v581
  %2983 = vmatprep.subr.mxu0 0.0
  %2984 = vmatpush1.msra.mxu0 %v582
  %2985 = vmatprep.subr.mxu0 0.0
  %2986 = vmatpush1.msra.mxu0 %v583
  %2987 = vmatprep.subr.mxu0 0.0
  %2988 = vmatpush1.msra.mxu0 %v584
  %2989 = vmatprep.subr.mxu0 0.0
  %2990 = vmatpush1.msra.mxu0 %v585
  %2991 = vmatprep.subr.mxu0 0.0
  %2992 = vmatpush1.msra.mxu0 %v586
  %2993 = vmatprep.subr.mxu0 0.0
  %2994 = vmatpush1.msra.mxu0 %v587
  %2995 = vmatprep.subr.mxu0 0.0
  %2996 = vmatpush1.msra.mxu0 %v588
  %2997 = vmatprep.subr.mxu0 0.0
  %2998 = vmatpush1.msra.mxu0 %v589
  %2999 = vmatprep.subr.mxu0 0.0
  %3000 = vmatpush1.msra.mxu0 %v590
  %3001 = vmatprep.subr.mxu0 0.0
  %3002 = vmatpush1.msra.mxu0 %v591
  %3003 = vmatprep.subr.mxu0 0.0
  %3004 = vmatpush1.msra.mxu0 %v592
  %3005 = vmatprep.subr.mxu0 0.0
  %3006 = vmatpush1.msra.mxu0 %v593
  %3007 = vmatprep.subr.mxu0 0.0
  %3008 = vmatpush1.msra.mxu0 %v594
  %3009 = vmatprep.subr.mxu0 0.0
  %3010 = vmatpush1.msra.mxu0 %v595
  %3011 = vmatprep.subr.mxu0 0.0
  %3012 = vmatpush1.msra.mxu0 %v596
  %3013 = vmatprep.subr.mxu0 0.0
  %3014 = vmatpush1.msra.mxu0 %v597
  %3015 = vmatprep.subr.mxu0 0.0
  %3016 = vmatpush1.msra.mxu0 %v598
  %3017 = vmatprep.subr.mxu0 0.0
  %3018 = vmatpush1.msra.mxu0 %v599
  %3019 = vmatprep.subr.mxu0 0.0
  %3020 = vmatpush1.msra.mxu0 %v600
  %3021 = vmatprep.subr.mxu0 0.0
  %3022 = vmatpush1.msra.mxu0 %v601
  %3023 = vmatprep.subr.mxu0 0.0
  %3024 = vmatpush1.msra.mxu0 %v602
  %3025 = vmatprep.subr.mxu0 0.0
  %3026 = vmatpush1.msra.mxu0 %v603
  %3027 = vmatprep.subr.mxu0 0.0
  %3028 = vmatpush1.msra.mxu0 %v604
  %3029 = vmatprep.subr.mxu0 0.0
  %3030 = vmatpush1.msra.mxu0 %v605
  %3031 = vmatprep.subr.mxu0 0.0
  %3032 = vmatpush1.msra.mxu0 %v606
  %3033 = vmatprep.subr.mxu0 0.0
  %3034 = vmatpush1.msra.mxu0 %v607
  %3035 = vmatprep.subr.mxu0 0.0
  %3036 = vmatpush1.msra.mxu0 %v608
  %3037 = vmatprep.subr.mxu0 0.0
  %3038 = vmatpush1.msra.mxu0 %v609
  %3039 = vmatprep.subr.mxu0 0.0
  %3040 = vmatpush1.msra.mxu0 %v610
  %3041 = vmatprep.mubr.f32.mxu0 %v1511
  %3042 = vmatmul.mubr.f32.gmra.mrb[0].mxu0 %v1509
  %v3043 = vpop.f32.mrb[0].mxu0
  %v3044 = vadd.f32 %v2974, %v3043
  %v3045 = vpop.f32.mrb[0].mxu0
  %3046 = vdwg.mxu0
  %3047 = vmatprep.subr.mxu0 0.0
  %3048 = vmatpush1.msra.mxu0 %v611
  %3049 = vmatprep.subr.mxu0 0.0
  %3050 = vmatpush1.msra.mxu0 %v612
  %3051 = vmatprep.subr.mxu0 0.0
  %3052 = vmatpush1.msra.mxu0 %v613
  %3053 = vmatprep.subr.mxu0 0.0
  %3054 = vmatpush1.msra.mxu0 %v614
  %3055 = vmatprep.subr.mxu0 0.0
  %3056 = vmatpush1.msra.mxu0 %v615
  %3057 = vmatprep.subr.mxu0 0.0
  %3058 = vmatpush1.msra.mxu0 %v616
  %3059 = vmatprep.subr.mxu0 0.0
  %3060 = vmatpush1.msra.mxu0 %v617
  %3061 = vmatprep.subr.mxu0 0.0
  %3062 = vmatpush1.msra.mxu0 %v618
  %3063 = vmatprep.subr.mxu0 0.0
  %3064 = vmatpush1.msra.mxu0 %v619
  %3065 = vmatprep.subr.mxu0 0.0
  %3066 = vmatpush1.msra.mxu0 %v620
  %3067 = vmatprep.subr.mxu0 0.0
  %3068 = vmatpush1.msra.mxu0 %v621
  %3069 = vmatprep.subr.mxu0 0.0
  %3070 = vmatpush1.msra.mxu0 %v622
  %3071 = vmatprep.subr.mxu0 0.0
  %3072 = vmatpush1.msra.mxu0 %v623
  %3073 = vmatprep.subr.mxu0 0.0
  %3074 = vmatpush1.msra.mxu0 %v624
  %3075 = vmatprep.subr.mxu0 0.0
  %3076 = vmatpush1.msra.mxu0 %v625
  %3077 = vmatprep.subr.mxu0 0.0
  %3078 = vmatpush1.msra.mxu0 %v626
  %3079 = vmatprep.subr.mxu0 0.0
  %3080 = vmatpush1.msra.mxu0 %v627
  %3081 = vmatprep.subr.mxu0 0.0
  %3082 = vmatpush1.msra.mxu0 %v628
  %3083 = vmatprep.subr.mxu0 0.0
  %3084 = vmatpush1.msra.mxu0 %v629
  %3085 = vmatprep.subr.mxu0 0.0
  %3086 = vmatpush1.msra.mxu0 %v630
  %3087 = vmatprep.subr.mxu0 0.0
  %3088 = vmatpush1.msra.mxu0 %v631
  %3089 = vmatprep.subr.mxu0 0.0
  %3090 = vmatpush1.msra.mxu0 %v632
  %3091 = vmatprep.subr.mxu0 0.0
  %3092 = vmatpush1.msra.mxu0 %v633
  %3093 = vmatprep.subr.mxu0 0.0
  %3094 = vmatpush1.msra.mxu0 %v634
  %3095 = vmatprep.subr.mxu0 0.0
  %3096 = vmatpush1.msra.mxu0 %v635
  %3097 = vmatprep.subr.mxu0 0.0
  %3098 = vmatpush1.msra.mxu0 %v636
  %3099 = vmatprep.subr.mxu0 0.0
  %3100 = vmatpush1.msra.mxu0 %v637
  %3101 = vmatprep.subr.mxu0 0.0
  %3102 = vmatpush1.msra.mxu0 %v638
  %3103 = vmatprep.subr.mxu0 0.0
  %3104 = vmatpush1.msra.mxu0 %v639
  %3105 = vmatprep.subr.mxu0 0.0
  %3106 = vmatpush1.msra.mxu0 %v640
  %3107 = vmatprep.subr.mxu0 0.0
  %3108 = vmatpush1.msra.mxu0 %v641
  %3109 = vmatprep.subr.mxu0 0.0
  %3110 = vmatpush1.msra.mxu0 %v642
  %3111 = vmatprep.mubr.f32.mxu0 %v1527
  %3112 = vmatmul.mubr.f32.gmra.mrb[0].mxu0 %v1519
  %v3113 = vpop.f32.mrb[0].mxu0
  %v3114 = vadd.f32 %v3044, %v3113
  %v3115 = vpop.f32.mrb[0].mxu0
  %3116 = vdwg.mxu0
  %3117 = vmatprep.subr.mxu0 0.0
  %3118 = vmatpush1.msra.mxu0 %v643
  %3119 = vmatprep.subr.mxu0 0.0
  %3120 = vmatpush1.msra.mxu0 %v644
  %3121 = vmatprep.subr.mxu0 0.0
  %3122 = vmatpush1.msra.mxu0 %v645
  %3123 = vmatprep.subr.mxu0 0.0
  %3124 = vmatpush1.msra.mxu0 %v646
  %3125 = vmatprep.subr.mxu0 0.0
  %3126 = vmatpush1.msra.mxu0 %v647
  %3127 = vmatprep.subr.mxu0 0.0
  %3128 = vmatpush1.msra.mxu0 %v648
  %3129 = vmatprep.subr.mxu0 0.0
  %3130 = vmatpush1.msra.mxu0 %v649
  %3131 = vmatprep.subr.mxu0 0.0
  %3132 = vmatpush1.msra.mxu0 %v650
  %3133 = vmatprep.subr.mxu0 0.0
  %3134 = vmatpush1.msra.mxu0 %v651
  %3135 = vmatprep.subr.mxu0 0.0
  %3136 = vmatpush1.msra.mxu0 %v652
  %3137 = vmatprep.subr.mxu0 0.0
  %3138 = vmatpush1.msra.mxu0 %v653
  %3139 = vmatprep.subr.mxu0 0.0
  %3140 = vmatpush1.msra.mxu0 %v654
  %3141 = vmatprep.subr.mxu0 0.0
  %3142 = vmatpush1.msra.mxu0 %v655
  %3143 = vmatprep.subr.mxu0 0.0
  %3144 = vmatpush1.msra.mxu0 %v656
  %3145 = vmatprep.subr.mxu0 0.0
  %3146 = vmatpush1.msra.mxu0 %v657
  %3147 = vmatprep.subr.mxu0 0.0
  %3148 = vmatpush1.msra.mxu0 %v658
  %3149 = vmatprep.subr.mxu0 0.0
  %3150 = vmatpush1.msra.mxu0 %v659
  %3151 = vmatprep.subr.mxu0 0.0
  %3152 = vmatpush1.msra.mxu0 %v660
  %3153 = vmatprep.subr.mxu0 0.0
  %3154 = vmatpush1.msra.mxu0 %v661
  %3155 = vmatprep.subr.mxu0 0.0
  %3156 = vmatpush1.msra.mxu0 %v662
  %3157 = vmatprep.subr.mxu0 0.0
  %3158 = vmatpush1.msra.mxu0 %v663
  %3159 = vmatprep.subr.mxu0 0.0
  %3160 = vmatpush1.msra.mxu0 %v664
  %3161 = vmatprep.subr.mxu0 0.0
  %3162 = vmatpush1.msra.mxu0 %v665
  %3163 = vmatprep.subr.mxu0 0.0
  %3164 = vmatpush1.msra.mxu0 %v666
  %3165 = vmatprep.subr.mxu0 0.0
  %3166 = vmatpush1.msra.mxu0 %v667
  %3167 = vmatprep.subr.mxu0 0.0
  %3168 = vmatpush1.msra.mxu0 %v668
  %3169 = vmatprep.subr.mxu0 0.0
  %3170 = vmatpush1.msra.mxu0 %v669
  %3171 = vmatprep.subr.mxu0 0.0
  %3172 = vmatpush1.msra.mxu0 %v670
  %3173 = vmatprep.subr.mxu0 0.0
  %3174 = vmatpush1.msra.mxu0 %v671
  %3175 = vmatprep.subr.mxu0 0.0
  %3176 = vmatpush1.msra.mxu0 %v672
  %3177 = vmatprep.subr.mxu0 0.0
  %3178 = vmatpush1.msra.mxu0 %v673
  %3179 = vmatprep.subr.mxu0 0.0
  %3180 = vmatpush1.msra.mxu0 %v674
  %3181 = vmatprep.mubr.f32.mxu0 %v1528
  %3182 = vmatmul.mubr.f32.gmra.mrb[0].mxu0 %v1526
  %v3183 = vpop.f32.mrb[0].mxu0
  %v3184 = vadd.f32 %v3114, %v3183
  %v3185 = vpop.f32.mrb[0].mxu0
  %3186 = vdwg.mxu0
  %3187 = vmatprep.subr.mxu0 0.0
  %3188 = vmatpush1.msra.mxu0 %v675
  %3189 = vmatprep.subr.mxu0 0.0
  %3190 = vmatpush1.msra.mxu0 %v676
  %3191 = vmatprep.subr.mxu0 0.0
  %3192 = vmatpush1.msra.mxu0 %v677
  %3193 = vmatprep.subr.mxu0 0.0
  %3194 = vmatpush1.msra.mxu0 %v678
  %3195 = vmatprep.subr.mxu0 0.0
  %3196 = vmatpush1.msra.mxu0 %v679
  %3197 = vmatprep.subr.mxu0 0.0
  %3198 = vmatpush1.msra.mxu0 %v680
  %3199 = vmatprep.subr.mxu0 0.0
  %3200 = vmatpush1.msra.mxu0 %v681
  %3201 = vmatprep.subr.mxu0 0.0
  %3202 = vmatpush1.msra.mxu0 %v682
  %3203 = vmatprep.subr.mxu0 0.0
  %3204 = vmatpush1.msra.mxu0 %v683
  %3205 = vmatprep.subr.mxu0 0.0
  %3206 = vmatpush1.msra.mxu0 %v684
  %3207 = vmatprep.subr.mxu0 0.0
  %3208 = vmatpush1.msra.mxu0 %v685
  %3209 = vmatprep.subr.mxu0 0.0
  %3210 = vmatpush1.msra.mxu0 %v686
  %3211 = vmatprep.subr.mxu0 0.0
  %3212 = vmatpush1.msra.mxu0 %v687
  %3213 = vmatprep.subr.mxu0 0.0
  %3214 = vmatpush1.msra.mxu0 %v688
  %3215 = vmatprep.subr.mxu0 0.0
  %3216 = vmatpush1.msra.mxu0 %v689
  %3217 = vmatprep.subr.mxu0 0.0
  %3218 = vmatpush1.msra.mxu0 %v690
  %3219 = vmatprep.subr.mxu0 0.0
  %3220 = vmatpush1.msra.mxu0 %v691
  %3221 = vmatprep.subr.mxu0 0.0
  %3222 = vmatpush1.msra.mxu0 %v692
  %3223 = vmatprep.subr.mxu0 0.0
  %3224 = vmatpush1.msra.mxu0 %v693
  %3225 = vmatprep.subr.mxu0 0.0
  %3226 = vmatpush1.msra.mxu0 %v694
  %3227 = vmatprep.subr.mxu0 0.0
  %3228 = vmatpush1.msra.mxu0 %v695
  %3229 = vmatprep.subr.mxu0 0.0
  %3230 = vmatpush1.msra.mxu0 %v696
  %3231 = vmatprep.subr.mxu0 0.0
  %3232 = vmatpush1.msra.mxu0 %v697
  %3233 = vmatprep.subr.mxu0 0.0
  %3234 = vmatpush1.msra.mxu0 %v698
  %3235 = vmatprep.subr.mxu0 0.0
  %3236 = vmatpush1.msra.mxu0 %v699
  %3237 = vmatprep.subr.mxu0 0.0
  %3238 = vmatpush1.msra.mxu0 %v700
  %3239 = vmatprep.subr.mxu0 0.0
  %3240 = vmatpush1.msra.mxu0 %v701
  %3241 = vmatprep.subr.mxu0 0.0
  %3242 = vmatpush1.msra.mxu0 %v702
  %3243 = vmatprep.subr.mxu0 0.0
  %3244 = vmatpush1.msra.mxu0 %v703
  %3245 = vmatprep.subr.mxu0 0.0
  %3246 = vmatpush1.msra.mxu0 %v704
  %3247 = vmatprep.subr.mxu0 0.0
  %3248 = vmatpush1.msra.mxu0 %v705
  %3249 = vmatprep.subr.mxu0 0.0
  %3250 = vmatpush1.msra.mxu0 %v706
  %3251 = vmatprep.mubr.f32.mxu0 %v1544
  %3252 = vmatmul.mubr.f32.gmra.mrb[0].mxu0 %v1536
  %v3253 = vpop.f32.mrb[0].mxu0
  %v3254 = vadd.f32 %v3184, %v3253
  %v3255 = vpop.f32.mrb[0].mxu0
  %3256 = vdwg.mxu0
  %3257 = vmatprep.subr.mxu0 0.0
  %3258 = vmatpush1.msra.mxu0 %v707
  %3259 = vmatprep.subr.mxu0 0.0
  %3260 = vmatpush1.msra.mxu0 %v708
  %3261 = vmatprep.subr.mxu0 0.0
  %3262 = vmatpush1.msra.mxu0 %v709
  %3263 = vmatprep.subr.mxu0 0.0
  %3264 = vmatpush1.msra.mxu0 %v710
  %3265 = vmatprep.subr.mxu0 0.0
  %3266 = vmatpush1.msra.mxu0 %v711
  %3267 = vmatprep.subr.mxu0 0.0
  %3268 = vmatpush1.msra.mxu0 %v712
  %3269 = vmatprep.subr.mxu0 0.0
  %3270 = vmatpush1.msra.mxu0 %v713
  %3271 = vmatprep.subr.mxu0 0.0
  %3272 = vmatpush1.msra.mxu0 %v714
  %3273 = vmatprep.subr.mxu0 0.0
  %3274 = vmatpush1.msra.mxu0 %v715
  %3275 = vmatprep.subr.mxu0 0.0
  %3276 = vmatpush1.msra.mxu0 %v716
  %3277 = vmatprep.subr.mxu0 0.0
  %3278 = vmatpush1.msra.mxu0 %v717
  %3279 = vmatprep.subr.mxu0 0.0
  %3280 = vmatpush1.msra.mxu0 %v718
  %3281 = vmatprep.subr.mxu0 0.0
  %3282 = vmatpush1.msra.mxu0 %v719
  %3283 = vmatprep.subr.mxu0 0.0
  %3284 = vmatpush1.msra.mxu0 %v720
  %3285 = vmatprep.subr.mxu0 0.0
  %3286 = vmatpush1.msra.mxu0 %v721
  %3287 = vmatprep.subr.mxu0 0.0
  %3288 = vmatpush1.msra.mxu0 %v722
  %3289 = vmatprep.subr.mxu0 0.0
  %3290 = vmatpush1.msra.mxu0 %v723
  %3291 = vmatprep.subr.mxu0 0.0
  %3292 = vmatpush1.msra.mxu0 %v724
  %3293 = vmatprep.subr.mxu0 0.0
  %3294 = vmatpush1.msra.mxu0 %v725
  %3295 = vmatprep.subr.mxu0 0.0
  %3296 = vmatpush1.msra.mxu0 %v726
  %3297 = vmatprep.subr.mxu0 0.0
  %3298 = vmatpush1.msra.mxu0 %v727
  %3299 = vmatprep.subr.mxu0 0.0
  %3300 = vmatpush1.msra.mxu0 %v728
  %3301 = vmatprep.subr.mxu0 0.0
  %3302 = vmatpush1.msra.mxu0 %v729
  %3303 = vmatprep.subr.mxu0 0.0
  %3304 = vmatpush1.msra.mxu0 %v730
  %3305 = vmatprep.subr.mxu0 0.0
  %3306 = vmatpush1.msra.mxu0 %v731
  %3307 = vmatprep.subr.mxu0 0.0
  %3308 = vmatpush1.msra.mxu0 %v732
  %3309 = vmatprep.subr.mxu0 0.0
  %3310 = vmatpush1.msra.mxu0 %v733
  %3311 = vmatprep.subr.mxu0 0.0
  %3312 = vmatpush1.msra.mxu0 %v734
  %3313 = vmatprep.subr.mxu0 0.0
  %3314 = vmatpush1.msra.mxu0 %v735
  %3315 = vmatprep.subr.mxu0 0.0
  %3316 = vmatpush1.msra.mxu0 %v736
  %3317 = vmatprep.subr.mxu0 0.0
  %3318 = vmatpush1.msra.mxu0 %v737
  %3319 = vmatprep.subr.mxu0 0.0
  %3320 = vmatpush1.msra.mxu0 %v738
  %3321 = vmatprep.mubr.f32.mxu0 %v1545
  %3322 = vmatmul.mubr.f32.gmra.mrb[0].mxu0 %v1543
  %v3323 = vpop.f32.mrb[0].mxu0
  %v3324 = vadd.f32 %v3254, %v3323
  %v3325 = vpop.f32.mrb[0].mxu0
  %3326 = vdwg.mxu0
  %3327 = vmatprep.subr.mxu0 0.0
  %3328 = vmatpush1.msra.mxu0 %v739
  %3329 = vmatprep.subr.mxu0 0.0
  %3330 = vmatpush1.msra.mxu0 %v740
  %3331 = vmatprep.subr.mxu0 0.0
  %3332 = vmatpush1.msra.mxu0 %v741
  %3333 = vmatprep.subr.mxu0 0.0
  %3334 = vmatpush1.msra.mxu0 %v742
  %3335 = vmatprep.subr.mxu0 0.0
  %3336 = vmatpush1.msra.mxu0 %v743
  %3337 = vmatprep.subr.mxu0 0.0
  %3338 = vmatpush1.msra.mxu0 %v744
  %3339 = vmatprep.subr.mxu0 0.0
  %3340 = vmatpush1.msra.mxu0 %v745
  %3341 = vmatprep.subr.mxu0 0.0
  %3342 = vmatpush1.msra.mxu0 %v746
  %3343 = vmatprep.subr.mxu0 0.0
  %3344 = vmatpush1.msra.mxu0 %v747
  %3345 = vmatprep.subr.mxu0 0.0
  %3346 = vmatpush1.msra.mxu0 %v748
  %3347 = vmatprep.subr.mxu0 0.0
  %3348 = vmatpush1.msra.mxu0 %v749
  %3349 = vmatprep.subr.mxu0 0.0
  %3350 = vmatpush1.msra.mxu0 %v750
  %3351 = vmatprep.subr.mxu0 0.0
  %3352 = vmatpush1.msra.mxu0 %v751
  %3353 = vmatprep.subr.mxu0 0.0
  %3354 = vmatpush1.msra.mxu0 %v752
  %3355 = vmatprep.subr.mxu0 0.0
  %3356 = vmatpush1.msra.mxu0 %v753
  %3357 = vmatprep.subr.mxu0 0.0
  %3358 = vmatpush1.msra.mxu0 %v754
  %3359 = vmatprep.subr.mxu0 0.0
  %3360 = vmatpush1.msra.mxu0 %v755
  %3361 = vmatprep.subr.mxu0 0.0
  %3362 = vmatpush1.msra.mxu0 %v756
  %3363 = vmatprep.subr.mxu0 0.0
  %3364 = vmatpush1.msra.mxu0 %v757
  %3365 = vmatprep.subr.mxu0 0.0
  %3366 = vmatpush1.msra.mxu0 %v758
  %3367 = vmatprep.subr.mxu0 0.0
  %3368 = vmatpush1.msra.mxu0 %v759
  %3369 = vmatprep.subr.mxu0 0.0
  %3370 = vmatpush1.msra.mxu0 %v760
  %3371 = vmatprep.subr.mxu0 0.0
  %3372 = vmatpush1.msra.mxu0 %v761
  %3373 = vmatprep.subr.mxu0 0.0
  %3374 = vmatpush1.msra.mxu0 %v762
  %3375 = vmatprep.subr.mxu0 0.0
  %3376 = vmatpush1.msra.mxu0 %v763
  %3377 = vmatprep.subr.mxu0 0.0
  %3378 = vmatpush1.msra.mxu0 %v764
  %3379 = vmatprep.subr.mxu0 0.0
  %3380 = vmatpush1.msra.mxu0 %v765
  %3381 = vmatprep.subr.mxu0 0.0
  %3382 = vmatpush1.msra.mxu0 %v766
  %3383 = vmatprep.subr.mxu0 0.0
  %3384 = vmatpush1.msra.mxu0 %v767
  %3385 = vmatprep.subr.mxu0 0.0
  %3386 = vmatpush1.msra.mxu0 %v768
  %3387 = vmatprep.subr.mxu0 0.0
  %3388 = vmatpush1.msra.mxu0 %v769
  %3389 = vmatprep.subr.mxu0 0.0
  %3390 = vmatpush1.msra.mxu0 %v770
  %3391 = vmatprep.mubr.f32.mxu0 %v1561
  %3392 = vmatmul.mubr.f32.gmra.mrb[0].mxu0 %v1553
  %v3393 = vpop.f32.mrb[0].mxu0
  %v3394 = vadd.f32 %v3324, %v3393
  %v3395 = vpop.f32.mrb[0].mxu0
  %3396 = vdwg.mxu0
  %3397 = vmatprep.subr.mxu0 0.0
  %3398 = vmatpush1.msra.mxu0 %v771
  %3399 = vmatprep.subr.mxu0 0.0
  %3400 = vmatpush1.msra.mxu0 %v772
  %3401 = vmatprep.subr.mxu0 0.0
  %3402 = vmatpush1.msra.mxu0 %v773
  %3403 = vmatprep.subr.mxu0 0.0
  %3404 = vmatpush1.msra.mxu0 %v774
  %3405 = vmatprep.subr.mxu0 0.0
  %3406 = vmatpush1.msra.mxu0 %v775
  %3407 = vmatprep.subr.mxu0 0.0
  %3408 = vmatpush1.msra.mxu0 %v776
  %3409 = vmatprep.subr.mxu0 0.0
  %3410 = vmatpush1.msra.mxu0 %v777
  %3411 = vmatprep.subr.mxu0 0.0
  %3412 = vmatpush1.msra.mxu0 %v778
  %3413 = vmatprep.subr.mxu0 0.0
  %3414 = vmatpush1.msra.mxu0 %v779
  %3415 = vmatprep.subr.mxu0 0.0
  %3416 = vmatpush1.msra.mxu0 %v780
  %3417 = vmatprep.subr.mxu0 0.0
  %3418 = vmatpush1.msra.mxu0 %v781
  %3419 = vmatprep.subr.mxu0 0.0
  %3420 = vmatpush1.msra.mxu0 %v782
  %3421 = vmatprep.subr.mxu0 0.0
  %3422 = vmatpush1.msra.mxu0 %v783
  %3423 = vmatprep.subr.mxu0 0.0
  %3424 = vmatpush1.msra.mxu0 %v784
  %3425 = vmatprep.subr.mxu0 0.0
  %3426 = vmatpush1.msra.mxu0 %v785
  %3427 = vmatprep.subr.mxu0 0.0
  %3428 = vmatpush1.msra.mxu0 %v786
  %3429 = vmatprep.subr.mxu0 0.0
  %3430 = vmatpush1.msra.mxu0 %v787
  %3431 = vmatprep.subr.mxu0 0.0
  %3432 = vmatpush1.msra.mxu0 %v788
  %3433 = vmatprep.subr.mxu0 0.0
  %3434 = vmatpush1.msra.mxu0 %v789
  %3435 = vmatprep.subr.mxu0 0.0
  %3436 = vmatpush1.msra.mxu0 %v790
  %3437 = vmatprep.subr.mxu0 0.0
  %3438 = vmatpush1.msra.mxu0 %v791
  %3439 = vmatprep.subr.mxu0 0.0
  %3440 = vmatpush1.msra.mxu0 %v792
  %3441 = vmatprep.subr.mxu0 0.0
  %3442 = vmatpush1.msra.mxu0 %v793
  %3443 = vmatprep.subr.mxu0 0.0
  %3444 = vmatpush1.msra.mxu0 %v794
  %3445 = vmatprep.subr.mxu0 0.0
  %3446 = vmatpush1.msra.mxu0 %v795
  %3447 = vmatprep.subr.mxu0 0.0
  %3448 = vmatpush1.msra.mxu0 %v796
  %3449 = vmatprep.subr.mxu0 0.0
  %3450 = vmatpush1.msra.mxu0 %v797
  %3451 = vmatprep.subr.mxu0 0.0
  %3452 = vmatpush1.msra.mxu0 %v798
  %3453 = vmatprep.subr.mxu0 0.0
  %3454 = vmatpush1.msra.mxu0 %v799
  %3455 = vmatprep.subr.mxu0 0.0
  %3456 = vmatpush1.msra.mxu0 %v800
  %3457 = vmatprep.subr.mxu0 0.0
  %3458 = vmatpush1.msra.mxu0 %v801
  %3459 = vmatprep.subr.mxu0 0.0
  %3460 = vmatpush1.msra.mxu0 %v802
  %3461 = vmatprep.mubr.f32.mxu0 %v1562
  %3462 = vmatmul.mubr.f32.gmra.mrb[0].mxu0 %v1560
  %v3463 = vpop.f32.mrb[0].mxu0
  %v3464 = vadd.f32 %v3394, %v3463
  %v3465 = vpop.f32.mrb[0].mxu0
  %3466 = vdwg.mxu0
  %3467 = vmatprep.subr.mxu0 0.0
  %3468 = vmatpush1.msra.mxu0 %v803
  %3469 = vmatprep.subr.mxu0 0.0
  %3470 = vmatpush1.msra.mxu0 %v804
  %3471 = vmatprep.subr.mxu0 0.0
  %3472 = vmatpush1.msra.mxu0 %v805
  %3473 = vmatprep.subr.mxu0 0.0
  %3474 = vmatpush1.msra.mxu0 %v806
  %3475 = vmatprep.subr.mxu0 0.0
  %3476 = vmatpush1.msra.mxu0 %v807
  %3477 = vmatprep.subr.mxu0 0.0
  %3478 = vmatpush1.msra.mxu0 %v808
  %3479 = vmatprep.subr.mxu0 0.0
  %3480 = vmatpush1.msra.mxu0 %v809
  %3481 = vmatprep.subr.mxu0 0.0
  %3482 = vmatpush1.msra.mxu0 %v810
  %3483 = vmatprep.subr.mxu0 0.0
  %3484 = vmatpush1.msra.mxu0 %v811
  %3485 = vmatprep.subr.mxu0 0.0
  %3486 = vmatpush1.msra.mxu0 %v812
  %3487 = vmatprep.subr.mxu0 0.0
  %3488 = vmatpush1.msra.mxu0 %v813
  %3489 = vmatprep.subr.mxu0 0.0
  %3490 = vmatpush1.msra.mxu0 %v814
  %3491 = vmatprep.subr.mxu0 0.0
  %3492 = vmatpush1.msra.mxu0 %v815
  %3493 = vmatprep.subr.mxu0 0.0
  %3494 = vmatpush1.msra.mxu0 %v816
  %3495 = vmatprep.subr.mxu0 0.0
  %3496 = vmatpush1.msra.mxu0 %v817
  %3497 = vmatprep.subr.mxu0 0.0
  %3498 = vmatpush1.msra.mxu0 %v818
  %3499 = vmatprep.subr.mxu0 0.0
  %3500 = vmatpush1.msra.mxu0 %v819
  %3501 = vmatprep.subr.mxu0 0.0
  %3502 = vmatpush1.msra.mxu0 %v820
  %3503 = vmatprep.subr.mxu0 0.0
  %3504 = vmatpush1.msra.mxu0 %v821
  %3505 = vmatprep.subr.mxu0 0.0
  %3506 = vmatpush1.msra.mxu0 %v822
  %3507 = vmatprep.subr.mxu0 0.0
  %3508 = vmatpush1.msra.mxu0 %v823
  %3509 = vmatprep.subr.mxu0 0.0
  %3510 = vmatpush1.msra.mxu0 %v824
  %3511 = vmatprep.subr.mxu0 0.0
  %3512 = vmatpush1.msra.mxu0 %v825
  %3513 = vmatprep.subr.mxu0 0.0
  %3514 = vmatpush1.msra.mxu0 %v826
  %3515 = vmatprep.subr.mxu0 0.0
  %3516 = vmatpush1.msra.mxu0 %v827
  %3517 = vmatprep.subr.mxu0 0.0
  %3518 = vmatpush1.msra.mxu0 %v828
  %3519 = vmatprep.subr.mxu0 0.0
  %3520 = vmatpush1.msra.mxu0 %v829
  %3521 = vmatprep.subr.mxu0 0.0
  %3522 = vmatpush1.msra.mxu0 %v830
  %3523 = vmatprep.subr.mxu0 0.0
  %3524 = vmatpush1.msra.mxu0 %v831
  %3525 = vmatprep.subr.mxu0 0.0
  %3526 = vmatpush1.msra.mxu0 %v832
  %3527 = vmatprep.subr.mxu0 0.0
  %3528 = vmatpush1.msra.mxu0 %v833
  %3529 = vmatprep.subr.mxu0 0.0
  %3530 = vmatpush1.msra.mxu0 %v834
  %3531 = vmatprep.mubr.f32.mxu0 %v1578
  %3532 = vmatmul.mubr.f32.gmra.mrb[0].mxu0 %v1570
  %v3533 = vpop.f32.mrb[0].mxu0
  %v3534 = vadd.f32 %v3464, %v3533
  %v3535 = vpop.f32.mrb[0].mxu0
  %3536 = vdwg.mxu0
  %3537 = vmatprep.subr.mxu0 0.0
  %3538 = vmatpush1.msra.mxu0 %v835
  %3539 = vmatprep.subr.mxu0 0.0
  %3540 = vmatpush1.msra.mxu0 %v836
  %3541 = vmatprep.subr.mxu0 0.0
  %3542 = vmatpush1.msra.mxu0 %v837
  %3543 = vmatprep.subr.mxu0 0.0
  %3544 = vmatpush1.msra.mxu0 %v838
  %3545 = vmatprep.subr.mxu0 0.0
  %3546 = vmatpush1.msra.mxu0 %v839
  %3547 = vmatprep.subr.mxu0 0.0
  %3548 = vmatpush1.msra.mxu0 %v840
  %3549 = vmatprep.subr.mxu0 0.0
  %3550 = vmatpush1.msra.mxu0 %v841
  %3551 = vmatprep.subr.mxu0 0.0
  %3552 = vmatpush1.msra.mxu0 %v842
  %3553 = vmatprep.subr.mxu0 0.0
  %3554 = vmatpush1.msra.mxu0 %v843
  %3555 = vmatprep.subr.mxu0 0.0
  %3556 = vmatpush1.msra.mxu0 %v844
  %3557 = vmatprep.subr.mxu0 0.0
  %3558 = vmatpush1.msra.mxu0 %v845
  %3559 = vmatprep.subr.mxu0 0.0
  %3560 = vmatpush1.msra.mxu0 %v846
  %3561 = vmatprep.subr.mxu0 0.0
  %3562 = vmatpush1.msra.mxu0 %v847
  %3563 = vmatprep.subr.mxu0 0.0
  %3564 = vmatpush1.msra.mxu0 %v848
  %3565 = vmatprep.subr.mxu0 0.0
  %3566 = vmatpush1.msra.mxu0 %v849
  %3567 = vmatprep.subr.mxu0 0.0
  %3568 = vmatpush1.msra.mxu0 %v850
  %3569 = vmatprep.subr.mxu0 0.0
  %3570 = vmatpush1.msra.mxu0 %v851
  %3571 = vmatprep.subr.mxu0 0.0
  %3572 = vmatpush1.msra.mxu0 %v852
  %3573 = vmatprep.subr.mxu0 0.0
  %3574 = vmatpush1.msra.mxu0 %v853
  %3575 = vmatprep.subr.mxu0 0.0
  %3576 = vmatpush1.msra.mxu0 %v854
  %3577 = vmatprep.subr.mxu0 0.0
  %3578 = vmatpush1.msra.mxu0 %v855
  %3579 = vmatprep.subr.mxu0 0.0
  %3580 = vmatpush1.msra.mxu0 %v856
  %3581 = vmatprep.subr.mxu0 0.0
  %3582 = vmatpush1.msra.mxu0 %v857
  %3583 = vmatprep.subr.mxu0 0.0
  %3584 = vmatpush1.msra.mxu0 %v858
  %3585 = vmatprep.subr.mxu0 0.0
  %3586 = vmatpush1.msra.mxu0 %v859
  %3587 = vmatprep.subr.mxu0 0.0
  %3588 = vmatpush1.msra.mxu0 %v860
  %3589 = vmatprep.subr.mxu0 0.0
  %3590 = vmatpush1.msra.mxu0 %v861
  %3591 = vmatprep.subr.mxu0 0.0
  %3592 = vmatpush1.msra.mxu0 %v862
  %3593 = vmatprep.subr.mxu0 0.0
  %3594 = vmatpush1.msra.mxu0 %v863
  %3595 = vmatprep.subr.mxu0 0.0
  %3596 = vmatpush1.msra.mxu0 %v864
  %3597 = vmatprep.subr.mxu0 0.0
  %3598 = vmatpush1.msra.mxu0 %v865
  %3599 = vmatprep.subr.mxu0 0.0
  %3600 = vmatpush1.msra.mxu0 %v866
  %3601 = vmatprep.mubr.f32.mxu0 %v1579
  %3602 = vmatmul.mubr.f32.gmra.mrb[0].mxu0 %v1577
  %v3603 = vpop.f32.mrb[0].mxu0
  %v3604 = vadd.f32 %v3534, %v3603
  %v3605 = vpop.f32.mrb[0].mxu0
  %3606 = vdwg.mxu0
  %3607 = vmatprep.subr.mxu0 0.0
  %3608 = vmatpush1.msra.mxu0 %v867
  %3609 = vmatprep.subr.mxu0 0.0
  %3610 = vmatpush1.msra.mxu0 %v868
  %3611 = vmatprep.subr.mxu0 0.0
  %3612 = vmatpush1.msra.mxu0 %v869
  %3613 = vmatprep.subr.mxu0 0.0
  %3614 = vmatpush1.msra.mxu0 %v870
  %3615 = vmatprep.subr.mxu0 0.0
  %3616 = vmatpush1.msra.mxu0 %v871
  %3617 = vmatprep.subr.mxu0 0.0
  %3618 = vmatpush1.msra.mxu0 %v872
  %3619 = vmatprep.subr.mxu0 0.0
  %3620 = vmatpush1.msra.mxu0 %v873
  %3621 = vmatprep.subr.mxu0 0.0
  %3622 = vmatpush1.msra.mxu0 %v874
  %3623 = vmatprep.subr.mxu0 0.0
  %3624 = vmatpush1.msra.mxu0 %v875
  %3625 = vmatprep.subr.mxu0 0.0
  %3626 = vmatpush1.msra.mxu0 %v876
  %3627 = vmatprep.subr.mxu0 0.0
  %3628 = vmatpush1.msra.mxu0 %v877
  %3629 = vmatprep.subr.mxu0 0.0
  %3630 = vmatpush1.msra.mxu0 %v878
  %3631 = vmatprep.subr.mxu0 0.0
  %3632 = vmatpush1.msra.mxu0 %v879
  %3633 = vmatprep.subr.mxu0 0.0
  %3634 = vmatpush1.msra.mxu0 %v880
  %3635 = vmatprep.subr.mxu0 0.0
  %3636 = vmatpush1.msra.mxu0 %v881
  %3637 = vmatprep.subr.mxu0 0.0
  %3638 = vmatpush1.msra.mxu0 %v882
  %3639 = vmatprep.subr.mxu0 0.0
  %3640 = vmatpush1.msra.mxu0 %v883
  %3641 = vmatprep.subr.mxu0 0.0
  %3642 = vmatpush1.msra.mxu0 %v884
  %3643 = vmatprep.subr.mxu0 0.0
  %3644 = vmatpush1.msra.mxu0 %v885
  %3645 = vmatprep.subr.mxu0 0.0
  %3646 = vmatpush1.msra.mxu0 %v886
  %3647 = vmatprep.subr.mxu0 0.0
  %3648 = vmatpush1.msra.mxu0 %v887
  %3649 = vmatprep.subr.mxu0 0.0
  %3650 = vmatpush1.msra.mxu0 %v888
  %3651 = vmatprep.subr.mxu0 0.0
  %3652 = vmatpush1.msra.mxu0 %v889
  %3653 = vmatprep.subr.mxu0 0.0
  %3654 = vmatpush1.msra.mxu0 %v890
  %3655 = vmatprep.subr.mxu0 0.0
  %3656 = vmatpush1.msra.mxu0 %v891
  %3657 = vmatprep.subr.mxu0 0.0
  %3658 = vmatpush1.msra.mxu0 %v892
  %3659 = vmatprep.subr.mxu0 0.0
  %3660 = vmatpush1.msra.mxu0 %v893
  %3661 = vmatprep.subr.mxu0 0.0
  %3662 = vmatpush1.msra.mxu0 %v894
  %3663 = vmatprep.subr.mxu0 0.0
  %3664 = vmatpush1.msra.mxu0 %v895
  %3665 = vmatprep.subr.mxu0 0.0
  %3666 = vmatpush1.msra.mxu0 %v896
  %3667 = vmatprep.subr.mxu0 0.0
  %3668 = vmatpush1.msra.mxu0 %v897
  %3669 = vmatprep.subr.mxu0 0.0
  %3670 = vmatpush1.msra.mxu0 %v898
  %3671 = vmatprep.mubr.f32.mxu0 %v1595
  %3672 = vmatmul.mubr.f32.gmra.mrb[0].mxu0 %v1587
  %v3673 = vpop.f32.mrb[0].mxu0
  %v3674 = vadd.f32 %v3604, %v3673
  %v3675 = vpop.f32.mrb[0].mxu0
  %3676 = vdwg.mxu0
  %3677 = vmatprep.subr.mxu0 0.0
  %3678 = vmatpush1.msra.mxu0 %v899
  %3679 = vmatprep.subr.mxu0 0.0
  %3680 = vmatpush1.msra.mxu0 %v900
  %3681 = vmatprep.subr.mxu0 0.0
  %3682 = vmatpush1.msra.mxu0 %v901
  %3683 = vmatprep.subr.mxu0 0.0
  %3684 = vmatpush1.msra.mxu0 %v902
  %3685 = vmatprep.subr.mxu0 0.0
  %3686 = vmatpush1.msra.mxu0 %v903
  %3687 = vmatprep.subr.mxu0 0.0
  %3688 = vmatpush1.msra.mxu0 %v904
  %3689 = vmatprep.subr.mxu0 0.0
  %3690 = vmatpush1.msra.mxu0 %v905
  %3691 = vmatprep.subr.mxu0 0.0
  %3692 = vmatpush1.msra.mxu0 %v906
  %3693 = vmatprep.subr.mxu0 0.0
  %3694 = vmatpush1.msra.mxu0 %v907
  %3695 = vmatprep.subr.mxu0 0.0
  %3696 = vmatpush1.msra.mxu0 %v908
  %3697 = vmatprep.subr.mxu0 0.0
  %3698 = vmatpush1.msra.mxu0 %v909
  %3699 = vmatprep.subr.mxu0 0.0
  %3700 = vmatpush1.msra.mxu0 %v910
  %3701 = vmatprep.subr.mxu0 0.0
  %3702 = vmatpush1.msra.mxu0 %v911
  %3703 = vmatprep.subr.mxu0 0.0
  %3704 = vmatpush1.msra.mxu0 %v912
  %3705 = vmatprep.subr.mxu0 0.0
  %3706 = vmatpush1.msra.mxu0 %v913
  %3707 = vmatprep.subr.mxu0 0.0
  %3708 = vmatpush1.msra.mxu0 %v914
  %3709 = vmatprep.subr.mxu0 0.0
  %3710 = vmatpush1.msra.mxu0 %v915
  %3711 = vmatprep.subr.mxu0 0.0
  %3712 = vmatpush1.msra.mxu0 %v916
  %3713 = vmatprep.subr.mxu0 0.0
  %3714 = vmatpush1.msra.mxu0 %v917
  %3715 = vmatprep.subr.mxu0 0.0
  %3716 = vmatpush1.msra.mxu0 %v918
  %3717 = vmatprep.subr.mxu0 0.0
  %3718 = vmatpush1.msra.mxu0 %v919
  %3719 = vmatprep.subr.mxu0 0.0
  %3720 = vmatpush1.msra.mxu0 %v920
  %3721 = vmatprep.subr.mxu0 0.0
  %3722 = vmatpush1.msra.mxu0 %v921
  %3723 = vmatprep.subr.mxu0 0.0
  %3724 = vmatpush1.msra.mxu0 %v922
  %3725 = vmatprep.subr.mxu0 0.0
  %3726 = vmatpush1.msra.mxu0 %v923
  %3727 = vmatprep.subr.mxu0 0.0
  %3728 = vmatpush1.msra.mxu0 %v924
  %3729 = vmatprep.subr.mxu0 0.0
  %3730 = vmatpush1.msra.mxu0 %v925
  %3731 = vmatprep.subr.mxu0 0.0
  %3732 = vmatpush1.msra.mxu0 %v926
  %3733 = vmatprep.subr.mxu0 0.0
  %3734 = vmatpush1.msra.mxu0 %v927
  %3735 = vmatprep.subr.mxu0 0.0
  %3736 = vmatpush1.msra.mxu0 %v928
  %3737 = vmatprep.subr.mxu0 0.0
  %3738 = vmatpush1.msra.mxu0 %v929
  %3739 = vmatprep.subr.mxu0 0.0
  %3740 = vmatpush1.msra.mxu0 %v930
  %3741 = vmatprep.mubr.f32.mxu0 %v1596
  %3742 = vmatmul.mubr.f32.gmra.mrb[0].mxu0 %v1594
  %v3743 = vpop.f32.mrb[0].mxu0
  %v3744 = vadd.f32 %v3674, %v3743
  %v3745 = vpop.f32.mrb[0].mxu0
  %3746 = vdwg.mxu0
  %3747 = vmatprep.subr.mxu0 0.0
  %3748 = vmatpush1.msra.mxu0 %v931
  %3749 = vmatprep.subr.mxu0 0.0
  %3750 = vmatpush1.msra.mxu0 %v932
  %3751 = vmatprep.subr.mxu0 0.0
  %3752 = vmatpush1.msra.mxu0 %v933
  %3753 = vmatprep.subr.mxu0 0.0
  %3754 = vmatpush1.msra.mxu0 %v934
  %3755 = vmatprep.subr.mxu0 0.0
  %3756 = vmatpush1.msra.mxu0 %v935
  %3757 = vmatprep.subr.mxu0 0.0
  %3758 = vmatpush1.msra.mxu0 %v936
  %3759 = vmatprep.subr.mxu0 0.0
  %3760 = vmatpush1.msra.mxu0 %v937
  %3761 = vmatprep.subr.mxu0 0.0
  %3762 = vmatpush1.msra.mxu0 %v938
  %3763 = vmatprep.subr.mxu0 0.0
  %3764 = vmatpush1.msra.mxu0 %v939
  %3765 = vmatprep.subr.mxu0 0.0
  %3766 = vmatpush1.msra.mxu0 %v940
  %3767 = vmatprep.subr.mxu0 0.0
  %3768 = vmatpush1.msra.mxu0 %v941
  %3769 = vmatprep.subr.mxu0 0.0
  %3770 = vmatpush1.msra.mxu0 %v942
  %3771 = vmatprep.subr.mxu0 0.0
  %3772 = vmatpush1.msra.mxu0 %v943
  %3773 = vmatprep.subr.mxu0 0.0
  %3774 = vmatpush1.msra.mxu0 %v944
  %3775 = vmatprep.subr.mxu0 0.0
  %3776 = vmatpush1.msra.mxu0 %v945
  %3777 = vmatprep.subr.mxu0 0.0
  %3778 = vmatpush1.msra.mxu0 %v946
  %3779 = vmatprep.subr.mxu0 0.0
  %3780 = vmatpush1.msra.mxu0 %v947
  %3781 = vmatprep.subr.mxu0 0.0
  %3782 = vmatpush1.msra.mxu0 %v948
  %3783 = vmatprep.subr.mxu0 0.0
  %3784 = vmatpush1.msra.mxu0 %v949
  %3785 = vmatprep.subr.mxu0 0.0
  %3786 = vmatpush1.msra.mxu0 %v950
  %3787 = vmatprep.subr.mxu0 0.0
  %3788 = vmatpush1.msra.mxu0 %v951
  %3789 = vmatprep.subr.mxu0 0.0
  %3790 = vmatpush1.msra.mxu0 %v952
  %3791 = vmatprep.subr.mxu0 0.0
  %3792 = vmatpush1.msra.mxu0 %v953
  %3793 = vmatprep.subr.mxu0 0.0
  %3794 = vmatpush1.msra.mxu0 %v954
  %3795 = vmatprep.subr.mxu0 0.0
  %3796 = vmatpush1.msra.mxu0 %v955
  %3797 = vmatprep.subr.mxu0 0.0
  %3798 = vmatpush1.msra.mxu0 %v956
  %3799 = vmatprep.subr.mxu0 0.0
  %3800 = vmatpush1.msra.mxu0 %v957
  %3801 = vmatprep.subr.mxu0 0.0
  %3802 = vmatpush1.msra.mxu0 %v958
  %3803 = vmatprep.subr.mxu0 0.0
  %3804 = vmatpush1.msra.mxu0 %v959
  %3805 = vmatprep.subr.mxu0 0.0
  %3806 = vmatpush1.msra.mxu0 %v960
  %3807 = vmatprep.subr.mxu0 0.0
  %3808 = vmatpush1.msra.mxu0 %v961
  %3809 = vmatprep.subr.mxu0 0.0
  %3810 = vmatpush1.msra.mxu0 %v962
  %3811 = vmatprep.mubr.f32.mxu0 %v1612
  %3812 = vmatmul.mubr.f32.gmra.mrb[0].mxu0 %v1604
  %v3813 = vpop.f32.mrb[0].mxu0
  %v3814 = vadd.f32 %v3744, %v3813
  %v3815 = vpop.f32.mrb[0].mxu0
  %3816 = vdwg.mxu0
  %3817 = vmatprep.subr.mxu0 0.0
  %3818 = vmatpush1.msra.mxu0 %v963
  %3819 = vmatprep.subr.mxu0 0.0
  %3820 = vmatpush1.msra.mxu0 %v964
  %3821 = vmatprep.subr.mxu0 0.0
  %3822 = vmatpush1.msra.mxu0 %v965
  %3823 = vmatprep.subr.mxu0 0.0
  %3824 = vmatpush1.msra.mxu0 %v966
  %3825 = vmatprep.subr.mxu0 0.0
  %3826 = vmatpush1.msra.mxu0 %v967
  %3827 = vmatprep.subr.mxu0 0.0
  %3828 = vmatpush1.msra.mxu0 %v968
  %3829 = vmatprep.subr.mxu0 0.0
  %3830 = vmatpush1.msra.mxu0 %v969
  %3831 = vmatprep.subr.mxu0 0.0
  %3832 = vmatpush1.msra.mxu0 %v970
  %3833 = vmatprep.subr.mxu0 0.0
  %3834 = vmatpush1.msra.mxu0 %v971
  %3835 = vmatprep.subr.mxu0 0.0
  %3836 = vmatpush1.msra.mxu0 %v972
  %3837 = vmatprep.subr.mxu0 0.0
  %3838 = vmatpush1.msra.mxu0 %v973
  %3839 = vmatprep.subr.mxu0 0.0
  %3840 = vmatpush1.msra.mxu0 %v974
  %3841 = vmatprep.subr.mxu0 0.0
  %3842 = vmatpush1.msra.mxu0 %v975
  %3843 = vmatprep.subr.mxu0 0.0
  %3844 = vmatpush1.msra.mxu0 %v976
  %3845 = vmatprep.subr.mxu0 0.0
  %3846 = vmatpush1.msra.mxu0 %v977
  %3847 = vmatprep.subr.mxu0 0.0
  %3848 = vmatpush1.msra.mxu0 %v978
  %3849 = vmatprep.subr.mxu0 0.0
  %3850 = vmatpush1.msra.mxu0 %v979
  %3851 = vmatprep.subr.mxu0 0.0
  %3852 = vmatpush1.msra.mxu0 %v980
  %3853 = vmatprep.subr.mxu0 0.0
  %3854 = vmatpush1.msra.mxu0 %v981
  %3855 = vmatprep.subr.mxu0 0.0
  %3856 = vmatpush1.msra.mxu0 %v982
  %3857 = vmatprep.subr.mxu0 0.0
  %3858 = vmatpush1.msra.mxu0 %v983
  %3859 = vmatprep.subr.mxu0 0.0
  %3860 = vmatpush1.msra.mxu0 %v984
  %3861 = vmatprep.subr.mxu0 0.0
  %3862 = vmatpush1.msra.mxu0 %v985
  %3863 = vmatprep.subr.mxu0 0.0
  %3864 = vmatpush1.msra.mxu0 %v986
  %3865 = vmatprep.subr.mxu0 0.0
  %3866 = vmatpush1.msra.mxu0 %v987
  %3867 = vmatprep.subr.mxu0 0.0
  %3868 = vmatpush1.msra.mxu0 %v988
  %3869 = vmatprep.subr.mxu0 0.0
  %3870 = vmatpush1.msra.mxu0 %v989
  %3871 = vmatprep.subr.mxu0 0.0
  %3872 = vmatpush1.msra.mxu0 %v990
  %3873 = vmatprep.subr.mxu0 0.0
  %3874 = vmatpush1.msra.mxu0 %v991
  %3875 = vmatprep.subr.mxu0 0.0
  %3876 = vmatpush1.msra.mxu0 %v992
  %3877 = vmatprep.subr.mxu0 0.0
  %3878 = vmatpush1.msra.mxu0 %v993
  %3879 = vmatprep.subr.mxu0 0.0
  %3880 = vmatpush1.msra.mxu0 %v994
  %3881 = vmatprep.mubr.f32.mxu0 %v1613
  %3882 = vmatmul.mubr.f32.gmra.mrb[0].mxu0 %v1611
  %v3883 = vpop.f32.mrb[0].mxu0
  %v3884 = vadd.f32 %v3814, %v3883
  %v3885 = vpop.f32.mrb[0].mxu0
  %3886 = vdwg.mxu0
  %3887 = vmatprep.subr.mxu0 0.0
  %3888 = vmatpush1.msra.mxu0 %v995
  %3889 = vmatprep.subr.mxu0 0.0
  %3890 = vmatpush1.msra.mxu0 %v996
  %3891 = vmatprep.subr.mxu0 0.0
  %3892 = vmatpush1.msra.mxu0 %v997
  %3893 = vmatprep.subr.mxu0 0.0
  %3894 = vmatpush1.msra.mxu0 %v998
  %3895 = vmatprep.subr.mxu0 0.0
  %3896 = vmatpush1.msra.mxu0 %v999
  %3897 = vmatprep.subr.mxu0 0.0
  %3898 = vmatpush1.msra.mxu0 %v1000
  %3899 = vmatprep.subr.mxu0 0.0
  %3900 = vmatpush1.msra.mxu0 %v1001
  %3901 = vmatprep.subr.mxu0 0.0
  %3902 = vmatpush1.msra.mxu0 %v1002
  %3903 = vmatprep.subr.mxu0 0.0
  %3904 = vmatpush1.msra.mxu0 %v1003
  %3905 = vmatprep.subr.mxu0 0.0
  %3906 = vmatpush1.msra.mxu0 %v1004
  %3907 = vmatprep.subr.mxu0 0.0
  %3908 = vmatpush1.msra.mxu0 %v1005
  %3909 = vmatprep.subr.mxu0 0.0
  %3910 = vmatpush1.msra.mxu0 %v1006
  %3911 = vmatprep.subr.mxu0 0.0
  %3912 = vmatpush1.msra.mxu0 %v1007
  %3913 = vmatprep.subr.mxu0 0.0
  %3914 = vmatpush1.msra.mxu0 %v1008
  %3915 = vmatprep.subr.mxu0 0.0
  %3916 = vmatpush1.msra.mxu0 %v1009
  %3917 = vmatprep.subr.mxu0 0.0
  %3918 = vmatpush1.msra.mxu0 %v1010
  %3919 = vmatprep.subr.mxu0 0.0
  %3920 = vmatpush1.msra.mxu0 %v1011
  %3921 = vmatprep.subr.mxu0 0.0
  %3922 = vmatpush1.msra.mxu0 %v1012
  %3923 = vmatprep.subr.mxu0 0.0
  %3924 = vmatpush1.msra.mxu0 %v1013
  %3925 = vmatprep.subr.mxu0 0.0
  %3926 = vmatpush1.msra.mxu0 %v1014
  %3927 = vmatprep.subr.mxu0 0.0
  %3928 = vmatpush1.msra.mxu0 %v1015
  %3929 = vmatprep.subr.mxu0 0.0
  %3930 = vmatpush1.msra.mxu0 %v1016
  %3931 = vmatprep.subr.mxu0 0.0
  %3932 = vmatpush1.msra.mxu0 %v1017
  %3933 = vmatprep.subr.mxu0 0.0
  %3934 = vmatpush1.msra.mxu0 %v1018
  %3935 = vmatprep.subr.mxu0 0.0
  %3936 = vmatpush1.msra.mxu0 %v1019
  %3937 = vmatprep.subr.mxu0 0.0
  %3938 = vmatpush1.msra.mxu0 %v1020
  %3939 = vmatprep.subr.mxu0 0.0
  %3940 = vmatpush1.msra.mxu0 %v1021
  %3941 = vmatprep.subr.mxu0 0.0
  %3942 = vmatpush1.msra.mxu0 %v1022
  %3943 = vmatprep.subr.mxu0 0.0
  %3944 = vmatpush1.msra.mxu0 %v1023
  %3945 = vmatprep.subr.mxu0 0.0
  %3946 = vmatpush1.msra.mxu0 %v1024
  %3947 = vmatprep.subr.mxu0 0.0
  %3948 = vmatpush1.msra.mxu0 %v1025
  %3949 = vmatprep.subr.mxu0 0.0
  %3950 = vmatpush1.msra.mxu0 %v1026
  %3951 = vmatprep.mubr.f32.mxu0 %v1629
  %3952 = vmatmul.mubr.f32.gmra.mrb[0].mxu0 %v1621
  %v3953 = vpop.f32.mrb[0].mxu0
  %v3954 = vadd.f32 %v3884, %v3953
  %v3955 = vpop.f32.mrb[0].mxu0
  %3956 = vdwg.mxu0
  %3957 = vmatprep.subr.mxu0 0.0
  %3958 = vmatpush1.msra.mxu0 %v1027
  %3959 = vmatprep.subr.mxu0 0.0
  %3960 = vmatpush1.msra.mxu0 %v1028
  %3961 = vmatprep.subr.mxu0 0.0
  %3962 = vmatpush1.msra.mxu0 %v1029
  %3963 = vmatprep.subr.mxu0 0.0
  %3964 = vmatpush1.msra.mxu0 %v1030
  %3965 = vmatprep.subr.mxu0 0.0
  %3966 = vmatpush1.msra.mxu0 %v1031
  %3967 = vmatprep.subr.mxu0 0.0
  %3968 = vmatpush1.msra.mxu0 %v1032
  %3969 = vmatprep.subr.mxu0 0.0
  %3970 = vmatpush1.msra.mxu0 %v1033
  %3971 = vmatprep.subr.mxu0 0.0
  %3972 = vmatpush1.msra.mxu0 %v1034
  %3973 = vmatprep.subr.mxu0 0.0
  %3974 = vmatpush1.msra.mxu0 %v1035
  %3975 = vmatprep.subr.mxu0 0.0
  %3976 = vmatpush1.msra.mxu0 %v1036
  %3977 = vmatprep.subr.mxu0 0.0
  %3978 = vmatpush1.msra.mxu0 %v1037
  %3979 = vmatprep.subr.mxu0 0.0
  %3980 = vmatpush1.msra.mxu0 %v1038
  %3981 = vmatprep.subr.mxu0 0.0
  %3982 = vmatpush1.msra.mxu0 %v1039
  %3983 = vmatprep.subr.mxu0 0.0
  %3984 = vmatpush1.msra.mxu0 %v1040
  %3985 = vmatprep.subr.mxu0 0.0
  %3986 = vmatpush1.msra.mxu0 %v1041
  %3987 = vmatprep.subr.mxu0 0.0
  %3988 = vmatpush1.msra.mxu0 %v1042
  %3989 = vmatprep.subr.mxu0 0.0
  %3990 = vmatpush1.msra.mxu0 %v1043
  %3991 = vmatprep.subr.mxu0 0.0
  %3992 = vmatpush1.msra.mxu0 %v1044
  %3993 = vmatprep.subr.mxu0 0.0
  %3994 = vmatpush1.msra.mxu0 %v1045
  %3995 = vmatprep.subr.mxu0 0.0
  %3996 = vmatpush1.msra.mxu0 %v1046
  %3997 = vmatprep.subr.mxu0 0.0
  %3998 = vmatpush1.msra.mxu0 %v1047
  %3999 = vmatprep.subr.mxu0 0.0
  %4000 = vmatpush1.msra.mxu0 %v1048
  %4001 = vmatprep.subr.mxu0 0.0
  %4002 = vmatpush1.msra.mxu0 %v1049
  %4003 = vmatprep.subr.mxu0 0.0
  %4004 = vmatpush1.msra.mxu0 %v1050
  %4005 = vmatprep.subr.mxu0 0.0
  %4006 = vmatpush1.msra.mxu0 %v1051
  %4007 = vmatprep.subr.mxu0 0.0
  %4008 = vmatpush1.msra.mxu0 %v1052
  %4009 = vmatprep.subr.mxu0 0.0
  %4010 = vmatpush1.msra.mxu0 %v1053
  %4011 = vmatprep.subr.mxu0 0.0
  %4012 = vmatpush1.msra.mxu0 %v1054
  %4013 = vmatprep.subr.mxu0 0.0
  %4014 = vmatpush1.msra.mxu0 %v1055
  %4015 = vmatprep.subr.mxu0 0.0
  %4016 = vmatpush1.msra.mxu0 %v1056
  %4017 = vmatprep.subr.mxu0 0.0
  %4018 = vmatpush1.msra.mxu0 %v1057
  %4019 = vmatprep.subr.mxu0 0.0
  %4020 = vmatpush1.msra.mxu0 %v1058
  %4021 = vmatprep.mubr.f32.mxu0 %v1630
  %4022 = vmatmul.mubr.f32.gmra.mrb[0].mxu0 %v1628
  %v4023 = vpop.f32.mrb[0].mxu0
  %v4024 = vadd.f32 %v3954, %v4023
  %v4025 = vpop.f32.mrb[0].mxu0
  %4026 = vdwg.mxu0
  %4027 = vmatprep.subr.mxu0 0.0
  %4028 = vmatpush1.msra.mxu0 %v1059
  %4029 = vmatprep.subr.mxu0 0.0
  %4030 = vmatpush1.msra.mxu0 %v1060
  %4031 = vmatprep.subr.mxu0 0.0
  %4032 = vmatpush1.msra.mxu0 %v1061
  %4033 = vmatprep.subr.mxu0 0.0
  %4034 = vmatpush1.msra.mxu0 %v1062
  %4035 = vmatprep.subr.mxu0 0.0
  %4036 = vmatpush1.msra.mxu0 %v1063
  %4037 = vmatprep.subr.mxu0 0.0
  %4038 = vmatpush1.msra.mxu0 %v1064
  %4039 = vmatprep.subr.mxu0 0.0
  %4040 = vmatpush1.msra.mxu0 %v1065
  %4041 = vmatprep.subr.mxu0 0.0
  %4042 = vmatpush1.msra.mxu0 %v1066
  %4043 = vmatprep.subr.mxu0 0.0
  %4044 = vmatpush1.msra.mxu0 %v1067
  %4045 = vmatprep.subr.mxu0 0.0
  %4046 = vmatpush1.msra.mxu0 %v1068
  %4047 = vmatprep.subr.mxu0 0.0
  %4048 = vmatpush1.msra.mxu0 %v1069
  %4049 = vmatprep.subr.mxu0 0.0
  %4050 = vmatpush1.msra.mxu0 %v1070
  %4051 = vmatprep.subr.mxu0 0.0
  %4052 = vmatpush1.msra.mxu0 %v1071
  %4053 = vmatprep.subr.mxu0 0.0
  %4054 = vmatpush1.msra.mxu0 %v1072
  %4055 = vmatprep.subr.mxu0 0.0
  %4056 = vmatpush1.msra.mxu0 %v1073
  %4057 = vmatprep.subr.mxu0 0.0
  %4058 = vmatpush1.msra.mxu0 %v1074
  %4059 = vmatprep.subr.mxu0 0.0
  %4060 = vmatpush1.msra.mxu0 %v1075
  %4061 = vmatprep.subr.mxu0 0.0
  %4062 = vmatpush1.msra.mxu0 %v1076
  %4063 = vmatprep.subr.mxu0 0.0
  %4064 = vmatpush1.msra.mxu0 %v1077
  %4065 = vmatprep.subr.mxu0 0.0
  %4066 = vmatpush1.msra.mxu0 %v1078
  %4067 = vmatprep.subr.mxu0 0.0
  %4068 = vmatpush1.msra.mxu0 %v1079
  %4069 = vmatprep.subr.mxu0 0.0
  %4070 = vmatpush1.msra.mxu0 %v1080
  %4071 = vmatprep.subr.mxu0 0.0
  %4072 = vmatpush1.msra.mxu0 %v1081
  %4073 = vmatprep.subr.mxu0 0.0
  %4074 = vmatpush1.msra.mxu0 %v1082
  %4075 = vmatprep.subr.mxu0 0.0
  %4076 = vmatpush1.msra.mxu0 %v1083
  %4077 = vmatprep.subr.mxu0 0.0
  %4078 = vmatpush1.msra.mxu0 %v1084
  %4079 = vmatprep.subr.mxu0 0.0
  %4080 = vmatpush1.msra.mxu0 %v1085
  %4081 = vmatprep.subr.mxu0 0.0
  %4082 = vmatpush1.msra.mxu0 %v1086
  %4083 = vmatprep.subr.mxu0 0.0
  %4084 = vmatpush1.msra.mxu0 %v1087
  %4085 = vmatprep.subr.mxu0 0.0
  %4086 = vmatpush1.msra.mxu0 %v1088
  %4087 = vmatprep.subr.mxu0 0.0
  %4088 = vmatpush1.msra.mxu0 %v1089
  %4089 = vmatprep.subr.mxu0 0.0
  %4090 = vmatpush1.msra.mxu0 %v1090
  %4091 = vmatprep.mubr.f32.mxu0 %v1646
  %4092 = vmatmul.mubr.f32.gmra.mrb[0].mxu0 %v1638
  %v4093 = vpop.f32.mrb[0].mxu0
  %v4094 = vadd.f32 %v4024, %v4093
  %v4095 = vpop.f32.mrb[0].mxu0
  %4096 = vdwg.mxu0
  %4097 = vmatprep.subr.mxu0 0.0
  %4098 = vmatpush1.msra.mxu0 %v1091
  %4099 = vmatprep.subr.mxu0 0.0
  %4100 = vmatpush1.msra.mxu0 %v1092
  %4101 = vmatprep.subr.mxu0 0.0
  %4102 = vmatpush1.msra.mxu0 %v1093
  %4103 = vmatprep.subr.mxu0 0.0
  %4104 = vmatpush1.msra.mxu0 %v1094
  %4105 = vmatprep.subr.mxu0 0.0
  %4106 = vmatpush1.msra.mxu0 %v1095
  %4107 = vmatprep.subr.mxu0 0.0
  %4108 = vmatpush1.msra.mxu0 %v1096
  %4109 = vmatprep.subr.mxu0 0.0
  %4110 = vmatpush1.msra.mxu0 %v1097
  %4111 = vmatprep.subr.mxu0 0.0
  %4112 = vmatpush1.msra.mxu0 %v1098
  %4113 = vmatprep.subr.mxu0 0.0
  %4114 = vmatpush1.msra.mxu0 %v1099
  %4115 = vmatprep.subr.mxu0 0.0
  %4116 = vmatpush1.msra.mxu0 %v1100
  %4117 = vmatprep.subr.mxu0 0.0
  %4118 = vmatpush1.msra.mxu0 %v1101
  %4119 = vmatprep.subr.mxu0 0.0
  %4120 = vmatpush1.msra.mxu0 %v1102
  %4121 = vmatprep.subr.mxu0 0.0
  %4122 = vmatpush1.msra.mxu0 %v1103
  %4123 = vmatprep.subr.mxu0 0.0
  %4124 = vmatpush1.msra.mxu0 %v1104
  %4125 = vmatprep.subr.mxu0 0.0
  %4126 = vmatpush1.msra.mxu0 %v1105
  %4127 = vmatprep.subr.mxu0 0.0
  %4128 = vmatpush1.msra.mxu0 %v1106
  %4129 = vmatprep.subr.mxu0 0.0
  %4130 = vmatpush1.msra.mxu0 %v1107
  %4131 = vmatprep.subr.mxu0 0.0
  %4132 = vmatpush1.msra.mxu0 %v1108
  %4133 = vmatprep.subr.mxu0 0.0
  %4134 = vmatpush1.msra.mxu0 %v1109
  %4135 = vmatprep.subr.mxu0 0.0
  %4136 = vmatpush1.msra.mxu0 %v1110
  %4137 = vmatprep.subr.mxu0 0.0
  %4138 = vmatpush1.msra.mxu0 %v1111
  %4139 = vmatprep.subr.mxu0 0.0
  %4140 = vmatpush1.msra.mxu0 %v1112
  %4141 = vmatprep.subr.mxu0 0.0
  %4142 = vmatpush1.msra.mxu0 %v1113
  %4143 = vmatprep.subr.mxu0 0.0
  %4144 = vmatpush1.msra.mxu0 %v1114
  %4145 = vmatprep.subr.mxu0 0.0
  %4146 = vmatpush1.msra.mxu0 %v1115
  %4147 = vmatprep.subr.mxu0 0.0
  %4148 = vmatpush1.msra.mxu0 %v1116
  %4149 = vmatprep.subr.mxu0 0.0
  %4150 = vmatpush1.msra.mxu0 %v1117
  %4151 = vmatprep.subr.mxu0 0.0
  %4152 = vmatpush1.msra.mxu0 %v1118
  %4153 = vmatprep.subr.mxu0 0.0
  %4154 = vmatpush1.msra.mxu0 %v1119
  %4155 = vmatprep.subr.mxu0 0.0
  %4156 = vmatpush1.msra.mxu0 %v1120
  %4157 = vmatprep.subr.mxu0 0.0
  %4158 = vmatpush1.msra.mxu0 %v1121
  %4159 = vmatprep.subr.mxu0 0.0
  %4160 = vmatpush1.msra.mxu0 %v1122
  %4161 = vmatprep.mubr.f32.mxu0 %v1647
  %4162 = vmatmul.mubr.f32.gmra.mrb[0].mxu0 %v1645
  %v4163 = vpop.f32.mrb[0].mxu0
  %v4164 = vadd.f32 %v4094, %v4163
  %v4165 = vpop.f32.mrb[0].mxu0
  %4166 = vdwg.mxu0
  %4167 = vmatprep.subr.mxu0 0.0
  %4168 = vmatpush1.msra.mxu0 %v1123
  %4169 = vmatprep.subr.mxu0 0.0
  %4170 = vmatpush1.msra.mxu0 %v1124
  %4171 = vmatprep.subr.mxu0 0.0
  %4172 = vmatpush1.msra.mxu0 %v1125
  %4173 = vmatprep.subr.mxu0 0.0
  %4174 = vmatpush1.msra.mxu0 %v1126
  %4175 = vmatprep.subr.mxu0 0.0
  %4176 = vmatpush1.msra.mxu0 %v1127
  %4177 = vmatprep.subr.mxu0 0.0
  %4178 = vmatpush1.msra.mxu0 %v1128
  %4179 = vmatprep.subr.mxu0 0.0
  %4180 = vmatpush1.msra.mxu0 %v1129
  %4181 = vmatprep.subr.mxu0 0.0
  %4182 = vmatpush1.msra.mxu0 %v1130
  %4183 = vmatprep.subr.mxu0 0.0
  %4184 = vmatpush1.msra.mxu0 %v1131
  %4185 = vmatprep.subr.mxu0 0.0
  %4186 = vmatpush1.msra.mxu0 %v1132
  %4187 = vmatprep.subr.mxu0 0.0
  %4188 = vmatpush1.msra.mxu0 %v1133
  %4189 = vmatprep.subr.mxu0 0.0
  %4190 = vmatpush1.msra.mxu0 %v1134
  %4191 = vmatprep.subr.mxu0 0.0
  %4192 = vmatpush1.msra.mxu0 %v1135
  %4193 = vmatprep.subr.mxu0 0.0
  %4194 = vmatpush1.msra.mxu0 %v1136
  %4195 = vmatprep.subr.mxu0 0.0
  %4196 = vmatpush1.msra.mxu0 %v1137
  %4197 = vmatprep.subr.mxu0 0.0
  %4198 = vmatpush1.msra.mxu0 %v1138
  %4199 = vmatprep.subr.mxu0 0.0
  %4200 = vmatpush1.msra.mxu0 %v1139
  %4201 = vmatprep.subr.mxu0 0.0
  %4202 = vmatpush1.msra.mxu0 %v1140
  %4203 = vmatprep.subr.mxu0 0.0
  %4204 = vmatpush1.msra.mxu0 %v1141
  %4205 = vmatprep.subr.mxu0 0.0
  %4206 = vmatpush1.msra.mxu0 %v1142
  %4207 = vmatprep.subr.mxu0 0.0
  %4208 = vmatpush1.msra.mxu0 %v1143
  %4209 = vmatprep.subr.mxu0 0.0
  %4210 = vmatpush1.msra.mxu0 %v1144
  %4211 = vmatprep.subr.mxu0 0.0
  %4212 = vmatpush1.msra.mxu0 %v1145
  %4213 = vmatprep.subr.mxu0 0.0
  %4214 = vmatpush1.msra.mxu0 %v1146
  %4215 = vmatprep.subr.mxu0 0.0
  %4216 = vmatpush1.msra.mxu0 %v1147
  %4217 = vmatprep.subr.mxu0 0.0
  %4218 = vmatpush1.msra.mxu0 %v1148
  %4219 = vmatprep.subr.mxu0 0.0
  %4220 = vmatpush1.msra.mxu0 %v1149
  %4221 = vmatprep.subr.mxu0 0.0
  %4222 = vmatpush1.msra.mxu0 %v1150
  %4223 = vmatprep.subr.mxu0 0.0
  %4224 = vmatpush1.msra.mxu0 %v1151
  %4225 = vmatprep.subr.mxu0 0.0
  %4226 = vmatpush1.msra.mxu0 %v1152
  %4227 = vmatprep.subr.mxu0 0.0
  %4228 = vmatpush1.msra.mxu0 %v1153
  %4229 = vmatprep.subr.mxu0 0.0
  %4230 = vmatpush1.msra.mxu0 %v1154
  %4231 = vmatprep.mubr.f32.mxu0 %v1663
  %4232 = vmatmul.mubr.f32.gmra.mrb[0].mxu0 %v1655
  %v4233 = vpop.f32.mrb[0].mxu0
  %v4234 = vadd.f32 %v4164, %v4233
  %v4235 = vpop.f32.mrb[0].mxu0
  %4236 = vdwg.mxu0
  %4237 = vmatprep.subr.mxu0 0.0
  %4238 = vmatpush1.msra.mxu0 %v1155
  %4239 = vmatprep.subr.mxu0 0.0
  %4240 = vmatpush1.msra.mxu0 %v1156
  %4241 = vmatprep.subr.mxu0 0.0
  %4242 = vmatpush1.msra.mxu0 %v1157
  %4243 = vmatprep.subr.mxu0 0.0
  %4244 = vmatpush1.msra.mxu0 %v1158
  %4245 = vmatprep.subr.mxu0 0.0
  %4246 = vmatpush1.msra.mxu0 %v1159
  %4247 = vmatprep.subr.mxu0 0.0
  %4248 = vmatpush1.msra.mxu0 %v1160
  %4249 = vmatprep.subr.mxu0 0.0
  %4250 = vmatpush1.msra.mxu0 %v1161
  %4251 = vmatprep.subr.mxu0 0.0
  %4252 = vmatpush1.msra.mxu0 %v1162
  %4253 = vmatprep.subr.mxu0 0.0
  %4254 = vmatpush1.msra.mxu0 %v1163
  %4255 = vmatprep.subr.mxu0 0.0
  %4256 = vmatpush1.msra.mxu0 %v1164
  %4257 = vmatprep.subr.mxu0 0.0
  %4258 = vmatpush1.msra.mxu0 %v1165
  %4259 = vmatprep.subr.mxu0 0.0
  %4260 = vmatpush1.msra.mxu0 %v1166
  %4261 = vmatprep.subr.mxu0 0.0
  %4262 = vmatpush1.msra.mxu0 %v1167
  %4263 = vmatprep.subr.mxu0 0.0
  %4264 = vmatpush1.msra.mxu0 %v1168
  %4265 = vmatprep.subr.mxu0 0.0
  %4266 = vmatpush1.msra.mxu0 %v1169
  %4267 = vmatprep.subr.mxu0 0.0
  %4268 = vmatpush1.msra.mxu0 %v1170
  %4269 = vmatprep.subr.mxu0 0.0
  %4270 = vmatpush1.msra.mxu0 %v1171
  %4271 = vmatprep.subr.mxu0 0.0
  %4272 = vmatpush1.msra.mxu0 %v1172
  %4273 = vmatprep.subr.mxu0 0.0
  %4274 = vmatpush1.msra.mxu0 %v1173
  %4275 = vmatprep.subr.mxu0 0.0
  %4276 = vmatpush1.msra.mxu0 %v1174
  %4277 = vmatprep.subr.mxu0 0.0
  %4278 = vmatpush1.msra.mxu0 %v1175
  %4279 = vmatprep.subr.mxu0 0.0
  %4280 = vmatpush1.msra.mxu0 %v1176
  %4281 = vmatprep.subr.mxu0 0.0
  %4282 = vmatpush1.msra.mxu0 %v1177
  %4283 = vmatprep.subr.mxu0 0.0
  %4284 = vmatpush1.msra.mxu0 %v1178
  %4285 = vmatprep.subr.mxu0 0.0
  %4286 = vmatpush1.msra.mxu0 %v1179
  %4287 = vmatprep.subr.mxu0 0.0
  %4288 = vmatpush1.msra.mxu0 %v1180
  %4289 = vmatprep.subr.mxu0 0.0
  %4290 = vmatpush1.msra.mxu0 %v1181
  %4291 = vmatprep.subr.mxu0 0.0
  %4292 = vmatpush1.msra.mxu0 %v1182
  %4293 = vmatprep.subr.mxu0 0.0
  %4294 = vmatpush1.msra.mxu0 %v1183
  %4295 = vmatprep.subr.mxu0 0.0
  %4296 = vmatpush1.msra.mxu0 %v1184
  %4297 = vmatprep.subr.mxu0 0.0
  %4298 = vmatpush1.msra.mxu0 %v1185
  %4299 = vmatprep.subr.mxu0 0.0
  %4300 = vmatpush1.msra.mxu0 %v1186
  %4301 = vmatprep.mubr.f32.mxu0 %v1664
  %4302 = vmatmul.mubr.f32.gmra.mrb[0].mxu0 %v1662
  %v4303 = vpop.f32.mrb[0].mxu0
  %v4304 = vadd.f32 %v4234, %v4303
  %v4305 = vpop.f32.mrb[0].mxu0
  %4306 = vdwg.mxu0
  %4307 = vmatprep.subr.mxu0 0.0
  %4308 = vmatpush1.msra.mxu0 %v1187
  %4309 = vmatprep.subr.mxu0 0.0
  %4310 = vmatpush1.msra.mxu0 %v1188
  %4311 = vmatprep.subr.mxu0 0.0
  %4312 = vmatpush1.msra.mxu0 %v1189
  %4313 = vmatprep.subr.mxu0 0.0
  %4314 = vmatpush1.msra.mxu0 %v1190
  %4315 = vmatprep.subr.mxu0 0.0
  %4316 = vmatpush1.msra.mxu0 %v1191
  %4317 = vmatprep.subr.mxu0 0.0
  %4318 = vmatpush1.msra.mxu0 %v1192
  %4319 = vmatprep.subr.mxu0 0.0
  %4320 = vmatpush1.msra.mxu0 %v1193
  %4321 = vmatprep.subr.mxu0 0.0
  %4322 = vmatpush1.msra.mxu0 %v1194
  %4323 = vmatprep.subr.mxu0 0.0
  %4324 = vmatpush1.msra.mxu0 %v1195
  %4325 = vmatprep.subr.mxu0 0.0
  %4326 = vmatpush1.msra.mxu0 %v1196
  %4327 = vmatprep.subr.mxu0 0.0
  %4328 = vmatpush1.msra.mxu0 %v1197
  %4329 = vmatprep.subr.mxu0 0.0
  %4330 = vmatpush1.msra.mxu0 %v1198
  %4331 = vmatprep.subr.mxu0 0.0
  %4332 = vmatpush1.msra.mxu0 %v1199
  %4333 = vmatprep.subr.mxu0 0.0
  %4334 = vmatpush1.msra.mxu0 %v1200
  %4335 = vmatprep.subr.mxu0 0.0
  %4336 = vmatpush1.msra.mxu0 %v1201
  %4337 = vmatprep.subr.mxu0 0.0
  %4338 = vmatpush1.msra.mxu0 %v1202
  %4339 = vmatprep.subr.mxu0 0.0
  %4340 = vmatpush1.msra.mxu0 %v1203
  %4341 = vmatprep.subr.mxu0 0.0
  %4342 = vmatpush1.msra.mxu0 %v1204
  %4343 = vmatprep.subr.mxu0 0.0
  %4344 = vmatpush1.msra.mxu0 %v1205
  %4345 = vmatprep.subr.mxu0 0.0
  %4346 = vmatpush1.msra.mxu0 %v1206
  %4347 = vmatprep.subr.mxu0 0.0
  %4348 = vmatpush1.msra.mxu0 %v1207
  %4349 = vmatprep.subr.mxu0 0.0
  %4350 = vmatpush1.msra.mxu0 %v1208
  %4351 = vmatprep.subr.mxu0 0.0
  %4352 = vmatpush1.msra.mxu0 %v1209
  %4353 = vmatprep.subr.mxu0 0.0
  %4354 = vmatpush1.msra.mxu0 %v1210
  %4355 = vmatprep.subr.mxu0 0.0
  %4356 = vmatpush1.msra.mxu0 %v1211
  %4357 = vmatprep.subr.mxu0 0.0
  %4358 = vmatpush1.msra.mxu0 %v1212
  %4359 = vmatprep.subr.mxu0 0.0
  %4360 = vmatpush1.msra.mxu0 %v1213
  %4361 = vmatprep.subr.mxu0 0.0
  %4362 = vmatpush1.msra.mxu0 %v1214
  %4363 = vmatprep.subr.mxu0 0.0
  %4364 = vmatpush1.msra.mxu0 %v1215
  %4365 = vmatprep.subr.mxu0 0.0
  %4366 = vmatpush1.msra.mxu0 %v1216
  %4367 = vmatprep.subr.mxu0 0.0
  %4368 = vmatpush1.msra.mxu0 %v1217
  %4369 = vmatprep.subr.mxu0 0.0
  %4370 = vmatpush1.msra.mxu0 %v1218
  %4371 = vmatprep.mubr.f32.mxu0 %v1680
  %4372 = vmatmul.mubr.f32.gmra.mrb[0].mxu0 %v1672
  %v4373 = vpop.f32.mrb[0].mxu0
  %v4374 = vadd.f32 %v4304, %v4373
  %v4375 = vpop.f32.mrb[0].mxu0
  %4376 = vdwg.mxu0
  %4377 = vmatprep.subr.mxu0 0.0
  %4378 = vmatpush1.msra.mxu0 %v1219
  %4379 = vmatprep.subr.mxu0 0.0
  %4380 = vmatpush1.msra.mxu0 %v1220
  %4381 = vmatprep.subr.mxu0 0.0
  %4382 = vmatpush1.msra.mxu0 %v1221
  %4383 = vmatprep.subr.mxu0 0.0
  %4384 = vmatpush1.msra.mxu0 %v1222
  %4385 = vmatprep.subr.mxu0 0.0
  %4386 = vmatpush1.msra.mxu0 %v1223
  %4387 = vmatprep.subr.mxu0 0.0
  %4388 = vmatpush1.msra.mxu0 %v1224
  %4389 = vmatprep.subr.mxu0 0.0
  %4390 = vmatpush1.msra.mxu0 %v1225
  %4391 = vmatprep.subr.mxu0 0.0
  %4392 = vmatpush1.msra.mxu0 %v1226
  %4393 = vmatprep.subr.mxu0 0.0
  %4394 = vmatpush1.msra.mxu0 %v1227
  %4395 = vmatprep.subr.mxu0 0.0
  %4396 = vmatpush1.msra.mxu0 %v1228
  %4397 = vmatprep.subr.mxu0 0.0
  %4398 = vmatpush1.msra.mxu0 %v1229
  %4399 = vmatprep.subr.mxu0 0.0
  %4400 = vmatpush1.msra.mxu0 %v1230
  %4401 = vmatprep.subr.mxu0 0.0
  %4402 = vmatpush1.msra.mxu0 %v1231
  %4403 = vmatprep.subr.mxu0 0.0
  %4404 = vmatpush1.msra.mxu0 %v1232
  %4405 = vmatprep.subr.mxu0 0.0
  %4406 = vmatpush1.msra.mxu0 %v1233
  %4407 = vmatprep.subr.mxu0 0.0
  %4408 = vmatpush1.msra.mxu0 %v1234
  %4409 = vmatprep.subr.mxu0 0.0
  %4410 = vmatpush1.msra.mxu0 %v1235
  %4411 = vmatprep.subr.mxu0 0.0
  %4412 = vmatpush1.msra.mxu0 %v1236
  %4413 = vmatprep.subr.mxu0 0.0
  %4414 = vmatpush1.msra.mxu0 %v1237
  %4415 = vmatprep.subr.mxu0 0.0
  %4416 = vmatpush1.msra.mxu0 %v1238
  %4417 = vmatprep.subr.mxu0 0.0
  %4418 = vmatpush1.msra.mxu0 %v1239
  %4419 = vmatprep.subr.mxu0 0.0
  %4420 = vmatpush1.msra.mxu0 %v1240
  %4421 = vmatprep.subr.mxu0 0.0
  %4422 = vmatpush1.msra.mxu0 %v1241
  %4423 = vmatprep.subr.mxu0 0.0
  %4424 = vmatpush1.msra.mxu0 %v1242
  %4425 = vmatprep.subr.mxu0 0.0
  %4426 = vmatpush1.msra.mxu0 %v1243
  %4427 = vmatprep.subr.mxu0 0.0
  %4428 = vmatpush1.msra.mxu0 %v1244
  %4429 = vmatprep.subr.mxu0 0.0
  %4430 = vmatpush1.msra.mxu0 %v1245
  %4431 = vmatprep.subr.mxu0 0.0
  %4432 = vmatpush1.msra.mxu0 %v1246
  %4433 = vmatprep.subr.mxu0 0.0
  %4434 = vmatpush1.msra.mxu0 %v1247
  %4435 = vmatprep.subr.mxu0 0.0
  %4436 = vmatpush1.msra.mxu0 %v1248
  %4437 = vmatprep.subr.mxu0 0.0
  %4438 = vmatpush1.msra.mxu0 %v1249
  %4439 = vmatprep.subr.mxu0 0.0
  %4440 = vmatpush1.msra.mxu0 %v1250
  %4441 = vmatprep.mubr.f32.mxu0 %v1681
  %4442 = vmatmul.mubr.f32.gmra.mrb[0].mxu0 %v1679
  %v4443 = vpop.f32.mrb[0].mxu0
  %v4444 = vadd.f32 %v4374, %v4443
  %v4445 = vpop.f32.mrb[0].mxu0
  %4446 = vdwg.mxu0
  %4447 = vmatprep.subr.mxu0 0.0
  %4448 = vmatpush1.msra.mxu0 %v1251
  %4449 = vmatprep.subr.mxu0 0.0
  %4450 = vmatpush1.msra.mxu0 %v1252
  %4451 = vmatprep.subr.mxu0 0.0
  %4452 = vmatpush1.msra.mxu0 %v1253
  %4453 = vmatprep.subr.mxu0 0.0
  %4454 = vmatpush1.msra.mxu0 %v1254
  %4455 = vmatprep.subr.mxu0 0.0
  %4456 = vmatpush1.msra.mxu0 %v1255
  %4457 = vmatprep.subr.mxu0 0.0
  %4458 = vmatpush1.msra.mxu0 %v1256
  %4459 = vmatprep.subr.mxu0 0.0
  %4460 = vmatpush1.msra.mxu0 %v1257
  %4461 = vmatprep.subr.mxu0 0.0
  %4462 = vmatpush1.msra.mxu0 %v1258
  %4463 = vmatprep.subr.mxu0 0.0
  %4464 = vmatpush1.msra.mxu0 %v1259
  %4465 = vmatprep.subr.mxu0 0.0
  %4466 = vmatpush1.msra.mxu0 %v1260
  %4467 = vmatprep.subr.mxu0 0.0
  %4468 = vmatpush1.msra.mxu0 %v1261
  %4469 = vmatprep.subr.mxu0 0.0
  %4470 = vmatpush1.msra.mxu0 %v1262
  %4471 = vmatprep.subr.mxu0 0.0
  %4472 = vmatpush1.msra.mxu0 %v1263
  %4473 = vmatprep.subr.mxu0 0.0
  %4474 = vmatpush1.msra.mxu0 %v1264
  %4475 = vmatprep.subr.mxu0 0.0
  %4476 = vmatpush1.msra.mxu0 %v1265
  %4477 = vmatprep.subr.mxu0 0.0
  %4478 = vmatpush1.msra.mxu0 %v1266
  %4479 = vmatprep.subr.mxu0 0.0
  %4480 = vmatpush1.msra.mxu0 %v1267
  %4481 = vmatprep.subr.mxu0 0.0
  %4482 = vmatpush1.msra.mxu0 %v1268
  %4483 = vmatprep.subr.mxu0 0.0
  %4484 = vmatpush1.msra.mxu0 %v1269
  %4485 = vmatprep.subr.mxu0 0.0
  %4486 = vmatpush1.msra.mxu0 %v1270
  %4487 = vmatprep.subr.mxu0 0.0
  %4488 = vmatpush1.msra.mxu0 %v1271
  %4489 = vmatprep.subr.mxu0 0.0
  %4490 = vmatpush1.msra.mxu0 %v1272
  %4491 = vmatprep.subr.mxu0 0.0
  %4492 = vmatpush1.msra.mxu0 %v1273
  %4493 = vmatprep.subr.mxu0 0.0
  %4494 = vmatpush1.msra.mxu0 %v1274
  %4495 = vmatprep.subr.mxu0 0.0
  %4496 = vmatpush1.msra.mxu0 %v1275
  %4497 = vmatprep.subr.mxu0 0.0
  %4498 = vmatpush1.msra.mxu0 %v1276
  %4499 = vmatprep.subr.mxu0 0.0
  %4500 = vmatpush1.msra.mxu0 %v1277
  %4501 = vmatprep.subr.mxu0 0.0
  %4502 = vmatpush1.msra.mxu0 %v1278
  %4503 = vmatprep.subr.mxu0 0.0
  %4504 = vmatpush1.msra.mxu0 %v1279
  %4505 = vmatprep.subr.mxu0 0.0
  %4506 = vmatpush1.msra.mxu0 %v1280
  %4507 = vmatprep.subr.mxu0 0.0
  %4508 = vmatpush1.msra.mxu0 %v1281
  %4509 = vmatprep.subr.mxu0 0.0
  %4510 = vmatpush1.msra.mxu0 %v1282
  %4511 = vmatprep.mubr.f32.mxu0 %v1697
  %4512 = vmatmul.mubr.f32.gmra.mrb[0].mxu0 %v1689
  %v4513 = vpop.f32.mrb[0].mxu0
  %v4514 = vadd.f32 %v4444, %v4513
  %v4515 = vpop.f32.mrb[0].mxu0
  %4516 = vdwg.mxu0
  %4517 = vmatprep.subr.mxu0 0.0
  %4518 = vmatpush1.msra.mxu0 %v1283
  %4519 = vmatprep.subr.mxu0 0.0
  %4520 = vmatpush1.msra.mxu0 %v1284
  %4521 = vmatprep.subr.mxu0 0.0
  %4522 = vmatpush1.msra.mxu0 %v1285
  %4523 = vmatprep.subr.mxu0 0.0
  %4524 = vmatpush1.msra.mxu0 %v1286
  %4525 = vmatprep.subr.mxu0 0.0
  %4526 = vmatpush1.msra.mxu0 %v1287
  %4527 = vmatprep.subr.mxu0 0.0
  %4528 = vmatpush1.msra.mxu0 %v1288
  %4529 = vmatprep.subr.mxu0 0.0
  %4530 = vmatpush1.msra.mxu0 %v1289
  %4531 = vmatprep.subr.mxu0 0.0
  %4532 = vmatpush1.msra.mxu0 %v1290
  %4533 = vmatprep.subr.mxu0 0.0
  %4534 = vmatpush1.msra.mxu0 %v1291
  %4535 = vmatprep.subr.mxu0 0.0
  %4536 = vmatpush1.msra.mxu0 %v1292
  %4537 = vmatprep.subr.mxu0 0.0
  %4538 = vmatpush1.msra.mxu0 %v1293
  %4539 = vmatprep.subr.mxu0 0.0
  %4540 = vmatpush1.msra.mxu0 %v1294
  %4541 = vmatprep.subr.mxu0 0.0
  %4542 = vmatpush1.msra.mxu0 %v1295
  %4543 = vmatprep.subr.mxu0 0.0
  %4544 = vmatpush1.msra.mxu0 %v1296
  %4545 = vmatprep.subr.mxu0 0.0
  %4546 = vmatpush1.msra.mxu0 %v1297
  %4547 = vmatprep.subr.mxu0 0.0
  %4548 = vmatpush1.msra.mxu0 %v1298
  %4549 = vmatprep.subr.mxu0 0.0
  %4550 = vmatpush1.msra.mxu0 %v1299
  %4551 = vmatprep.subr.mxu0 0.0
  %4552 = vmatpush1.msra.mxu0 %v1300
  %4553 = vmatprep.subr.mxu0 0.0
  %4554 = vmatpush1.msra.mxu0 %v1301
  %4555 = vmatprep.subr.mxu0 0.0
  %4556 = vmatpush1.msra.mxu0 %v1302
  %4557 = vmatprep.subr.mxu0 0.0
  %4558 = vmatpush1.msra.mxu0 %v1303
  %4559 = vmatprep.subr.mxu0 0.0
  %4560 = vmatpush1.msra.mxu0 %v1304
  %4561 = vmatprep.subr.mxu0 0.0
  %4562 = vmatpush1.msra.mxu0 %v1305
  %4563 = vmatprep.subr.mxu0 0.0
  %4564 = vmatpush1.msra.mxu0 %v1306
  %4565 = vmatprep.subr.mxu0 0.0
  %4566 = vmatpush1.msra.mxu0 %v1307
  %4567 = vmatprep.subr.mxu0 0.0
  %4568 = vmatpush1.msra.mxu0 %v1308
  %4569 = vmatprep.subr.mxu0 0.0
  %4570 = vmatpush1.msra.mxu0 %v1309
  %4571 = vmatprep.subr.mxu0 0.0
  %4572 = vmatpush1.msra.mxu0 %v1310
  %4573 = vmatprep.subr.mxu0 0.0
  %4574 = vmatpush1.msra.mxu0 %v1311
  %4575 = vmatprep.subr.mxu0 0.0
  %4576 = vmatpush1.msra.mxu0 %v1312
  %4577 = vmatprep.subr.mxu0 0.0
  %4578 = vmatpush1.msra.mxu0 %v1313
  %4579 = vmatprep.subr.mxu0 0.0
  %4580 = vmatpush1.msra.mxu0 %v1314
  %4581 = vmatprep.mubr.f32.mxu0 %v1698
  %4582 = vmatmul.mubr.f32.gmra.mrb[0].mxu0 %v1696
  %v4583 = vpop.f32.mrb[0].mxu0
  %v4584 = vadd.f32 %v4514, %v4583
  %v4585 = vpop.f32.mrb[0].mxu0
  %4586 = vdwg.mxu0
  %4587 = vmatprep.subr.mxu0 0.0
  %4588 = vmatpush1.msra.mxu0 %v1315
  %4589 = vmatprep.subr.mxu0 0.0
  %4590 = vmatpush1.msra.mxu0 %v1316
  %4591 = vmatprep.subr.mxu0 0.0
  %4592 = vmatpush1.msra.mxu0 %v1317
  %4593 = vmatprep.subr.mxu0 0.0
  %4594 = vmatpush1.msra.mxu0 %v1318
  %4595 = vmatprep.subr.mxu0 0.0
  %4596 = vmatpush1.msra.mxu0 %v1319
  %4597 = vmatprep.subr.mxu0 0.0
  %4598 = vmatpush1.msra.mxu0 %v1320
  %4599 = vmatprep.subr.mxu0 0.0
  %4600 = vmatpush1.msra.mxu0 %v1321
  %4601 = vmatprep.subr.mxu0 0.0
  %4602 = vmatpush1.msra.mxu0 %v1322
  %4603 = vmatprep.subr.mxu0 0.0
  %4604 = vmatpush1.msra.mxu0 %v1323
  %4605 = vmatprep.subr.mxu0 0.0
  %4606 = vmatpush1.msra.mxu0 %v1324
  %4607 = vmatprep.subr.mxu0 0.0
  %4608 = vmatpush1.msra.mxu0 %v1325
  %4609 = vmatprep.subr.mxu0 0.0
  %4610 = vmatpush1.msra.mxu0 %v1326
  %4611 = vmatprep.subr.mxu0 0.0
  %4612 = vmatpush1.msra.mxu0 %v1327
  %4613 = vmatprep.subr.mxu0 0.0
  %4614 = vmatpush1.msra.mxu0 %v1328
  %4615 = vmatprep.subr.mxu0 0.0
  %4616 = vmatpush1.msra.mxu0 %v1329
  %4617 = vmatprep.subr.mxu0 0.0
  %4618 = vmatpush1.msra.mxu0 %v1330
  %4619 = vmatprep.subr.mxu0 0.0
  %4620 = vmatpush1.msra.mxu0 0.0
  %4621 = vmatprep.subr.mxu0 0.0
  %4622 = vmatpush1.msra.mxu0 0.0
  %4623 = vmatprep.subr.mxu0 0.0
  %4624 = vmatpush1.msra.mxu0 0.0
  %4625 = vmatprep.subr.mxu0 0.0
  %4626 = vmatpush1.msra.mxu0 0.0
  %4627 = vmatprep.subr.mxu0 0.0
  %4628 = vmatpush1.msra.mxu0 0.0
  %4629 = vmatprep.subr.mxu0 0.0
  %4630 = vmatpush1.msra.mxu0 0.0
  %4631 = vmatprep.subr.mxu0 0.0
  %4632 = vmatpush1.msra.mxu0 0.0
  %4633 = vmatprep.subr.mxu0 0.0
  %4634 = vmatpush1.msra.mxu0 0.0
  %4635 = vmatprep.subr.mxu0 0.0
  %4636 = vmatpush1.msra.mxu0 0.0
  %4637 = vmatprep.subr.mxu0 0.0
  %4638 = vmatpush1.msra.mxu0 0.0
  %4639 = vmatprep.subr.mxu0 0.0
  %4640 = vmatpush1.msra.mxu0 0.0
  %4641 = vmatprep.subr.mxu0 0.0
  %4642 = vmatpush1.msra.mxu0 0.0
  %4643 = vmatprep.subr.mxu0 0.0
  %4644 = vmatpush1.msra.mxu0 0.0
  %4645 = vmatprep.subr.mxu0 0.0
  %4646 = vmatpush1.msra.mxu0 0.0
  %4647 = vmatprep.subr.mxu0 0.0
  %4648 = vmatpush1.msra.mxu0 0.0
  %4649 = vmatprep.subr.mxu0 0.0
  %4650 = vmatpush1.msra.mxu0 0.0
  %4651 = vmatprep.mubr.f32.mxu0 0.0
  %4652 = vmatmul.mubr.f32.gmra.mrb[0].mxu0 %v1705
  %v4653 = vpop.f32.mrb[0].mxu0
  %v4654 = vadd.f32 %v4584, %v4653
  %v4655 = vpop.f32.mrb[0].mxu0
  %4656 = vdwg.mxu0
  %vm4657 = vcmp.gt.f32.partialorder %v4654, 0.0
  %v4658 = vmul.f32 %v4654, 0.01
  %v4659 = vsel %vm4657, %v4654, %v4658
  %4660 = vst [vmem:[%s3] sm:$0x3] %v4659
  // Predicated region
  $region14: #{encode_net_forward.4} parent=0 // pred_check
    _
  $region15: #{encode_net_forward.4} parent=0 // pred_check_branch
    %4662 = sbr.rel (0) target = $region17
  $region16: #{encode_net_forward.4} parent=0 // pred_region
    _
  $region17: #{encode_net_forward.4} parent=0 // pred_fallthru
    _
  // Predicated region
  $region18: #{encode_net_forward.4} parent=0 // pred_check
    _
  $region19: #{encode_net_forward.4} parent=0 // pred_check_branch
    %4664 = sbr.rel (0) target = $region21
  $region20: #{encode_net_forward.4} parent=0 // pred_region
    _
  $region21: #{encode_net_forward.4} parent=0 // pred_fallthru
    _

// kernel: encode_net_forward.5
$region0: #{encode_net_forward.5}
  #allocation0 [shape = 'u32[]', space=smem, size = 0x4, offset = 0x4, fixed_abs, tag = 'smem constant byte address 0x4 - core index']
  #allocation1 [shape = 'u32[144,128]{1,0:T(1,128)}', space=vmem, size = 0x12000, scoped, tag = 'internal scratch']
  %s0 = inlined_call_operand.vmem [shape: f32[2,1,57600], index: 0, kind: input, shape index: {}]
  %s1 = inlined_call_operand.vmem [shape: f32[128,1], index: 1, kind: input, shape index: {}]
  %s2 = inlined_call_operand.vmem [shape: f32[2,128,1], index: 2, kind: input, shape index: {}]
  %s3 = inlined_call_operand.hbm [shape: f32[2,128,57600], index: 3, kind: output, shape index: {}]
  %s4 = sld [smem:[#allocation0]]
  $region45: #{encode_net_forward.5} parent=0
    _
  %s6 = ssub.s32 1, %s4
  %s7 = scalar_select 0, %s6, %s4
  $region1: #{encode_net_forward.5} parent=0
    #allocation2 [shape = 'u8[9830400]{0}', space=vmem, size = 0x960000, scoped, tag = 'output window, operand 0']
    #allocation3 [shape = 's32[2]{0}', space=sflag, size = 0x8, scoped, tag = 'scoped memory for encode_net_forward.5']
    %8 = vsyncpa [#allocation3], 0
    %s9 = scalar_lea.sflag [#allocation3], 1
    %10 = vsyncpa %s9, 0
    loop: start=0, step=1, limit=14
    $region2: #{encode_net_forward.5} parent=1 // loop_pre_header
      _
    $region3: #{encode_net_forward.5} parent=1 // loop_header
      %s12 = sphi 0, %s16
      %p13 = scmp.ge.s32.totalorder %s12, 14
      %s19 = sphi 0, %s31
      %s20 = sphi 0, %s27
      %s21 = sphi 0, %s19
      %s22 = sphi 0, %s20
      %s23 = sphi 0, %s21
      %s24 = sphi 0, %s22
      %s36 = sphi 0, %s38
      %s39 = sphi 0, %s36
      %s40 = sphi 0, %s39
      %s56 = sphi 0, %s40
      %s60 = sphi 0, %s60
      %s62 = sphi 0, %s60
      %s63 = sphi 0, %s62
      %s77 = sphi 0, %s63
      %s83 = sphi 0, %s85
      %s86 = sphi 0, %s83
      %s87 = sphi 0, %s86
      %s103 = sphi 0, %s87
      %s111 = sphi 0, %s113
      %s114 = sphi 0, %s111
      %s115 = sphi 0, %s114
      %s131 = sphi 0, %s115
    $region4: #{encode_net_forward.5} parent=1 // loop_header_branch
      %15 = sbr.rel (%p13) target = $region8
    $region5: #{encode_net_forward.5} parent=1 // loop_body
      %s17 = ssub.s32 %s12, 1
      %s18 = ssub.s32 %s12, 2
      %s25 = sadd.s32 1, %s20
      %p26 = scmp.ge.s32.totalorder %s25, 6
      %s27 = scalar_select %p26, 0, %s25
      %s28 = sadd.s32 1, %s19
      %s29 = scalar_select %p26, %s28, %s19
      %p30 = scmp.ge.s32.totalorder %s29, 2
      %s31 = scalar_select %p30, 0, %s29
      %s32 = ssub.s32 %s19, %s31
      %s33 = ssub.s32 %s20, %s27
      %s34 = sor.u32 %s32, %s33
      %p35 = scmp.eq.s32.totalorder %s34, 0
      %s37 = sadd.s32 %s36, 1
      %s38 = scalar_select %p35, %s36, %s37
      %p41 = pneg %p35
      %p42 = scmp.eq.s32.totalorder %s12, 11
      %p43 = por %p41, %p42
      %p44 = scmp.ne.s32.totalorder %s36, %s39
      %p45 = scmp.eq.s32.totalorder %s12, 0
      %p46 = por %p44, %p45
      %p47 = scmp.ne.s32.totalorder %s36, %s39
      %p48 = scmp.eq.s32.totalorder %s17, 11
      %p49 = por %p47, %p48
      %p50 = scmp.ne.s32.totalorder %s39, %s40
      %p51 = scmp.eq.s32.totalorder %s17, 0
      %p52 = por %p50, %p51
      %p53 = scmp.ne.s32.totalorder %s39, %s40
      %p54 = scmp.eq.s32.totalorder %s18, 11
      %p55 = por %p53, %p54
      %p57 = scmp.ne.s32.totalorder %s40, %s56
      %p58 = scmp.eq.s32.totalorder %s18, 0
      %p59 = por %p57, %p58
      %s61 = sadd.s32 %s60, 1
      %p64 = scmp.eq.s32.totalorder %s12, 11
      %p65 = scmp.ne.s32.totalorder %s60, %s62
      %p66 = scmp.eq.s32.totalorder %s12, 0
      %p67 = por %p65, %p66
      %p68 = scmp.ne.s32.totalorder %s60, %s62
      %p69 = scmp.eq.s32.totalorder %s17, 11
      %p70 = por %p68, %p69
      %p71 = scmp.ne.s32.totalorder %s62, %s63
      %p72 = scmp.eq.s32.totalorder %s17, 0
      %p73 = por %p71, %p72
      %p74 = scmp.ne.s32.totalorder %s62, %s63
      %p75 = scmp.eq.s32.totalorder %s18, 11
      %p76 = por %p74, %p75
      %p78 = scmp.ne.s32.totalorder %s63, %s77
      %p79 = scmp.eq.s32.totalorder %s18, 0
      %p80 = por %p78, %p79
      %s81 = ssub.s32 %s19, %s31
      %p82 = scmp.eq.s32.totalorder %s81, 0
      %s84 = sadd.s32 %s83, 1
      %s85 = scalar_select %p82, %s83, %s84
      %p88 = pneg %p82
      %p89 = scmp.eq.s32.totalorder %s12, 11
      %p90 = por %p88, %p89
      %p91 = scmp.ne.s32.totalorder %s83, %s86
      %p92 = scmp.eq.s32.totalorder %s12, 0
      %p93 = por %p91, %p92
      %p94 = scmp.ne.s32.totalorder %s83, %s86
      %p95 = scmp.eq.s32.totalorder %s17, 11
      %p96 = por %p94, %p95
      %p97 = scmp.ne.s32.totalorder %s86, %s87
      %p98 = scmp.eq.s32.totalorder %s17, 0
      %p99 = por %p97, %p98
      %p100 = scmp.ne.s32.totalorder %s86, %s87
      %p101 = scmp.eq.s32.totalorder %s18, 11
      %p102 = por %p100, %p101
      %p104 = scmp.ne.s32.totalorder %s87, %s103
      %p105 = scmp.eq.s32.totalorder %s18, 0
      %p106 = por %p104, %p105
      %s107 = ssub.s32 %s19, %s31
      %s108 = ssub.s32 %s20, %s27
      %s109 = sor.u32 %s107, %s108
      %p110 = scmp.eq.s32.totalorder %s109, 0
      %s112 = sadd.s32 %s111, 1
      %s113 = scalar_select %p110, %s111, %s112
      %p116 = pneg %p110
      %p117 = scmp.eq.s32.totalorder %s12, 11
      %p118 = por %p116, %p117
      %p119 = scmp.ne.s32.totalorder %s111, %s114
      %p120 = scmp.eq.s32.totalorder %s12, 0
      %p121 = por %p119, %p120
      %p122 = scmp.ne.s32.totalorder %s111, %s114
      %p123 = scmp.eq.s32.totalorder %s17, 11
      %p124 = por %p122, %p123
      %p125 = scmp.ne.s32.totalorder %s114, %s115
      %p126 = scmp.eq.s32.totalorder %s17, 0
      %p127 = por %p125, %p126
      %p128 = scmp.ne.s32.totalorder %s114, %s115
      %p129 = scmp.eq.s32.totalorder %s18, 11
      %p130 = por %p128, %p129
      %p132 = scmp.ne.s32.totalorder %s115, %s131
      %p133 = scmp.eq.s32.totalorder %s18, 0
      %p134 = por %p132, %p133
      %p135 = scmp.le.s32.totalorder 1, %s12
      %p136 = scmp.lt.s32.totalorder %s12, 13
      %p137 = pnand %p135, %p136
      %p138 = pneg %p137
      // Predicated region
      $region9: #{encode_net_forward.5} parent=5 // pred_check
        _
      $region10: #{encode_net_forward.5} parent=5 // pred_check_branch
        %140 = sbr.rel (%p137) target = $region12
      $region11: #{encode_net_forward.5} parent=5 // pred_region
        %s141 = ssub.s32 %s12, 1
        // Predicated region
        $region13: #{encode_net_forward.5} parent=11 // pred_check
          %p142 = pneg %p73
        $region14: #{encode_net_forward.5} parent=11 // pred_check_branch
          %144 = sbr.rel (%p142) target = $region16
        $region15: #{encode_net_forward.5} parent=11 // pred_region
          _
        $region16: #{encode_net_forward.5} parent=11 // pred_fallthru
          _
      $region12: #{encode_net_forward.5} parent=5 // pred_fallthru
        _
      %p145 = scmp.lt.s32.totalorder %s12, 12
      // Predicated region
      $region17: #{encode_net_forward.5} parent=5 // pred_check
        %p146 = pneg %p145
      $region18: #{encode_net_forward.5} parent=5 // pred_check_branch
        %148 = sbr.rel (%p146) target = $region20
      $region19: #{encode_net_forward.5} parent=5 // pred_region
        // Predicated region
        $region21: #{encode_net_forward.5} parent=19 // pred_check
          %p149 = pneg %p46
        $region22: #{encode_net_forward.5} parent=19 // pred_check_branch
          %151 = sbr.rel (%p149) target = $region24
        $region23: #{encode_net_forward.5} parent=19 // pred_region
          %s152 = smul.u32 75, %s20
          %p153 = scmp.lt.s32.totalorder %s19, 1
          %s154 = scalar_select %p153, %s19, 1
          %p155 = scmp.lt.s32.totalorder %s152, 449
          %s156 = scalar_select %p155, %s152, 449
          %s157 = smul.addr %s154, 450
          %s158 = sadd.s32 %s156, %s157
          %s159 = scalar_lea.vmem %s0, %s158
          %s160 = smul.u32 75, %s20
        $region24: #{encode_net_forward.5} parent=19 // pred_fallthru
          _
        // Predicated region
        $region25: #{encode_net_forward.5} parent=19 // pred_check
          %p161 = pneg %p93
        $region26: #{encode_net_forward.5} parent=19 // pred_check_branch
          %163 = sbr.rel (%p161) target = $region28
        $region27: #{encode_net_forward.5} parent=19 // pred_region
          %p164 = scmp.lt.s32.totalorder %s19, 1
          %s165 = scalar_select %p164, %s19, 1
          %s166 = smul.addr %s165, 16
          %s167 = smul.addr %s166, 8
          %s168 = scalar_lea.vmem %s2, %s167
        $region28: #{encode_net_forward.5} parent=19 // pred_fallthru
          _
      $region20: #{encode_net_forward.5} parent=5 // pred_fallthru
        _
      %p169 = scmp.le.s32.totalorder 1, %s12
      %p170 = scmp.lt.s32.totalorder %s12, 13
      %p171 = pnand %p169, %p170
      %p172 = pneg %p171
      // Predicated region
      $region29: #{encode_net_forward.5} parent=5 // pred_check
        _
      $region30: #{encode_net_forward.5} parent=5 // pred_check_branch
        %174 = sbr.rel (%p171) target = $region32
      $region31: #{encode_net_forward.5} parent=5 // pred_region
        %s175 = ssub.s32 %s12, 1
        %s176 = smul.u32 75, %s22
        %p177 = scmp.lt.s32.totalorder %s21, 1
        %s178 = scalar_select %p177, %s21, 1
        %p179 = scmp.lt.s32.totalorder %s176, 449
        %s180 = scalar_select %p179, %s176, 449
        %s181 = smul.addr %s178, 450
        %s182 = sadd.s32 %s180, %s181
        %s183 = scalar_lea.vmem %s0, %s182
        %p184 = pneg %p52
        %p185 = pneg %p49
        %p186 = pneg %p73
        %p187 = pneg %p70
        %p188 = scmp.lt.s32.totalorder %s21, 1
        %s189 = scalar_select %p188, %s21, 1
        %s190 = smul.addr %s189, 16
        %s191 = smul.addr %s190, 8
        %s192 = scalar_lea.vmem %s2, %s191
        %p193 = pneg %p99
        %p194 = pneg %p96
        %p195 = pneg %p127
        %p196 = pneg %p124
        %s197 = sand.u32 %s114, 1
        %s198 = scalar_lea.sflag [#allocation3], %s197
        %s199 = sand.u32 %s114, 1
        %s200 = smul.addr %s199, 9600
        %s201 = scalar_lea.vmem [#allocation2], %s200
        %s202 = smul.u32 75, %s22
        %p203 = scmp.lt.s32.totalorder %s21, 1
        %s204 = scalar_select %p203, %s21, 1
        %p205 = scmp.lt.s32.totalorder %s202, 449
        %s206 = scalar_select %p205, %s202, 449
        %s207 = smul.addr %s204, 450
        %s208 = sadd.s32 %s206, %s207
        %s209 = scalar_lea.vmem %s0, %s208
        %s210 = smul.u32 75, %s22
        %p211 = scmp.lt.s32.totalorder %s21, 1
        %s212 = scalar_select %p211, %s21, 1
        %s213 = smul.addr %s212, 16
        %s214 = smul.addr %s213, 8
        %s215 = scalar_lea.vmem %s2, %s214
        %s216 = smul.u32 75, %s22
        %v217 = vld [vmem:[%s209] sm:$0xff]
        %v218 = vld [vmem:[%s209 + $0x8] sm:$0xff]
        %v219 = vld [vmem:[%s209 + $0x10] sm:$0xff]
        %v220 = vld [vmem:[%s209 + $0x18] sm:$0xff]
        %v221 = vld [vmem:[%s209 + $0x20] sm:$0xff]
        %v222 = vld [vmem:[%s209 + $0x28] sm:$0xff]
        %v223 = vld [vmem:[%s209 + $0x30] sm:$0xff]
        %v224 = vld [vmem:[%s209 + $0x38] sm:$0xff]
        %v225 = vld [vmem:[%s209 + $0x40] sm:$0xff]
        %v226 = vld [vmem:[%s209 + $0x48] sm:$0x7]
        %v227 = vld [vmem:[%s1] sm:$0xff]
        %v228 = vld [vmem:[%s1 + $0x8] sm:$0xff]
        %v229 = vld [vmem:[%s1 + $0x10] sm:$0xff]
        %v230 = vld [vmem:[%s1 + $0x18] sm:$0xff]
        %v231 = vld [vmem:[%s1 + $0x20] sm:$0xff]
        %v232 = vld [vmem:[%s1 + $0x28] sm:$0xff]
        %v233 = vld [vmem:[%s1 + $0x30] sm:$0xff]
        %v234 = vld [vmem:[%s1 + $0x38] sm:$0xff]
        %v235 = vld [vmem:[%s1 + $0x40] sm:$0xff]
        %v236 = vld [vmem:[%s1 + $0x48] sm:$0xff]
        %v237 = vld [vmem:[%s1 + $0x50] sm:$0xff]
        %v238 = vld [vmem:[%s1 + $0x58] sm:$0xff]
        %v239 = vld [vmem:[%s1 + $0x60] sm:$0xff]
        %v240 = vld [vmem:[%s1 + $0x68] sm:$0xff]
        %v241 = vld [vmem:[%s1 + $0x70] sm:$0xff]
        %v242 = vld [vmem:[%s1 + $0x78] sm:$0xff]
        %v253 = vlaneseq
        %v254 = vshrl.u32 %v253, 7
        %v255 = vsub.s32 0, %v254
        %v256 = vrot.slane %v217, %v255
        %v257 = vlaneseq
        %v258 = vshrl.u32 %v257, 7
        %v259 = vsub.s32 1, %v258
        %v260 = vrot.slane %v217, %v259
        %v261 = vlaneseq
        %v262 = vshrl.u32 %v261, 7
        %v263 = vsub.s32 2, %v262
        %v264 = vrot.slane %v217, %v263
        %v265 = vlaneseq
        %v266 = vshrl.u32 %v265, 7
        %v267 = vsub.s32 3, %v266
        %v268 = vrot.slane %v217, %v267
        %v269 = vlaneseq
        %v270 = vshrl.u32 %v269, 7
        %v271 = vsub.s32 4, %v270
        %v272 = vrot.slane %v217, %v271
        %v273 = vlaneseq
        %v274 = vshrl.u32 %v273, 7
        %v275 = vsub.s32 5, %v274
        %v276 = vrot.slane %v217, %v275
        %v277 = vlaneseq
        %v278 = vshrl.u32 %v277, 7
        %v279 = vsub.s32 6, %v278
        %v280 = vrot.slane %v217, %v279
        %v281 = vlaneseq
        %v282 = vshrl.u32 %v281, 7
        %v283 = vsub.s32 7, %v282
        %v284 = vrot.slane %v217, %v283
        %v285 = vlaneseq
        %v286 = vshrl.u32 %v285, 7
        %v287 = vsub.s32 0, %v286
        %v288 = vrot.slane %v218, %v287
        %v289 = vlaneseq
        %v290 = vshrl.u32 %v289, 7
        %v291 = vsub.s32 1, %v290
        %v292 = vrot.slane %v218, %v291
        %v293 = vlaneseq
        %v294 = vshrl.u32 %v293, 7
        %v295 = vsub.s32 2, %v294
        %v296 = vrot.slane %v218, %v295
        %v297 = vlaneseq
        %v298 = vshrl.u32 %v297, 7
        %v299 = vsub.s32 3, %v298
        %v300 = vrot.slane %v218, %v299
        %v301 = vlaneseq
        %v302 = vshrl.u32 %v301, 7
        %v303 = vsub.s32 4, %v302
        %v304 = vrot.slane %v218, %v303
        %v305 = vlaneseq
        %v306 = vshrl.u32 %v305, 7
        %v307 = vsub.s32 5, %v306
        %v308 = vrot.slane %v218, %v307
        %v309 = vlaneseq
        %v310 = vshrl.u32 %v309, 7
        %v311 = vsub.s32 6, %v310
        %v312 = vrot.slane %v218, %v311
        %v313 = vlaneseq
        %v314 = vshrl.u32 %v313, 7
        %v315 = vsub.s32 7, %v314
        %v316 = vrot.slane %v218, %v315
        %v317 = vlaneseq
        %v318 = vshrl.u32 %v317, 7
        %v319 = vsub.s32 0, %v318
        %v320 = vrot.slane %v219, %v319
        %v321 = vlaneseq
        %v322 = vshrl.u32 %v321, 7
        %v323 = vsub.s32 1, %v322
        %v324 = vrot.slane %v219, %v323
        %v325 = vlaneseq
        %v326 = vshrl.u32 %v325, 7
        %v327 = vsub.s32 2, %v326
        %v328 = vrot.slane %v219, %v327
        %v329 = vlaneseq
        %v330 = vshrl.u32 %v329, 7
        %v331 = vsub.s32 3, %v330
        %v332 = vrot.slane %v219, %v331
        %v333 = vlaneseq
        %v334 = vshrl.u32 %v333, 7
        %v335 = vsub.s32 4, %v334
        %v336 = vrot.slane %v219, %v335
        %v337 = vlaneseq
        %v338 = vshrl.u32 %v337, 7
        %v339 = vsub.s32 5, %v338
        %v340 = vrot.slane %v219, %v339
        %v341 = vlaneseq
        %v342 = vshrl.u32 %v341, 7
        %v343 = vsub.s32 6, %v342
        %v344 = vrot.slane %v219, %v343
        %v345 = vlaneseq
        %v346 = vshrl.u32 %v345, 7
        %v347 = vsub.s32 7, %v346
        %v348 = vrot.slane %v219, %v347
        %v349 = vlaneseq
        %v350 = vshrl.u32 %v349, 7
        %v351 = vsub.s32 0, %v350
        %v352 = vrot.slane %v220, %v351
        %v353 = vlaneseq
        %v354 = vshrl.u32 %v353, 7
        %v355 = vsub.s32 1, %v354
        %v356 = vrot.slane %v220, %v355
        %v357 = vlaneseq
        %v358 = vshrl.u32 %v357, 7
        %v359 = vsub.s32 2, %v358
        %v360 = vrot.slane %v220, %v359
        %v361 = vlaneseq
        %v362 = vshrl.u32 %v361, 7
        %v363 = vsub.s32 3, %v362
        %v364 = vrot.slane %v220, %v363
        %v365 = vlaneseq
        %v366 = vshrl.u32 %v365, 7
        %v367 = vsub.s32 4, %v366
        %v368 = vrot.slane %v220, %v367
        %v369 = vlaneseq
        %v370 = vshrl.u32 %v369, 7
        %v371 = vsub.s32 5, %v370
        %v372 = vrot.slane %v220, %v371
        %v373 = vlaneseq
        %v374 = vshrl.u32 %v373, 7
        %v375 = vsub.s32 6, %v374
        %v376 = vrot.slane %v220, %v375
        %v377 = vlaneseq
        %v378 = vshrl.u32 %v377, 7
        %v379 = vsub.s32 7, %v378
        %v380 = vrot.slane %v220, %v379
        %v381 = vlaneseq
        %v382 = vshrl.u32 %v381, 7
        %v383 = vsub.s32 0, %v382
        %v384 = vrot.slane %v221, %v383
        %v385 = vlaneseq
        %v386 = vshrl.u32 %v385, 7
        %v387 = vsub.s32 1, %v386
        %v388 = vrot.slane %v221, %v387
        %v389 = vlaneseq
        %v390 = vshrl.u32 %v389, 7
        %v391 = vsub.s32 2, %v390
        %v392 = vrot.slane %v221, %v391
        %v393 = vlaneseq
        %v394 = vshrl.u32 %v393, 7
        %v395 = vsub.s32 3, %v394
        %v396 = vrot.slane %v221, %v395
        %v397 = vlaneseq
        %v398 = vshrl.u32 %v397, 7
        %v399 = vsub.s32 4, %v398
        %v400 = vrot.slane %v221, %v399
        %v401 = vlaneseq
        %v402 = vshrl.u32 %v401, 7
        %v403 = vsub.s32 5, %v402
        %v404 = vrot.slane %v221, %v403
        %v405 = vlaneseq
        %v406 = vshrl.u32 %v405, 7
        %v407 = vsub.s32 6, %v406
        %v408 = vrot.slane %v221, %v407
        %v409 = vlaneseq
        %v410 = vshrl.u32 %v409, 7
        %v411 = vsub.s32 7, %v410
        %v412 = vrot.slane %v221, %v411
        %v413 = vlaneseq
        %v414 = vshrl.u32 %v413, 7
        %v415 = vsub.s32 0, %v414
        %v416 = vrot.slane %v222, %v415
        %v417 = vlaneseq
        %v418 = vshrl.u32 %v417, 7
        %v419 = vsub.s32 1, %v418
        %v420 = vrot.slane %v222, %v419
        %v421 = vlaneseq
        %v422 = vshrl.u32 %v421, 7
        %v423 = vsub.s32 2, %v422
        %v424 = vrot.slane %v222, %v423
        %v425 = vlaneseq
        %v426 = vshrl.u32 %v425, 7
        %v427 = vsub.s32 3, %v426
        %v428 = vrot.slane %v222, %v427
        %v429 = vlaneseq
        %v430 = vshrl.u32 %v429, 7
        %v431 = vsub.s32 4, %v430
        %v432 = vrot.slane %v222, %v431
        %v433 = vlaneseq
        %v434 = vshrl.u32 %v433, 7
        %v435 = vsub.s32 5, %v434
        %v436 = vrot.slane %v222, %v435
        %v437 = vlaneseq
        %v438 = vshrl.u32 %v437, 7
        %v439 = vsub.s32 6, %v438
        %v440 = vrot.slane %v222, %v439
        %v441 = vlaneseq
        %v442 = vshrl.u32 %v441, 7
        %v443 = vsub.s32 7, %v442
        %v444 = vrot.slane %v222, %v443
        %v445 = vlaneseq
        %v446 = vshrl.u32 %v445, 7
        %v447 = vsub.s32 0, %v446
        %v448 = vrot.slane %v223, %v447
        %v449 = vlaneseq
        %v450 = vshrl.u32 %v449, 7
        %v451 = vsub.s32 1, %v450
        %v452 = vrot.slane %v223, %v451
        %v453 = vlaneseq
        %v454 = vshrl.u32 %v453, 7
        %v455 = vsub.s32 2, %v454
        %v456 = vrot.slane %v223, %v455
        %v457 = vlaneseq
        %v458 = vshrl.u32 %v457, 7
        %v459 = vsub.s32 3, %v458
        %v460 = vrot.slane %v223, %v459
        %v461 = vlaneseq
        %v462 = vshrl.u32 %v461, 7
        %v463 = vsub.s32 4, %v462
        %v464 = vrot.slane %v223, %v463
        %v465 = vlaneseq
        %v466 = vshrl.u32 %v465, 7
        %v467 = vsub.s32 5, %v466
        %v468 = vrot.slane %v223, %v467
        %v469 = vlaneseq
        %v470 = vshrl.u32 %v469, 7
        %v471 = vsub.s32 6, %v470
        %v472 = vrot.slane %v223, %v471
        %v473 = vlaneseq
        %v474 = vshrl.u32 %v473, 7
        %v475 = vsub.s32 7, %v474
        %v476 = vrot.slane %v223, %v475
        %v477 = vlaneseq
        %v478 = vshrl.u32 %v477, 7
        %v479 = vsub.s32 0, %v478
        %v480 = vrot.slane %v224, %v479
        %v481 = vlaneseq
        %v482 = vshrl.u32 %v481, 7
        %v483 = vsub.s32 1, %v482
        %v484 = vrot.slane %v224, %v483
        %v485 = vlaneseq
        %v486 = vshrl.u32 %v485, 7
        %v487 = vsub.s32 2, %v486
        %v488 = vrot.slane %v224, %v487
        %v489 = vlaneseq
        %v490 = vshrl.u32 %v489, 7
        %v491 = vsub.s32 3, %v490
        %v492 = vrot.slane %v224, %v491
        %v493 = vlaneseq
        %v494 = vshrl.u32 %v493, 7
        %v495 = vsub.s32 4, %v494
        %v496 = vrot.slane %v224, %v495
        %v497 = vlaneseq
        %v498 = vshrl.u32 %v497, 7
        %v499 = vsub.s32 5, %v498
        %v500 = vrot.slane %v224, %v499
        %v501 = vlaneseq
        %v502 = vshrl.u32 %v501, 7
        %v503 = vsub.s32 6, %v502
        %v504 = vrot.slane %v224, %v503
        %v505 = vlaneseq
        %v506 = vshrl.u32 %v505, 7
        %v507 = vsub.s32 7, %v506
        %v508 = vrot.slane %v224, %v507
        %v509 = vlaneseq
        %v510 = vshrl.u32 %v509, 7
        %v511 = vsub.s32 0, %v510
        %v512 = vrot.slane %v225, %v511
        %v513 = vlaneseq
        %v514 = vshrl.u32 %v513, 7
        %v515 = vsub.s32 1, %v514
        %v516 = vrot.slane %v225, %v515
        %v517 = vlaneseq
        %v518 = vshrl.u32 %v517, 7
        %v519 = vsub.s32 2, %v518
        %v520 = vrot.slane %v225, %v519
        %v521 = vlaneseq
        %v522 = vshrl.u32 %v521, 7
        %v523 = vsub.s32 3, %v522
        %v524 = vrot.slane %v225, %v523
        %v525 = vlaneseq
        %v526 = vshrl.u32 %v525, 7
        %v527 = vsub.s32 4, %v526
        %v528 = vrot.slane %v225, %v527
        %v529 = vlaneseq
        %v530 = vshrl.u32 %v529, 7
        %v531 = vsub.s32 5, %v530
        %v532 = vrot.slane %v225, %v531
        %v533 = vlaneseq
        %v534 = vshrl.u32 %v533, 7
        %v535 = vsub.s32 6, %v534
        %v536 = vrot.slane %v225, %v535
        %v537 = vlaneseq
        %v538 = vshrl.u32 %v537, 7
        %v539 = vsub.s32 7, %v538
        %v540 = vrot.slane %v225, %v539
        %v541 = vlaneseq
        %v542 = vshrl.u32 %v541, 7
        %v543 = vsub.s32 0, %v542
        %v544 = vrot.slane %v226, %v543
        %v545 = vlaneseq
        %v546 = vshrl.u32 %v545, 7
        %v547 = vsub.s32 1, %v546
        %v548 = vrot.slane %v226, %v547
        %v549 = vlaneseq
        %v550 = vshrl.u32 %v549, 7
        %v551 = vsub.s32 2, %v550
        %v552 = vrot.slane %v226, %v551
        %629 = vset.pattern.permute.xlu0 0
        %630 = vperm.xlu0 %629, %v227
        %v631 = vpop.permute.xlu0 %630
        %634 = vset.pattern.permute.xlu0 0
        %635 = vperm.xlu0 %634, %v228
        %v636 = vpop.permute.xlu0 %635
        %639 = vset.pattern.permute.xlu0 0
        %640 = vperm.xlu0 %639, %v229
        %v641 = vpop.permute.xlu0 %640
        %644 = vset.pattern.permute.xlu0 0
        %645 = vperm.xlu0 %644, %v230
        %v646 = vpop.permute.xlu0 %645
        %649 = vset.pattern.permute.xlu0 0
        %650 = vperm.xlu0 %649, %v231
        %v651 = vpop.permute.xlu0 %650
        %654 = vset.pattern.permute.xlu0 0
        %655 = vperm.xlu0 %654, %v232
        %v656 = vpop.permute.xlu0 %655
        %659 = vset.pattern.permute.xlu0 0
        %660 = vperm.xlu0 %659, %v233
        %v661 = vpop.permute.xlu0 %660
        %664 = vset.pattern.permute.xlu0 0
        %665 = vperm.xlu0 %664, %v234
        %v666 = vpop.permute.xlu0 %665
        %669 = vset.pattern.permute.xlu0 0
        %670 = vperm.xlu0 %669, %v235
        %v671 = vpop.permute.xlu0 %670
        %674 = vset.pattern.permute.xlu0 0
        %675 = vperm.xlu0 %674, %v236
        %v676 = vpop.permute.xlu0 %675
        %679 = vset.pattern.permute.xlu0 0
        %680 = vperm.xlu0 %679, %v237
        %v681 = vpop.permute.xlu0 %680
        %684 = vset.pattern.permute.xlu0 0
        %685 = vperm.xlu0 %684, %v238
        %v686 = vpop.permute.xlu0 %685
        %689 = vset.pattern.permute.xlu0 0
        %690 = vperm.xlu0 %689, %v239
        %v691 = vpop.permute.xlu0 %690
        %694 = vset.pattern.permute.xlu0 0
        %695 = vperm.xlu0 %694, %v240
        %v696 = vpop.permute.xlu0 %695
        %699 = vset.pattern.permute.xlu0 0
        %700 = vperm.xlu0 %699, %v241
        %v701 = vpop.permute.xlu0 %700
        %704 = vset.pattern.permute.xlu0 0
        %705 = vperm.xlu0 %704, %v242
        %v706 = vpop.permute.xlu0 %705
        %v708 = vmul.f32 %v256, %v631
        %v709 = vmul.f32 %v260, %v631
        %v710 = vmul.f32 %v264, %v631
        %v711 = vmul.f32 %v268, %v631
        %v712 = vmul.f32 %v272, %v631
        %v713 = vmul.f32 %v276, %v631
        %v714 = vmul.f32 %v280, %v631
        %v715 = vmul.f32 %v284, %v631
        %v716 = vmul.f32 %v288, %v631
        %v717 = vmul.f32 %v292, %v631
        %v718 = vmul.f32 %v296, %v631
        %v719 = vmul.f32 %v300, %v631
        %v720 = vmul.f32 %v304, %v631
        %v721 = vmul.f32 %v308, %v631
        %v722 = vmul.f32 %v312, %v631
        %v723 = vmul.f32 %v316, %v631
        %v724 = vmul.f32 %v320, %v631
        %v725 = vmul.f32 %v324, %v631
        %v726 = vmul.f32 %v328, %v631
        %v727 = vmul.f32 %v332, %v631
        %v728 = vmul.f32 %v336, %v631
        %v729 = vmul.f32 %v340, %v631
        %v730 = vmul.f32 %v344, %v631
        %v731 = vmul.f32 %v348, %v631
        %v732 = vmul.f32 %v352, %v631
        %v733 = vmul.f32 %v356, %v631
        %v734 = vmul.f32 %v360, %v631
        %v735 = vmul.f32 %v364, %v631
        %v736 = vmul.f32 %v368, %v631
        %v737 = vmul.f32 %v372, %v631
        %v738 = vmul.f32 %v376, %v631
        %v739 = vmul.f32 %v380, %v631
        %v740 = vmul.f32 %v384, %v631
        %v741 = vmul.f32 %v388, %v631
        %v742 = vmul.f32 %v392, %v631
        %v743 = vmul.f32 %v396, %v631
        %v744 = vmul.f32 %v400, %v631
        %v745 = vmul.f32 %v404, %v631
        %v746 = vmul.f32 %v408, %v631
        %v747 = vmul.f32 %v412, %v631
        %v748 = vmul.f32 %v416, %v631
        %v749 = vmul.f32 %v420, %v631
        %v750 = vmul.f32 %v424, %v631
        %v751 = vmul.f32 %v428, %v631
        %v752 = vmul.f32 %v432, %v631
        %v753 = vmul.f32 %v436, %v631
        %v754 = vmul.f32 %v440, %v631
        %v755 = vmul.f32 %v444, %v631
        %v756 = vmul.f32 %v448, %v631
        %v757 = vmul.f32 %v452, %v631
        %v758 = vmul.f32 %v456, %v631
        %v759 = vmul.f32 %v460, %v631
        %v760 = vmul.f32 %v464, %v631
        %v761 = vmul.f32 %v468, %v631
        %v762 = vmul.f32 %v472, %v631
        %v763 = vmul.f32 %v476, %v631
        %v764 = vmul.f32 %v480, %v631
        %v765 = vmul.f32 %v484, %v631
        %v766 = vmul.f32 %v488, %v631
        %v767 = vmul.f32 %v492, %v631
        %v768 = vmul.f32 %v496, %v631
        %v769 = vmul.f32 %v500, %v631
        %v770 = vmul.f32 %v504, %v631
        %v771 = vmul.f32 %v508, %v631
        %v772 = vmul.f32 %v512, %v631
        %v773 = vmul.f32 %v516, %v631
        %v774 = vmul.f32 %v520, %v631
        %v775 = vmul.f32 %v524, %v631
        %v776 = vmul.f32 %v528, %v631
        %v777 = vmul.f32 %v532, %v631
        %v778 = vmul.f32 %v536, %v631
        %v779 = vmul.f32 %v540, %v631
        %v780 = vmul.f32 %v544, %v631
        %v781 = vmul.f32 %v548, %v631
        %v782 = vmul.f32 %v552, %v631
        %v783 = vmul.f32 %v256, %v636
        %v784 = vmul.f32 %v260, %v636
        %v785 = vmul.f32 %v264, %v636
        %v786 = vmul.f32 %v268, %v636
        %v787 = vmul.f32 %v272, %v636
        %v788 = vmul.f32 %v276, %v636
        %v789 = vmul.f32 %v280, %v636
        %v790 = vmul.f32 %v284, %v636
        %v791 = vmul.f32 %v288, %v636
        %v792 = vmul.f32 %v292, %v636
        %v793 = vmul.f32 %v296, %v636
        %v794 = vmul.f32 %v300, %v636
        %v795 = vmul.f32 %v304, %v636
        %v796 = vmul.f32 %v308, %v636
        %v797 = vmul.f32 %v312, %v636
        %v798 = vmul.f32 %v316, %v636
        %v799 = vmul.f32 %v320, %v636
        %v800 = vmul.f32 %v324, %v636
        %v801 = vmul.f32 %v328, %v636
        %v802 = vmul.f32 %v332, %v636
        %v803 = vmul.f32 %v336, %v636
        %v804 = vmul.f32 %v340, %v636
        %v805 = vmul.f32 %v344, %v636
        %v806 = vmul.f32 %v348, %v636
        %v807 = vmul.f32 %v352, %v636
        %v808 = vmul.f32 %v356, %v636
        %v809 = vmul.f32 %v360, %v636
        %v810 = vmul.f32 %v364, %v636
        %v811 = vmul.f32 %v368, %v636
        %v812 = vmul.f32 %v372, %v636
        %v813 = vmul.f32 %v376, %v636
        %v814 = vmul.f32 %v380, %v636
        %v815 = vmul.f32 %v384, %v636
        %v816 = vmul.f32 %v388, %v636
        %v817 = vmul.f32 %v392, %v636
        %v818 = vmul.f32 %v396, %v636
        %v819 = vmul.f32 %v400, %v636
        %v820 = vmul.f32 %v404, %v636
        %v821 = vmul.f32 %v408, %v636
        %v822 = vmul.f32 %v412, %v636
        %v823 = vmul.f32 %v416, %v636
        %v824 = vmul.f32 %v420, %v636
        %v825 = vmul.f32 %v424, %v636
        %v826 = vmul.f32 %v428, %v636
        %v827 = vmul.f32 %v432, %v636
        %v828 = vmul.f32 %v436, %v636
        %v829 = vmul.f32 %v440, %v636
        %v830 = vmul.f32 %v444, %v636
        %v831 = vmul.f32 %v448, %v636
        %v832 = vmul.f32 %v452, %v636
        %v833 = vmul.f32 %v456, %v636
        %v834 = vmul.f32 %v460, %v636
        %v835 = vmul.f32 %v464, %v636
        %v836 = vmul.f32 %v468, %v636
        %v837 = vmul.f32 %v472, %v636
        %v838 = vmul.f32 %v476, %v636
        %v839 = vmul.f32 %v480, %v636
        %v840 = vmul.f32 %v484, %v636
        %v841 = vmul.f32 %v488, %v636
        %v842 = vmul.f32 %v492, %v636
        %v843 = vmul.f32 %v496, %v636
        %v844 = vmul.f32 %v500, %v636
        %v845 = vmul.f32 %v504, %v636
        %v846 = vmul.f32 %v508, %v636
        %v847 = vmul.f32 %v512, %v636
        %v848 = vmul.f32 %v516, %v636
        %v849 = vmul.f32 %v520, %v636
        %v850 = vmul.f32 %v524, %v636
        %v851 = vmul.f32 %v528, %v636
        %v852 = vmul.f32 %v532, %v636
        %v853 = vmul.f32 %v536, %v636
        %v854 = vmul.f32 %v540, %v636
        %v855 = vmul.f32 %v544, %v636
        %v856 = vmul.f32 %v548, %v636
        %v857 = vmul.f32 %v552, %v636
        %v858 = vmul.f32 %v256, %v641
        %v859 = vmul.f32 %v260, %v641
        %v860 = vmul.f32 %v264, %v641
        %v861 = vmul.f32 %v268, %v641
        %v862 = vmul.f32 %v272, %v641
        %v863 = vmul.f32 %v276, %v641
        %v864 = vmul.f32 %v280, %v641
        %v865 = vmul.f32 %v284, %v641
        %v866 = vmul.f32 %v288, %v641
        %v867 = vmul.f32 %v292, %v641
        %v868 = vmul.f32 %v296, %v641
        %v869 = vmul.f32 %v300, %v641
        %v870 = vmul.f32 %v304, %v641
        %v871 = vmul.f32 %v308, %v641
        %v872 = vmul.f32 %v312, %v641
        %v873 = vmul.f32 %v316, %v641
        %v874 = vmul.f32 %v320, %v641
        %v875 = vmul.f32 %v324, %v641
        %v876 = vmul.f32 %v328, %v641
        %v877 = vmul.f32 %v332, %v641
        %v878 = vmul.f32 %v336, %v641
        %v879 = vmul.f32 %v340, %v641
        %v880 = vmul.f32 %v344, %v641
        %v881 = vmul.f32 %v348, %v641
        %v882 = vmul.f32 %v352, %v641
        %v883 = vmul.f32 %v356, %v641
        %v884 = vmul.f32 %v360, %v641
        %v885 = vmul.f32 %v364, %v641
        %v886 = vmul.f32 %v368, %v641
        %v887 = vmul.f32 %v372, %v641
        %v888 = vmul.f32 %v376, %v641
        %v889 = vmul.f32 %v380, %v641
        %v890 = vmul.f32 %v384, %v641
        %v891 = vmul.f32 %v388, %v641
        %v892 = vmul.f32 %v392, %v641
        %v893 = vmul.f32 %v396, %v641
        %v894 = vmul.f32 %v400, %v641
        %v895 = vmul.f32 %v404, %v641
        %v896 = vmul.f32 %v408, %v641
        %v897 = vmul.f32 %v412, %v641
        %v898 = vmul.f32 %v416, %v641
        %v899 = vmul.f32 %v420, %v641
        %v900 = vmul.f32 %v424, %v641
        %v901 = vmul.f32 %v428, %v641
        %v902 = vmul.f32 %v432, %v641
        %v903 = vmul.f32 %v436, %v641
        %v904 = vmul.f32 %v440, %v641
        %v905 = vmul.f32 %v444, %v641
        %v906 = vmul.f32 %v448, %v641
        %v907 = vmul.f32 %v452, %v641
        %v908 = vmul.f32 %v456, %v641
        %v909 = vmul.f32 %v460, %v641
        %v910 = vmul.f32 %v464, %v641
        %v911 = vmul.f32 %v468, %v641
        %v912 = vmul.f32 %v472, %v641
        %v913 = vmul.f32 %v476, %v641
        %v914 = vmul.f32 %v480, %v641
        %v915 = vmul.f32 %v484, %v641
        %v916 = vmul.f32 %v488, %v641
        %v917 = vmul.f32 %v492, %v641
        %v918 = vmul.f32 %v496, %v641
        %v919 = vmul.f32 %v500, %v641
        %v920 = vmul.f32 %v504, %v641
        %v921 = vmul.f32 %v508, %v641
        %v922 = vmul.f32 %v512, %v641
        %v923 = vmul.f32 %v516, %v641
        %v924 = vmul.f32 %v520, %v641
        %v925 = vmul.f32 %v524, %v641
        %v926 = vmul.f32 %v528, %v641
        %v927 = vmul.f32 %v532, %v641
        %v928 = vmul.f32 %v536, %v641
        %v929 = vmul.f32 %v540, %v641
        %v930 = vmul.f32 %v544, %v641
        %v931 = vmul.f32 %v548, %v641
        %v932 = vmul.f32 %v552, %v641
        %v933 = vmul.f32 %v256, %v646
        %v934 = vmul.f32 %v260, %v646
        %v935 = vmul.f32 %v264, %v646
        %v936 = vmul.f32 %v268, %v646
        %v937 = vmul.f32 %v272, %v646
        %v938 = vmul.f32 %v276, %v646
        %v939 = vmul.f32 %v280, %v646
        %v940 = vmul.f32 %v284, %v646
        %v941 = vmul.f32 %v288, %v646
        %v942 = vmul.f32 %v292, %v646
        %v943 = vmul.f32 %v296, %v646
        %v944 = vmul.f32 %v300, %v646
        %v945 = vmul.f32 %v304, %v646
        %v946 = vmul.f32 %v308, %v646
        %v947 = vmul.f32 %v312, %v646
        %v948 = vmul.f32 %v316, %v646
        %v949 = vmul.f32 %v320, %v646
        %v950 = vmul.f32 %v324, %v646
        %v951 = vmul.f32 %v328, %v646
        %v952 = vmul.f32 %v332, %v646
        %v953 = vmul.f32 %v336, %v646
        %v954 = vmul.f32 %v340, %v646
        %v955 = vmul.f32 %v344, %v646
        %v956 = vmul.f32 %v348, %v646
        %v957 = vmul.f32 %v352, %v646
        %v958 = vmul.f32 %v356, %v646
        %v959 = vmul.f32 %v360, %v646
        %v960 = vmul.f32 %v364, %v646
        %v961 = vmul.f32 %v368, %v646
        %v962 = vmul.f32 %v372, %v646
        %v963 = vmul.f32 %v376, %v646
        %v964 = vmul.f32 %v380, %v646
        %v965 = vmul.f32 %v384, %v646
        %v966 = vmul.f32 %v388, %v646
        %v967 = vmul.f32 %v392, %v646
        %v968 = vmul.f32 %v396, %v646
        %v969 = vmul.f32 %v400, %v646
        %v970 = vmul.f32 %v404, %v646
        %v971 = vmul.f32 %v408, %v646
        %v972 = vmul.f32 %v412, %v646
        %v973 = vmul.f32 %v416, %v646
        %v974 = vmul.f32 %v420, %v646
        %v975 = vmul.f32 %v424, %v646
        %v976 = vmul.f32 %v428, %v646
        %v977 = vmul.f32 %v432, %v646
        %v978 = vmul.f32 %v436, %v646
        %v979 = vmul.f32 %v440, %v646
        %v980 = vmul.f32 %v444, %v646
        %v981 = vmul.f32 %v448, %v646
        %v982 = vmul.f32 %v452, %v646
        %v983 = vmul.f32 %v456, %v646
        %v984 = vmul.f32 %v460, %v646
        %v985 = vmul.f32 %v464, %v646
        %v986 = vmul.f32 %v468, %v646
        %v987 = vmul.f32 %v472, %v646
        %v988 = vmul.f32 %v476, %v646
        %v989 = vmul.f32 %v480, %v646
        %v990 = vmul.f32 %v484, %v646
        %v991 = vmul.f32 %v488, %v646
        %v992 = vmul.f32 %v492, %v646
        %v993 = vmul.f32 %v496, %v646
        %v994 = vmul.f32 %v500, %v646
        %v995 = vmul.f32 %v504, %v646
        %v996 = vmul.f32 %v508, %v646
        %v997 = vmul.f32 %v512, %v646
        %v998 = vmul.f32 %v516, %v646
        %v999 = vmul.f32 %v520, %v646
        %v1000 = vmul.f32 %v524, %v646
        %v1001 = vmul.f32 %v528, %v646
        %v1002 = vmul.f32 %v532, %v646
        %v1003 = vmul.f32 %v536, %v646
        %v1004 = vmul.f32 %v540, %v646
        %v1005 = vmul.f32 %v544, %v646
        %v1006 = vmul.f32 %v548, %v646
        %v1007 = vmul.f32 %v552, %v646
        %v1008 = vmul.f32 %v256, %v651
        %v1009 = vmul.f32 %v260, %v651
        %v1010 = vmul.f32 %v264, %v651
        %v1011 = vmul.f32 %v268, %v651
        %v1012 = vmul.f32 %v272, %v651
        %v1013 = vmul.f32 %v276, %v651
        %v1014 = vmul.f32 %v280, %v651
        %v1015 = vmul.f32 %v284, %v651
        %v1016 = vmul.f32 %v288, %v651
        %v1017 = vmul.f32 %v292, %v651
        %v1018 = vmul.f32 %v296, %v651
        %v1019 = vmul.f32 %v300, %v651
        %v1020 = vmul.f32 %v304, %v651
        %v1021 = vmul.f32 %v308, %v651
        %v1022 = vmul.f32 %v312, %v651
        %v1023 = vmul.f32 %v316, %v651
        %v1024 = vmul.f32 %v320, %v651
        %v1025 = vmul.f32 %v324, %v651
        %v1026 = vmul.f32 %v328, %v651
        %v1027 = vmul.f32 %v332, %v651
        %v1028 = vmul.f32 %v336, %v651
        %v1029 = vmul.f32 %v340, %v651
        %v1030 = vmul.f32 %v344, %v651
        %v1031 = vmul.f32 %v348, %v651
        %v1032 = vmul.f32 %v352, %v651
        %v1033 = vmul.f32 %v356, %v651
        %v1034 = vmul.f32 %v360, %v651
        %v1035 = vmul.f32 %v364, %v651
        %v1036 = vmul.f32 %v368, %v651
        %v1037 = vmul.f32 %v372, %v651
        %v1038 = vmul.f32 %v376, %v651
        %v1039 = vmul.f32 %v380, %v651
        %v1040 = vmul.f32 %v384, %v651
        %v1041 = vmul.f32 %v388, %v651
        %v1042 = vmul.f32 %v392, %v651
        %v1043 = vmul.f32 %v396, %v651
        %v1044 = vmul.f32 %v400, %v651
        %v1045 = vmul.f32 %v404, %v651
        %v1046 = vmul.f32 %v408, %v651
        %v1047 = vmul.f32 %v412, %v651
        %v1048 = vmul.f32 %v416, %v651
        %v1049 = vmul.f32 %v420, %v651
        %v1050 = vmul.f32 %v424, %v651
        %v1051 = vmul.f32 %v428, %v651
        %v1052 = vmul.f32 %v432, %v651
        %v1053 = vmul.f32 %v436, %v651
        %v1054 = vmul.f32 %v440, %v651
        %v1055 = vmul.f32 %v444, %v651
        %v1056 = vmul.f32 %v448, %v651
        %v1057 = vmul.f32 %v452, %v651
        %v1058 = vmul.f32 %v456, %v651
        %v1059 = vmul.f32 %v460, %v651
        %v1060 = vmul.f32 %v464, %v651
        %v1061 = vmul.f32 %v468, %v651
        %v1062 = vmul.f32 %v472, %v651
        %v1063 = vmul.f32 %v476, %v651
        %v1064 = vmul.f32 %v480, %v651
        %v1065 = vmul.f32 %v484, %v651
        %v1066 = vmul.f32 %v488, %v651
        %v1067 = vmul.f32 %v492, %v651
        %v1068 = vmul.f32 %v496, %v651
        %v1069 = vmul.f32 %v500, %v651
        %v1070 = vmul.f32 %v504, %v651
        %v1071 = vmul.f32 %v508, %v651
        %v1072 = vmul.f32 %v512, %v651
        %v1073 = vmul.f32 %v516, %v651
        %v1074 = vmul.f32 %v520, %v651
        %v1075 = vmul.f32 %v524, %v651
        %v1076 = vmul.f32 %v528, %v651
        %v1077 = vmul.f32 %v532, %v651
        %v1078 = vmul.f32 %v536, %v651
        %v1079 = vmul.f32 %v540, %v651
        %v1080 = vmul.f32 %v544, %v651
        %v1081 = vmul.f32 %v548, %v651
        %v1082 = vmul.f32 %v552, %v651
        %v1083 = vmul.f32 %v256, %v656
        %v1084 = vmul.f32 %v260, %v656
        %v1085 = vmul.f32 %v264, %v656
        %v1086 = vmul.f32 %v268, %v656
        %v1087 = vmul.f32 %v272, %v656
        %v1088 = vmul.f32 %v276, %v656
        %v1089 = vmul.f32 %v280, %v656
        %v1090 = vmul.f32 %v284, %v656
        %v1091 = vmul.f32 %v288, %v656
        %v1092 = vmul.f32 %v292, %v656
        %v1093 = vmul.f32 %v296, %v656
        %v1094 = vmul.f32 %v300, %v656
        %v1095 = vmul.f32 %v304, %v656
        %v1096 = vmul.f32 %v308, %v656
        %v1097 = vmul.f32 %v312, %v656
        %v1098 = vmul.f32 %v316, %v656
        %v1099 = vmul.f32 %v320, %v656
        %v1100 = vmul.f32 %v324, %v656
        %v1101 = vmul.f32 %v328, %v656
        %v1102 = vmul.f32 %v332, %v656
        %v1103 = vmul.f32 %v336, %v656
        %v1104 = vmul.f32 %v340, %v656
        %v1105 = vmul.f32 %v344, %v656
        %v1106 = vmul.f32 %v348, %v656
        %v1107 = vmul.f32 %v352, %v656
        %v1108 = vmul.f32 %v356, %v656
        %v1109 = vmul.f32 %v360, %v656
        %v1110 = vmul.f32 %v364, %v656
        %v1111 = vmul.f32 %v368, %v656
        %v1112 = vmul.f32 %v372, %v656
        %v1113 = vmul.f32 %v376, %v656
        %v1114 = vmul.f32 %v380, %v656
        %v1115 = vmul.f32 %v384, %v656
        %v1116 = vmul.f32 %v388, %v656
        %v1117 = vmul.f32 %v392, %v656
        %v1118 = vmul.f32 %v396, %v656
        %v1119 = vmul.f32 %v400, %v656
        %v1120 = vmul.f32 %v404, %v656
        %v1121 = vmul.f32 %v408, %v656
        %v1122 = vmul.f32 %v412, %v656
        %v1123 = vmul.f32 %v416, %v656
        %v1124 = vmul.f32 %v420, %v656
        %v1125 = vmul.f32 %v424, %v656
        %v1126 = vmul.f32 %v428, %v656
        %v1127 = vmul.f32 %v432, %v656
        %v1128 = vmul.f32 %v436, %v656
        %v1129 = vmul.f32 %v440, %v656
        %v1130 = vmul.f32 %v444, %v656
        %v1131 = vmul.f32 %v448, %v656
        %v1132 = vmul.f32 %v452, %v656
        %v1133 = vmul.f32 %v456, %v656
        %v1134 = vmul.f32 %v460, %v656
        %v1135 = vmul.f32 %v464, %v656
        %v1136 = vmul.f32 %v468, %v656
        %v1137 = vmul.f32 %v472, %v656
        %v1138 = vmul.f32 %v476, %v656
        %v1139 = vmul.f32 %v480, %v656
        %v1140 = vmul.f32 %v484, %v656
        %v1141 = vmul.f32 %v488, %v656
        %v1142 = vmul.f32 %v492, %v656
        %v1143 = vmul.f32 %v496, %v656
        %v1144 = vmul.f32 %v500, %v656
        %v1145 = vmul.f32 %v504, %v656
        %v1146 = vmul.f32 %v508, %v656
        %v1147 = vmul.f32 %v512, %v656
        %v1148 = vmul.f32 %v516, %v656
        %v1149 = vmul.f32 %v520, %v656
        %v1150 = vmul.f32 %v524, %v656
        %v1151 = vmul.f32 %v528, %v656
        %v1152 = vmul.f32 %v532, %v656
        %v1153 = vmul.f32 %v536, %v656
        %v1154 = vmul.f32 %v540, %v656
        %v1155 = vmul.f32 %v544, %v656
        %v1156 = vmul.f32 %v548, %v656
        %v1157 = vmul.f32 %v552, %v656
        %v1158 = vmul.f32 %v256, %v661
        %v1159 = vmul.f32 %v260, %v661
        %v1160 = vmul.f32 %v264, %v661
        %v1161 = vmul.f32 %v268, %v661
        %v1162 = vmul.f32 %v272, %v661
        %v1163 = vmul.f32 %v276, %v661
        %v1164 = vmul.f32 %v280, %v661
        %v1165 = vmul.f32 %v284, %v661
        %v1166 = vmul.f32 %v288, %v661
        %v1167 = vmul.f32 %v292, %v661
        %v1168 = vmul.f32 %v296, %v661
        %v1169 = vmul.f32 %v300, %v661
        %v1170 = vmul.f32 %v304, %v661
        %v1171 = vmul.f32 %v308, %v661
        %v1172 = vmul.f32 %v312, %v661
        %v1173 = vmul.f32 %v316, %v661
        %v1174 = vmul.f32 %v320, %v661
        %v1175 = vmul.f32 %v324, %v661
        %v1176 = vmul.f32 %v328, %v661
        %v1177 = vmul.f32 %v332, %v661
        %v1178 = vmul.f32 %v336, %v661
        %v1179 = vmul.f32 %v340, %v661
        %v1180 = vmul.f32 %v344, %v661
        %v1181 = vmul.f32 %v348, %v661
        %v1182 = vmul.f32 %v352, %v661
        %v1183 = vmul.f32 %v356, %v661
        %v1184 = vmul.f32 %v360, %v661
        %v1185 = vmul.f32 %v364, %v661
        %v1186 = vmul.f32 %v368, %v661
        %v1187 = vmul.f32 %v372, %v661
        %v1188 = vmul.f32 %v376, %v661
        %v1189 = vmul.f32 %v380, %v661
        %v1190 = vmul.f32 %v384, %v661
        %v1191 = vmul.f32 %v388, %v661
        %v1192 = vmul.f32 %v392, %v661
        %v1193 = vmul.f32 %v396, %v661
        %v1194 = vmul.f32 %v400, %v661
        %v1195 = vmul.f32 %v404, %v661
        %v1196 = vmul.f32 %v408, %v661
        %v1197 = vmul.f32 %v412, %v661
        %v1198 = vmul.f32 %v416, %v661
        %v1199 = vmul.f32 %v420, %v661
        %v1200 = vmul.f32 %v424, %v661
        %v1201 = vmul.f32 %v428, %v661
        %v1202 = vmul.f32 %v432, %v661
        %v1203 = vmul.f32 %v436, %v661
        %v1204 = vmul.f32 %v440, %v661
        %v1205 = vmul.f32 %v444, %v661
        %v1206 = vmul.f32 %v448, %v661
        %v1207 = vmul.f32 %v452, %v661
        %v1208 = vmul.f32 %v456, %v661
        %v1209 = vmul.f32 %v460, %v661
        %v1210 = vmul.f32 %v464, %v661
        %v1211 = vmul.f32 %v468, %v661
        %v1212 = vmul.f32 %v472, %v661
        %v1213 = vmul.f32 %v476, %v661
        %v1214 = vmul.f32 %v480, %v661
        %v1215 = vmul.f32 %v484, %v661
        %v1216 = vmul.f32 %v488, %v661
        %v1217 = vmul.f32 %v492, %v661
        %v1218 = vmul.f32 %v496, %v661
        %v1219 = vmul.f32 %v500, %v661
        %v1220 = vmul.f32 %v504, %v661
        %v1221 = vmul.f32 %v508, %v661
        %v1222 = vmul.f32 %v512, %v661
        %v1223 = vmul.f32 %v516, %v661
        %v1224 = vmul.f32 %v520, %v661
        %v1225 = vmul.f32 %v524, %v661
        %v1226 = vmul.f32 %v528, %v661
        %v1227 = vmul.f32 %v532, %v661
        %v1228 = vmul.f32 %v536, %v661
        %v1229 = vmul.f32 %v540, %v661
        %v1230 = vmul.f32 %v544, %v661
        %v1231 = vmul.f32 %v548, %v661
        %v1232 = vmul.f32 %v552, %v661
        %v1233 = vmul.f32 %v256, %v666
        %v1234 = vmul.f32 %v260, %v666
        %v1235 = vmul.f32 %v264, %v666
        %v1236 = vmul.f32 %v268, %v666
        %v1237 = vmul.f32 %v272, %v666
        %v1238 = vmul.f32 %v276, %v666
        %v1239 = vmul.f32 %v280, %v666
        %v1240 = vmul.f32 %v284, %v666
        %v1241 = vmul.f32 %v288, %v666
        %v1242 = vmul.f32 %v292, %v666
        %v1243 = vmul.f32 %v296, %v666
        %v1244 = vmul.f32 %v300, %v666
        %v1245 = vmul.f32 %v304, %v666
        %v1246 = vmul.f32 %v308, %v666
        %v1247 = vmul.f32 %v312, %v666
        %v1248 = vmul.f32 %v316, %v666
        %v1249 = vmul.f32 %v320, %v666
        %v1250 = vmul.f32 %v324, %v666
        %v1251 = vmul.f32 %v328, %v666
        %v1252 = vmul.f32 %v332, %v666
        %v1253 = vmul.f32 %v336, %v666
        %v1254 = vmul.f32 %v340, %v666
        %v1255 = vmul.f32 %v344, %v666
        %v1256 = vmul.f32 %v348, %v666
        %v1257 = vmul.f32 %v352, %v666
        %v1258 = vmul.f32 %v356, %v666
        %v1259 = vmul.f32 %v360, %v666
        %v1260 = vmul.f32 %v364, %v666
        %v1261 = vmul.f32 %v368, %v666
        %v1262 = vmul.f32 %v372, %v666
        %v1263 = vmul.f32 %v376, %v666
        %v1264 = vmul.f32 %v380, %v666
        %v1265 = vmul.f32 %v384, %v666
        %v1266 = vmul.f32 %v388, %v666
        %v1267 = vmul.f32 %v392, %v666
        %v1268 = vmul.f32 %v396, %v666
        %v1269 = vmul.f32 %v400, %v666
        %v1270 = vmul.f32 %v404, %v666
        %v1271 = vmul.f32 %v408, %v666
        %v1272 = vmul.f32 %v412, %v666
        %v1273 = vmul.f32 %v416, %v666
        %v1274 = vmul.f32 %v420, %v666
        %v1275 = vmul.f32 %v424, %v666
        %v1276 = vmul.f32 %v428, %v666
        %v1277 = vmul.f32 %v432, %v666
        %v1278 = vmul.f32 %v436, %v666
        %v1279 = vmul.f32 %v440, %v666
        %v1280 = vmul.f32 %v444, %v666
        %v1281 = vmul.f32 %v448, %v666
        %v1282 = vmul.f32 %v452, %v666
        %v1283 = vmul.f32 %v456, %v666
        %v1284 = vmul.f32 %v460, %v666
        %v1285 = vmul.f32 %v464, %v666
        %v1286 = vmul.f32 %v468, %v666
        %v1287 = vmul.f32 %v472, %v666
        %v1288 = vmul.f32 %v476, %v666
        %v1289 = vmul.f32 %v480, %v666
        %v1290 = vmul.f32 %v484, %v666
        %v1291 = vmul.f32 %v488, %v666
        %v1292 = vmul.f32 %v492, %v666
        %v1293 = vmul.f32 %v496, %v666
        %v1294 = vmul.f32 %v500, %v666
        %v1295 = vmul.f32 %v504, %v666
        %v1296 = vmul.f32 %v508, %v666
        %v1297 = vmul.f32 %v512, %v666
        %v1298 = vmul.f32 %v516, %v666
        %v1299 = vmul.f32 %v520, %v666
        %v1300 = vmul.f32 %v524, %v666
        %v1301 = vmul.f32 %v528, %v666
        %v1302 = vmul.f32 %v532, %v666
        %v1303 = vmul.f32 %v536, %v666
        %v1304 = vmul.f32 %v540, %v666
        %v1305 = vmul.f32 %v544, %v666
        %v1306 = vmul.f32 %v548, %v666
        %v1307 = vmul.f32 %v552, %v666
        %v1308 = vmul.f32 %v256, %v671
        %v1309 = vmul.f32 %v260, %v671
        %v1310 = vmul.f32 %v264, %v671
        %v1311 = vmul.f32 %v268, %v671
        %v1312 = vmul.f32 %v272, %v671
        %v1313 = vmul.f32 %v276, %v671
        %v1314 = vmul.f32 %v280, %v671
        %v1315 = vmul.f32 %v284, %v671
        %v1316 = vmul.f32 %v288, %v671
        %v1317 = vmul.f32 %v292, %v671
        %v1318 = vmul.f32 %v296, %v671
        %v1319 = vmul.f32 %v300, %v671
        %v1320 = vmul.f32 %v304, %v671
        %v1321 = vmul.f32 %v308, %v671
        %v1322 = vmul.f32 %v312, %v671
        %v1323 = vmul.f32 %v316, %v671
        %v1324 = vmul.f32 %v320, %v671
        %v1325 = vmul.f32 %v324, %v671
        %v1326 = vmul.f32 %v328, %v671
        %v1327 = vmul.f32 %v332, %v671
        %v1328 = vmul.f32 %v336, %v671
        %v1329 = vmul.f32 %v340, %v671
        %v1330 = vmul.f32 %v344, %v671
        %v1331 = vmul.f32 %v348, %v671
        %v1332 = vmul.f32 %v352, %v671
        %v1333 = vmul.f32 %v356, %v671
        %v1334 = vmul.f32 %v360, %v671
        %v1335 = vmul.f32 %v364, %v671
        %v1336 = vmul.f32 %v368, %v671
        %v1337 = vmul.f32 %v372, %v671
        %v1338 = vmul.f32 %v376, %v671
        %v1339 = vmul.f32 %v380, %v671
        %v1340 = vmul.f32 %v384, %v671
        %v1341 = vmul.f32 %v388, %v671
        %v1342 = vmul.f32 %v392, %v671
        %v1343 = vmul.f32 %v396, %v671
        %v1344 = vmul.f32 %v400, %v671
        %v1345 = vmul.f32 %v404, %v671
        %v1346 = vmul.f32 %v408, %v671
        %v1347 = vmul.f32 %v412, %v671
        %v1348 = vmul.f32 %v416, %v671
        %v1349 = vmul.f32 %v420, %v671
        %v1350 = vmul.f32 %v424, %v671
        %v1351 = vmul.f32 %v428, %v671
        %v1352 = vmul.f32 %v432, %v671
        %v1353 = vmul.f32 %v436, %v671
        %v1354 = vmul.f32 %v440, %v671
        %v1355 = vmul.f32 %v444, %v671
        %v1356 = vmul.f32 %v448, %v671
        %v1357 = vmul.f32 %v452, %v671
        %v1358 = vmul.f32 %v456, %v671
        %v1359 = vmul.f32 %v460, %v671
        %v1360 = vmul.f32 %v464, %v671
        %v1361 = vmul.f32 %v468, %v671
        %v1362 = vmul.f32 %v472, %v671
        %v1363 = vmul.f32 %v476, %v671
        %v1364 = vmul.f32 %v480, %v671
        %v1365 = vmul.f32 %v484, %v671
        %v1366 = vmul.f32 %v488, %v671
        %v1367 = vmul.f32 %v492, %v671
        %v1368 = vmul.f32 %v496, %v671
        %v1369 = vmul.f32 %v500, %v671
        %v1370 = vmul.f32 %v504, %v671
        %v1371 = vmul.f32 %v508, %v671
        %v1372 = vmul.f32 %v512, %v671
        %v1373 = vmul.f32 %v516, %v671
        %v1374 = vmul.f32 %v520, %v671
        %v1375 = vmul.f32 %v524, %v671
        %v1376 = vmul.f32 %v528, %v671
        %v1377 = vmul.f32 %v532, %v671
        %v1378 = vmul.f32 %v536, %v671
        %v1379 = vmul.f32 %v540, %v671
        %v1380 = vmul.f32 %v544, %v671
        %v1381 = vmul.f32 %v548, %v671
        %v1382 = vmul.f32 %v552, %v671
        %v1383 = vmul.f32 %v256, %v676
        %v1384 = vmul.f32 %v260, %v676
        %v1385 = vmul.f32 %v264, %v676
        %v1386 = vmul.f32 %v268, %v676
        %v1387 = vmul.f32 %v272, %v676
        %v1388 = vmul.f32 %v276, %v676
        %v1389 = vmul.f32 %v280, %v676
        %v1390 = vmul.f32 %v284, %v676
        %v1391 = vmul.f32 %v288, %v676
        %v1392 = vmul.f32 %v292, %v676
        %v1393 = vmul.f32 %v296, %v676
        %v1394 = vmul.f32 %v300, %v676
        %v1395 = vmul.f32 %v304, %v676
        %v1396 = vmul.f32 %v308, %v676
        %v1397 = vmul.f32 %v312, %v676
        %v1398 = vmul.f32 %v316, %v676
        %v1399 = vmul.f32 %v320, %v676
        %v1400 = vmul.f32 %v324, %v676
        %v1401 = vmul.f32 %v328, %v676
        %v1402 = vmul.f32 %v332, %v676
        %v1403 = vmul.f32 %v336, %v676
        %v1404 = vmul.f32 %v340, %v676
        %v1405 = vmul.f32 %v344, %v676
        %v1406 = vmul.f32 %v348, %v676
        %v1407 = vmul.f32 %v352, %v676
        %v1408 = vmul.f32 %v356, %v676
        %v1409 = vmul.f32 %v360, %v676
        %v1410 = vmul.f32 %v364, %v676
        %v1411 = vmul.f32 %v368, %v676
        %v1412 = vmul.f32 %v372, %v676
        %v1413 = vmul.f32 %v376, %v676
        %v1414 = vmul.f32 %v380, %v676
        %v1415 = vmul.f32 %v384, %v676
        %v1416 = vmul.f32 %v388, %v676
        %v1417 = vmul.f32 %v392, %v676
        %v1418 = vmul.f32 %v396, %v676
        %v1419 = vmul.f32 %v400, %v676
        %v1420 = vmul.f32 %v404, %v676
        %v1421 = vmul.f32 %v408, %v676
        %v1422 = vmul.f32 %v412, %v676
        %v1423 = vmul.f32 %v416, %v676
        %v1424 = vmul.f32 %v420, %v676
        %v1425 = vmul.f32 %v424, %v676
        %v1426 = vmul.f32 %v428, %v676
        %v1427 = vmul.f32 %v432, %v676
        %v1428 = vmul.f32 %v436, %v676
        %v1429 = vmul.f32 %v440, %v676
        %v1430 = vmul.f32 %v444, %v676
        %v1431 = vmul.f32 %v448, %v676
        %v1432 = vmul.f32 %v452, %v676
        %v1433 = vmul.f32 %v456, %v676
        %v1434 = vmul.f32 %v460, %v676
        %v1435 = vmul.f32 %v464, %v676
        %v1436 = vmul.f32 %v468, %v676
        %v1437 = vmul.f32 %v472, %v676
        %v1438 = vmul.f32 %v476, %v676
        %v1439 = vmul.f32 %v480, %v676
        %v1440 = vmul.f32 %v484, %v676
        %v1441 = vmul.f32 %v488, %v676
        %v1442 = vmul.f32 %v492, %v676
        %v1443 = vmul.f32 %v496, %v676
        %v1444 = vmul.f32 %v500, %v676
        %v1445 = vmul.f32 %v504, %v676
        %v1446 = vmul.f32 %v508, %v676
        %v1447 = vmul.f32 %v512, %v676
        %v1448 = vmul.f32 %v516, %v676
        %v1449 = vmul.f32 %v520, %v676
        %v1450 = vmul.f32 %v524, %v676
        %v1451 = vmul.f32 %v528, %v676
        %v1452 = vmul.f32 %v532, %v676
        %v1453 = vmul.f32 %v536, %v676
        %v1454 = vmul.f32 %v540, %v676
        %v1455 = vmul.f32 %v544, %v676
        %v1456 = vmul.f32 %v548, %v676
        %v1457 = vmul.f32 %v552, %v676
        %v1458 = vmul.f32 %v256, %v681
        %v1459 = vmul.f32 %v260, %v681
        %v1460 = vmul.f32 %v264, %v681
        %v1461 = vmul.f32 %v268, %v681
        %v1462 = vmul.f32 %v272, %v681
        %v1463 = vmul.f32 %v276, %v681
        %v1464 = vmul.f32 %v280, %v681
        %v1465 = vmul.f32 %v284, %v681
        %v1466 = vmul.f32 %v288, %v681
        %v1467 = vmul.f32 %v292, %v681
        %v1468 = vmul.f32 %v296, %v681
        %v1469 = vmul.f32 %v300, %v681
        %v1470 = vmul.f32 %v304, %v681
        %v1471 = vmul.f32 %v308, %v681
        %v1472 = vmul.f32 %v312, %v681
        %v1473 = vmul.f32 %v316, %v681
        %v1474 = vmul.f32 %v320, %v681
        %v1475 = vmul.f32 %v324, %v681
        %v1476 = vmul.f32 %v328, %v681
        %v1477 = vmul.f32 %v332, %v681
        %v1478 = vmul.f32 %v336, %v681
        %v1479 = vmul.f32 %v340, %v681
        %v1480 = vmul.f32 %v344, %v681
        %v1481 = vmul.f32 %v348, %v681
        %v1482 = vmul.f32 %v352, %v681
        %v1483 = vmul.f32 %v356, %v681
        %v1484 = vmul.f32 %v360, %v681
        %v1485 = vmul.f32 %v364, %v681
        %v1486 = vmul.f32 %v368, %v681
        %v1487 = vmul.f32 %v372, %v681
        %v1488 = vmul.f32 %v376, %v681
        %v1489 = vmul.f32 %v380, %v681
        %v1490 = vmul.f32 %v384, %v681
        %v1491 = vmul.f32 %v388, %v681
        %v1492 = vmul.f32 %v392, %v681
        %v1493 = vmul.f32 %v396, %v681
        %v1494 = vmul.f32 %v400, %v681
        %v1495 = vmul.f32 %v404, %v681
        %v1496 = vmul.f32 %v408, %v681
        %v1497 = vmul.f32 %v412, %v681
        %v1498 = vmul.f32 %v416, %v681
        %v1499 = vmul.f32 %v420, %v681
        %v1500 = vmul.f32 %v424, %v681
        %v1501 = vmul.f32 %v428, %v681
        %v1502 = vmul.f32 %v432, %v681
        %v1503 = vmul.f32 %v436, %v681
        %v1504 = vmul.f32 %v440, %v681
        %v1505 = vmul.f32 %v444, %v681
        %v1506 = vmul.f32 %v448, %v681
        %v1507 = vmul.f32 %v452, %v681
        %v1508 = vmul.f32 %v456, %v681
        %v1509 = vmul.f32 %v460, %v681
        %v1510 = vmul.f32 %v464, %v681
        %v1511 = vmul.f32 %v468, %v681
        %v1512 = vmul.f32 %v472, %v681
        %v1513 = vmul.f32 %v476, %v681
        %v1514 = vmul.f32 %v480, %v681
        %v1515 = vmul.f32 %v484, %v681
        %v1516 = vmul.f32 %v488, %v681
        %v1517 = vmul.f32 %v492, %v681
        %v1518 = vmul.f32 %v496, %v681
        %v1519 = vmul.f32 %v500, %v681
        %v1520 = vmul.f32 %v504, %v681
        %v1521 = vmul.f32 %v508, %v681
        %v1522 = vmul.f32 %v512, %v681
        %v1523 = vmul.f32 %v516, %v681
        %v1524 = vmul.f32 %v520, %v681
        %v1525 = vmul.f32 %v524, %v681
        %v1526 = vmul.f32 %v528, %v681
        %v1527 = vmul.f32 %v532, %v681
        %v1528 = vmul.f32 %v536, %v681
        %v1529 = vmul.f32 %v540, %v681
        %v1530 = vmul.f32 %v544, %v681
        %v1531 = vmul.f32 %v548, %v681
        %v1532 = vmul.f32 %v552, %v681
        %v1533 = vmul.f32 %v256, %v686
        %v1534 = vmul.f32 %v260, %v686
        %v1535 = vmul.f32 %v264, %v686
        %v1536 = vmul.f32 %v268, %v686
        %v1537 = vmul.f32 %v272, %v686
        %v1538 = vmul.f32 %v276, %v686
        %v1539 = vmul.f32 %v280, %v686
        %v1540 = vmul.f32 %v284, %v686
        %v1541 = vmul.f32 %v288, %v686
        %v1542 = vmul.f32 %v292, %v686
        %v1543 = vmul.f32 %v296, %v686
        %v1544 = vmul.f32 %v300, %v686
        %v1545 = vmul.f32 %v304, %v686
        %v1546 = vmul.f32 %v308, %v686
        %v1547 = vmul.f32 %v312, %v686
        %v1548 = vmul.f32 %v316, %v686
        %v1549 = vmul.f32 %v320, %v686
        %v1550 = vmul.f32 %v324, %v686
        %v1551 = vmul.f32 %v328, %v686
        %v1552 = vmul.f32 %v332, %v686
        %v1553 = vmul.f32 %v336, %v686
        %v1554 = vmul.f32 %v340, %v686
        %v1555 = vmul.f32 %v344, %v686
        %v1556 = vmul.f32 %v348, %v686
        %v1557 = vmul.f32 %v352, %v686
        %v1558 = vmul.f32 %v356, %v686
        %v1559 = vmul.f32 %v360, %v686
        %v1560 = vmul.f32 %v364, %v686
        %v1561 = vmul.f32 %v368, %v686
        %v1562 = vmul.f32 %v372, %v686
        %v1563 = vmul.f32 %v376, %v686
        %v1564 = vmul.f32 %v380, %v686
        %v1565 = vmul.f32 %v384, %v686
        %v1566 = vmul.f32 %v388, %v686
        %v1567 = vmul.f32 %v392, %v686
        %v1568 = vmul.f32 %v396, %v686
        %v1569 = vmul.f32 %v400, %v686
        %v1570 = vmul.f32 %v404, %v686
        %v1571 = vmul.f32 %v408, %v686
        %v1572 = vmul.f32 %v412, %v686
        %v1573 = vmul.f32 %v416, %v686
        %v1574 = vmul.f32 %v420, %v686
        %v1575 = vmul.f32 %v424, %v686
        %v1576 = vmul.f32 %v428, %v686
        %v1577 = vmul.f32 %v432, %v686
        %v1578 = vmul.f32 %v436, %v686
        %v1579 = vmul.f32 %v440, %v686
        %v1580 = vmul.f32 %v444, %v686
        %v1581 = vmul.f32 %v448, %v686
        %v1582 = vmul.f32 %v452, %v686
        %v1583 = vmul.f32 %v456, %v686
        %v1584 = vmul.f32 %v460, %v686
        %v1585 = vmul.f32 %v464, %v686
        %v1586 = vmul.f32 %v468, %v686
        %v1587 = vmul.f32 %v472, %v686
        %v1588 = vmul.f32 %v476, %v686
        %v1589 = vmul.f32 %v480, %v686
        %v1590 = vmul.f32 %v484, %v686
        %v1591 = vmul.f32 %v488, %v686
        %v1592 = vmul.f32 %v492, %v686
        %v1593 = vmul.f32 %v496, %v686
        %v1594 = vmul.f32 %v500, %v686
        %v1595 = vmul.f32 %v504, %v686
        %v1596 = vmul.f32 %v508, %v686
        %v1597 = vmul.f32 %v512, %v686
        %v1598 = vmul.f32 %v516, %v686
        %v1599 = vmul.f32 %v520, %v686
        %v1600 = vmul.f32 %v524, %v686
        %v1601 = vmul.f32 %v528, %v686
        %v1602 = vmul.f32 %v532, %v686
        %v1603 = vmul.f32 %v536, %v686
        %v1604 = vmul.f32 %v540, %v686
        %v1605 = vmul.f32 %v544, %v686
        %v1606 = vmul.f32 %v548, %v686
        %v1607 = vmul.f32 %v552, %v686
        %v1608 = vmul.f32 %v256, %v691
        %v1609 = vmul.f32 %v260, %v691
        %v1610 = vmul.f32 %v264, %v691
        %v1611 = vmul.f32 %v268, %v691
        %v1612 = vmul.f32 %v272, %v691
        %v1613 = vmul.f32 %v276, %v691
        %v1614 = vmul.f32 %v280, %v691
        %v1615 = vmul.f32 %v284, %v691
        %v1616 = vmul.f32 %v288, %v691
        %v1617 = vmul.f32 %v292, %v691
        %v1618 = vmul.f32 %v296, %v691
        %v1619 = vmul.f32 %v300, %v691
        %v1620 = vmul.f32 %v304, %v691
        %v1621 = vmul.f32 %v308, %v691
        %v1622 = vmul.f32 %v312, %v691
        %v1623 = vmul.f32 %v316, %v691
        %v1624 = vmul.f32 %v320, %v691
        %v1625 = vmul.f32 %v324, %v691
        %v1626 = vmul.f32 %v328, %v691
        %v1627 = vmul.f32 %v332, %v691
        %v1628 = vmul.f32 %v336, %v691
        %v1629 = vmul.f32 %v340, %v691
        %v1630 = vmul.f32 %v344, %v691
        %v1631 = vmul.f32 %v348, %v691
        %v1632 = vmul.f32 %v352, %v691
        %v1633 = vmul.f32 %v356, %v691
        %v1634 = vmul.f32 %v360, %v691
        %v1635 = vmul.f32 %v364, %v691
        %v1636 = vmul.f32 %v368, %v691
        %v1637 = vmul.f32 %v372, %v691
        %v1638 = vmul.f32 %v376, %v691
        %v1639 = vmul.f32 %v380, %v691
        %v1640 = vmul.f32 %v384, %v691
        %v1641 = vmul.f32 %v388, %v691
        %v1642 = vmul.f32 %v392, %v691
        %v1643 = vmul.f32 %v396, %v691
        %v1644 = vmul.f32 %v400, %v691
        %v1645 = vmul.f32 %v404, %v691
        %v1646 = vmul.f32 %v408, %v691
        %v1647 = vmul.f32 %v412, %v691
        %v1648 = vmul.f32 %v416, %v691
        %v1649 = vmul.f32 %v420, %v691
        %v1650 = vmul.f32 %v424, %v691
        %v1651 = vmul.f32 %v428, %v691
        %v1652 = vmul.f32 %v432, %v691
        %v1653 = vmul.f32 %v436, %v691
        %v1654 = vmul.f32 %v440, %v691
        %v1655 = vmul.f32 %v444, %v691
        %v1656 = vmul.f32 %v448, %v691
        %v1657 = vmul.f32 %v452, %v691
        %v1658 = vmul.f32 %v456, %v691
        %v1659 = vmul.f32 %v460, %v691
        %v1660 = vmul.f32 %v464, %v691
        %v1661 = vmul.f32 %v468, %v691
        %v1662 = vmul.f32 %v472, %v691
        %v1663 = vmul.f32 %v476, %v691
        %v1664 = vmul.f32 %v480, %v691
        %v1665 = vmul.f32 %v484, %v691
        %v1666 = vmul.f32 %v488, %v691
        %v1667 = vmul.f32 %v492, %v691
        %v1668 = vmul.f32 %v496, %v691
        %v1669 = vmul.f32 %v500, %v691
        %v1670 = vmul.f32 %v504, %v691
        %v1671 = vmul.f32 %v508, %v691
        %v1672 = vmul.f32 %v512, %v691
        %v1673 = vmul.f32 %v516, %v691
        %v1674 = vmul.f32 %v520, %v691
        %v1675 = vmul.f32 %v524, %v691
        %v1676 = vmul.f32 %v528, %v691
        %v1677 = vmul.f32 %v532, %v691
        %v1678 = vmul.f32 %v536, %v691
        %v1679 = vmul.f32 %v540, %v691
        %v1680 = vmul.f32 %v544, %v691
        %v1681 = vmul.f32 %v548, %v691
        %v1682 = vmul.f32 %v552, %v691
        %v1683 = vmul.f32 %v256, %v696
        %v1684 = vmul.f32 %v260, %v696
        %v1685 = vmul.f32 %v264, %v696
        %v1686 = vmul.f32 %v268, %v696
        %v1687 = vmul.f32 %v272, %v696
        %v1688 = vmul.f32 %v276, %v696
        %v1689 = vmul.f32 %v280, %v696
        %v1690 = vmul.f32 %v284, %v696
        %v1691 = vmul.f32 %v288, %v696
        %v1692 = vmul.f32 %v292, %v696
        %v1693 = vmul.f32 %v296, %v696
        %v1694 = vmul.f32 %v300, %v696
        %v1695 = vmul.f32 %v304, %v696
        %v1696 = vmul.f32 %v308, %v696
        %v1697 = vmul.f32 %v312, %v696
        %v1698 = vmul.f32 %v316, %v696
        %v1699 = vmul.f32 %v320, %v696
        %v1700 = vmul.f32 %v324, %v696
        %v1701 = vmul.f32 %v328, %v696
        %v1702 = vmul.f32 %v332, %v696
        %v1703 = vmul.f32 %v336, %v696
        %v1704 = vmul.f32 %v340, %v696
        %v1705 = vmul.f32 %v344, %v696
        %v1706 = vmul.f32 %v348, %v696
        %v1707 = vmul.f32 %v352, %v696
        %v1708 = vmul.f32 %v356, %v696
        %v1709 = vmul.f32 %v360, %v696
        %v1710 = vmul.f32 %v364, %v696
        %v1711 = vmul.f32 %v368, %v696
        %v1712 = vmul.f32 %v372, %v696
        %v1713 = vmul.f32 %v376, %v696
        %v1714 = vmul.f32 %v380, %v696
        %v1715 = vmul.f32 %v384, %v696
        %v1716 = vmul.f32 %v388, %v696
        %v1717 = vmul.f32 %v392, %v696
        %v1718 = vmul.f32 %v396, %v696
        %v1719 = vmul.f32 %v400, %v696
        %v1720 = vmul.f32 %v404, %v696
        %v1721 = vmul.f32 %v408, %v696
        %v1722 = vmul.f32 %v412, %v696
        %v1723 = vmul.f32 %v416, %v696
        %v1724 = vmul.f32 %v420, %v696
        %v1725 = vmul.f32 %v424, %v696
        %v1726 = vmul.f32 %v428, %v696
        %v1727 = vmul.f32 %v432, %v696
        %v1728 = vmul.f32 %v436, %v696
        %v1729 = vmul.f32 %v440, %v696
        %v1730 = vmul.f32 %v444, %v696
        %v1731 = vmul.f32 %v448, %v696
        %v1732 = vmul.f32 %v452, %v696
        %v1733 = vmul.f32 %v456, %v696
        %v1734 = vmul.f32 %v460, %v696
        %v1735 = vmul.f32 %v464, %v696
        %v1736 = vmul.f32 %v468, %v696
        %v1737 = vmul.f32 %v472, %v696
        %v1738 = vmul.f32 %v476, %v696
        %v1739 = vmul.f32 %v480, %v696
        %v1740 = vmul.f32 %v484, %v696
        %v1741 = vmul.f32 %v488, %v696
        %v1742 = vmul.f32 %v492, %v696
        %v1743 = vmul.f32 %v496, %v696
        %v1744 = vmul.f32 %v500, %v696
        %v1745 = vmul.f32 %v504, %v696
        %v1746 = vmul.f32 %v508, %v696
        %v1747 = vmul.f32 %v512, %v696
        %v1748 = vmul.f32 %v516, %v696
        %v1749 = vmul.f32 %v520, %v696
        %v1750 = vmul.f32 %v524, %v696
        %v1751 = vmul.f32 %v528, %v696
        %v1752 = vmul.f32 %v532, %v696
        %v1753 = vmul.f32 %v536, %v696
        %v1754 = vmul.f32 %v540, %v696
        %v1755 = vmul.f32 %v544, %v696
        %v1756 = vmul.f32 %v548, %v696
        %v1757 = vmul.f32 %v552, %v696
        %v1758 = vmul.f32 %v256, %v701
        %v1759 = vmul.f32 %v260, %v701
        %v1760 = vmul.f32 %v264, %v701
        %v1761 = vmul.f32 %v268, %v701
        %v1762 = vmul.f32 %v272, %v701
        %v1763 = vmul.f32 %v276, %v701
        %v1764 = vmul.f32 %v280, %v701
        %v1765 = vmul.f32 %v284, %v701
        %v1766 = vmul.f32 %v288, %v701
        %v1767 = vmul.f32 %v292, %v701
        %v1768 = vmul.f32 %v296, %v701
        %v1769 = vmul.f32 %v300, %v701
        %v1770 = vmul.f32 %v304, %v701
        %v1771 = vmul.f32 %v308, %v701
        %v1772 = vmul.f32 %v312, %v701
        %v1773 = vmul.f32 %v316, %v701
        %v1774 = vmul.f32 %v320, %v701
        %v1775 = vmul.f32 %v324, %v701
        %v1776 = vmul.f32 %v328, %v701
        %v1777 = vmul.f32 %v332, %v701
        %v1778 = vmul.f32 %v336, %v701
        %v1779 = vmul.f32 %v340, %v701
        %v1780 = vmul.f32 %v344, %v701
        %v1781 = vmul.f32 %v348, %v701
        %v1782 = vmul.f32 %v352, %v701
        %v1783 = vmul.f32 %v356, %v701
        %v1784 = vmul.f32 %v360, %v701
        %v1785 = vmul.f32 %v364, %v701
        %v1786 = vmul.f32 %v368, %v701
        %v1787 = vmul.f32 %v372, %v701
        %v1788 = vmul.f32 %v376, %v701
        %v1789 = vmul.f32 %v380, %v701
        %v1790 = vmul.f32 %v384, %v701
        %v1791 = vmul.f32 %v388, %v701
        %v1792 = vmul.f32 %v392, %v701
        %v1793 = vmul.f32 %v396, %v701
        %v1794 = vmul.f32 %v400, %v701
        %v1795 = vmul.f32 %v404, %v701
        %v1796 = vmul.f32 %v408, %v701
        %v1797 = vmul.f32 %v412, %v701
        %v1798 = vmul.f32 %v416, %v701
        %v1799 = vmul.f32 %v420, %v701
        %v1800 = vmul.f32 %v424, %v701
        %v1801 = vmul.f32 %v428, %v701
        %v1802 = vmul.f32 %v432, %v701
        %v1803 = vmul.f32 %v436, %v701
        %v1804 = vmul.f32 %v440, %v701
        %v1805 = vmul.f32 %v444, %v701
        %v1806 = vmul.f32 %v448, %v701
        %v1807 = vmul.f32 %v452, %v701
        %v1808 = vmul.f32 %v456, %v701
        %v1809 = vmul.f32 %v460, %v701
        %v1810 = vmul.f32 %v464, %v701
        %v1811 = vmul.f32 %v468, %v701
        %v1812 = vmul.f32 %v472, %v701
        %v1813 = vmul.f32 %v476, %v701
        %v1814 = vmul.f32 %v480, %v701
        %v1815 = vmul.f32 %v484, %v701
        %v1816 = vmul.f32 %v488, %v701
        %v1817 = vmul.f32 %v492, %v701
        %v1818 = vmul.f32 %v496, %v701
        %v1819 = vmul.f32 %v500, %v701
        %v1820 = vmul.f32 %v504, %v701
        %v1821 = vmul.f32 %v508, %v701
        %v1822 = vmul.f32 %v512, %v701
        %v1823 = vmul.f32 %v516, %v701
        %v1824 = vmul.f32 %v520, %v701
        %v1825 = vmul.f32 %v524, %v701
        %v1826 = vmul.f32 %v528, %v701
        %v1827 = vmul.f32 %v532, %v701
        %v1828 = vmul.f32 %v536, %v701
        %v1829 = vmul.f32 %v540, %v701
        %v1830 = vmul.f32 %v544, %v701
        %v1831 = vmul.f32 %v548, %v701
        %v1832 = vmul.f32 %v552, %v701
        %v1833 = vmul.f32 %v256, %v706
        %v1834 = vmul.f32 %v260, %v706
        %v1835 = vmul.f32 %v264, %v706
        %v1836 = vmul.f32 %v268, %v706
        %v1837 = vmul.f32 %v272, %v706
        %v1838 = vmul.f32 %v276, %v706
        %v1839 = vmul.f32 %v280, %v706
        %v1840 = vmul.f32 %v284, %v706
        %v1841 = vmul.f32 %v288, %v706
        %v1842 = vmul.f32 %v292, %v706
        %v1843 = vmul.f32 %v296, %v706
        %v1844 = vmul.f32 %v300, %v706
        %v1845 = vmul.f32 %v304, %v706
        %v1846 = vmul.f32 %v308, %v706
        %v1847 = vmul.f32 %v312, %v706
        %v1848 = vmul.f32 %v316, %v706
        %v1849 = vmul.f32 %v320, %v706
        %v1850 = vmul.f32 %v324, %v706
        %v1851 = vmul.f32 %v328, %v706
        %v1852 = vmul.f32 %v332, %v706
        %v1853 = vmul.f32 %v336, %v706
        %v1854 = vmul.f32 %v340, %v706
        %v1855 = vmul.f32 %v344, %v706
        %v1856 = vmul.f32 %v348, %v706
        %v1857 = vmul.f32 %v352, %v706
        %v1858 = vmul.f32 %v356, %v706
        %v1859 = vmul.f32 %v360, %v706
        %v1860 = vmul.f32 %v364, %v706
        %v1861 = vmul.f32 %v368, %v706
        %v1862 = vmul.f32 %v372, %v706
        %v1863 = vmul.f32 %v376, %v706
        %v1864 = vmul.f32 %v380, %v706
        %v1865 = vmul.f32 %v384, %v706
        %v1866 = vmul.f32 %v388, %v706
        %v1867 = vmul.f32 %v392, %v706
        %v1868 = vmul.f32 %v396, %v706
        %v1869 = vmul.f32 %v400, %v706
        %v1870 = vmul.f32 %v404, %v706
        %v1871 = vmul.f32 %v408, %v706
        %v1872 = vmul.f32 %v412, %v706
        %v1873 = vmul.f32 %v416, %v706
        %v1874 = vmul.f32 %v420, %v706
        %v1875 = vmul.f32 %v424, %v706
        %v1876 = vmul.f32 %v428, %v706
        %v1877 = vmul.f32 %v432, %v706
        %v1878 = vmul.f32 %v436, %v706
        %v1879 = vmul.f32 %v440, %v706
        %v1880 = vmul.f32 %v444, %v706
        %v1881 = vmul.f32 %v448, %v706
        %v1882 = vmul.f32 %v452, %v706
        %v1883 = vmul.f32 %v456, %v706
        %v1884 = vmul.f32 %v460, %v706
        %v1885 = vmul.f32 %v464, %v706
        %v1886 = vmul.f32 %v468, %v706
        %v1887 = vmul.f32 %v472, %v706
        %v1888 = vmul.f32 %v476, %v706
        %v1889 = vmul.f32 %v480, %v706
        %v1890 = vmul.f32 %v484, %v706
        %v1891 = vmul.f32 %v488, %v706
        %v1892 = vmul.f32 %v492, %v706
        %v1893 = vmul.f32 %v496, %v706
        %v1894 = vmul.f32 %v500, %v706
        %v1895 = vmul.f32 %v504, %v706
        %v1896 = vmul.f32 %v508, %v706
        %v1897 = vmul.f32 %v512, %v706
        %v1898 = vmul.f32 %v516, %v706
        %v1899 = vmul.f32 %v520, %v706
        %v1900 = vmul.f32 %v524, %v706
        %v1901 = vmul.f32 %v528, %v706
        %v1902 = vmul.f32 %v532, %v706
        %v1903 = vmul.f32 %v536, %v706
        %v1904 = vmul.f32 %v540, %v706
        %v1905 = vmul.f32 %v544, %v706
        %v1906 = vmul.f32 %v548, %v706
        %v1907 = vmul.f32 %v552, %v706
        %v1908 = vld [vmem:[%s215] sm:$0xff]
        %v1909 = vld [vmem:[%s215 + $0x8] sm:$0xff]
        %v1910 = vld [vmem:[%s215 + $0x10] sm:$0xff]
        %v1911 = vld [vmem:[%s215 + $0x18] sm:$0xff]
        %v1912 = vld [vmem:[%s215 + $0x20] sm:$0xff]
        %v1913 = vld [vmem:[%s215 + $0x28] sm:$0xff]
        %v1914 = vld [vmem:[%s215 + $0x30] sm:$0xff]
        %v1915 = vld [vmem:[%s215 + $0x38] sm:$0xff]
        %v1916 = vld [vmem:[%s215 + $0x40] sm:$0xff]
        %v1917 = vld [vmem:[%s215 + $0x48] sm:$0xff]
        %v1918 = vld [vmem:[%s215 + $0x50] sm:$0xff]
        %v1919 = vld [vmem:[%s215 + $0x58] sm:$0xff]
        %v1920 = vld [vmem:[%s215 + $0x60] sm:$0xff]
        %v1921 = vld [vmem:[%s215 + $0x68] sm:$0xff]
        %v1922 = vld [vmem:[%s215 + $0x70] sm:$0xff]
        %v1923 = vld [vmem:[%s215 + $0x78] sm:$0xff]
        %1925 = vset.pattern.permute.xlu0 0
        %1926 = vperm.xlu0 %1925, %v1908
        %v1927 = vpop.permute.xlu0 %1926
        %1930 = vset.pattern.permute.xlu0 0
        %1931 = vperm.xlu0 %1930, %v1909
        %v1932 = vpop.permute.xlu0 %1931
        %1935 = vset.pattern.permute.xlu0 0
        %1936 = vperm.xlu0 %1935, %v1910
        %v1937 = vpop.permute.xlu0 %1936
        %1940 = vset.pattern.permute.xlu0 0
        %1941 = vperm.xlu0 %1940, %v1911
        %v1942 = vpop.permute.xlu0 %1941
        %1945 = vset.pattern.permute.xlu0 0
        %1946 = vperm.xlu0 %1945, %v1912
        %v1947 = vpop.permute.xlu0 %1946
        %1950 = vset.pattern.permute.xlu0 0
        %1951 = vperm.xlu0 %1950, %v1913
        %v1952 = vpop.permute.xlu0 %1951
        %1955 = vset.pattern.permute.xlu0 0
        %1956 = vperm.xlu0 %1955, %v1914
        %v1957 = vpop.permute.xlu0 %1956
        %1960 = vset.pattern.permute.xlu0 0
        %1961 = vperm.xlu0 %1960, %v1915
        %v1962 = vpop.permute.xlu0 %1961
        %1965 = vset.pattern.permute.xlu0 0
        %1966 = vperm.xlu0 %1965, %v1916
        %v1967 = vpop.permute.xlu0 %1966
        %1970 = vset.pattern.permute.xlu0 0
        %1971 = vperm.xlu0 %1970, %v1917
        %v1972 = vpop.permute.xlu0 %1971
        %1975 = vset.pattern.permute.xlu0 0
        %1976 = vperm.xlu0 %1975, %v1918
        %v1977 = vpop.permute.xlu0 %1976
        %1980 = vset.pattern.permute.xlu0 0
        %1981 = vperm.xlu0 %1980, %v1919
        %v1982 = vpop.permute.xlu0 %1981
        %1985 = vset.pattern.permute.xlu0 0
        %1986 = vperm.xlu0 %1985, %v1920
        %v1987 = vpop.permute.xlu0 %1986
        %1990 = vset.pattern.permute.xlu0 0
        %1991 = vperm.xlu0 %1990, %v1921
        %v1992 = vpop.permute.xlu0 %1991
        %1995 = vset.pattern.permute.xlu0 0
        %1996 = vperm.xlu0 %1995, %v1922
        %v1997 = vpop.permute.xlu0 %1996
        %2000 = vset.pattern.permute.xlu0 0
        %2001 = vperm.xlu0 %2000, %v1923
        %v2002 = vpop.permute.xlu0 %2001
        %v2004 = vadd.f32 %v708, %v1927
        %v2005 = vadd.f32 %v709, %v1927
        %v2006 = vadd.f32 %v710, %v1927
        %v2007 = vadd.f32 %v711, %v1927
        %v2008 = vadd.f32 %v712, %v1927
        %v2009 = vadd.f32 %v713, %v1927
        %v2010 = vadd.f32 %v714, %v1927
        %v2011 = vadd.f32 %v715, %v1927
        %v2012 = vadd.f32 %v716, %v1927
        %v2013 = vadd.f32 %v717, %v1927
        %v2014 = vadd.f32 %v718, %v1927
        %v2015 = vadd.f32 %v719, %v1927
        %v2016 = vadd.f32 %v720, %v1927
        %v2017 = vadd.f32 %v721, %v1927
        %v2018 = vadd.f32 %v722, %v1927
        %v2019 = vadd.f32 %v723, %v1927
        %v2020 = vadd.f32 %v724, %v1927
        %v2021 = vadd.f32 %v725, %v1927
        %v2022 = vadd.f32 %v726, %v1927
        %v2023 = vadd.f32 %v727, %v1927
        %v2024 = vadd.f32 %v728, %v1927
        %v2025 = vadd.f32 %v729, %v1927
        %v2026 = vadd.f32 %v730, %v1927
        %v2027 = vadd.f32 %v731, %v1927
        %v2028 = vadd.f32 %v732, %v1927
        %v2029 = vadd.f32 %v733, %v1927
        %v2030 = vadd.f32 %v734, %v1927
        %v2031 = vadd.f32 %v735, %v1927
        %v2032 = vadd.f32 %v736, %v1927
        %v2033 = vadd.f32 %v737, %v1927
        %v2034 = vadd.f32 %v738, %v1927
        %v2035 = vadd.f32 %v739, %v1927
        %v2036 = vadd.f32 %v740, %v1927
        %v2037 = vadd.f32 %v741, %v1927
        %v2038 = vadd.f32 %v742, %v1927
        %v2039 = vadd.f32 %v743, %v1927
        %v2040 = vadd.f32 %v744, %v1927
        %v2041 = vadd.f32 %v745, %v1927
        %v2042 = vadd.f32 %v746, %v1927
        %v2043 = vadd.f32 %v747, %v1927
        %v2044 = vadd.f32 %v748, %v1927
        %v2045 = vadd.f32 %v749, %v1927
        %v2046 = vadd.f32 %v750, %v1927
        %v2047 = vadd.f32 %v751, %v1927
        %v2048 = vadd.f32 %v752, %v1927
        %v2049 = vadd.f32 %v753, %v1927
        %v2050 = vadd.f32 %v754, %v1927
        %v2051 = vadd.f32 %v755, %v1927
        %v2052 = vadd.f32 %v756, %v1927
        %v2053 = vadd.f32 %v757, %v1927
        %v2054 = vadd.f32 %v758, %v1927
        %v2055 = vadd.f32 %v759, %v1927
        %v2056 = vadd.f32 %v760, %v1927
        %v2057 = vadd.f32 %v761, %v1927
        %v2058 = vadd.f32 %v762, %v1927
        %v2059 = vadd.f32 %v763, %v1927
        %v2060 = vadd.f32 %v764, %v1927
        %v2061 = vadd.f32 %v765, %v1927
        %v2062 = vadd.f32 %v766, %v1927
        %v2063 = vadd.f32 %v767, %v1927
        %v2064 = vadd.f32 %v768, %v1927
        %v2065 = vadd.f32 %v769, %v1927
        %v2066 = vadd.f32 %v770, %v1927
        %v2067 = vadd.f32 %v771, %v1927
        %v2068 = vadd.f32 %v772, %v1927
        %v2069 = vadd.f32 %v773, %v1927
        %v2070 = vadd.f32 %v774, %v1927
        %v2071 = vadd.f32 %v775, %v1927
        %v2072 = vadd.f32 %v776, %v1927
        %v2073 = vadd.f32 %v777, %v1927
        %v2074 = vadd.f32 %v778, %v1927
        %v2075 = vadd.f32 %v779, %v1927
        %v2076 = vadd.f32 %v780, %v1927
        %v2077 = vadd.f32 %v781, %v1927
        %v2078 = vadd.f32 %v782, %v1927
        %v2079 = vadd.f32 %v783, %v1932
        %v2080 = vadd.f32 %v784, %v1932
        %v2081 = vadd.f32 %v785, %v1932
        %v2082 = vadd.f32 %v786, %v1932
        %v2083 = vadd.f32 %v787, %v1932
        %v2084 = vadd.f32 %v788, %v1932
        %v2085 = vadd.f32 %v789, %v1932
        %v2086 = vadd.f32 %v790, %v1932
        %v2087 = vadd.f32 %v791, %v1932
        %v2088 = vadd.f32 %v792, %v1932
        %v2089 = vadd.f32 %v793, %v1932
        %v2090 = vadd.f32 %v794, %v1932
        %v2091 = vadd.f32 %v795, %v1932
        %v2092 = vadd.f32 %v796, %v1932
        %v2093 = vadd.f32 %v797, %v1932
        %v2094 = vadd.f32 %v798, %v1932
        %v2095 = vadd.f32 %v799, %v1932
        %v2096 = vadd.f32 %v800, %v1932
        %v2097 = vadd.f32 %v801, %v1932
        %v2098 = vadd.f32 %v802, %v1932
        %v2099 = vadd.f32 %v803, %v1932
        %v2100 = vadd.f32 %v804, %v1932
        %v2101 = vadd.f32 %v805, %v1932
        %v2102 = vadd.f32 %v806, %v1932
        %v2103 = vadd.f32 %v807, %v1932
        %v2104 = vadd.f32 %v808, %v1932
        %v2105 = vadd.f32 %v809, %v1932
        %v2106 = vadd.f32 %v810, %v1932
        %v2107 = vadd.f32 %v811, %v1932
        %v2108 = vadd.f32 %v812, %v1932
        %v2109 = vadd.f32 %v813, %v1932
        %v2110 = vadd.f32 %v814, %v1932
        %v2111 = vadd.f32 %v815, %v1932
        %v2112 = vadd.f32 %v816, %v1932
        %v2113 = vadd.f32 %v817, %v1932
        %v2114 = vadd.f32 %v818, %v1932
        %v2115 = vadd.f32 %v819, %v1932
        %v2116 = vadd.f32 %v820, %v1932
        %v2117 = vadd.f32 %v821, %v1932
        %v2118 = vadd.f32 %v822, %v1932
        %v2119 = vadd.f32 %v823, %v1932
        %v2120 = vadd.f32 %v824, %v1932
        %v2121 = vadd.f32 %v825, %v1932
        %v2122 = vadd.f32 %v826, %v1932
        %v2123 = vadd.f32 %v827, %v1932
        %v2124 = vadd.f32 %v828, %v1932
        %v2125 = vadd.f32 %v829, %v1932
        %v2126 = vadd.f32 %v830, %v1932
        %v2127 = vadd.f32 %v831, %v1932
        %v2128 = vadd.f32 %v832, %v1932
        %v2129 = vadd.f32 %v833, %v1932
        %v2130 = vadd.f32 %v834, %v1932
        %v2131 = vadd.f32 %v835, %v1932
        %v2132 = vadd.f32 %v836, %v1932
        %v2133 = vadd.f32 %v837, %v1932
        %v2134 = vadd.f32 %v838, %v1932
        %v2135 = vadd.f32 %v839, %v1932
        %v2136 = vadd.f32 %v840, %v1932
        %v2137 = vadd.f32 %v841, %v1932
        %v2138 = vadd.f32 %v842, %v1932
        %v2139 = vadd.f32 %v843, %v1932
        %v2140 = vadd.f32 %v844, %v1932
        %v2141 = vadd.f32 %v845, %v1932
        %v2142 = vadd.f32 %v846, %v1932
        %v2143 = vadd.f32 %v847, %v1932
        %v2144 = vadd.f32 %v848, %v1932
        %v2145 = vadd.f32 %v849, %v1932
        %v2146 = vadd.f32 %v850, %v1932
        %v2147 = vadd.f32 %v851, %v1932
        %v2148 = vadd.f32 %v852, %v1932
        %v2149 = vadd.f32 %v853, %v1932
        %v2150 = vadd.f32 %v854, %v1932
        %v2151 = vadd.f32 %v855, %v1932
        %v2152 = vadd.f32 %v856, %v1932
        %v2153 = vadd.f32 %v857, %v1932
        %v2154 = vadd.f32 %v858, %v1937
        %v2155 = vadd.f32 %v859, %v1937
        %v2156 = vadd.f32 %v860, %v1937
        %v2157 = vadd.f32 %v861, %v1937
        %v2158 = vadd.f32 %v862, %v1937
        %v2159 = vadd.f32 %v863, %v1937
        %v2160 = vadd.f32 %v864, %v1937
        %v2161 = vadd.f32 %v865, %v1937
        %v2162 = vadd.f32 %v866, %v1937
        %v2163 = vadd.f32 %v867, %v1937
        %v2164 = vadd.f32 %v868, %v1937
        %v2165 = vadd.f32 %v869, %v1937
        %v2166 = vadd.f32 %v870, %v1937
        %v2167 = vadd.f32 %v871, %v1937
        %v2168 = vadd.f32 %v872, %v1937
        %v2169 = vadd.f32 %v873, %v1937
        %v2170 = vadd.f32 %v874, %v1937
        %v2171 = vadd.f32 %v875, %v1937
        %v2172 = vadd.f32 %v876, %v1937
        %v2173 = vadd.f32 %v877, %v1937
        %v2174 = vadd.f32 %v878, %v1937
        %v2175 = vadd.f32 %v879, %v1937
        %v2176 = vadd.f32 %v880, %v1937
        %v2177 = vadd.f32 %v881, %v1937
        %v2178 = vadd.f32 %v882, %v1937
        %v2179 = vadd.f32 %v883, %v1937
        %v2180 = vadd.f32 %v884, %v1937
        %v2181 = vadd.f32 %v885, %v1937
        %v2182 = vadd.f32 %v886, %v1937
        %v2183 = vadd.f32 %v887, %v1937
        %v2184 = vadd.f32 %v888, %v1937
        %v2185 = vadd.f32 %v889, %v1937
        %v2186 = vadd.f32 %v890, %v1937
        %v2187 = vadd.f32 %v891, %v1937
        %v2188 = vadd.f32 %v892, %v1937
        %v2189 = vadd.f32 %v893, %v1937
        %v2190 = vadd.f32 %v894, %v1937
        %v2191 = vadd.f32 %v895, %v1937
        %v2192 = vadd.f32 %v896, %v1937
        %v2193 = vadd.f32 %v897, %v1937
        %v2194 = vadd.f32 %v898, %v1937
        %v2195 = vadd.f32 %v899, %v1937
        %v2196 = vadd.f32 %v900, %v1937
        %v2197 = vadd.f32 %v901, %v1937
        %v2198 = vadd.f32 %v902, %v1937
        %v2199 = vadd.f32 %v903, %v1937
        %v2200 = vadd.f32 %v904, %v1937
        %v2201 = vadd.f32 %v905, %v1937
        %v2202 = vadd.f32 %v906, %v1937
        %v2203 = vadd.f32 %v907, %v1937
        %v2204 = vadd.f32 %v908, %v1937
        %v2205 = vadd.f32 %v909, %v1937
        %v2206 = vadd.f32 %v910, %v1937
        %v2207 = vadd.f32 %v911, %v1937
        %v2208 = vadd.f32 %v912, %v1937
        %v2209 = vadd.f32 %v913, %v1937
        %v2210 = vadd.f32 %v914, %v1937
        %v2211 = vadd.f32 %v915, %v1937
        %v2212 = vadd.f32 %v916, %v1937
        %v2213 = vadd.f32 %v917, %v1937
        %v2214 = vadd.f32 %v918, %v1937
        %v2215 = vadd.f32 %v919, %v1937
        %v2216 = vadd.f32 %v920, %v1937
        %v2217 = vadd.f32 %v921, %v1937
        %v2218 = vadd.f32 %v922, %v1937
        %v2219 = vadd.f32 %v923, %v1937
        %v2220 = vadd.f32 %v924, %v1937
        %v2221 = vadd.f32 %v925, %v1937
        %v2222 = vadd.f32 %v926, %v1937
        %v2223 = vadd.f32 %v927, %v1937
        %v2224 = vadd.f32 %v928, %v1937
        %v2225 = vadd.f32 %v929, %v1937
        %v2226 = vadd.f32 %v930, %v1937
        %v2227 = vadd.f32 %v931, %v1937
        %v2228 = vadd.f32 %v932, %v1937
        %v2229 = vadd.f32 %v933, %v1942
        %v2230 = vadd.f32 %v934, %v1942
        %v2231 = vadd.f32 %v935, %v1942
        %v2232 = vadd.f32 %v936, %v1942
        %v2233 = vadd.f32 %v937, %v1942
        %v2234 = vadd.f32 %v938, %v1942
        %v2235 = vadd.f32 %v939, %v1942
        %v2236 = vadd.f32 %v940, %v1942
        %v2237 = vadd.f32 %v941, %v1942
        %v2238 = vadd.f32 %v942, %v1942
        %v2239 = vadd.f32 %v943, %v1942
        %v2240 = vadd.f32 %v944, %v1942
        %v2241 = vadd.f32 %v945, %v1942
        %v2242 = vadd.f32 %v946, %v1942
        %v2243 = vadd.f32 %v947, %v1942
        %v2244 = vadd.f32 %v948, %v1942
        %v2245 = vadd.f32 %v949, %v1942
        %v2246 = vadd.f32 %v950, %v1942
        %v2247 = vadd.f32 %v951, %v1942
        %v2248 = vadd.f32 %v952, %v1942
        %v2249 = vadd.f32 %v953, %v1942
        %v2250 = vadd.f32 %v954, %v1942
        %v2251 = vadd.f32 %v955, %v1942
        %v2252 = vadd.f32 %v956, %v1942
        %v2253 = vadd.f32 %v957, %v1942
        %v2254 = vadd.f32 %v958, %v1942
        %v2255 = vadd.f32 %v959, %v1942
        %v2256 = vadd.f32 %v960, %v1942
        %v2257 = vadd.f32 %v961, %v1942
        %v2258 = vadd.f32 %v962, %v1942
        %v2259 = vadd.f32 %v963, %v1942
        %v2260 = vadd.f32 %v964, %v1942
        %v2261 = vadd.f32 %v965, %v1942
        %v2262 = vadd.f32 %v966, %v1942
        %v2263 = vadd.f32 %v967, %v1942
        %v2264 = vadd.f32 %v968, %v1942
        %v2265 = vadd.f32 %v969, %v1942
        %v2266 = vadd.f32 %v970, %v1942
        %v2267 = vadd.f32 %v971, %v1942
        %v2268 = vadd.f32 %v972, %v1942
        %v2269 = vadd.f32 %v973, %v1942
        %v2270 = vadd.f32 %v974, %v1942
        %v2271 = vadd.f32 %v975, %v1942
        %v2272 = vadd.f32 %v976, %v1942
        %v2273 = vadd.f32 %v977, %v1942
        %v2274 = vadd.f32 %v978, %v1942
        %v2275 = vadd.f32 %v979, %v1942
        %v2276 = vadd.f32 %v980, %v1942
        %v2277 = vadd.f32 %v981, %v1942
        %v2278 = vadd.f32 %v982, %v1942
        %v2279 = vadd.f32 %v983, %v1942
        %v2280 = vadd.f32 %v984, %v1942
        %v2281 = vadd.f32 %v985, %v1942
        %v2282 = vadd.f32 %v986, %v1942
        %v2283 = vadd.f32 %v987, %v1942
        %v2284 = vadd.f32 %v988, %v1942
        %v2285 = vadd.f32 %v989, %v1942
        %v2286 = vadd.f32 %v990, %v1942
        %v2287 = vadd.f32 %v991, %v1942
        %v2288 = vadd.f32 %v992, %v1942
        %v2289 = vadd.f32 %v993, %v1942
        %v2290 = vadd.f32 %v994, %v1942
        %v2291 = vadd.f32 %v995, %v1942
        %v2292 = vadd.f32 %v996, %v1942
        %v2293 = vadd.f32 %v997, %v1942
        %v2294 = vadd.f32 %v998, %v1942
        %v2295 = vadd.f32 %v999, %v1942
        %v2296 = vadd.f32 %v1000, %v1942
        %v2297 = vadd.f32 %v1001, %v1942
        %v2298 = vadd.f32 %v1002, %v1942
        %v2299 = vadd.f32 %v1003, %v1942
        %v2300 = vadd.f32 %v1004, %v1942
        %v2301 = vadd.f32 %v1005, %v1942
        %v2302 = vadd.f32 %v1006, %v1942
        %v2303 = vadd.f32 %v1007, %v1942
        %v2304 = vadd.f32 %v1008, %v1947
        %v2305 = vadd.f32 %v1009, %v1947
        %v2306 = vadd.f32 %v1010, %v1947
        %v2307 = vadd.f32 %v1011, %v1947
        %v2308 = vadd.f32 %v1012, %v1947
        %v2309 = vadd.f32 %v1013, %v1947
        %v2310 = vadd.f32 %v1014, %v1947
        %v2311 = vadd.f32 %v1015, %v1947
        %v2312 = vadd.f32 %v1016, %v1947
        %v2313 = vadd.f32 %v1017, %v1947
        %v2314 = vadd.f32 %v1018, %v1947
        %v2315 = vadd.f32 %v1019, %v1947
        %v2316 = vadd.f32 %v1020, %v1947
        %v2317 = vadd.f32 %v1021, %v1947
        %v2318 = vadd.f32 %v1022, %v1947
        %v2319 = vadd.f32 %v1023, %v1947
        %v2320 = vadd.f32 %v1024, %v1947
        %v2321 = vadd.f32 %v1025, %v1947
        %v2322 = vadd.f32 %v1026, %v1947
        %v2323 = vadd.f32 %v1027, %v1947
        %v2324 = vadd.f32 %v1028, %v1947
        %v2325 = vadd.f32 %v1029, %v1947
        %v2326 = vadd.f32 %v1030, %v1947
        %v2327 = vadd.f32 %v1031, %v1947
        %v2328 = vadd.f32 %v1032, %v1947
        %v2329 = vadd.f32 %v1033, %v1947
        %v2330 = vadd.f32 %v1034, %v1947
        %v2331 = vadd.f32 %v1035, %v1947
        %v2332 = vadd.f32 %v1036, %v1947
        %v2333 = vadd.f32 %v1037, %v1947
        %v2334 = vadd.f32 %v1038, %v1947
        %v2335 = vadd.f32 %v1039, %v1947
        %v2336 = vadd.f32 %v1040, %v1947
        %v2337 = vadd.f32 %v1041, %v1947
        %v2338 = vadd.f32 %v1042, %v1947
        %v2339 = vadd.f32 %v1043, %v1947
        %v2340 = vadd.f32 %v1044, %v1947
        %v2341 = vadd.f32 %v1045, %v1947
        %v2342 = vadd.f32 %v1046, %v1947
        %v2343 = vadd.f32 %v1047, %v1947
        %v2344 = vadd.f32 %v1048, %v1947
        %v2345 = vadd.f32 %v1049, %v1947
        %v2346 = vadd.f32 %v1050, %v1947
        %v2347 = vadd.f32 %v1051, %v1947
        %v2348 = vadd.f32 %v1052, %v1947
        %v2349 = vadd.f32 %v1053, %v1947
        %v2350 = vadd.f32 %v1054, %v1947
        %v2351 = vadd.f32 %v1055, %v1947
        %v2352 = vadd.f32 %v1056, %v1947
        %v2353 = vadd.f32 %v1057, %v1947
        %v2354 = vadd.f32 %v1058, %v1947
        %v2355 = vadd.f32 %v1059, %v1947
        %v2356 = vadd.f32 %v1060, %v1947
        %v2357 = vadd.f32 %v1061, %v1947
        %v2358 = vadd.f32 %v1062, %v1947
        %v2359 = vadd.f32 %v1063, %v1947
        %v2360 = vadd.f32 %v1064, %v1947
        %v2361 = vadd.f32 %v1065, %v1947
        %v2362 = vadd.f32 %v1066, %v1947
        %v2363 = vadd.f32 %v1067, %v1947
        %v2364 = vadd.f32 %v1068, %v1947
        %v2365 = vadd.f32 %v1069, %v1947
        %v2366 = vadd.f32 %v1070, %v1947
        %v2367 = vadd.f32 %v1071, %v1947
        %v2368 = vadd.f32 %v1072, %v1947
        %v2369 = vadd.f32 %v1073, %v1947
        %v2370 = vadd.f32 %v1074, %v1947
        %v2371 = vadd.f32 %v1075, %v1947
        %v2372 = vadd.f32 %v1076, %v1947
        %v2373 = vadd.f32 %v1077, %v1947
        %v2374 = vadd.f32 %v1078, %v1947
        %v2375 = vadd.f32 %v1079, %v1947
        %v2376 = vadd.f32 %v1080, %v1947
        %v2377 = vadd.f32 %v1081, %v1947
        %v2378 = vadd.f32 %v1082, %v1947
        %v2379 = vadd.f32 %v1083, %v1952
        %v2380 = vadd.f32 %v1084, %v1952
        %v2381 = vadd.f32 %v1085, %v1952
        %v2382 = vadd.f32 %v1086, %v1952
        %v2383 = vadd.f32 %v1087, %v1952
        %v2384 = vadd.f32 %v1088, %v1952
        %v2385 = vadd.f32 %v1089, %v1952
        %v2386 = vadd.f32 %v1090, %v1952
        %v2387 = vadd.f32 %v1091, %v1952
        %v2388 = vadd.f32 %v1092, %v1952
        %v2389 = vadd.f32 %v1093, %v1952
        %v2390 = vadd.f32 %v1094, %v1952
        %v2391 = vadd.f32 %v1095, %v1952
        %v2392 = vadd.f32 %v1096, %v1952
        %v2393 = vadd.f32 %v1097, %v1952
        %v2394 = vadd.f32 %v1098, %v1952
        %v2395 = vadd.f32 %v1099, %v1952
        %v2396 = vadd.f32 %v1100, %v1952
        %v2397 = vadd.f32 %v1101, %v1952
        %v2398 = vadd.f32 %v1102, %v1952
        %v2399 = vadd.f32 %v1103, %v1952
        %v2400 = vadd.f32 %v1104, %v1952
        %v2401 = vadd.f32 %v1105, %v1952
        %v2402 = vadd.f32 %v1106, %v1952
        %v2403 = vadd.f32 %v1107, %v1952
        %v2404 = vadd.f32 %v1108, %v1952
        %v2405 = vadd.f32 %v1109, %v1952
        %v2406 = vadd.f32 %v1110, %v1952
        %v2407 = vadd.f32 %v1111, %v1952
        %v2408 = vadd.f32 %v1112, %v1952
        %v2409 = vadd.f32 %v1113, %v1952
        %v2410 = vadd.f32 %v1114, %v1952
        %v2411 = vadd.f32 %v1115, %v1952
        %v2412 = vadd.f32 %v1116, %v1952
        %v2413 = vadd.f32 %v1117, %v1952
        %v2414 = vadd.f32 %v1118, %v1952
        %v2415 = vadd.f32 %v1119, %v1952
        %v2416 = vadd.f32 %v1120, %v1952
        %v2417 = vadd.f32 %v1121, %v1952
        %v2418 = vadd.f32 %v1122, %v1952
        %v2419 = vadd.f32 %v1123, %v1952
        %v2420 = vadd.f32 %v1124, %v1952
        %v2421 = vadd.f32 %v1125, %v1952
        %v2422 = vadd.f32 %v1126, %v1952
        %v2423 = vadd.f32 %v1127, %v1952
        %v2424 = vadd.f32 %v1128, %v1952
        %v2425 = vadd.f32 %v1129, %v1952
        %v2426 = vadd.f32 %v1130, %v1952
        %v2427 = vadd.f32 %v1131, %v1952
        %v2428 = vadd.f32 %v1132, %v1952
        %v2429 = vadd.f32 %v1133, %v1952
        %v2430 = vadd.f32 %v1134, %v1952
        %v2431 = vadd.f32 %v1135, %v1952
        %v2432 = vadd.f32 %v1136, %v1952
        %v2433 = vadd.f32 %v1137, %v1952
        %v2434 = vadd.f32 %v1138, %v1952
        %v2435 = vadd.f32 %v1139, %v1952
        %v2436 = vadd.f32 %v1140, %v1952
        %v2437 = vadd.f32 %v1141, %v1952
        %v2438 = vadd.f32 %v1142, %v1952
        %v2439 = vadd.f32 %v1143, %v1952
        %v2440 = vadd.f32 %v1144, %v1952
        %v2441 = vadd.f32 %v1145, %v1952
        %v2442 = vadd.f32 %v1146, %v1952
        %v2443 = vadd.f32 %v1147, %v1952
        %v2444 = vadd.f32 %v1148, %v1952
        %v2445 = vadd.f32 %v1149, %v1952
        %v2446 = vadd.f32 %v1150, %v1952
        %v2447 = vadd.f32 %v1151, %v1952
        %v2448 = vadd.f32 %v1152, %v1952
        %v2449 = vadd.f32 %v1153, %v1952
        %v2450 = vadd.f32 %v1154, %v1952
        %v2451 = vadd.f32 %v1155, %v1952
        %v2452 = vadd.f32 %v1156, %v1952
        %v2453 = vadd.f32 %v1157, %v1952
        %v2454 = vadd.f32 %v1158, %v1957
        %v2455 = vadd.f32 %v1159, %v1957
        %v2456 = vadd.f32 %v1160, %v1957
        %v2457 = vadd.f32 %v1161, %v1957
        %v2458 = vadd.f32 %v1162, %v1957
        %v2459 = vadd.f32 %v1163, %v1957
        %v2460 = vadd.f32 %v1164, %v1957
        %v2461 = vadd.f32 %v1165, %v1957
        %v2462 = vadd.f32 %v1166, %v1957
        %v2463 = vadd.f32 %v1167, %v1957
        %v2464 = vadd.f32 %v1168, %v1957
        %v2465 = vadd.f32 %v1169, %v1957
        %v2466 = vadd.f32 %v1170, %v1957
        %v2467 = vadd.f32 %v1171, %v1957
        %v2468 = vadd.f32 %v1172, %v1957
        %v2469 = vadd.f32 %v1173, %v1957
        %v2470 = vadd.f32 %v1174, %v1957
        %v2471 = vadd.f32 %v1175, %v1957
        %v2472 = vadd.f32 %v1176, %v1957
        %v2473 = vadd.f32 %v1177, %v1957
        %v2474 = vadd.f32 %v1178, %v1957
        %v2475 = vadd.f32 %v1179, %v1957
        %v2476 = vadd.f32 %v1180, %v1957
        %v2477 = vadd.f32 %v1181, %v1957
        %v2478 = vadd.f32 %v1182, %v1957
        %v2479 = vadd.f32 %v1183, %v1957
        %v2480 = vadd.f32 %v1184, %v1957
        %v2481 = vadd.f32 %v1185, %v1957
        %v2482 = vadd.f32 %v1186, %v1957
        %v2483 = vadd.f32 %v1187, %v1957
        %v2484 = vadd.f32 %v1188, %v1957
        %v2485 = vadd.f32 %v1189, %v1957
        %v2486 = vadd.f32 %v1190, %v1957
        %v2487 = vadd.f32 %v1191, %v1957
        %v2488 = vadd.f32 %v1192, %v1957
        %v2489 = vadd.f32 %v1193, %v1957
        %v2490 = vadd.f32 %v1194, %v1957
        %v2491 = vadd.f32 %v1195, %v1957
        %v2492 = vadd.f32 %v1196, %v1957
        %v2493 = vadd.f32 %v1197, %v1957
        %v2494 = vadd.f32 %v1198, %v1957
        %v2495 = vadd.f32 %v1199, %v1957
        %v2496 = vadd.f32 %v1200, %v1957
        %v2497 = vadd.f32 %v1201, %v1957
        %v2498 = vadd.f32 %v1202, %v1957
        %v2499 = vadd.f32 %v1203, %v1957
        %v2500 = vadd.f32 %v1204, %v1957
        %v2501 = vadd.f32 %v1205, %v1957
        %v2502 = vadd.f32 %v1206, %v1957
        %v2503 = vadd.f32 %v1207, %v1957
        %v2504 = vadd.f32 %v1208, %v1957
        %v2505 = vadd.f32 %v1209, %v1957
        %v2506 = vadd.f32 %v1210, %v1957
        %v2507 = vadd.f32 %v1211, %v1957
        %v2508 = vadd.f32 %v1212, %v1957
        %v2509 = vadd.f32 %v1213, %v1957
        %v2510 = vadd.f32 %v1214, %v1957
        %v2511 = vadd.f32 %v1215, %v1957
        %v2512 = vadd.f32 %v1216, %v1957
        %v2513 = vadd.f32 %v1217, %v1957
        %v2514 = vadd.f32 %v1218, %v1957
        %v2515 = vadd.f32 %v1219, %v1957
        %v2516 = vadd.f32 %v1220, %v1957
        %v2517 = vadd.f32 %v1221, %v1957
        %v2518 = vadd.f32 %v1222, %v1957
        %v2519 = vadd.f32 %v1223, %v1957
        %v2520 = vadd.f32 %v1224, %v1957
        %v2521 = vadd.f32 %v1225, %v1957
        %v2522 = vadd.f32 %v1226, %v1957
        %v2523 = vadd.f32 %v1227, %v1957
        %v2524 = vadd.f32 %v1228, %v1957
        %v2525 = vadd.f32 %v1229, %v1957
        %v2526 = vadd.f32 %v1230, %v1957
        %v2527 = vadd.f32 %v1231, %v1957
        %v2528 = vadd.f32 %v1232, %v1957
        %v2529 = vadd.f32 %v1233, %v1962
        %v2530 = vadd.f32 %v1234, %v1962
        %v2531 = vadd.f32 %v1235, %v1962
        %v2532 = vadd.f32 %v1236, %v1962
        %v2533 = vadd.f32 %v1237, %v1962
        %v2534 = vadd.f32 %v1238, %v1962
        %v2535 = vadd.f32 %v1239, %v1962
        %v2536 = vadd.f32 %v1240, %v1962
        %v2537 = vadd.f32 %v1241, %v1962
        %v2538 = vadd.f32 %v1242, %v1962
        %v2539 = vadd.f32 %v1243, %v1962
        %v2540 = vadd.f32 %v1244, %v1962
        %v2541 = vadd.f32 %v1245, %v1962
        %v2542 = vadd.f32 %v1246, %v1962
        %v2543 = vadd.f32 %v1247, %v1962
        %v2544 = vadd.f32 %v1248, %v1962
        %v2545 = vadd.f32 %v1249, %v1962
        %v2546 = vadd.f32 %v1250, %v1962
        %v2547 = vadd.f32 %v1251, %v1962
        %v2548 = vadd.f32 %v1252, %v1962
        %v2549 = vadd.f32 %v1253, %v1962
        %v2550 = vadd.f32 %v1254, %v1962
        %v2551 = vadd.f32 %v1255, %v1962
        %v2552 = vadd.f32 %v1256, %v1962
        %v2553 = vadd.f32 %v1257, %v1962
        %v2554 = vadd.f32 %v1258, %v1962
        %v2555 = vadd.f32 %v1259, %v1962
        %v2556 = vadd.f32 %v1260, %v1962
        %v2557 = vadd.f32 %v1261, %v1962
        %v2558 = vadd.f32 %v1262, %v1962
        %v2559 = vadd.f32 %v1263, %v1962
        %v2560 = vadd.f32 %v1264, %v1962
        %v2561 = vadd.f32 %v1265, %v1962
        %v2562 = vadd.f32 %v1266, %v1962
        %v2563 = vadd.f32 %v1267, %v1962
        %v2564 = vadd.f32 %v1268, %v1962
        %v2565 = vadd.f32 %v1269, %v1962
        %v2566 = vadd.f32 %v1270, %v1962
        %v2567 = vadd.f32 %v1271, %v1962
        %v2568 = vadd.f32 %v1272, %v1962
        %v2569 = vadd.f32 %v1273, %v1962
        %v2570 = vadd.f32 %v1274, %v1962
        %v2571 = vadd.f32 %v1275, %v1962
        %v2572 = vadd.f32 %v1276, %v1962
        %v2573 = vadd.f32 %v1277, %v1962
        %v2574 = vadd.f32 %v1278, %v1962
        %v2575 = vadd.f32 %v1279, %v1962
        %v2576 = vadd.f32 %v1280, %v1962
        %v2577 = vadd.f32 %v1281, %v1962
        %v2578 = vadd.f32 %v1282, %v1962
        %v2579 = vadd.f32 %v1283, %v1962
        %v2580 = vadd.f32 %v1284, %v1962
        %v2581 = vadd.f32 %v1285, %v1962
        %v2582 = vadd.f32 %v1286, %v1962
        %v2583 = vadd.f32 %v1287, %v1962
        %v2584 = vadd.f32 %v1288, %v1962
        %v2585 = vadd.f32 %v1289, %v1962
        %v2586 = vadd.f32 %v1290, %v1962
        %v2587 = vadd.f32 %v1291, %v1962
        %v2588 = vadd.f32 %v1292, %v1962
        %v2589 = vadd.f32 %v1293, %v1962
        %v2590 = vadd.f32 %v1294, %v1962
        %v2591 = vadd.f32 %v1295, %v1962
        %v2592 = vadd.f32 %v1296, %v1962
        %v2593 = vadd.f32 %v1297, %v1962
        %v2594 = vadd.f32 %v1298, %v1962
        %v2595 = vadd.f32 %v1299, %v1962
        %v2596 = vadd.f32 %v1300, %v1962
        %v2597 = vadd.f32 %v1301, %v1962
        %v2598 = vadd.f32 %v1302, %v1962
        %v2599 = vadd.f32 %v1303, %v1962
        %v2600 = vadd.f32 %v1304, %v1962
        %v2601 = vadd.f32 %v1305, %v1962
        %v2602 = vadd.f32 %v1306, %v1962
        %v2603 = vadd.f32 %v1307, %v1962
        %v2604 = vadd.f32 %v1308, %v1967
        %v2605 = vadd.f32 %v1309, %v1967
        %v2606 = vadd.f32 %v1310, %v1967
        %v2607 = vadd.f32 %v1311, %v1967
        %v2608 = vadd.f32 %v1312, %v1967
        %v2609 = vadd.f32 %v1313, %v1967
        %v2610 = vadd.f32 %v1314, %v1967
        %v2611 = vadd.f32 %v1315, %v1967
        %v2612 = vadd.f32 %v1316, %v1967
        %v2613 = vadd.f32 %v1317, %v1967
        %v2614 = vadd.f32 %v1318, %v1967
        %v2615 = vadd.f32 %v1319, %v1967
        %v2616 = vadd.f32 %v1320, %v1967
        %v2617 = vadd.f32 %v1321, %v1967
        %v2618 = vadd.f32 %v1322, %v1967
        %v2619 = vadd.f32 %v1323, %v1967
        %v2620 = vadd.f32 %v1324, %v1967
        %v2621 = vadd.f32 %v1325, %v1967
        %v2622 = vadd.f32 %v1326, %v1967
        %v2623 = vadd.f32 %v1327, %v1967
        %v2624 = vadd.f32 %v1328, %v1967
        %v2625 = vadd.f32 %v1329, %v1967
        %v2626 = vadd.f32 %v1330, %v1967
        %v2627 = vadd.f32 %v1331, %v1967
        %v2628 = vadd.f32 %v1332, %v1967
        %v2629 = vadd.f32 %v1333, %v1967
        %v2630 = vadd.f32 %v1334, %v1967
        %v2631 = vadd.f32 %v1335, %v1967
        %v2632 = vadd.f32 %v1336, %v1967
        %v2633 = vadd.f32 %v1337, %v1967
        %v2634 = vadd.f32 %v1338, %v1967
        %v2635 = vadd.f32 %v1339, %v1967
        %v2636 = vadd.f32 %v1340, %v1967
        %v2637 = vadd.f32 %v1341, %v1967
        %v2638 = vadd.f32 %v1342, %v1967
        %v2639 = vadd.f32 %v1343, %v1967
        %v2640 = vadd.f32 %v1344, %v1967
        %v2641 = vadd.f32 %v1345, %v1967
        %v2642 = vadd.f32 %v1346, %v1967
        %v2643 = vadd.f32 %v1347, %v1967
        %v2644 = vadd.f32 %v1348, %v1967
        %v2645 = vadd.f32 %v1349, %v1967
        %v2646 = vadd.f32 %v1350, %v1967
        %v2647 = vadd.f32 %v1351, %v1967
        %v2648 = vadd.f32 %v1352, %v1967
        %v2649 = vadd.f32 %v1353, %v1967
        %v2650 = vadd.f32 %v1354, %v1967
        %v2651 = vadd.f32 %v1355, %v1967
        %v2652 = vadd.f32 %v1356, %v1967
        %v2653 = vadd.f32 %v1357, %v1967
        %v2654 = vadd.f32 %v1358, %v1967
        %v2655 = vadd.f32 %v1359, %v1967
        %v2656 = vadd.f32 %v1360, %v1967
        %v2657 = vadd.f32 %v1361, %v1967
        %v2658 = vadd.f32 %v1362, %v1967
        %v2659 = vadd.f32 %v1363, %v1967
        %v2660 = vadd.f32 %v1364, %v1967
        %v2661 = vadd.f32 %v1365, %v1967
        %v2662 = vadd.f32 %v1366, %v1967
        %v2663 = vadd.f32 %v1367, %v1967
        %v2664 = vadd.f32 %v1368, %v1967
        %v2665 = vadd.f32 %v1369, %v1967
        %v2666 = vadd.f32 %v1370, %v1967
        %v2667 = vadd.f32 %v1371, %v1967
        %v2668 = vadd.f32 %v1372, %v1967
        %v2669 = vadd.f32 %v1373, %v1967
        %v2670 = vadd.f32 %v1374, %v1967
        %v2671 = vadd.f32 %v1375, %v1967
        %v2672 = vadd.f32 %v1376, %v1967
        %v2673 = vadd.f32 %v1377, %v1967
        %v2674 = vadd.f32 %v1378, %v1967
        %v2675 = vadd.f32 %v1379, %v1967
        %v2676 = vadd.f32 %v1380, %v1967
        %v2677 = vadd.f32 %v1381, %v1967
        %v2678 = vadd.f32 %v1382, %v1967
        %v2679 = vadd.f32 %v1383, %v1972
        %v2680 = vadd.f32 %v1384, %v1972
        %v2681 = vadd.f32 %v1385, %v1972
        %v2682 = vadd.f32 %v1386, %v1972
        %v2683 = vadd.f32 %v1387, %v1972
        %v2684 = vadd.f32 %v1388, %v1972
        %v2685 = vadd.f32 %v1389, %v1972
        %v2686 = vadd.f32 %v1390, %v1972
        %v2687 = vadd.f32 %v1391, %v1972
        %v2688 = vadd.f32 %v1392, %v1972
        %v2689 = vadd.f32 %v1393, %v1972
        %v2690 = vadd.f32 %v1394, %v1972
        %v2691 = vadd.f32 %v1395, %v1972
        %v2692 = vadd.f32 %v1396, %v1972
        %v2693 = vadd.f32 %v1397, %v1972
        %v2694 = vadd.f32 %v1398, %v1972
        %v2695 = vadd.f32 %v1399, %v1972
        %v2696 = vadd.f32 %v1400, %v1972
        %v2697 = vadd.f32 %v1401, %v1972
        %v2698 = vadd.f32 %v1402, %v1972
        %v2699 = vadd.f32 %v1403, %v1972
        %v2700 = vadd.f32 %v1404, %v1972
        %v2701 = vadd.f32 %v1405, %v1972
        %v2702 = vadd.f32 %v1406, %v1972
        %v2703 = vadd.f32 %v1407, %v1972
        %v2704 = vadd.f32 %v1408, %v1972
        %v2705 = vadd.f32 %v1409, %v1972
        %v2706 = vadd.f32 %v1410, %v1972
        %v2707 = vadd.f32 %v1411, %v1972
        %v2708 = vadd.f32 %v1412, %v1972
        %v2709 = vadd.f32 %v1413, %v1972
        %v2710 = vadd.f32 %v1414, %v1972
        %v2711 = vadd.f32 %v1415, %v1972
        %v2712 = vadd.f32 %v1416, %v1972
        %v2713 = vadd.f32 %v1417, %v1972
        %v2714 = vadd.f32 %v1418, %v1972
        %v2715 = vadd.f32 %v1419, %v1972
        %v2716 = vadd.f32 %v1420, %v1972
        %v2717 = vadd.f32 %v1421, %v1972
        %v2718 = vadd.f32 %v1422, %v1972
        %v2719 = vadd.f32 %v1423, %v1972
        %v2720 = vadd.f32 %v1424, %v1972
        %v2721 = vadd.f32 %v1425, %v1972
        %v2722 = vadd.f32 %v1426, %v1972
        %v2723 = vadd.f32 %v1427, %v1972
        %v2724 = vadd.f32 %v1428, %v1972
        %v2725 = vadd.f32 %v1429, %v1972
        %v2726 = vadd.f32 %v1430, %v1972
        %v2727 = vadd.f32 %v1431, %v1972
        %v2728 = vadd.f32 %v1432, %v1972
        %v2729 = vadd.f32 %v1433, %v1972
        %v2730 = vadd.f32 %v1434, %v1972
        %v2731 = vadd.f32 %v1435, %v1972
        %v2732 = vadd.f32 %v1436, %v1972
        %v2733 = vadd.f32 %v1437, %v1972
        %v2734 = vadd.f32 %v1438, %v1972
        %v2735 = vadd.f32 %v1439, %v1972
        %v2736 = vadd.f32 %v1440, %v1972
        %v2737 = vadd.f32 %v1441, %v1972
        %v2738 = vadd.f32 %v1442, %v1972
        %v2739 = vadd.f32 %v1443, %v1972
        %v2740 = vadd.f32 %v1444, %v1972
        %v2741 = vadd.f32 %v1445, %v1972
        %v2742 = vadd.f32 %v1446, %v1972
        %v2743 = vadd.f32 %v1447, %v1972
        %v2744 = vadd.f32 %v1448, %v1972
        %v2745 = vadd.f32 %v1449, %v1972
        %v2746 = vadd.f32 %v1450, %v1972
        %v2747 = vadd.f32 %v1451, %v1972
        %v2748 = vadd.f32 %v1452, %v1972
        %v2749 = vadd.f32 %v1453, %v1972
        %v2750 = vadd.f32 %v1454, %v1972
        %v2751 = vadd.f32 %v1455, %v1972
        %v2752 = vadd.f32 %v1456, %v1972
        %v2753 = vadd.f32 %v1457, %v1972
        %v2754 = vadd.f32 %v1458, %v1977
        %v2755 = vadd.f32 %v1459, %v1977
        %v2756 = vadd.f32 %v1460, %v1977
        %v2757 = vadd.f32 %v1461, %v1977
        %v2758 = vadd.f32 %v1462, %v1977
        %v2759 = vadd.f32 %v1463, %v1977
        %v2760 = vadd.f32 %v1464, %v1977
        %v2761 = vadd.f32 %v1465, %v1977
        %v2762 = vadd.f32 %v1466, %v1977
        %v2763 = vadd.f32 %v1467, %v1977
        %v2764 = vadd.f32 %v1468, %v1977
        %v2765 = vadd.f32 %v1469, %v1977
        %v2766 = vadd.f32 %v1470, %v1977
        %v2767 = vadd.f32 %v1471, %v1977
        %v2768 = vadd.f32 %v1472, %v1977
        %v2769 = vadd.f32 %v1473, %v1977
        %v2770 = vadd.f32 %v1474, %v1977
        %v2771 = vadd.f32 %v1475, %v1977
        %v2772 = vadd.f32 %v1476, %v1977
        %v2773 = vadd.f32 %v1477, %v1977
        %v2774 = vadd.f32 %v1478, %v1977
        %v2775 = vadd.f32 %v1479, %v1977
        %v2776 = vadd.f32 %v1480, %v1977
        %v2777 = vadd.f32 %v1481, %v1977
        %v2778 = vadd.f32 %v1482, %v1977
        %v2779 = vadd.f32 %v1483, %v1977
        %v2780 = vadd.f32 %v1484, %v1977
        %v2781 = vadd.f32 %v1485, %v1977
        %v2782 = vadd.f32 %v1486, %v1977
        %v2783 = vadd.f32 %v1487, %v1977
        %v2784 = vadd.f32 %v1488, %v1977
        %v2785 = vadd.f32 %v1489, %v1977
        %v2786 = vadd.f32 %v1490, %v1977
        %v2787 = vadd.f32 %v1491, %v1977
        %v2788 = vadd.f32 %v1492, %v1977
        %v2789 = vadd.f32 %v1493, %v1977
        %v2790 = vadd.f32 %v1494, %v1977
        %v2791 = vadd.f32 %v1495, %v1977
        %v2792 = vadd.f32 %v1496, %v1977
        %v2793 = vadd.f32 %v1497, %v1977
        %v2794 = vadd.f32 %v1498, %v1977
        %v2795 = vadd.f32 %v1499, %v1977
        %v2796 = vadd.f32 %v1500, %v1977
        %v2797 = vadd.f32 %v1501, %v1977
        %v2798 = vadd.f32 %v1502, %v1977
        %v2799 = vadd.f32 %v1503, %v1977
        %v2800 = vadd.f32 %v1504, %v1977
        %v2801 = vadd.f32 %v1505, %v1977
        %v2802 = vadd.f32 %v1506, %v1977
        %v2803 = vadd.f32 %v1507, %v1977
        %v2804 = vadd.f32 %v1508, %v1977
        %v2805 = vadd.f32 %v1509, %v1977
        %v2806 = vadd.f32 %v1510, %v1977
        %v2807 = vadd.f32 %v1511, %v1977
        %v2808 = vadd.f32 %v1512, %v1977
        %v2809 = vadd.f32 %v1513, %v1977
        %v2810 = vadd.f32 %v1514, %v1977
        %v2811 = vadd.f32 %v1515, %v1977
        %v2812 = vadd.f32 %v1516, %v1977
        %v2813 = vadd.f32 %v1517, %v1977
        %v2814 = vadd.f32 %v1518, %v1977
        %v2815 = vadd.f32 %v1519, %v1977
        %v2816 = vadd.f32 %v1520, %v1977
        %v2817 = vadd.f32 %v1521, %v1977
        %v2818 = vadd.f32 %v1522, %v1977
        %v2819 = vadd.f32 %v1523, %v1977
        %v2820 = vadd.f32 %v1524, %v1977
        %v2821 = vadd.f32 %v1525, %v1977
        %v2822 = vadd.f32 %v1526, %v1977
        %v2823 = vadd.f32 %v1527, %v1977
        %v2824 = vadd.f32 %v1528, %v1977
        %v2825 = vadd.f32 %v1529, %v1977
        %v2826 = vadd.f32 %v1530, %v1977
        %v2827 = vadd.f32 %v1531, %v1977
        %v2828 = vadd.f32 %v1532, %v1977
        %v2829 = vadd.f32 %v1533, %v1982
        %v2830 = vadd.f32 %v1534, %v1982
        %v2831 = vadd.f32 %v1535, %v1982
        %v2832 = vadd.f32 %v1536, %v1982
        %v2833 = vadd.f32 %v1537, %v1982
        %v2834 = vadd.f32 %v1538, %v1982
        %v2835 = vadd.f32 %v1539, %v1982
        %v2836 = vadd.f32 %v1540, %v1982
        %v2837 = vadd.f32 %v1541, %v1982
        %v2838 = vadd.f32 %v1542, %v1982
        %v2839 = vadd.f32 %v1543, %v1982
        %v2840 = vadd.f32 %v1544, %v1982
        %v2841 = vadd.f32 %v1545, %v1982
        %v2842 = vadd.f32 %v1546, %v1982
        %v2843 = vadd.f32 %v1547, %v1982
        %v2844 = vadd.f32 %v1548, %v1982
        %v2845 = vadd.f32 %v1549, %v1982
        %v2846 = vadd.f32 %v1550, %v1982
        %v2847 = vadd.f32 %v1551, %v1982
        %v2848 = vadd.f32 %v1552, %v1982
        %v2849 = vadd.f32 %v1553, %v1982
        %v2850 = vadd.f32 %v1554, %v1982
        %v2851 = vadd.f32 %v1555, %v1982
        %v2852 = vadd.f32 %v1556, %v1982
        %v2853 = vadd.f32 %v1557, %v1982
        %v2854 = vadd.f32 %v1558, %v1982
        %v2855 = vadd.f32 %v1559, %v1982
        %v2856 = vadd.f32 %v1560, %v1982
        %v2857 = vadd.f32 %v1561, %v1982
        %v2858 = vadd.f32 %v1562, %v1982
        %v2859 = vadd.f32 %v1563, %v1982
        %v2860 = vadd.f32 %v1564, %v1982
        %v2861 = vadd.f32 %v1565, %v1982
        %v2862 = vadd.f32 %v1566, %v1982
        %v2863 = vadd.f32 %v1567, %v1982
        %v2864 = vadd.f32 %v1568, %v1982
        %v2865 = vadd.f32 %v1569, %v1982
        %v2866 = vadd.f32 %v1570, %v1982
        %v2867 = vadd.f32 %v1571, %v1982
        %v2868 = vadd.f32 %v1572, %v1982
        %v2869 = vadd.f32 %v1573, %v1982
        %v2870 = vadd.f32 %v1574, %v1982
        %v2871 = vadd.f32 %v1575, %v1982
        %v2872 = vadd.f32 %v1576, %v1982
        %v2873 = vadd.f32 %v1577, %v1982
        %v2874 = vadd.f32 %v1578, %v1982
        %v2875 = vadd.f32 %v1579, %v1982
        %v2876 = vadd.f32 %v1580, %v1982
        %v2877 = vadd.f32 %v1581, %v1982
        %v2878 = vadd.f32 %v1582, %v1982
        %v2879 = vadd.f32 %v1583, %v1982
        %v2880 = vadd.f32 %v1584, %v1982
        %v2881 = vadd.f32 %v1585, %v1982
        %v2882 = vadd.f32 %v1586, %v1982
        %v2883 = vadd.f32 %v1587, %v1982
        %v2884 = vadd.f32 %v1588, %v1982
        %v2885 = vadd.f32 %v1589, %v1982
        %v2886 = vadd.f32 %v1590, %v1982
        %v2887 = vadd.f32 %v1591, %v1982
        %v2888 = vadd.f32 %v1592, %v1982
        %v2889 = vadd.f32 %v1593, %v1982
        %v2890 = vadd.f32 %v1594, %v1982
        %v2891 = vadd.f32 %v1595, %v1982
        %v2892 = vadd.f32 %v1596, %v1982
        %v2893 = vadd.f32 %v1597, %v1982
        %v2894 = vadd.f32 %v1598, %v1982
        %v2895 = vadd.f32 %v1599, %v1982
        %v2896 = vadd.f32 %v1600, %v1982
        %v2897 = vadd.f32 %v1601, %v1982
        %v2898 = vadd.f32 %v1602, %v1982
        %v2899 = vadd.f32 %v1603, %v1982
        %v2900 = vadd.f32 %v1604, %v1982
        %v2901 = vadd.f32 %v1605, %v1982
        %v2902 = vadd.f32 %v1606, %v1982
        %v2903 = vadd.f32 %v1607, %v1982
        %v2904 = vadd.f32 %v1608, %v1987
        %v2905 = vadd.f32 %v1609, %v1987
        %v2906 = vadd.f32 %v1610, %v1987
        %v2907 = vadd.f32 %v1611, %v1987
        %v2908 = vadd.f32 %v1612, %v1987
        %v2909 = vadd.f32 %v1613, %v1987
        %v2910 = vadd.f32 %v1614, %v1987
        %v2911 = vadd.f32 %v1615, %v1987
        %v2912 = vadd.f32 %v1616, %v1987
        %v2913 = vadd.f32 %v1617, %v1987
        %v2914 = vadd.f32 %v1618, %v1987
        %v2915 = vadd.f32 %v1619, %v1987
        %v2916 = vadd.f32 %v1620, %v1987
        %v2917 = vadd.f32 %v1621, %v1987
        %v2918 = vadd.f32 %v1622, %v1987
        %v2919 = vadd.f32 %v1623, %v1987
        %v2920 = vadd.f32 %v1624, %v1987
        %v2921 = vadd.f32 %v1625, %v1987
        %v2922 = vadd.f32 %v1626, %v1987
        %v2923 = vadd.f32 %v1627, %v1987
        %v2924 = vadd.f32 %v1628, %v1987
        %v2925 = vadd.f32 %v1629, %v1987
        %v2926 = vadd.f32 %v1630, %v1987
        %v2927 = vadd.f32 %v1631, %v1987
        %v2928 = vadd.f32 %v1632, %v1987
        %v2929 = vadd.f32 %v1633, %v1987
        %v2930 = vadd.f32 %v1634, %v1987
        %v2931 = vadd.f32 %v1635, %v1987
        %v2932 = vadd.f32 %v1636, %v1987
        %v2933 = vadd.f32 %v1637, %v1987
        %v2934 = vadd.f32 %v1638, %v1987
        %v2935 = vadd.f32 %v1639, %v1987
        %v2936 = vadd.f32 %v1640, %v1987
        %v2937 = vadd.f32 %v1641, %v1987
        %v2938 = vadd.f32 %v1642, %v1987
        %v2939 = vadd.f32 %v1643, %v1987
        %v2940 = vadd.f32 %v1644, %v1987
        %v2941 = vadd.f32 %v1645, %v1987
        %v2942 = vadd.f32 %v1646, %v1987
        %v2943 = vadd.f32 %v1647, %v1987
        %v2944 = vadd.f32 %v1648, %v1987
        %v2945 = vadd.f32 %v1649, %v1987
        %v2946 = vadd.f32 %v1650, %v1987
        %v2947 = vadd.f32 %v1651, %v1987
        %v2948 = vadd.f32 %v1652, %v1987
        %v2949 = vadd.f32 %v1653, %v1987
        %v2950 = vadd.f32 %v1654, %v1987
        %v2951 = vadd.f32 %v1655, %v1987
        %v2952 = vadd.f32 %v1656, %v1987
        %v2953 = vadd.f32 %v1657, %v1987
        %v2954 = vadd.f32 %v1658, %v1987
        %v2955 = vadd.f32 %v1659, %v1987
        %v2956 = vadd.f32 %v1660, %v1987
        %v2957 = vadd.f32 %v1661, %v1987
        %v2958 = vadd.f32 %v1662, %v1987
        %v2959 = vadd.f32 %v1663, %v1987
        %v2960 = vadd.f32 %v1664, %v1987
        %v2961 = vadd.f32 %v1665, %v1987
        %v2962 = vadd.f32 %v1666, %v1987
        %v2963 = vadd.f32 %v1667, %v1987
        %v2964 = vadd.f32 %v1668, %v1987
        %v2965 = vadd.f32 %v1669, %v1987
        %v2966 = vadd.f32 %v1670, %v1987
        %v2967 = vadd.f32 %v1671, %v1987
        %v2968 = vadd.f32 %v1672, %v1987
        %v2969 = vadd.f32 %v1673, %v1987
        %v2970 = vadd.f32 %v1674, %v1987
        %v2971 = vadd.f32 %v1675, %v1987
        %v2972 = vadd.f32 %v1676, %v1987
        %v2973 = vadd.f32 %v1677, %v1987
        %v2974 = vadd.f32 %v1678, %v1987
        %v2975 = vadd.f32 %v1679, %v1987
        %v2976 = vadd.f32 %v1680, %v1987
        %v2977 = vadd.f32 %v1681, %v1987
        %v2978 = vadd.f32 %v1682, %v1987
        %v2979 = vadd.f32 %v1683, %v1992
        %v2980 = vadd.f32 %v1684, %v1992
        %v2981 = vadd.f32 %v1685, %v1992
        %v2982 = vadd.f32 %v1686, %v1992
        %v2983 = vadd.f32 %v1687, %v1992
        %v2984 = vadd.f32 %v1688, %v1992
        %v2985 = vadd.f32 %v1689, %v1992
        %v2986 = vadd.f32 %v1690, %v1992
        %v2987 = vadd.f32 %v1691, %v1992
        %v2988 = vadd.f32 %v1692, %v1992
        %v2989 = vadd.f32 %v1693, %v1992
        %v2990 = vadd.f32 %v1694, %v1992
        %v2991 = vadd.f32 %v1695, %v1992
        %v2992 = vadd.f32 %v1696, %v1992
        %v2993 = vadd.f32 %v1697, %v1992
        %v2994 = vadd.f32 %v1698, %v1992
        %v2995 = vadd.f32 %v1699, %v1992
        %v2996 = vadd.f32 %v1700, %v1992
        %v2997 = vadd.f32 %v1701, %v1992
        %v2998 = vadd.f32 %v1702, %v1992
        %v2999 = vadd.f32 %v1703, %v1992
        %v3000 = vadd.f32 %v1704, %v1992
        %v3001 = vadd.f32 %v1705, %v1992
        %v3002 = vadd.f32 %v1706, %v1992
        %v3003 = vadd.f32 %v1707, %v1992
        %v3004 = vadd.f32 %v1708, %v1992
        %v3005 = vadd.f32 %v1709, %v1992
        %v3006 = vadd.f32 %v1710, %v1992
        %v3007 = vadd.f32 %v1711, %v1992
        %v3008 = vadd.f32 %v1712, %v1992
        %v3009 = vadd.f32 %v1713, %v1992
        %v3010 = vadd.f32 %v1714, %v1992
        %v3011 = vadd.f32 %v1715, %v1992
        %v3012 = vadd.f32 %v1716, %v1992
        %v3013 = vadd.f32 %v1717, %v1992
        %v3014 = vadd.f32 %v1718, %v1992
        %v3015 = vadd.f32 %v1719, %v1992
        %v3016 = vadd.f32 %v1720, %v1992
        %v3017 = vadd.f32 %v1721, %v1992
        %v3018 = vadd.f32 %v1722, %v1992
        %v3019 = vadd.f32 %v1723, %v1992
        %v3020 = vadd.f32 %v1724, %v1992
        %v3021 = vadd.f32 %v1725, %v1992
        %v3022 = vadd.f32 %v1726, %v1992
        %v3023 = vadd.f32 %v1727, %v1992
        %v3024 = vadd.f32 %v1728, %v1992
        %v3025 = vadd.f32 %v1729, %v1992
        %v3026 = vadd.f32 %v1730, %v1992
        %v3027 = vadd.f32 %v1731, %v1992
        %v3028 = vadd.f32 %v1732, %v1992
        %v3029 = vadd.f32 %v1733, %v1992
        %v3030 = vadd.f32 %v1734, %v1992
        %v3031 = vadd.f32 %v1735, %v1992
        %v3032 = vadd.f32 %v1736, %v1992
        %v3033 = vadd.f32 %v1737, %v1992
        %v3034 = vadd.f32 %v1738, %v1992
        %v3035 = vadd.f32 %v1739, %v1992
        %v3036 = vadd.f32 %v1740, %v1992
        %v3037 = vadd.f32 %v1741, %v1992
        %v3038 = vadd.f32 %v1742, %v1992
        %v3039 = vadd.f32 %v1743, %v1992
        %v3040 = vadd.f32 %v1744, %v1992
        %v3041 = vadd.f32 %v1745, %v1992
        %v3042 = vadd.f32 %v1746, %v1992
        %v3043 = vadd.f32 %v1747, %v1992
        %v3044 = vadd.f32 %v1748, %v1992
        %v3045 = vadd.f32 %v1749, %v1992
        %v3046 = vadd.f32 %v1750, %v1992
        %v3047 = vadd.f32 %v1751, %v1992
        %v3048 = vadd.f32 %v1752, %v1992
        %v3049 = vadd.f32 %v1753, %v1992
        %v3050 = vadd.f32 %v1754, %v1992
        %v3051 = vadd.f32 %v1755, %v1992
        %v3052 = vadd.f32 %v1756, %v1992
        %v3053 = vadd.f32 %v1757, %v1992
        %v3054 = vadd.f32 %v1758, %v1997
        %v3055 = vadd.f32 %v1759, %v1997
        %v3056 = vadd.f32 %v1760, %v1997
        %v3057 = vadd.f32 %v1761, %v1997
        %v3058 = vadd.f32 %v1762, %v1997
        %v3059 = vadd.f32 %v1763, %v1997
        %v3060 = vadd.f32 %v1764, %v1997
        %v3061 = vadd.f32 %v1765, %v1997
        %v3062 = vadd.f32 %v1766, %v1997
        %v3063 = vadd.f32 %v1767, %v1997
        %v3064 = vadd.f32 %v1768, %v1997
        %v3065 = vadd.f32 %v1769, %v1997
        %v3066 = vadd.f32 %v1770, %v1997
        %v3067 = vadd.f32 %v1771, %v1997
        %v3068 = vadd.f32 %v1772, %v1997
        %v3069 = vadd.f32 %v1773, %v1997
        %v3070 = vadd.f32 %v1774, %v1997
        %v3071 = vadd.f32 %v1775, %v1997
        %v3072 = vadd.f32 %v1776, %v1997
        %v3073 = vadd.f32 %v1777, %v1997
        %v3074 = vadd.f32 %v1778, %v1997
        %v3075 = vadd.f32 %v1779, %v1997
        %v3076 = vadd.f32 %v1780, %v1997
        %v3077 = vadd.f32 %v1781, %v1997
        %v3078 = vadd.f32 %v1782, %v1997
        %v3079 = vadd.f32 %v1783, %v1997
        %v3080 = vadd.f32 %v1784, %v1997
        %v3081 = vadd.f32 %v1785, %v1997
        %v3082 = vadd.f32 %v1786, %v1997
        %v3083 = vadd.f32 %v1787, %v1997
        %v3084 = vadd.f32 %v1788, %v1997
        %v3085 = vadd.f32 %v1789, %v1997
        %v3086 = vadd.f32 %v1790, %v1997
        %v3087 = vadd.f32 %v1791, %v1997
        %v3088 = vadd.f32 %v1792, %v1997
        %v3089 = vadd.f32 %v1793, %v1997
        %v3090 = vadd.f32 %v1794, %v1997
        %v3091 = vadd.f32 %v1795, %v1997
        %v3092 = vadd.f32 %v1796, %v1997
        %v3093 = vadd.f32 %v1797, %v1997
        %v3094 = vadd.f32 %v1798, %v1997
        %v3095 = vadd.f32 %v1799, %v1997
        %v3096 = vadd.f32 %v1800, %v1997
        %v3097 = vadd.f32 %v1801, %v1997
        %v3098 = vadd.f32 %v1802, %v1997
        %v3099 = vadd.f32 %v1803, %v1997
        %v3100 = vadd.f32 %v1804, %v1997
        %v3101 = vadd.f32 %v1805, %v1997
        %v3102 = vadd.f32 %v1806, %v1997
        %v3103 = vadd.f32 %v1807, %v1997
        %v3104 = vadd.f32 %v1808, %v1997
        %v3105 = vadd.f32 %v1809, %v1997
        %v3106 = vadd.f32 %v1810, %v1997
        %v3107 = vadd.f32 %v1811, %v1997
        %v3108 = vadd.f32 %v1812, %v1997
        %v3109 = vadd.f32 %v1813, %v1997
        %v3110 = vadd.f32 %v1814, %v1997
        %v3111 = vadd.f32 %v1815, %v1997
        %v3112 = vadd.f32 %v1816, %v1997
        %v3113 = vadd.f32 %v1817, %v1997
        %v3114 = vadd.f32 %v1818, %v1997
        %v3115 = vadd.f32 %v1819, %v1997
        %v3116 = vadd.f32 %v1820, %v1997
        %v3117 = vadd.f32 %v1821, %v1997
        %v3118 = vadd.f32 %v1822, %v1997
        %v3119 = vadd.f32 %v1823, %v1997
        %v3120 = vadd.f32 %v1824, %v1997
        %v3121 = vadd.f32 %v1825, %v1997
        %v3122 = vadd.f32 %v1826, %v1997
        %v3123 = vadd.f32 %v1827, %v1997
        %v3124 = vadd.f32 %v1828, %v1997
        %v3125 = vadd.f32 %v1829, %v1997
        %v3126 = vadd.f32 %v1830, %v1997
        %v3127 = vadd.f32 %v1831, %v1997
        %v3128 = vadd.f32 %v1832, %v1997
        %v3129 = vadd.f32 %v1833, %v2002
        %v3130 = vadd.f32 %v1834, %v2002
        %v3131 = vadd.f32 %v1835, %v2002
        %v3132 = vadd.f32 %v1836, %v2002
        %v3133 = vadd.f32 %v1837, %v2002
        %v3134 = vadd.f32 %v1838, %v2002
        %v3135 = vadd.f32 %v1839, %v2002
        %v3136 = vadd.f32 %v1840, %v2002
        %v3137 = vadd.f32 %v1841, %v2002
        %v3138 = vadd.f32 %v1842, %v2002
        %v3139 = vadd.f32 %v1843, %v2002
        %v3140 = vadd.f32 %v1844, %v2002
        %v3141 = vadd.f32 %v1845, %v2002
        %v3142 = vadd.f32 %v1846, %v2002
        %v3143 = vadd.f32 %v1847, %v2002
        %v3144 = vadd.f32 %v1848, %v2002
        %v3145 = vadd.f32 %v1849, %v2002
        %v3146 = vadd.f32 %v1850, %v2002
        %v3147 = vadd.f32 %v1851, %v2002
        %v3148 = vadd.f32 %v1852, %v2002
        %v3149 = vadd.f32 %v1853, %v2002
        %v3150 = vadd.f32 %v1854, %v2002
        %v3151 = vadd.f32 %v1855, %v2002
        %v3152 = vadd.f32 %v1856, %v2002
        %v3153 = vadd.f32 %v1857, %v2002
        %v3154 = vadd.f32 %v1858, %v2002
        %v3155 = vadd.f32 %v1859, %v2002
        %v3156 = vadd.f32 %v1860, %v2002
        %v3157 = vadd.f32 %v1861, %v2002
        %v3158 = vadd.f32 %v1862, %v2002
        %v3159 = vadd.f32 %v1863, %v2002
        %v3160 = vadd.f32 %v1864, %v2002
        %v3161 = vadd.f32 %v1865, %v2002
        %v3162 = vadd.f32 %v1866, %v2002
        %v3163 = vadd.f32 %v1867, %v2002
        %v3164 = vadd.f32 %v1868, %v2002
        %v3165 = vadd.f32 %v1869, %v2002
        %v3166 = vadd.f32 %v1870, %v2002
        %v3167 = vadd.f32 %v1871, %v2002
        %v3168 = vadd.f32 %v1872, %v2002
        %v3169 = vadd.f32 %v1873, %v2002
        %v3170 = vadd.f32 %v1874, %v2002
        %v3171 = vadd.f32 %v1875, %v2002
        %v3172 = vadd.f32 %v1876, %v2002
        %v3173 = vadd.f32 %v1877, %v2002
        %v3174 = vadd.f32 %v1878, %v2002
        %v3175 = vadd.f32 %v1879, %v2002
        %v3176 = vadd.f32 %v1880, %v2002
        %v3177 = vadd.f32 %v1881, %v2002
        %v3178 = vadd.f32 %v1882, %v2002
        %v3179 = vadd.f32 %v1883, %v2002
        %v3180 = vadd.f32 %v1884, %v2002
        %v3181 = vadd.f32 %v1885, %v2002
        %v3182 = vadd.f32 %v1886, %v2002
        %v3183 = vadd.f32 %v1887, %v2002
        %v3184 = vadd.f32 %v1888, %v2002
        %v3185 = vadd.f32 %v1889, %v2002
        %v3186 = vadd.f32 %v1890, %v2002
        %v3187 = vadd.f32 %v1891, %v2002
        %v3188 = vadd.f32 %v1892, %v2002
        %v3189 = vadd.f32 %v1893, %v2002
        %v3190 = vadd.f32 %v1894, %v2002
        %v3191 = vadd.f32 %v1895, %v2002
        %v3192 = vadd.f32 %v1896, %v2002
        %v3193 = vadd.f32 %v1897, %v2002
        %v3194 = vadd.f32 %v1898, %v2002
        %v3195 = vadd.f32 %v1899, %v2002
        %v3196 = vadd.f32 %v1900, %v2002
        %v3197 = vadd.f32 %v1901, %v2002
        %v3198 = vadd.f32 %v1902, %v2002
        %v3199 = vadd.f32 %v1903, %v2002
        %v3200 = vadd.f32 %v1904, %v2002
        %v3201 = vadd.f32 %v1905, %v2002
        %v3202 = vadd.f32 %v1906, %v2002
        %v3203 = vadd.f32 %v1907, %v2002
        %3204 = vst [vmem:[%s201] sm:$0xff] %v2004
        %3205 = vst [vmem:[%s201 + $0x8] sm:$0xff] %v2005
        %3206 = vst [vmem:[%s201 + $0x10] sm:$0xff] %v2006
        %3207 = vst [vmem:[%s201 + $0x18] sm:$0xff] %v2007
        %3208 = vst [vmem:[%s201 + $0x20] sm:$0xff] %v2008
        %3209 = vst [vmem:[%s201 + $0x28] sm:$0xff] %v2009
        %3210 = vst [vmem:[%s201 + $0x30] sm:$0xff] %v2010
        %3211 = vst [vmem:[%s201 + $0x38] sm:$0xff] %v2011
        %3212 = vst [vmem:[%s201 + $0x40] sm:$0xff] %v2012
        %3213 = vst [vmem:[%s201 + $0x48] sm:$0xff] %v2013
        %3214 = vst [vmem:[%s201 + $0x50] sm:$0xff] %v2014
        %3215 = vst [vmem:[%s201 + $0x58] sm:$0xff] %v2015
        %3216 = vst [vmem:[%s201 + $0x60] sm:$0xff] %v2016
        %3217 = vst [vmem:[%s201 + $0x68] sm:$0xff] %v2017
        %3218 = vst [vmem:[%s201 + $0x70] sm:$0xff] %v2018
        %3219 = vst [vmem:[%s201 + $0x78] sm:$0xff] %v2019
        %3220 = vst [vmem:[%s201 + $0x80] sm:$0xff] %v2020
        %3221 = vst [vmem:[%s201 + $0x88] sm:$0xff] %v2021
        %3222 = vst [vmem:[%s201 + $0x90] sm:$0xff] %v2022
        %3223 = vst [vmem:[%s201 + $0x98] sm:$0xff] %v2023
        %3224 = vst [vmem:[%s201 + $0xa0] sm:$0xff] %v2024
        %3225 = vst [vmem:[%s201 + $0xa8] sm:$0xff] %v2025
        %3226 = vst [vmem:[%s201 + $0xb0] sm:$0xff] %v2026
        %3227 = vst [vmem:[%s201 + $0xb8] sm:$0xff] %v2027
        %3228 = vst [vmem:[%s201 + $0xc0] sm:$0xff] %v2028
        %3229 = vst [vmem:[%s201 + $0xc8] sm:$0xff] %v2029
        %3230 = vst [vmem:[%s201 + $0xd0] sm:$0xff] %v2030
        %3231 = vst [vmem:[%s201 + $0xd8] sm:$0xff] %v2031
        %3232 = vst [vmem:[%s201 + $0xe0] sm:$0xff] %v2032
        %3233 = vst [vmem:[%s201 + $0xe8] sm:$0xff] %v2033
        %3234 = vst [vmem:[%s201 + $0xf0] sm:$0xff] %v2034
        %3235 = vst [vmem:[%s201 + $0xf8] sm:$0xff] %v2035
        %3236 = vst [vmem:[%s201 + $0x100] sm:$0xff] %v2036
        %3237 = vst [vmem:[%s201 + $0x108] sm:$0xff] %v2037
        %3238 = vst [vmem:[%s201 + $0x110] sm:$0xff] %v2038
        %3239 = vst [vmem:[%s201 + $0x118] sm:$0xff] %v2039
        %3240 = vst [vmem:[%s201 + $0x120] sm:$0xff] %v2040
        %3241 = vst [vmem:[%s201 + $0x128] sm:$0xff] %v2041
        %3242 = vst [vmem:[%s201 + $0x130] sm:$0xff] %v2042
        %3243 = vst [vmem:[%s201 + $0x138] sm:$0xff] %v2043
        %3244 = vst [vmem:[%s201 + $0x140] sm:$0xff] %v2044
        %3245 = vst [vmem:[%s201 + $0x148] sm:$0xff] %v2045
        %3246 = vst [vmem:[%s201 + $0x150] sm:$0xff] %v2046
        %3247 = vst [vmem:[%s201 + $0x158] sm:$0xff] %v2047
        %3248 = vst [vmem:[%s201 + $0x160] sm:$0xff] %v2048
        %3249 = vst [vmem:[%s201 + $0x168] sm:$0xff] %v2049
        %3250 = vst [vmem:[%s201 + $0x170] sm:$0xff] %v2050
        %3251 = vst [vmem:[%s201 + $0x178] sm:$0xff] %v2051
        %3252 = vst [vmem:[%s201 + $0x180] sm:$0xff] %v2052
        %3253 = vst [vmem:[%s201 + $0x188] sm:$0xff] %v2053
        %3254 = vst [vmem:[%s201 + $0x190] sm:$0xff] %v2054
        %3255 = vst [vmem:[%s201 + $0x198] sm:$0xff] %v2055
        %3256 = vst [vmem:[%s201 + $0x1a0] sm:$0xff] %v2056
        %3257 = vst [vmem:[%s201 + $0x1a8] sm:$0xff] %v2057
        %3258 = vst [vmem:[%s201 + $0x1b0] sm:$0xff] %v2058
        %3259 = vst [vmem:[%s201 + $0x1b8] sm:$0xff] %v2059
        %3260 = vst [vmem:[%s201 + $0x1c0] sm:$0xff] %v2060
        %3261 = vst [vmem:[%s201 + $0x1c8] sm:$0xff] %v2061
        %3262 = vst [vmem:[%s201 + $0x1d0] sm:$0xff] %v2062
        %3263 = vst [vmem:[%s201 + $0x1d8] sm:$0xff] %v2063
        %3264 = vst [vmem:[%s201 + $0x1e0] sm:$0xff] %v2064
        %3265 = vst [vmem:[%s201 + $0x1e8] sm:$0xff] %v2065
        %3266 = vst [vmem:[%s201 + $0x1f0] sm:$0xff] %v2066
        %3267 = vst [vmem:[%s201 + $0x1f8] sm:$0xff] %v2067
        %3268 = vst [vmem:[%s201 + $0x200] sm:$0xff] %v2068
        %3269 = vst [vmem:[%s201 + $0x208] sm:$0xff] %v2069
        %3270 = vst [vmem:[%s201 + $0x210] sm:$0xff] %v2070
        %3271 = vst [vmem:[%s201 + $0x218] sm:$0xff] %v2071
        %3272 = vst [vmem:[%s201 + $0x220] sm:$0xff] %v2072
        %3273 = vst [vmem:[%s201 + $0x228] sm:$0xff] %v2073
        %3274 = vst [vmem:[%s201 + $0x230] sm:$0xff] %v2074
        %3275 = vst [vmem:[%s201 + $0x238] sm:$0xff] %v2075
        %3276 = vst [vmem:[%s201 + $0x240] sm:$0xff] %v2076
        %3277 = vst [vmem:[%s201 + $0x248] sm:$0xff] %v2077
        %3278 = vst [vmem:[%s201 + $0x250] sm:$0xff] %v2078
        %3279 = vst [vmem:[%s201 + $0x258] sm:$0xff] %v2079
        %3280 = vst [vmem:[%s201 + $0x260] sm:$0xff] %v2080
        %3281 = vst [vmem:[%s201 + $0x268] sm:$0xff] %v2081
        %3282 = vst [vmem:[%s201 + $0x270] sm:$0xff] %v2082
        %3283 = vst [vmem:[%s201 + $0x278] sm:$0xff] %v2083
        %3284 = vst [vmem:[%s201 + $0x280] sm:$0xff] %v2084
        %3285 = vst [vmem:[%s201 + $0x288] sm:$0xff] %v2085
        %3286 = vst [vmem:[%s201 + $0x290] sm:$0xff] %v2086
        %3287 = vst [vmem:[%s201 + $0x298] sm:$0xff] %v2087
        %3288 = vst [vmem:[%s201 + $0x2a0] sm:$0xff] %v2088
        %3289 = vst [vmem:[%s201 + $0x2a8] sm:$0xff] %v2089
        %3290 = vst [vmem:[%s201 + $0x2b0] sm:$0xff] %v2090
        %3291 = vst [vmem:[%s201 + $0x2b8] sm:$0xff] %v2091
        %3292 = vst [vmem:[%s201 + $0x2c0] sm:$0xff] %v2092
        %3293 = vst [vmem:[%s201 + $0x2c8] sm:$0xff] %v2093
        %3294 = vst [vmem:[%s201 + $0x2d0] sm:$0xff] %v2094
        %3295 = vst [vmem:[%s201 + $0x2d8] sm:$0xff] %v2095
        %3296 = vst [vmem:[%s201 + $0x2e0] sm:$0xff] %v2096
        %3297 = vst [vmem:[%s201 + $0x2e8] sm:$0xff] %v2097
        %3298 = vst [vmem:[%s201 + $0x2f0] sm:$0xff] %v2098
        %3299 = vst [vmem:[%s201 + $0x2f8] sm:$0xff] %v2099
        %3300 = vst [vmem:[%s201 + $0x300] sm:$0xff] %v2100
        %3301 = vst [vmem:[%s201 + $0x308] sm:$0xff] %v2101
        %3302 = vst [vmem:[%s201 + $0x310] sm:$0xff] %v2102
        %3303 = vst [vmem:[%s201 + $0x318] sm:$0xff] %v2103
        %3304 = vst [vmem:[%s201 + $0x320] sm:$0xff] %v2104
        %3305 = vst [vmem:[%s201 + $0x328] sm:$0xff] %v2105
        %3306 = vst [vmem:[%s201 + $0x330] sm:$0xff] %v2106
        %3307 = vst [vmem:[%s201 + $0x338] sm:$0xff] %v2107
        %3308 = vst [vmem:[%s201 + $0x340] sm:$0xff] %v2108
        %3309 = vst [vmem:[%s201 + $0x348] sm:$0xff] %v2109
        %3310 = vst [vmem:[%s201 + $0x350] sm:$0xff] %v2110
        %3311 = vst [vmem:[%s201 + $0x358] sm:$0xff] %v2111
        %3312 = vst [vmem:[%s201 + $0x360] sm:$0xff] %v2112
        %3313 = vst [vmem:[%s201 + $0x368] sm:$0xff] %v2113
        %3314 = vst [vmem:[%s201 + $0x370] sm:$0xff] %v2114
        %3315 = vst [vmem:[%s201 + $0x378] sm:$0xff] %v2115
        %3316 = vst [vmem:[%s201 + $0x380] sm:$0xff] %v2116
        %3317 = vst [vmem:[%s201 + $0x388] sm:$0xff] %v2117
        %3318 = vst [vmem:[%s201 + $0x390] sm:$0xff] %v2118
        %3319 = vst [vmem:[%s201 + $0x398] sm:$0xff] %v2119
        %3320 = vst [vmem:[%s201 + $0x3a0] sm:$0xff] %v2120
        %3321 = vst [vmem:[%s201 + $0x3a8] sm:$0xff] %v2121
        %3322 = vst [vmem:[%s201 + $0x3b0] sm:$0xff] %v2122
        %3323 = vst [vmem:[%s201 + $0x3b8] sm:$0xff] %v2123
        %3324 = vst [vmem:[%s201 + $0x3c0] sm:$0xff] %v2124
        %3325 = vst [vmem:[%s201 + $0x3c8] sm:$0xff] %v2125
        %3326 = vst [vmem:[%s201 + $0x3d0] sm:$0xff] %v2126
        %3327 = vst [vmem:[%s201 + $0x3d8] sm:$0xff] %v2127
        %3328 = vst [vmem:[%s201 + $0x3e0] sm:$0xff] %v2128
        %3329 = vst [vmem:[%s201 + $0x3e8] sm:$0xff] %v2129
        %3330 = vst [vmem:[%s201 + $0x3f0] sm:$0xff] %v2130
        %3331 = vst [vmem:[%s201 + $0x3f8] sm:$0xff] %v2131
        %3332 = vst [vmem:[%s201 + $0x400] sm:$0xff] %v2132
        %3333 = vst [vmem:[%s201 + $0x408] sm:$0xff] %v2133
        %3334 = vst [vmem:[%s201 + $0x410] sm:$0xff] %v2134
        %3335 = vst [vmem:[%s201 + $0x418] sm:$0xff] %v2135
        %3336 = vst [vmem:[%s201 + $0x420] sm:$0xff] %v2136
        %3337 = vst [vmem:[%s201 + $0x428] sm:$0xff] %v2137
        %3338 = vst [vmem:[%s201 + $0x430] sm:$0xff] %v2138
        %3339 = vst [vmem:[%s201 + $0x438] sm:$0xff] %v2139
        %3340 = vst [vmem:[%s201 + $0x440] sm:$0xff] %v2140
        %3341 = vst [vmem:[%s201 + $0x448] sm:$0xff] %v2141
        %3342 = vst [vmem:[%s201 + $0x450] sm:$0xff] %v2142
        %3343 = vst [vmem:[%s201 + $0x458] sm:$0xff] %v2143
        %3344 = vst [vmem:[%s201 + $0x460] sm:$0xff] %v2144
        %3345 = vst [vmem:[%s201 + $0x468] sm:$0xff] %v2145
        %3346 = vst [vmem:[%s201 + $0x470] sm:$0xff] %v2146
        %3347 = vst [vmem:[%s201 + $0x478] sm:$0xff] %v2147
        %3348 = vst [vmem:[%s201 + $0x480] sm:$0xff] %v2148
        %3349 = vst [vmem:[%s201 + $0x488] sm:$0xff] %v2149
        %3350 = vst [vmem:[%s201 + $0x490] sm:$0xff] %v2150
        %3351 = vst [vmem:[%s201 + $0x498] sm:$0xff] %v2151
        %3352 = vst [vmem:[%s201 + $0x4a0] sm:$0xff] %v2152
        %3353 = vst [vmem:[%s201 + $0x4a8] sm:$0xff] %v2153
        %3354 = vst [vmem:[%s201 + $0x4b0] sm:$0xff] %v2154
        %3355 = vst [vmem:[%s201 + $0x4b8] sm:$0xff] %v2155
        %3356 = vst [vmem:[%s201 + $0x4c0] sm:$0xff] %v2156
        %3357 = vst [vmem:[%s201 + $0x4c8] sm:$0xff] %v2157
        %3358 = vst [vmem:[%s201 + $0x4d0] sm:$0xff] %v2158
        %3359 = vst [vmem:[%s201 + $0x4d8] sm:$0xff] %v2159
        %3360 = vst [vmem:[%s201 + $0x4e0] sm:$0xff] %v2160
        %3361 = vst [vmem:[%s201 + $0x4e8] sm:$0xff] %v2161
        %3362 = vst [vmem:[%s201 + $0x4f0] sm:$0xff] %v2162
        %3363 = vst [vmem:[%s201 + $0x4f8] sm:$0xff] %v2163
        %3364 = vst [vmem:[%s201 + $0x500] sm:$0xff] %v2164
        %3365 = vst [vmem:[%s201 + $0x508] sm:$0xff] %v2165
        %3366 = vst [vmem:[%s201 + $0x510] sm:$0xff] %v2166
        %3367 = vst [vmem:[%s201 + $0x518] sm:$0xff] %v2167
        %3368 = vst [vmem:[%s201 + $0x520] sm:$0xff] %v2168
        %3369 = vst [vmem:[%s201 + $0x528] sm:$0xff] %v2169
        %3370 = vst [vmem:[%s201 + $0x530] sm:$0xff] %v2170
        %3371 = vst [vmem:[%s201 + $0x538] sm:$0xff] %v2171
        %3372 = vst [vmem:[%s201 + $0x540] sm:$0xff] %v2172
        %3373 = vst [vmem:[%s201 + $0x548] sm:$0xff] %v2173
        %3374 = vst [vmem:[%s201 + $0x550] sm:$0xff] %v2174
        %3375 = vst [vmem:[%s201 + $0x558] sm:$0xff] %v2175
        %3376 = vst [vmem:[%s201 + $0x560] sm:$0xff] %v2176
        %3377 = vst [vmem:[%s201 + $0x568] sm:$0xff] %v2177
        %3378 = vst [vmem:[%s201 + $0x570] sm:$0xff] %v2178
        %3379 = vst [vmem:[%s201 + $0x578] sm:$0xff] %v2179
        %3380 = vst [vmem:[%s201 + $0x580] sm:$0xff] %v2180
        %3381 = vst [vmem:[%s201 + $0x588] sm:$0xff] %v2181
        %3382 = vst [vmem:[%s201 + $0x590] sm:$0xff] %v2182
        %3383 = vst [vmem:[%s201 + $0x598] sm:$0xff] %v2183
        %3384 = vst [vmem:[%s201 + $0x5a0] sm:$0xff] %v2184
        %3385 = vst [vmem:[%s201 + $0x5a8] sm:$0xff] %v2185
        %3386 = vst [vmem:[%s201 + $0x5b0] sm:$0xff] %v2186
        %3387 = vst [vmem:[%s201 + $0x5b8] sm:$0xff] %v2187
        %3388 = vst [vmem:[%s201 + $0x5c0] sm:$0xff] %v2188
        %3389 = vst [vmem:[%s201 + $0x5c8] sm:$0xff] %v2189
        %3390 = vst [vmem:[%s201 + $0x5d0] sm:$0xff] %v2190
        %3391 = vst [vmem:[%s201 + $0x5d8] sm:$0xff] %v2191
        %3392 = vst [vmem:[%s201 + $0x5e0] sm:$0xff] %v2192
        %3393 = vst [vmem:[%s201 + $0x5e8] sm:$0xff] %v2193
        %3394 = vst [vmem:[%s201 + $0x5f0] sm:$0xff] %v2194
        %3395 = vst [vmem:[%s201 + $0x5f8] sm:$0xff] %v2195
        %3396 = vst [vmem:[%s201 + $0x600] sm:$0xff] %v2196
        %3397 = vst [vmem:[%s201 + $0x608] sm:$0xff] %v2197
        %3398 = vst [vmem:[%s201 + $0x610] sm:$0xff] %v2198
        %3399 = vst [vmem:[%s201 + $0x618] sm:$0xff] %v2199
        %3400 = vst [vmem:[%s201 + $0x620] sm:$0xff] %v2200
        %3401 = vst [vmem:[%s201 + $0x628] sm:$0xff] %v2201
        %3402 = vst [vmem:[%s201 + $0x630] sm:$0xff] %v2202
        %3403 = vst [vmem:[%s201 + $0x638] sm:$0xff] %v2203
        %3404 = vst [vmem:[%s201 + $0x640] sm:$0xff] %v2204
        %3405 = vst [vmem:[%s201 + $0x648] sm:$0xff] %v2205
        %3406 = vst [vmem:[%s201 + $0x650] sm:$0xff] %v2206
        %3407 = vst [vmem:[%s201 + $0x658] sm:$0xff] %v2207
        %3408 = vst [vmem:[%s201 + $0x660] sm:$0xff] %v2208
        %3409 = vst [vmem:[%s201 + $0x668] sm:$0xff] %v2209
        %3410 = vst [vmem:[%s201 + $0x670] sm:$0xff] %v2210
        %3411 = vst [vmem:[%s201 + $0x678] sm:$0xff] %v2211
        %3412 = vst [vmem:[%s201 + $0x680] sm:$0xff] %v2212
        %3413 = vst [vmem:[%s201 + $0x688] sm:$0xff] %v2213
        %3414 = vst [vmem:[%s201 + $0x690] sm:$0xff] %v2214
        %3415 = vst [vmem:[%s201 + $0x698] sm:$0xff] %v2215
        %3416 = vst [vmem:[%s201 + $0x6a0] sm:$0xff] %v2216
        %3417 = vst [vmem:[%s201 + $0x6a8] sm:$0xff] %v2217
        %3418 = vst [vmem:[%s201 + $0x6b0] sm:$0xff] %v2218
        %3419 = vst [vmem:[%s201 + $0x6b8] sm:$0xff] %v2219
        %3420 = vst [vmem:[%s201 + $0x6c0] sm:$0xff] %v2220
        %3421 = vst [vmem:[%s201 + $0x6c8] sm:$0xff] %v2221
        %3422 = vst [vmem:[%s201 + $0x6d0] sm:$0xff] %v2222
        %3423 = vst [vmem:[%s201 + $0x6d8] sm:$0xff] %v2223
        %3424 = vst [vmem:[%s201 + $0x6e0] sm:$0xff] %v2224
        %3425 = vst [vmem:[%s201 + $0x6e8] sm:$0xff] %v2225
        %3426 = vst [vmem:[%s201 + $0x6f0] sm:$0xff] %v2226
        %3427 = vst [vmem:[%s201 + $0x6f8] sm:$0xff] %v2227
        %3428 = vst [vmem:[%s201 + $0x700] sm:$0xff] %v2228
        %3429 = vst [vmem:[%s201 + $0x708] sm:$0xff] %v2229
        %3430 = vst [vmem:[%s201 + $0x710] sm:$0xff] %v2230
        %3431 = vst [vmem:[%s201 + $0x718] sm:$0xff] %v2231
        %3432 = vst [vmem:[%s201 + $0x720] sm:$0xff] %v2232
        %3433 = vst [vmem:[%s201 + $0x728] sm:$0xff] %v2233
        %3434 = vst [vmem:[%s201 + $0x730] sm:$0xff] %v2234
        %3435 = vst [vmem:[%s201 + $0x738] sm:$0xff] %v2235
        %3436 = vst [vmem:[%s201 + $0x740] sm:$0xff] %v2236
        %3437 = vst [vmem:[%s201 + $0x748] sm:$0xff] %v2237
        %3438 = vst [vmem:[%s201 + $0x750] sm:$0xff] %v2238
        %3439 = vst [vmem:[%s201 + $0x758] sm:$0xff] %v2239
        %3440 = vst [vmem:[%s201 + $0x760] sm:$0xff] %v2240
        %3441 = vst [vmem:[%s201 + $0x768] sm:$0xff] %v2241
        %3442 = vst [vmem:[%s201 + $0x770] sm:$0xff] %v2242
        %3443 = vst [vmem:[%s201 + $0x778] sm:$0xff] %v2243
        %3444 = vst [vmem:[%s201 + $0x780] sm:$0xff] %v2244
        %3445 = vst [vmem:[%s201 + $0x788] sm:$0xff] %v2245
        %3446 = vst [vmem:[%s201 + $0x790] sm:$0xff] %v2246
        %3447 = vst [vmem:[%s201 + $0x798] sm:$0xff] %v2247
        %3448 = vst [vmem:[%s201 + $0x7a0] sm:$0xff] %v2248
        %3449 = vst [vmem:[%s201 + $0x7a8] sm:$0xff] %v2249
        %3450 = vst [vmem:[%s201 + $0x7b0] sm:$0xff] %v2250
        %3451 = vst [vmem:[%s201 + $0x7b8] sm:$0xff] %v2251
        %3452 = vst [vmem:[%s201 + $0x7c0] sm:$0xff] %v2252
        %3453 = vst [vmem:[%s201 + $0x7c8] sm:$0xff] %v2253
        %3454 = vst [vmem:[%s201 + $0x7d0] sm:$0xff] %v2254
        %3455 = vst [vmem:[%s201 + $0x7d8] sm:$0xff] %v2255
        %3456 = vst [vmem:[%s201 + $0x7e0] sm:$0xff] %v2256
        %3457 = vst [vmem:[%s201 + $0x7e8] sm:$0xff] %v2257
        %3458 = vst [vmem:[%s201 + $0x7f0] sm:$0xff] %v2258
        %3459 = vst [vmem:[%s201 + $0x7f8] sm:$0xff] %v2259
        %3460 = vst [vmem:[%s201 + $0x800] sm:$0xff] %v2260
        %3461 = vst [vmem:[%s201 + $0x808] sm:$0xff] %v2261
        %3462 = vst [vmem:[%s201 + $0x810] sm:$0xff] %v2262
        %3463 = vst [vmem:[%s201 + $0x818] sm:$0xff] %v2263
        %3464 = vst [vmem:[%s201 + $0x820] sm:$0xff] %v2264
        %3465 = vst [vmem:[%s201 + $0x828] sm:$0xff] %v2265
        %3466 = vst [vmem:[%s201 + $0x830] sm:$0xff] %v2266
        %3467 = vst [vmem:[%s201 + $0x838] sm:$0xff] %v2267
        %3468 = vst [vmem:[%s201 + $0x840] sm:$0xff] %v2268
        %3469 = vst [vmem:[%s201 + $0x848] sm:$0xff] %v2269
        %3470 = vst [vmem:[%s201 + $0x850] sm:$0xff] %v2270
        %3471 = vst [vmem:[%s201 + $0x858] sm:$0xff] %v2271
        %3472 = vst [vmem:[%s201 + $0x860] sm:$0xff] %v2272
        %3473 = vst [vmem:[%s201 + $0x868] sm:$0xff] %v2273
        %3474 = vst [vmem:[%s201 + $0x870] sm:$0xff] %v2274
        %3475 = vst [vmem:[%s201 + $0x878] sm:$0xff] %v2275
        %3476 = vst [vmem:[%s201 + $0x880] sm:$0xff] %v2276
        %3477 = vst [vmem:[%s201 + $0x888] sm:$0xff] %v2277
        %3478 = vst [vmem:[%s201 + $0x890] sm:$0xff] %v2278
        %3479 = vst [vmem:[%s201 + $0x898] sm:$0xff] %v2279
        %3480 = vst [vmem:[%s201 + $0x8a0] sm:$0xff] %v2280
        %3481 = vst [vmem:[%s201 + $0x8a8] sm:$0xff] %v2281
        %3482 = vst [vmem:[%s201 + $0x8b0] sm:$0xff] %v2282
        %3483 = vst [vmem:[%s201 + $0x8b8] sm:$0xff] %v2283
        %3484 = vst [vmem:[%s201 + $0x8c0] sm:$0xff] %v2284
        %3485 = vst [vmem:[%s201 + $0x8c8] sm:$0xff] %v2285
        %3486 = vst [vmem:[%s201 + $0x8d0] sm:$0xff] %v2286
        %3487 = vst [vmem:[%s201 + $0x8d8] sm:$0xff] %v2287
        %3488 = vst [vmem:[%s201 + $0x8e0] sm:$0xff] %v2288
        %3489 = vst [vmem:[%s201 + $0x8e8] sm:$0xff] %v2289
        %3490 = vst [vmem:[%s201 + $0x8f0] sm:$0xff] %v2290
        %3491 = vst [vmem:[%s201 + $0x8f8] sm:$0xff] %v2291
        %3492 = vst [vmem:[%s201 + $0x900] sm:$0xff] %v2292
        %3493 = vst [vmem:[%s201 + $0x908] sm:$0xff] %v2293
        %3494 = vst [vmem:[%s201 + $0x910] sm:$0xff] %v2294
        %3495 = vst [vmem:[%s201 + $0x918] sm:$0xff] %v2295
        %3496 = vst [vmem:[%s201 + $0x920] sm:$0xff] %v2296
        %3497 = vst [vmem:[%s201 + $0x928] sm:$0xff] %v2297
        %3498 = vst [vmem:[%s201 + $0x930] sm:$0xff] %v2298
        %3499 = vst [vmem:[%s201 + $0x938] sm:$0xff] %v2299
        %3500 = vst [vmem:[%s201 + $0x940] sm:$0xff] %v2300
        %3501 = vst [vmem:[%s201 + $0x948] sm:$0xff] %v2301
        %3502 = vst [vmem:[%s201 + $0x950] sm:$0xff] %v2302
        %3503 = vst [vmem:[%s201 + $0x958] sm:$0xff] %v2303
        %3504 = vst [vmem:[%s201 + $0x960] sm:$0xff] %v2304
        %3505 = vst [vmem:[%s201 + $0x968] sm:$0xff] %v2305
        %3506 = vst [vmem:[%s201 + $0x970] sm:$0xff] %v2306
        %3507 = vst [vmem:[%s201 + $0x978] sm:$0xff] %v2307
        %3508 = vst [vmem:[%s201 + $0x980] sm:$0xff] %v2308
        %3509 = vst [vmem:[%s201 + $0x988] sm:$0xff] %v2309
        %3510 = vst [vmem:[%s201 + $0x990] sm:$0xff] %v2310
        %3511 = vst [vmem:[%s201 + $0x998] sm:$0xff] %v2311
        %3512 = vst [vmem:[%s201 + $0x9a0] sm:$0xff] %v2312
        %3513 = vst [vmem:[%s201 + $0x9a8] sm:$0xff] %v2313
        %3514 = vst [vmem:[%s201 + $0x9b0] sm:$0xff] %v2314
        %3515 = vst [vmem:[%s201 + $0x9b8] sm:$0xff] %v2315
        %3516 = vst [vmem:[%s201 + $0x9c0] sm:$0xff] %v2316
        %3517 = vst [vmem:[%s201 + $0x9c8] sm:$0xff] %v2317
        %3518 = vst [vmem:[%s201 + $0x9d0] sm:$0xff] %v2318
        %3519 = vst [vmem:[%s201 + $0x9d8] sm:$0xff] %v2319
        %3520 = vst [vmem:[%s201 + $0x9e0] sm:$0xff] %v2320
        %3521 = vst [vmem:[%s201 + $0x9e8] sm:$0xff] %v2321
        %3522 = vst [vmem:[%s201 + $0x9f0] sm:$0xff] %v2322
        %3523 = vst [vmem:[%s201 + $0x9f8] sm:$0xff] %v2323
        %3524 = vst [vmem:[%s201 + $0xa00] sm:$0xff] %v2324
        %3525 = vst [vmem:[%s201 + $0xa08] sm:$0xff] %v2325
        %3526 = vst [vmem:[%s201 + $0xa10] sm:$0xff] %v2326
        %3527 = vst [vmem:[%s201 + $0xa18] sm:$0xff] %v2327
        %3528 = vst [vmem:[%s201 + $0xa20] sm:$0xff] %v2328
        %3529 = vst [vmem:[%s201 + $0xa28] sm:$0xff] %v2329
        %3530 = vst [vmem:[%s201 + $0xa30] sm:$0xff] %v2330
        %3531 = vst [vmem:[%s201 + $0xa38] sm:$0xff] %v2331
        %3532 = vst [vmem:[%s201 + $0xa40] sm:$0xff] %v2332
        %3533 = vst [vmem:[%s201 + $0xa48] sm:$0xff] %v2333
        %3534 = vst [vmem:[%s201 + $0xa50] sm:$0xff] %v2334
        %3535 = vst [vmem:[%s201 + $0xa58] sm:$0xff] %v2335
        %3536 = vst [vmem:[%s201 + $0xa60] sm:$0xff] %v2336
        %3537 = vst [vmem:[%s201 + $0xa68] sm:$0xff] %v2337
        %3538 = vst [vmem:[%s201 + $0xa70] sm:$0xff] %v2338
        %3539 = vst [vmem:[%s201 + $0xa78] sm:$0xff] %v2339
        %3540 = vst [vmem:[%s201 + $0xa80] sm:$0xff] %v2340
        %3541 = vst [vmem:[%s201 + $0xa88] sm:$0xff] %v2341
        %3542 = vst [vmem:[%s201 + $0xa90] sm:$0xff] %v2342
        %3543 = vst [vmem:[%s201 + $0xa98] sm:$0xff] %v2343
        %3544 = vst [vmem:[%s201 + $0xaa0] sm:$0xff] %v2344
        %3545 = vst [vmem:[%s201 + $0xaa8] sm:$0xff] %v2345
        %3546 = vst [vmem:[%s201 + $0xab0] sm:$0xff] %v2346
        %3547 = vst [vmem:[%s201 + $0xab8] sm:$0xff] %v2347
        %3548 = vst [vmem:[%s201 + $0xac0] sm:$0xff] %v2348
        %3549 = vst [vmem:[%s201 + $0xac8] sm:$0xff] %v2349
        %3550 = vst [vmem:[%s201 + $0xad0] sm:$0xff] %v2350
        %3551 = vst [vmem:[%s201 + $0xad8] sm:$0xff] %v2351
        %3552 = vst [vmem:[%s201 + $0xae0] sm:$0xff] %v2352
        %3553 = vst [vmem:[%s201 + $0xae8] sm:$0xff] %v2353
        %3554 = vst [vmem:[%s201 + $0xaf0] sm:$0xff] %v2354
        %3555 = vst [vmem:[%s201 + $0xaf8] sm:$0xff] %v2355
        %3556 = vst [vmem:[%s201 + $0xb00] sm:$0xff] %v2356
        %3557 = vst [vmem:[%s201 + $0xb08] sm:$0xff] %v2357
        %3558 = vst [vmem:[%s201 + $0xb10] sm:$0xff] %v2358
        %3559 = vst [vmem:[%s201 + $0xb18] sm:$0xff] %v2359
        %3560 = vst [vmem:[%s201 + $0xb20] sm:$0xff] %v2360
        %3561 = vst [vmem:[%s201 + $0xb28] sm:$0xff] %v2361
        %3562 = vst [vmem:[%s201 + $0xb30] sm:$0xff] %v2362
        %3563 = vst [vmem:[%s201 + $0xb38] sm:$0xff] %v2363
        %3564 = vst [vmem:[%s201 + $0xb40] sm:$0xff] %v2364
        %3565 = vst [vmem:[%s201 + $0xb48] sm:$0xff] %v2365
        %3566 = vst [vmem:[%s201 + $0xb50] sm:$0xff] %v2366
        %3567 = vst [vmem:[%s201 + $0xb58] sm:$0xff] %v2367
        %3568 = vst [vmem:[%s201 + $0xb60] sm:$0xff] %v2368
        %3569 = vst [vmem:[%s201 + $0xb68] sm:$0xff] %v2369
        %3570 = vst [vmem:[%s201 + $0xb70] sm:$0xff] %v2370
        %3571 = vst [vmem:[%s201 + $0xb78] sm:$0xff] %v2371
        %3572 = vst [vmem:[%s201 + $0xb80] sm:$0xff] %v2372
        %3573 = vst [vmem:[%s201 + $0xb88] sm:$0xff] %v2373
        %3574 = vst [vmem:[%s201 + $0xb90] sm:$0xff] %v2374
        %3575 = vst [vmem:[%s201 + $0xb98] sm:$0xff] %v2375
        %3576 = vst [vmem:[%s201 + $0xba0] sm:$0xff] %v2376
        %3577 = vst [vmem:[%s201 + $0xba8] sm:$0xff] %v2377
        %3578 = vst [vmem:[%s201 + $0xbb0] sm:$0xff] %v2378
        %3579 = vst [vmem:[%s201 + $0xbb8] sm:$0xff] %v2379
        %3580 = vst [vmem:[%s201 + $0xbc0] sm:$0xff] %v2380
        %3581 = vst [vmem:[%s201 + $0xbc8] sm:$0xff] %v2381
        %3582 = vst [vmem:[%s201 + $0xbd0] sm:$0xff] %v2382
        %3583 = vst [vmem:[%s201 + $0xbd8] sm:$0xff] %v2383
        %3584 = vst [vmem:[%s201 + $0xbe0] sm:$0xff] %v2384
        %3585 = vst [vmem:[%s201 + $0xbe8] sm:$0xff] %v2385
        %3586 = vst [vmem:[%s201 + $0xbf0] sm:$0xff] %v2386
        %3587 = vst [vmem:[%s201 + $0xbf8] sm:$0xff] %v2387
        %3588 = vst [vmem:[%s201 + $0xc00] sm:$0xff] %v2388
        %3589 = vst [vmem:[%s201 + $0xc08] sm:$0xff] %v2389
        %3590 = vst [vmem:[%s201 + $0xc10] sm:$0xff] %v2390
        %3591 = vst [vmem:[%s201 + $0xc18] sm:$0xff] %v2391
        %3592 = vst [vmem:[%s201 + $0xc20] sm:$0xff] %v2392
        %3593 = vst [vmem:[%s201 + $0xc28] sm:$0xff] %v2393
        %3594 = vst [vmem:[%s201 + $0xc30] sm:$0xff] %v2394
        %3595 = vst [vmem:[%s201 + $0xc38] sm:$0xff] %v2395
        %3596 = vst [vmem:[%s201 + $0xc40] sm:$0xff] %v2396
        %3597 = vst [vmem:[%s201 + $0xc48] sm:$0xff] %v2397
        %3598 = vst [vmem:[%s201 + $0xc50] sm:$0xff] %v2398
        %3599 = vst [vmem:[%s201 + $0xc58] sm:$0xff] %v2399
        %3600 = vst [vmem:[%s201 + $0xc60] sm:$0xff] %v2400
        %3601 = vst [vmem:[%s201 + $0xc68] sm:$0xff] %v2401
        %3602 = vst [vmem:[%s201 + $0xc70] sm:$0xff] %v2402
        %3603 = vst [vmem:[%s201 + $0xc78] sm:$0xff] %v2403
        %3604 = vst [vmem:[%s201 + $0xc80] sm:$0xff] %v2404
        %3605 = vst [vmem:[%s201 + $0xc88] sm:$0xff] %v2405
        %3606 = vst [vmem:[%s201 + $0xc90] sm:$0xff] %v2406
        %3607 = vst [vmem:[%s201 + $0xc98] sm:$0xff] %v2407
        %3608 = vst [vmem:[%s201 + $0xca0] sm:$0xff] %v2408
        %3609 = vst [vmem:[%s201 + $0xca8] sm:$0xff] %v2409
        %3610 = vst [vmem:[%s201 + $0xcb0] sm:$0xff] %v2410
        %3611 = vst [vmem:[%s201 + $0xcb8] sm:$0xff] %v2411
        %3612 = vst [vmem:[%s201 + $0xcc0] sm:$0xff] %v2412
        %3613 = vst [vmem:[%s201 + $0xcc8] sm:$0xff] %v2413
        %3614 = vst [vmem:[%s201 + $0xcd0] sm:$0xff] %v2414
        %3615 = vst [vmem:[%s201 + $0xcd8] sm:$0xff] %v2415
        %3616 = vst [vmem:[%s201 + $0xce0] sm:$0xff] %v2416
        %3617 = vst [vmem:[%s201 + $0xce8] sm:$0xff] %v2417
        %3618 = vst [vmem:[%s201 + $0xcf0] sm:$0xff] %v2418
        %3619 = vst [vmem:[%s201 + $0xcf8] sm:$0xff] %v2419
        %3620 = vst [vmem:[%s201 + $0xd00] sm:$0xff] %v2420
        %3621 = vst [vmem:[%s201 + $0xd08] sm:$0xff] %v2421
        %3622 = vst [vmem:[%s201 + $0xd10] sm:$0xff] %v2422
        %3623 = vst [vmem:[%s201 + $0xd18] sm:$0xff] %v2423
        %3624 = vst [vmem:[%s201 + $0xd20] sm:$0xff] %v2424
        %3625 = vst [vmem:[%s201 + $0xd28] sm:$0xff] %v2425
        %3626 = vst [vmem:[%s201 + $0xd30] sm:$0xff] %v2426
        %3627 = vst [vmem:[%s201 + $0xd38] sm:$0xff] %v2427
        %3628 = vst [vmem:[%s201 + $0xd40] sm:$0xff] %v2428
        %3629 = vst [vmem:[%s201 + $0xd48] sm:$0xff] %v2429
        %3630 = vst [vmem:[%s201 + $0xd50] sm:$0xff] %v2430
        %3631 = vst [vmem:[%s201 + $0xd58] sm:$0xff] %v2431
        %3632 = vst [vmem:[%s201 + $0xd60] sm:$0xff] %v2432
        %3633 = vst [vmem:[%s201 + $0xd68] sm:$0xff] %v2433
        %3634 = vst [vmem:[%s201 + $0xd70] sm:$0xff] %v2434
        %3635 = vst [vmem:[%s201 + $0xd78] sm:$0xff] %v2435
        %3636 = vst [vmem:[%s201 + $0xd80] sm:$0xff] %v2436
        %3637 = vst [vmem:[%s201 + $0xd88] sm:$0xff] %v2437
        %3638 = vst [vmem:[%s201 + $0xd90] sm:$0xff] %v2438
        %3639 = vst [vmem:[%s201 + $0xd98] sm:$0xff] %v2439
        %3640 = vst [vmem:[%s201 + $0xda0] sm:$0xff] %v2440
        %3641 = vst [vmem:[%s201 + $0xda8] sm:$0xff] %v2441
        %3642 = vst [vmem:[%s201 + $0xdb0] sm:$0xff] %v2442
        %3643 = vst [vmem:[%s201 + $0xdb8] sm:$0xff] %v2443
        %3644 = vst [vmem:[%s201 + $0xdc0] sm:$0xff] %v2444
        %3645 = vst [vmem:[%s201 + $0xdc8] sm:$0xff] %v2445
        %3646 = vst [vmem:[%s201 + $0xdd0] sm:$0xff] %v2446
        %3647 = vst [vmem:[%s201 + $0xdd8] sm:$0xff] %v2447
        %3648 = vst [vmem:[%s201 + $0xde0] sm:$0xff] %v2448
        %3649 = vst [vmem:[%s201 + $0xde8] sm:$0xff] %v2449
        %3650 = vst [vmem:[%s201 + $0xdf0] sm:$0xff] %v2450
        %3651 = vst [vmem:[%s201 + $0xdf8] sm:$0xff] %v2451
        %3652 = vst [vmem:[%s201 + $0xe00] sm:$0xff] %v2452
        %3653 = vst [vmem:[%s201 + $0xe08] sm:$0xff] %v2453
        %3654 = vst [vmem:[%s201 + $0xe10] sm:$0xff] %v2454
        %3655 = vst [vmem:[%s201 + $0xe18] sm:$0xff] %v2455
        %3656 = vst [vmem:[%s201 + $0xe20] sm:$0xff] %v2456
        %3657 = vst [vmem:[%s201 + $0xe28] sm:$0xff] %v2457
        %3658 = vst [vmem:[%s201 + $0xe30] sm:$0xff] %v2458
        %3659 = vst [vmem:[%s201 + $0xe38] sm:$0xff] %v2459
        %3660 = vst [vmem:[%s201 + $0xe40] sm:$0xff] %v2460
        %3661 = vst [vmem:[%s201 + $0xe48] sm:$0xff] %v2461
        %3662 = vst [vmem:[%s201 + $0xe50] sm:$0xff] %v2462
        %3663 = vst [vmem:[%s201 + $0xe58] sm:$0xff] %v2463
        %3664 = vst [vmem:[%s201 + $0xe60] sm:$0xff] %v2464
        %3665 = vst [vmem:[%s201 + $0xe68] sm:$0xff] %v2465
        %3666 = vst [vmem:[%s201 + $0xe70] sm:$0xff] %v2466
        %3667 = vst [vmem:[%s201 + $0xe78] sm:$0xff] %v2467
        %3668 = vst [vmem:[%s201 + $0xe80] sm:$0xff] %v2468
        %3669 = vst [vmem:[%s201 + $0xe88] sm:$0xff] %v2469
        %3670 = vst [vmem:[%s201 + $0xe90] sm:$0xff] %v2470
        %3671 = vst [vmem:[%s201 + $0xe98] sm:$0xff] %v2471
        %3672 = vst [vmem:[%s201 + $0xea0] sm:$0xff] %v2472
        %3673 = vst [vmem:[%s201 + $0xea8] sm:$0xff] %v2473
        %3674 = vst [vmem:[%s201 + $0xeb0] sm:$0xff] %v2474
        %3675 = vst [vmem:[%s201 + $0xeb8] sm:$0xff] %v2475
        %3676 = vst [vmem:[%s201 + $0xec0] sm:$0xff] %v2476
        %3677 = vst [vmem:[%s201 + $0xec8] sm:$0xff] %v2477
        %3678 = vst [vmem:[%s201 + $0xed0] sm:$0xff] %v2478
        %3679 = vst [vmem:[%s201 + $0xed8] sm:$0xff] %v2479
        %3680 = vst [vmem:[%s201 + $0xee0] sm:$0xff] %v2480
        %3681 = vst [vmem:[%s201 + $0xee8] sm:$0xff] %v2481
        %3682 = vst [vmem:[%s201 + $0xef0] sm:$0xff] %v2482
        %3683 = vst [vmem:[%s201 + $0xef8] sm:$0xff] %v2483
        %3684 = vst [vmem:[%s201 + $0xf00] sm:$0xff] %v2484
        %3685 = vst [vmem:[%s201 + $0xf08] sm:$0xff] %v2485
        %3686 = vst [vmem:[%s201 + $0xf10] sm:$0xff] %v2486
        %3687 = vst [vmem:[%s201 + $0xf18] sm:$0xff] %v2487
        %3688 = vst [vmem:[%s201 + $0xf20] sm:$0xff] %v2488
        %3689 = vst [vmem:[%s201 + $0xf28] sm:$0xff] %v2489
        %3690 = vst [vmem:[%s201 + $0xf30] sm:$0xff] %v2490
        %3691 = vst [vmem:[%s201 + $0xf38] sm:$0xff] %v2491
        %3692 = vst [vmem:[%s201 + $0xf40] sm:$0xff] %v2492
        %3693 = vst [vmem:[%s201 + $0xf48] sm:$0xff] %v2493
        %3694 = vst [vmem:[%s201 + $0xf50] sm:$0xff] %v2494
        %3695 = vst [vmem:[%s201 + $0xf58] sm:$0xff] %v2495
        %3696 = vst [vmem:[%s201 + $0xf60] sm:$0xff] %v2496
        %3697 = vst [vmem:[%s201 + $0xf68] sm:$0xff] %v2497
        %3698 = vst [vmem:[%s201 + $0xf70] sm:$0xff] %v2498
        %3699 = vst [vmem:[%s201 + $0xf78] sm:$0xff] %v2499
        %3700 = vst [vmem:[%s201 + $0xf80] sm:$0xff] %v2500
        %3701 = vst [vmem:[%s201 + $0xf88] sm:$0xff] %v2501
        %3702 = vst [vmem:[%s201 + $0xf90] sm:$0xff] %v2502
        %3703 = vst [vmem:[%s201 + $0xf98] sm:$0xff] %v2503
        %3704 = vst [vmem:[%s201 + $0xfa0] sm:$0xff] %v2504
        %3705 = vst [vmem:[%s201 + $0xfa8] sm:$0xff] %v2505
        %3706 = vst [vmem:[%s201 + $0xfb0] sm:$0xff] %v2506
        %3707 = vst [vmem:[%s201 + $0xfb8] sm:$0xff] %v2507
        %3708 = vst [vmem:[%s201 + $0xfc0] sm:$0xff] %v2508
        %3709 = vst [vmem:[%s201 + $0xfc8] sm:$0xff] %v2509
        %3710 = vst [vmem:[%s201 + $0xfd0] sm:$0xff] %v2510
        %3711 = vst [vmem:[%s201 + $0xfd8] sm:$0xff] %v2511
        %3712 = vst [vmem:[%s201 + $0xfe0] sm:$0xff] %v2512
        %3713 = vst [vmem:[%s201 + $0xfe8] sm:$0xff] %v2513
        %3714 = vst [vmem:[%s201 + $0xff0] sm:$0xff] %v2514
        %3715 = vst [vmem:[%s201 + $0xff8] sm:$0xff] %v2515
        %3716 = vst [vmem:[%s201 + $0x1000] sm:$0xff] %v2516
        %3717 = vst [vmem:[%s201 + $0x1008] sm:$0xff] %v2517
        %3718 = vst [vmem:[%s201 + $0x1010] sm:$0xff] %v2518
        %3719 = vst [vmem:[%s201 + $0x1018] sm:$0xff] %v2519
        %3720 = vst [vmem:[%s201 + $0x1020] sm:$0xff] %v2520
        %3721 = vst [vmem:[%s201 + $0x1028] sm:$0xff] %v2521
        %3722 = vst [vmem:[%s201 + $0x1030] sm:$0xff] %v2522
        %3723 = vst [vmem:[%s201 + $0x1038] sm:$0xff] %v2523
        %3724 = vst [vmem:[%s201 + $0x1040] sm:$0xff] %v2524
        %3725 = vst [vmem:[%s201 + $0x1048] sm:$0xff] %v2525
        %3726 = vst [vmem:[%s201 + $0x1050] sm:$0xff] %v2526
        %3727 = vst [vmem:[%s201 + $0x1058] sm:$0xff] %v2527
        %3728 = vst [vmem:[%s201 + $0x1060] sm:$0xff] %v2528
        %3729 = vst [vmem:[%s201 + $0x1068] sm:$0xff] %v2529
        %3730 = vst [vmem:[%s201 + $0x1070] sm:$0xff] %v2530
        %3731 = vst [vmem:[%s201 + $0x1078] sm:$0xff] %v2531
        %3732 = vst [vmem:[%s201 + $0x1080] sm:$0xff] %v2532
        %3733 = vst [vmem:[%s201 + $0x1088] sm:$0xff] %v2533
        %3734 = vst [vmem:[%s201 + $0x1090] sm:$0xff] %v2534
        %3735 = vst [vmem:[%s201 + $0x1098] sm:$0xff] %v2535
        %3736 = vst [vmem:[%s201 + $0x10a0] sm:$0xff] %v2536
        %3737 = vst [vmem:[%s201 + $0x10a8] sm:$0xff] %v2537
        %3738 = vst [vmem:[%s201 + $0x10b0] sm:$0xff] %v2538
        %3739 = vst [vmem:[%s201 + $0x10b8] sm:$0xff] %v2539
        %3740 = vst [vmem:[%s201 + $0x10c0] sm:$0xff] %v2540
        %3741 = vst [vmem:[%s201 + $0x10c8] sm:$0xff] %v2541
        %3742 = vst [vmem:[%s201 + $0x10d0] sm:$0xff] %v2542
        %3743 = vst [vmem:[%s201 + $0x10d8] sm:$0xff] %v2543
        %3744 = vst [vmem:[%s201 + $0x10e0] sm:$0xff] %v2544
        %3745 = vst [vmem:[%s201 + $0x10e8] sm:$0xff] %v2545
        %3746 = vst [vmem:[%s201 + $0x10f0] sm:$0xff] %v2546
        %3747 = vst [vmem:[%s201 + $0x10f8] sm:$0xff] %v2547
        %3748 = vst [vmem:[%s201 + $0x1100] sm:$0xff] %v2548
        %3749 = vst [vmem:[%s201 + $0x1108] sm:$0xff] %v2549
        %3750 = vst [vmem:[%s201 + $0x1110] sm:$0xff] %v2550
        %3751 = vst [vmem:[%s201 + $0x1118] sm:$0xff] %v2551
        %3752 = vst [vmem:[%s201 + $0x1120] sm:$0xff] %v2552
        %3753 = vst [vmem:[%s201 + $0x1128] sm:$0xff] %v2553
        %3754 = vst [vmem:[%s201 + $0x1130] sm:$0xff] %v2554
        %3755 = vst [vmem:[%s201 + $0x1138] sm:$0xff] %v2555
        %3756 = vst [vmem:[%s201 + $0x1140] sm:$0xff] %v2556
        %3757 = vst [vmem:[%s201 + $0x1148] sm:$0xff] %v2557
        %3758 = vst [vmem:[%s201 + $0x1150] sm:$0xff] %v2558
        %3759 = vst [vmem:[%s201 + $0x1158] sm:$0xff] %v2559
        %3760 = vst [vmem:[%s201 + $0x1160] sm:$0xff] %v2560
        %3761 = vst [vmem:[%s201 + $0x1168] sm:$0xff] %v2561
        %3762 = vst [vmem:[%s201 + $0x1170] sm:$0xff] %v2562
        %3763 = vst [vmem:[%s201 + $0x1178] sm:$0xff] %v2563
        %3764 = vst [vmem:[%s201 + $0x1180] sm:$0xff] %v2564
        %3765 = vst [vmem:[%s201 + $0x1188] sm:$0xff] %v2565
        %3766 = vst [vmem:[%s201 + $0x1190] sm:$0xff] %v2566
        %3767 = vst [vmem:[%s201 + $0x1198] sm:$0xff] %v2567
        %3768 = vst [vmem:[%s201 + $0x11a0] sm:$0xff] %v2568
        %3769 = vst [vmem:[%s201 + $0x11a8] sm:$0xff] %v2569
        %3770 = vst [vmem:[%s201 + $0x11b0] sm:$0xff] %v2570
        %3771 = vst [vmem:[%s201 + $0x11b8] sm:$0xff] %v2571
        %3772 = vst [vmem:[%s201 + $0x11c0] sm:$0xff] %v2572
        %3773 = vst [vmem:[%s201 + $0x11c8] sm:$0xff] %v2573
        %3774 = vst [vmem:[%s201 + $0x11d0] sm:$0xff] %v2574
        %3775 = vst [vmem:[%s201 + $0x11d8] sm:$0xff] %v2575
        %3776 = vst [vmem:[%s201 + $0x11e0] sm:$0xff] %v2576
        %3777 = vst [vmem:[%s201 + $0x11e8] sm:$0xff] %v2577
        %3778 = vst [vmem:[%s201 + $0x11f0] sm:$0xff] %v2578
        %3779 = vst [vmem:[%s201 + $0x11f8] sm:$0xff] %v2579
        %3780 = vst [vmem:[%s201 + $0x1200] sm:$0xff] %v2580
        %3781 = vst [vmem:[%s201 + $0x1208] sm:$0xff] %v2581
        %3782 = vst [vmem:[%s201 + $0x1210] sm:$0xff] %v2582
        %3783 = vst [vmem:[%s201 + $0x1218] sm:$0xff] %v2583
        %3784 = vst [vmem:[%s201 + $0x1220] sm:$0xff] %v2584
        %3785 = vst [vmem:[%s201 + $0x1228] sm:$0xff] %v2585
        %3786 = vst [vmem:[%s201 + $0x1230] sm:$0xff] %v2586
        %3787 = vst [vmem:[%s201 + $0x1238] sm:$0xff] %v2587
        %3788 = vst [vmem:[%s201 + $0x1240] sm:$0xff] %v2588
        %3789 = vst [vmem:[%s201 + $0x1248] sm:$0xff] %v2589
        %3790 = vst [vmem:[%s201 + $0x1250] sm:$0xff] %v2590
        %3791 = vst [vmem:[%s201 + $0x1258] sm:$0xff] %v2591
        %3792 = vst [vmem:[%s201 + $0x1260] sm:$0xff] %v2592
        %3793 = vst [vmem:[%s201 + $0x1268] sm:$0xff] %v2593
        %3794 = vst [vmem:[%s201 + $0x1270] sm:$0xff] %v2594
        %3795 = vst [vmem:[%s201 + $0x1278] sm:$0xff] %v2595
        %3796 = vst [vmem:[%s201 + $0x1280] sm:$0xff] %v2596
        %3797 = vst [vmem:[%s201 + $0x1288] sm:$0xff] %v2597
        %3798 = vst [vmem:[%s201 + $0x1290] sm:$0xff] %v2598
        %3799 = vst [vmem:[%s201 + $0x1298] sm:$0xff] %v2599
        %3800 = vst [vmem:[%s201 + $0x12a0] sm:$0xff] %v2600
        %3801 = vst [vmem:[%s201 + $0x12a8] sm:$0xff] %v2601
        %3802 = vst [vmem:[%s201 + $0x12b0] sm:$0xff] %v2602
        %3803 = vst [vmem:[%s201 + $0x12b8] sm:$0xff] %v2603
        %3804 = vst [vmem:[%s201 + $0x12c0] sm:$0xff] %v2604
        %3805 = vst [vmem:[%s201 + $0x12c8] sm:$0xff] %v2605
        %3806 = vst [vmem:[%s201 + $0x12d0] sm:$0xff] %v2606
        %3807 = vst [vmem:[%s201 + $0x12d8] sm:$0xff] %v2607
        %3808 = vst [vmem:[%s201 + $0x12e0] sm:$0xff] %v2608
        %3809 = vst [vmem:[%s201 + $0x12e8] sm:$0xff] %v2609
        %3810 = vst [vmem:[%s201 + $0x12f0] sm:$0xff] %v2610
        %3811 = vst [vmem:[%s201 + $0x12f8] sm:$0xff] %v2611
        %3812 = vst [vmem:[%s201 + $0x1300] sm:$0xff] %v2612
        %3813 = vst [vmem:[%s201 + $0x1308] sm:$0xff] %v2613
        %3814 = vst [vmem:[%s201 + $0x1310] sm:$0xff] %v2614
        %3815 = vst [vmem:[%s201 + $0x1318] sm:$0xff] %v2615
        %3816 = vst [vmem:[%s201 + $0x1320] sm:$0xff] %v2616
        %3817 = vst [vmem:[%s201 + $0x1328] sm:$0xff] %v2617
        %3818 = vst [vmem:[%s201 + $0x1330] sm:$0xff] %v2618
        %3819 = vst [vmem:[%s201 + $0x1338] sm:$0xff] %v2619
        %3820 = vst [vmem:[%s201 + $0x1340] sm:$0xff] %v2620
        %3821 = vst [vmem:[%s201 + $0x1348] sm:$0xff] %v2621
        %3822 = vst [vmem:[%s201 + $0x1350] sm:$0xff] %v2622
        %3823 = vst [vmem:[%s201 + $0x1358] sm:$0xff] %v2623
        %3824 = vst [vmem:[%s201 + $0x1360] sm:$0xff] %v2624
        %3825 = vst [vmem:[%s201 + $0x1368] sm:$0xff] %v2625
        %3826 = vst [vmem:[%s201 + $0x1370] sm:$0xff] %v2626
        %3827 = vst [vmem:[%s201 + $0x1378] sm:$0xff] %v2627
        %3828 = vst [vmem:[%s201 + $0x1380] sm:$0xff] %v2628
        %3829 = vst [vmem:[%s201 + $0x1388] sm:$0xff] %v2629
        %3830 = vst [vmem:[%s201 + $0x1390] sm:$0xff] %v2630
        %3831 = vst [vmem:[%s201 + $0x1398] sm:$0xff] %v2631
        %3832 = vst [vmem:[%s201 + $0x13a0] sm:$0xff] %v2632
        %3833 = vst [vmem:[%s201 + $0x13a8] sm:$0xff] %v2633
        %3834 = vst [vmem:[%s201 + $0x13b0] sm:$0xff] %v2634
        %3835 = vst [vmem:[%s201 + $0x13b8] sm:$0xff] %v2635
        %3836 = vst [vmem:[%s201 + $0x13c0] sm:$0xff] %v2636
        %3837 = vst [vmem:[%s201 + $0x13c8] sm:$0xff] %v2637
        %3838 = vst [vmem:[%s201 + $0x13d0] sm:$0xff] %v2638
        %3839 = vst [vmem:[%s201 + $0x13d8] sm:$0xff] %v2639
        %3840 = vst [vmem:[%s201 + $0x13e0] sm:$0xff] %v2640
        %3841 = vst [vmem:[%s201 + $0x13e8] sm:$0xff] %v2641
        %3842 = vst [vmem:[%s201 + $0x13f0] sm:$0xff] %v2642
        %3843 = vst [vmem:[%s201 + $0x13f8] sm:$0xff] %v2643
        %3844 = vst [vmem:[%s201 + $0x1400] sm:$0xff] %v2644
        %3845 = vst [vmem:[%s201 + $0x1408] sm:$0xff] %v2645
        %3846 = vst [vmem:[%s201 + $0x1410] sm:$0xff] %v2646
        %3847 = vst [vmem:[%s201 + $0x1418] sm:$0xff] %v2647
        %3848 = vst [vmem:[%s201 + $0x1420] sm:$0xff] %v2648
        %3849 = vst [vmem:[%s201 + $0x1428] sm:$0xff] %v2649
        %3850 = vst [vmem:[%s201 + $0x1430] sm:$0xff] %v2650
        %3851 = vst [vmem:[%s201 + $0x1438] sm:$0xff] %v2651
        %3852 = vst [vmem:[%s201 + $0x1440] sm:$0xff] %v2652
        %3853 = vst [vmem:[%s201 + $0x1448] sm:$0xff] %v2653
        %3854 = vst [vmem:[%s201 + $0x1450] sm:$0xff] %v2654
        %3855 = vst [vmem:[%s201 + $0x1458] sm:$0xff] %v2655
        %3856 = vst [vmem:[%s201 + $0x1460] sm:$0xff] %v2656
        %3857 = vst [vmem:[%s201 + $0x1468] sm:$0xff] %v2657
        %3858 = vst [vmem:[%s201 + $0x1470] sm:$0xff] %v2658
        %3859 = vst [vmem:[%s201 + $0x1478] sm:$0xff] %v2659
        %3860 = vst [vmem:[%s201 + $0x1480] sm:$0xff] %v2660
        %3861 = vst [vmem:[%s201 + $0x1488] sm:$0xff] %v2661
        %3862 = vst [vmem:[%s201 + $0x1490] sm:$0xff] %v2662
        %3863 = vst [vmem:[%s201 + $0x1498] sm:$0xff] %v2663
        %3864 = vst [vmem:[%s201 + $0x14a0] sm:$0xff] %v2664
        %3865 = vst [vmem:[%s201 + $0x14a8] sm:$0xff] %v2665
        %3866 = vst [vmem:[%s201 + $0x14b0] sm:$0xff] %v2666
        %3867 = vst [vmem:[%s201 + $0x14b8] sm:$0xff] %v2667
        %3868 = vst [vmem:[%s201 + $0x14c0] sm:$0xff] %v2668
        %3869 = vst [vmem:[%s201 + $0x14c8] sm:$0xff] %v2669
        %3870 = vst [vmem:[%s201 + $0x14d0] sm:$0xff] %v2670
        %3871 = vst [vmem:[%s201 + $0x14d8] sm:$0xff] %v2671
        %3872 = vst [vmem:[%s201 + $0x14e0] sm:$0xff] %v2672
        %3873 = vst [vmem:[%s201 + $0x14e8] sm:$0xff] %v2673
        %3874 = vst [vmem:[%s201 + $0x14f0] sm:$0xff] %v2674
        %3875 = vst [vmem:[%s201 + $0x14f8] sm:$0xff] %v2675
        %3876 = vst [vmem:[%s201 + $0x1500] sm:$0xff] %v2676
        %3877 = vst [vmem:[%s201 + $0x1508] sm:$0xff] %v2677
        %3878 = vst [vmem:[%s201 + $0x1510] sm:$0xff] %v2678
        %3879 = vst [vmem:[%s201 + $0x1518] sm:$0xff] %v2679
        %3880 = vst [vmem:[%s201 + $0x1520] sm:$0xff] %v2680
        %3881 = vst [vmem:[%s201 + $0x1528] sm:$0xff] %v2681
        %3882 = vst [vmem:[%s201 + $0x1530] sm:$0xff] %v2682
        %3883 = vst [vmem:[%s201 + $0x1538] sm:$0xff] %v2683
        %3884 = vst [vmem:[%s201 + $0x1540] sm:$0xff] %v2684
        %3885 = vst [vmem:[%s201 + $0x1548] sm:$0xff] %v2685
        %3886 = vst [vmem:[%s201 + $0x1550] sm:$0xff] %v2686
        %3887 = vst [vmem:[%s201 + $0x1558] sm:$0xff] %v2687
        %3888 = vst [vmem:[%s201 + $0x1560] sm:$0xff] %v2688
        %3889 = vst [vmem:[%s201 + $0x1568] sm:$0xff] %v2689
        %3890 = vst [vmem:[%s201 + $0x1570] sm:$0xff] %v2690
        %3891 = vst [vmem:[%s201 + $0x1578] sm:$0xff] %v2691
        %3892 = vst [vmem:[%s201 + $0x1580] sm:$0xff] %v2692
        %3893 = vst [vmem:[%s201 + $0x1588] sm:$0xff] %v2693
        %3894 = vst [vmem:[%s201 + $0x1590] sm:$0xff] %v2694
        %3895 = vst [vmem:[%s201 + $0x1598] sm:$0xff] %v2695
        %3896 = vst [vmem:[%s201 + $0x15a0] sm:$0xff] %v2696
        %3897 = vst [vmem:[%s201 + $0x15a8] sm:$0xff] %v2697
        %3898 = vst [vmem:[%s201 + $0x15b0] sm:$0xff] %v2698
        %3899 = vst [vmem:[%s201 + $0x15b8] sm:$0xff] %v2699
        %3900 = vst [vmem:[%s201 + $0x15c0] sm:$0xff] %v2700
        %3901 = vst [vmem:[%s201 + $0x15c8] sm:$0xff] %v2701
        %3902 = vst [vmem:[%s201 + $0x15d0] sm:$0xff] %v2702
        %3903 = vst [vmem:[%s201 + $0x15d8] sm:$0xff] %v2703
        %3904 = vst [vmem:[%s201 + $0x15e0] sm:$0xff] %v2704
        %3905 = vst [vmem:[%s201 + $0x15e8] sm:$0xff] %v2705
        %3906 = vst [vmem:[%s201 + $0x15f0] sm:$0xff] %v2706
        %3907 = vst [vmem:[%s201 + $0x15f8] sm:$0xff] %v2707
        %3908 = vst [vmem:[%s201 + $0x1600] sm:$0xff] %v2708
        %3909 = vst [vmem:[%s201 + $0x1608] sm:$0xff] %v2709
        %3910 = vst [vmem:[%s201 + $0x1610] sm:$0xff] %v2710
        %3911 = vst [vmem:[%s201 + $0x1618] sm:$0xff] %v2711
        %3912 = vst [vmem:[%s201 + $0x1620] sm:$0xff] %v2712
        %3913 = vst [vmem:[%s201 + $0x1628] sm:$0xff] %v2713
        %3914 = vst [vmem:[%s201 + $0x1630] sm:$0xff] %v2714
        %3915 = vst [vmem:[%s201 + $0x1638] sm:$0xff] %v2715
        %3916 = vst [vmem:[%s201 + $0x1640] sm:$0xff] %v2716
        %3917 = vst [vmem:[%s201 + $0x1648] sm:$0xff] %v2717
        %3918 = vst [vmem:[%s201 + $0x1650] sm:$0xff] %v2718
        %3919 = vst [vmem:[%s201 + $0x1658] sm:$0xff] %v2719
        %3920 = vst [vmem:[%s201 + $0x1660] sm:$0xff] %v2720
        %3921 = vst [vmem:[%s201 + $0x1668] sm:$0xff] %v2721
        %3922 = vst [vmem:[%s201 + $0x1670] sm:$0xff] %v2722
        %3923 = vst [vmem:[%s201 + $0x1678] sm:$0xff] %v2723
        %3924 = vst [vmem:[%s201 + $0x1680] sm:$0xff] %v2724
        %3925 = vst [vmem:[%s201 + $0x1688] sm:$0xff] %v2725
        %3926 = vst [vmem:[%s201 + $0x1690] sm:$0xff] %v2726
        %3927 = vst [vmem:[%s201 + $0x1698] sm:$0xff] %v2727
        %3928 = vst [vmem:[%s201 + $0x16a0] sm:$0xff] %v2728
        %3929 = vst [vmem:[%s201 + $0x16a8] sm:$0xff] %v2729
        %3930 = vst [vmem:[%s201 + $0x16b0] sm:$0xff] %v2730
        %3931 = vst [vmem:[%s201 + $0x16b8] sm:$0xff] %v2731
        %3932 = vst [vmem:[%s201 + $0x16c0] sm:$0xff] %v2732
        %3933 = vst [vmem:[%s201 + $0x16c8] sm:$0xff] %v2733
        %3934 = vst [vmem:[%s201 + $0x16d0] sm:$0xff] %v2734
        %3935 = vst [vmem:[%s201 + $0x16d8] sm:$0xff] %v2735
        %3936 = vst [vmem:[%s201 + $0x16e0] sm:$0xff] %v2736
        %3937 = vst [vmem:[%s201 + $0x16e8] sm:$0xff] %v2737
        %3938 = vst [vmem:[%s201 + $0x16f0] sm:$0xff] %v2738
        %3939 = vst [vmem:[%s201 + $0x16f8] sm:$0xff] %v2739
        %3940 = vst [vmem:[%s201 + $0x1700] sm:$0xff] %v2740
        %3941 = vst [vmem:[%s201 + $0x1708] sm:$0xff] %v2741
        %3942 = vst [vmem:[%s201 + $0x1710] sm:$0xff] %v2742
        %3943 = vst [vmem:[%s201 + $0x1718] sm:$0xff] %v2743
        %3944 = vst [vmem:[%s201 + $0x1720] sm:$0xff] %v2744
        %3945 = vst [vmem:[%s201 + $0x1728] sm:$0xff] %v2745
        %3946 = vst [vmem:[%s201 + $0x1730] sm:$0xff] %v2746
        %3947 = vst [vmem:[%s201 + $0x1738] sm:$0xff] %v2747
        %3948 = vst [vmem:[%s201 + $0x1740] sm:$0xff] %v2748
        %3949 = vst [vmem:[%s201 + $0x1748] sm:$0xff] %v2749
        %3950 = vst [vmem:[%s201 + $0x1750] sm:$0xff] %v2750
        %3951 = vst [vmem:[%s201 + $0x1758] sm:$0xff] %v2751
        %3952 = vst [vmem:[%s201 + $0x1760] sm:$0xff] %v2752
        %3953 = vst [vmem:[%s201 + $0x1768] sm:$0xff] %v2753
        %3954 = vst [vmem:[%s201 + $0x1770] sm:$0xff] %v2754
        %3955 = vst [vmem:[%s201 + $0x1778] sm:$0xff] %v2755
        %3956 = vst [vmem:[%s201 + $0x1780] sm:$0xff] %v2756
        %3957 = vst [vmem:[%s201 + $0x1788] sm:$0xff] %v2757
        %3958 = vst [vmem:[%s201 + $0x1790] sm:$0xff] %v2758
        %3959 = vst [vmem:[%s201 + $0x1798] sm:$0xff] %v2759
        %3960 = vst [vmem:[%s201 + $0x17a0] sm:$0xff] %v2760
        %3961 = vst [vmem:[%s201 + $0x17a8] sm:$0xff] %v2761
        %3962 = vst [vmem:[%s201 + $0x17b0] sm:$0xff] %v2762
        %3963 = vst [vmem:[%s201 + $0x17b8] sm:$0xff] %v2763
        %3964 = vst [vmem:[%s201 + $0x17c0] sm:$0xff] %v2764
        %3965 = vst [vmem:[%s201 + $0x17c8] sm:$0xff] %v2765
        %3966 = vst [vmem:[%s201 + $0x17d0] sm:$0xff] %v2766
        %3967 = vst [vmem:[%s201 + $0x17d8] sm:$0xff] %v2767
        %3968 = vst [vmem:[%s201 + $0x17e0] sm:$0xff] %v2768
        %3969 = vst [vmem:[%s201 + $0x17e8] sm:$0xff] %v2769
        %3970 = vst [vmem:[%s201 + $0x17f0] sm:$0xff] %v2770
        %3971 = vst [vmem:[%s201 + $0x17f8] sm:$0xff] %v2771
        %3972 = vst [vmem:[%s201 + $0x1800] sm:$0xff] %v2772
        %3973 = vst [vmem:[%s201 + $0x1808] sm:$0xff] %v2773
        %3974 = vst [vmem:[%s201 + $0x1810] sm:$0xff] %v2774
        %3975 = vst [vmem:[%s201 + $0x1818] sm:$0xff] %v2775
        %3976 = vst [vmem:[%s201 + $0x1820] sm:$0xff] %v2776
        %3977 = vst [vmem:[%s201 + $0x1828] sm:$0xff] %v2777
        %3978 = vst [vmem:[%s201 + $0x1830] sm:$0xff] %v2778
        %3979 = vst [vmem:[%s201 + $0x1838] sm:$0xff] %v2779
        %3980 = vst [vmem:[%s201 + $0x1840] sm:$0xff] %v2780
        %3981 = vst [vmem:[%s201 + $0x1848] sm:$0xff] %v2781
        %3982 = vst [vmem:[%s201 + $0x1850] sm:$0xff] %v2782
        %3983 = vst [vmem:[%s201 + $0x1858] sm:$0xff] %v2783
        %3984 = vst [vmem:[%s201 + $0x1860] sm:$0xff] %v2784
        %3985 = vst [vmem:[%s201 + $0x1868] sm:$0xff] %v2785
        %3986 = vst [vmem:[%s201 + $0x1870] sm:$0xff] %v2786
        %3987 = vst [vmem:[%s201 + $0x1878] sm:$0xff] %v2787
        %3988 = vst [vmem:[%s201 + $0x1880] sm:$0xff] %v2788
        %3989 = vst [vmem:[%s201 + $0x1888] sm:$0xff] %v2789
        %3990 = vst [vmem:[%s201 + $0x1890] sm:$0xff] %v2790
        %3991 = vst [vmem:[%s201 + $0x1898] sm:$0xff] %v2791
        %3992 = vst [vmem:[%s201 + $0x18a0] sm:$0xff] %v2792
        %3993 = vst [vmem:[%s201 + $0x18a8] sm:$0xff] %v2793
        %3994 = vst [vmem:[%s201 + $0x18b0] sm:$0xff] %v2794
        %3995 = vst [vmem:[%s201 + $0x18b8] sm:$0xff] %v2795
        %3996 = vst [vmem:[%s201 + $0x18c0] sm:$0xff] %v2796
        %3997 = vst [vmem:[%s201 + $0x18c8] sm:$0xff] %v2797
        %3998 = vst [vmem:[%s201 + $0x18d0] sm:$0xff] %v2798
        %3999 = vst [vmem:[%s201 + $0x18d8] sm:$0xff] %v2799
        %4000 = vst [vmem:[%s201 + $0x18e0] sm:$0xff] %v2800
        %4001 = vst [vmem:[%s201 + $0x18e8] sm:$0xff] %v2801
        %4002 = vst [vmem:[%s201 + $0x18f0] sm:$0xff] %v2802
        %4003 = vst [vmem:[%s201 + $0x18f8] sm:$0xff] %v2803
        %4004 = vst [vmem:[%s201 + $0x1900] sm:$0xff] %v2804
        %4005 = vst [vmem:[%s201 + $0x1908] sm:$0xff] %v2805
        %4006 = vst [vmem:[%s201 + $0x1910] sm:$0xff] %v2806
        %4007 = vst [vmem:[%s201 + $0x1918] sm:$0xff] %v2807
        %4008 = vst [vmem:[%s201 + $0x1920] sm:$0xff] %v2808
        %4009 = vst [vmem:[%s201 + $0x1928] sm:$0xff] %v2809
        %4010 = vst [vmem:[%s201 + $0x1930] sm:$0xff] %v2810
        %4011 = vst [vmem:[%s201 + $0x1938] sm:$0xff] %v2811
        %4012 = vst [vmem:[%s201 + $0x1940] sm:$0xff] %v2812
        %4013 = vst [vmem:[%s201 + $0x1948] sm:$0xff] %v2813
        %4014 = vst [vmem:[%s201 + $0x1950] sm:$0xff] %v2814
        %4015 = vst [vmem:[%s201 + $0x1958] sm:$0xff] %v2815
        %4016 = vst [vmem:[%s201 + $0x1960] sm:$0xff] %v2816
        %4017 = vst [vmem:[%s201 + $0x1968] sm:$0xff] %v2817
        %4018 = vst [vmem:[%s201 + $0x1970] sm:$0xff] %v2818
        %4019 = vst [vmem:[%s201 + $0x1978] sm:$0xff] %v2819
        %4020 = vst [vmem:[%s201 + $0x1980] sm:$0xff] %v2820
        %4021 = vst [vmem:[%s201 + $0x1988] sm:$0xff] %v2821
        %4022 = vst [vmem:[%s201 + $0x1990] sm:$0xff] %v2822
        %4023 = vst [vmem:[%s201 + $0x1998] sm:$0xff] %v2823
        %4024 = vst [vmem:[%s201 + $0x19a0] sm:$0xff] %v2824
        %4025 = vst [vmem:[%s201 + $0x19a8] sm:$0xff] %v2825
        %4026 = vst [vmem:[%s201 + $0x19b0] sm:$0xff] %v2826
        %4027 = vst [vmem:[%s201 + $0x19b8] sm:$0xff] %v2827
        %4028 = vst [vmem:[%s201 + $0x19c0] sm:$0xff] %v2828
        %4029 = vst [vmem:[%s201 + $0x19c8] sm:$0xff] %v2829
        %4030 = vst [vmem:[%s201 + $0x19d0] sm:$0xff] %v2830
        %4031 = vst [vmem:[%s201 + $0x19d8] sm:$0xff] %v2831
        %4032 = vst [vmem:[%s201 + $0x19e0] sm:$0xff] %v2832
        %4033 = vst [vmem:[%s201 + $0x19e8] sm:$0xff] %v2833
        %4034 = vst [vmem:[%s201 + $0x19f0] sm:$0xff] %v2834
        %4035 = vst [vmem:[%s201 + $0x19f8] sm:$0xff] %v2835
        %4036 = vst [vmem:[%s201 + $0x1a00] sm:$0xff] %v2836
        %4037 = vst [vmem:[%s201 + $0x1a08] sm:$0xff] %v2837
        %4038 = vst [vmem:[%s201 + $0x1a10] sm:$0xff] %v2838
        %4039 = vst [vmem:[%s201 + $0x1a18] sm:$0xff] %v2839
        %4040 = vst [vmem:[%s201 + $0x1a20] sm:$0xff] %v2840
        %4041 = vst [vmem:[%s201 + $0x1a28] sm:$0xff] %v2841
        %4042 = vst [vmem:[%s201 + $0x1a30] sm:$0xff] %v2842
        %4043 = vst [vmem:[%s201 + $0x1a38] sm:$0xff] %v2843
        %4044 = vst [vmem:[%s201 + $0x1a40] sm:$0xff] %v2844
        %4045 = vst [vmem:[%s201 + $0x1a48] sm:$0xff] %v2845
        %4046 = vst [vmem:[%s201 + $0x1a50] sm:$0xff] %v2846
        %4047 = vst [vmem:[%s201 + $0x1a58] sm:$0xff] %v2847
        %4048 = vst [vmem:[%s201 + $0x1a60] sm:$0xff] %v2848
        %4049 = vst [vmem:[%s201 + $0x1a68] sm:$0xff] %v2849
        %4050 = vst [vmem:[%s201 + $0x1a70] sm:$0xff] %v2850
        %4051 = vst [vmem:[%s201 + $0x1a78] sm:$0xff] %v2851
        %4052 = vst [vmem:[%s201 + $0x1a80] sm:$0xff] %v2852
        %4053 = vst [vmem:[%s201 + $0x1a88] sm:$0xff] %v2853
        %4054 = vst [vmem:[%s201 + $0x1a90] sm:$0xff] %v2854
        %4055 = vst [vmem:[%s201 + $0x1a98] sm:$0xff] %v2855
        %4056 = vst [vmem:[%s201 + $0x1aa0] sm:$0xff] %v2856
        %4057 = vst [vmem:[%s201 + $0x1aa8] sm:$0xff] %v2857
        %4058 = vst [vmem:[%s201 + $0x1ab0] sm:$0xff] %v2858
        %4059 = vst [vmem:[%s201 + $0x1ab8] sm:$0xff] %v2859
        %4060 = vst [vmem:[%s201 + $0x1ac0] sm:$0xff] %v2860
        %4061 = vst [vmem:[%s201 + $0x1ac8] sm:$0xff] %v2861
        %4062 = vst [vmem:[%s201 + $0x1ad0] sm:$0xff] %v2862
        %4063 = vst [vmem:[%s201 + $0x1ad8] sm:$0xff] %v2863
        %4064 = vst [vmem:[%s201 + $0x1ae0] sm:$0xff] %v2864
        %4065 = vst [vmem:[%s201 + $0x1ae8] sm:$0xff] %v2865
        %4066 = vst [vmem:[%s201 + $0x1af0] sm:$0xff] %v2866
        %4067 = vst [vmem:[%s201 + $0x1af8] sm:$0xff] %v2867
        %4068 = vst [vmem:[%s201 + $0x1b00] sm:$0xff] %v2868
        %4069 = vst [vmem:[%s201 + $0x1b08] sm:$0xff] %v2869
        %4070 = vst [vmem:[%s201 + $0x1b10] sm:$0xff] %v2870
        %4071 = vst [vmem:[%s201 + $0x1b18] sm:$0xff] %v2871
        %4072 = vst [vmem:[%s201 + $0x1b20] sm:$0xff] %v2872
        %4073 = vst [vmem:[%s201 + $0x1b28] sm:$0xff] %v2873
        %4074 = vst [vmem:[%s201 + $0x1b30] sm:$0xff] %v2874
        %4075 = vst [vmem:[%s201 + $0x1b38] sm:$0xff] %v2875
        %4076 = vst [vmem:[%s201 + $0x1b40] sm:$0xff] %v2876
        %4077 = vst [vmem:[%s201 + $0x1b48] sm:$0xff] %v2877
        %4078 = vst [vmem:[%s201 + $0x1b50] sm:$0xff] %v2878
        %4079 = vst [vmem:[%s201 + $0x1b58] sm:$0xff] %v2879
        %4080 = vst [vmem:[%s201 + $0x1b60] sm:$0xff] %v2880
        %4081 = vst [vmem:[%s201 + $0x1b68] sm:$0xff] %v2881
        %4082 = vst [vmem:[%s201 + $0x1b70] sm:$0xff] %v2882
        %4083 = vst [vmem:[%s201 + $0x1b78] sm:$0xff] %v2883
        %4084 = vst [vmem:[%s201 + $0x1b80] sm:$0xff] %v2884
        %4085 = vst [vmem:[%s201 + $0x1b88] sm:$0xff] %v2885
        %4086 = vst [vmem:[%s201 + $0x1b90] sm:$0xff] %v2886
        %4087 = vst [vmem:[%s201 + $0x1b98] sm:$0xff] %v2887
        %4088 = vst [vmem:[%s201 + $0x1ba0] sm:$0xff] %v2888
        %4089 = vst [vmem:[%s201 + $0x1ba8] sm:$0xff] %v2889
        %4090 = vst [vmem:[%s201 + $0x1bb0] sm:$0xff] %v2890
        %4091 = vst [vmem:[%s201 + $0x1bb8] sm:$0xff] %v2891
        %4092 = vst [vmem:[%s201 + $0x1bc0] sm:$0xff] %v2892
        %4093 = vst [vmem:[%s201 + $0x1bc8] sm:$0xff] %v2893
        %4094 = vst [vmem:[%s201 + $0x1bd0] sm:$0xff] %v2894
        %4095 = vst [vmem:[%s201 + $0x1bd8] sm:$0xff] %v2895
        %4096 = vst [vmem:[%s201 + $0x1be0] sm:$0xff] %v2896
        %4097 = vst [vmem:[%s201 + $0x1be8] sm:$0xff] %v2897
        %4098 = vst [vmem:[%s201 + $0x1bf0] sm:$0xff] %v2898
        %4099 = vst [vmem:[%s201 + $0x1bf8] sm:$0xff] %v2899
        %4100 = vst [vmem:[%s201 + $0x1c00] sm:$0xff] %v2900
        %4101 = vst [vmem:[%s201 + $0x1c08] sm:$0xff] %v2901
        %4102 = vst [vmem:[%s201 + $0x1c10] sm:$0xff] %v2902
        %4103 = vst [vmem:[%s201 + $0x1c18] sm:$0xff] %v2903
        %4104 = vst [vmem:[%s201 + $0x1c20] sm:$0xff] %v2904
        %4105 = vst [vmem:[%s201 + $0x1c28] sm:$0xff] %v2905
        %4106 = vst [vmem:[%s201 + $0x1c30] sm:$0xff] %v2906
        %4107 = vst [vmem:[%s201 + $0x1c38] sm:$0xff] %v2907
        %4108 = vst [vmem:[%s201 + $0x1c40] sm:$0xff] %v2908
        %4109 = vst [vmem:[%s201 + $0x1c48] sm:$0xff] %v2909
        %4110 = vst [vmem:[%s201 + $0x1c50] sm:$0xff] %v2910
        %4111 = vst [vmem:[%s201 + $0x1c58] sm:$0xff] %v2911
        %4112 = vst [vmem:[%s201 + $0x1c60] sm:$0xff] %v2912
        %4113 = vst [vmem:[%s201 + $0x1c68] sm:$0xff] %v2913
        %4114 = vst [vmem:[%s201 + $0x1c70] sm:$0xff] %v2914
        %4115 = vst [vmem:[%s201 + $0x1c78] sm:$0xff] %v2915
        %4116 = vst [vmem:[%s201 + $0x1c80] sm:$0xff] %v2916
        %4117 = vst [vmem:[%s201 + $0x1c88] sm:$0xff] %v2917
        %4118 = vst [vmem:[%s201 + $0x1c90] sm:$0xff] %v2918
        %4119 = vst [vmem:[%s201 + $0x1c98] sm:$0xff] %v2919
        %4120 = vst [vmem:[%s201 + $0x1ca0] sm:$0xff] %v2920
        %4121 = vst [vmem:[%s201 + $0x1ca8] sm:$0xff] %v2921
        %4122 = vst [vmem:[%s201 + $0x1cb0] sm:$0xff] %v2922
        %4123 = vst [vmem:[%s201 + $0x1cb8] sm:$0xff] %v2923
        %4124 = vst [vmem:[%s201 + $0x1cc0] sm:$0xff] %v2924
        %4125 = vst [vmem:[%s201 + $0x1cc8] sm:$0xff] %v2925
        %4126 = vst [vmem:[%s201 + $0x1cd0] sm:$0xff] %v2926
        %4127 = vst [vmem:[%s201 + $0x1cd8] sm:$0xff] %v2927
        %4128 = vst [vmem:[%s201 + $0x1ce0] sm:$0xff] %v2928
        %4129 = vst [vmem:[%s201 + $0x1ce8] sm:$0xff] %v2929
        %4130 = vst [vmem:[%s201 + $0x1cf0] sm:$0xff] %v2930
        %4131 = vst [vmem:[%s201 + $0x1cf8] sm:$0xff] %v2931
        %4132 = vst [vmem:[%s201 + $0x1d00] sm:$0xff] %v2932
        %4133 = vst [vmem:[%s201 + $0x1d08] sm:$0xff] %v2933
        %4134 = vst [vmem:[%s201 + $0x1d10] sm:$0xff] %v2934
        %4135 = vst [vmem:[%s201 + $0x1d18] sm:$0xff] %v2935
        %4136 = vst [vmem:[%s201 + $0x1d20] sm:$0xff] %v2936
        %4137 = vst [vmem:[%s201 + $0x1d28] sm:$0xff] %v2937
        %4138 = vst [vmem:[%s201 + $0x1d30] sm:$0xff] %v2938
        %4139 = vst [vmem:[%s201 + $0x1d38] sm:$0xff] %v2939
        %4140 = vst [vmem:[%s201 + $0x1d40] sm:$0xff] %v2940
        %4141 = vst [vmem:[%s201 + $0x1d48] sm:$0xff] %v2941
        %4142 = vst [vmem:[%s201 + $0x1d50] sm:$0xff] %v2942
        %4143 = vst [vmem:[%s201 + $0x1d58] sm:$0xff] %v2943
        %4144 = vst [vmem:[%s201 + $0x1d60] sm:$0xff] %v2944
        %4145 = vst [vmem:[%s201 + $0x1d68] sm:$0xff] %v2945
        %4146 = vst [vmem:[%s201 + $0x1d70] sm:$0xff] %v2946
        %4147 = vst [vmem:[%s201 + $0x1d78] sm:$0xff] %v2947
        %4148 = vst [vmem:[%s201 + $0x1d80] sm:$0xff] %v2948
        %4149 = vst [vmem:[%s201 + $0x1d88] sm:$0xff] %v2949
        %4150 = vst [vmem:[%s201 + $0x1d90] sm:$0xff] %v2950
        %4151 = vst [vmem:[%s201 + $0x1d98] sm:$0xff] %v2951
        %4152 = vst [vmem:[%s201 + $0x1da0] sm:$0xff] %v2952
        %4153 = vst [vmem:[%s201 + $0x1da8] sm:$0xff] %v2953
        %4154 = vst [vmem:[%s201 + $0x1db0] sm:$0xff] %v2954
        %4155 = vst [vmem:[%s201 + $0x1db8] sm:$0xff] %v2955
        %4156 = vst [vmem:[%s201 + $0x1dc0] sm:$0xff] %v2956
        %4157 = vst [vmem:[%s201 + $0x1dc8] sm:$0xff] %v2957
        %4158 = vst [vmem:[%s201 + $0x1dd0] sm:$0xff] %v2958
        %4159 = vst [vmem:[%s201 + $0x1dd8] sm:$0xff] %v2959
        %4160 = vst [vmem:[%s201 + $0x1de0] sm:$0xff] %v2960
        %4161 = vst [vmem:[%s201 + $0x1de8] sm:$0xff] %v2961
        %4162 = vst [vmem:[%s201 + $0x1df0] sm:$0xff] %v2962
        %4163 = vst [vmem:[%s201 + $0x1df8] sm:$0xff] %v2963
        %4164 = vst [vmem:[%s201 + $0x1e00] sm:$0xff] %v2964
        %4165 = vst [vmem:[%s201 + $0x1e08] sm:$0xff] %v2965
        %4166 = vst [vmem:[%s201 + $0x1e10] sm:$0xff] %v2966
        %4167 = vst [vmem:[%s201 + $0x1e18] sm:$0xff] %v2967
        %4168 = vst [vmem:[%s201 + $0x1e20] sm:$0xff] %v2968
        %4169 = vst [vmem:[%s201 + $0x1e28] sm:$0xff] %v2969
        %4170 = vst [vmem:[%s201 + $0x1e30] sm:$0xff] %v2970
        %4171 = vst [vmem:[%s201 + $0x1e38] sm:$0xff] %v2971
        %4172 = vst [vmem:[%s201 + $0x1e40] sm:$0xff] %v2972
        %4173 = vst [vmem:[%s201 + $0x1e48] sm:$0xff] %v2973
        %4174 = vst [vmem:[%s201 + $0x1e50] sm:$0xff] %v2974
        %4175 = vst [vmem:[%s201 + $0x1e58] sm:$0xff] %v2975
        %4176 = vst [vmem:[%s201 + $0x1e60] sm:$0xff] %v2976
        %4177 = vst [vmem:[%s201 + $0x1e68] sm:$0xff] %v2977
        %4178 = vst [vmem:[%s201 + $0x1e70] sm:$0xff] %v2978
        %4179 = vst [vmem:[%s201 + $0x1e78] sm:$0xff] %v2979
        %4180 = vst [vmem:[%s201 + $0x1e80] sm:$0xff] %v2980
        %4181 = vst [vmem:[%s201 + $0x1e88] sm:$0xff] %v2981
        %4182 = vst [vmem:[%s201 + $0x1e90] sm:$0xff] %v2982
        %4183 = vst [vmem:[%s201 + $0x1e98] sm:$0xff] %v2983
        %4184 = vst [vmem:[%s201 + $0x1ea0] sm:$0xff] %v2984
        %4185 = vst [vmem:[%s201 + $0x1ea8] sm:$0xff] %v2985
        %4186 = vst [vmem:[%s201 + $0x1eb0] sm:$0xff] %v2986
        %4187 = vst [vmem:[%s201 + $0x1eb8] sm:$0xff] %v2987
        %4188 = vst [vmem:[%s201 + $0x1ec0] sm:$0xff] %v2988
        %4189 = vst [vmem:[%s201 + $0x1ec8] sm:$0xff] %v2989
        %4190 = vst [vmem:[%s201 + $0x1ed0] sm:$0xff] %v2990
        %4191 = vst [vmem:[%s201 + $0x1ed8] sm:$0xff] %v2991
        %4192 = vst [vmem:[%s201 + $0x1ee0] sm:$0xff] %v2992
        %4193 = vst [vmem:[%s201 + $0x1ee8] sm:$0xff] %v2993
        %4194 = vst [vmem:[%s201 + $0x1ef0] sm:$0xff] %v2994
        %4195 = vst [vmem:[%s201 + $0x1ef8] sm:$0xff] %v2995
        %4196 = vst [vmem:[%s201 + $0x1f00] sm:$0xff] %v2996
        %4197 = vst [vmem:[%s201 + $0x1f08] sm:$0xff] %v2997
        %4198 = vst [vmem:[%s201 + $0x1f10] sm:$0xff] %v2998
        %4199 = vst [vmem:[%s201 + $0x1f18] sm:$0xff] %v2999
        %4200 = vst [vmem:[%s201 + $0x1f20] sm:$0xff] %v3000
        %4201 = vst [vmem:[%s201 + $0x1f28] sm:$0xff] %v3001
        %4202 = vst [vmem:[%s201 + $0x1f30] sm:$0xff] %v3002
        %4203 = vst [vmem:[%s201 + $0x1f38] sm:$0xff] %v3003
        %4204 = vst [vmem:[%s201 + $0x1f40] sm:$0xff] %v3004
        %4205 = vst [vmem:[%s201 + $0x1f48] sm:$0xff] %v3005
        %4206 = vst [vmem:[%s201 + $0x1f50] sm:$0xff] %v3006
        %4207 = vst [vmem:[%s201 + $0x1f58] sm:$0xff] %v3007
        %4208 = vst [vmem:[%s201 + $0x1f60] sm:$0xff] %v3008
        %4209 = vst [vmem:[%s201 + $0x1f68] sm:$0xff] %v3009
        %4210 = vst [vmem:[%s201 + $0x1f70] sm:$0xff] %v3010
        %4211 = vst [vmem:[%s201 + $0x1f78] sm:$0xff] %v3011
        %4212 = vst [vmem:[%s201 + $0x1f80] sm:$0xff] %v3012
        %4213 = vst [vmem:[%s201 + $0x1f88] sm:$0xff] %v3013
        %4214 = vst [vmem:[%s201 + $0x1f90] sm:$0xff] %v3014
        %4215 = vst [vmem:[%s201 + $0x1f98] sm:$0xff] %v3015
        %4216 = vst [vmem:[%s201 + $0x1fa0] sm:$0xff] %v3016
        %4217 = vst [vmem:[%s201 + $0x1fa8] sm:$0xff] %v3017
        %4218 = vst [vmem:[%s201 + $0x1fb0] sm:$0xff] %v3018
        %4219 = vst [vmem:[%s201 + $0x1fb8] sm:$0xff] %v3019
        %4220 = vst [vmem:[%s201 + $0x1fc0] sm:$0xff] %v3020
        %4221 = vst [vmem:[%s201 + $0x1fc8] sm:$0xff] %v3021
        %4222 = vst [vmem:[%s201 + $0x1fd0] sm:$0xff] %v3022
        %4223 = vst [vmem:[%s201 + $0x1fd8] sm:$0xff] %v3023
        %4224 = vst [vmem:[%s201 + $0x1fe0] sm:$0xff] %v3024
        %4225 = vst [vmem:[%s201 + $0x1fe8] sm:$0xff] %v3025
        %4226 = vst [vmem:[%s201 + $0x1ff0] sm:$0xff] %v3026
        %4227 = vst [vmem:[%s201 + $0x1ff8] sm:$0xff] %v3027
        %4228 = vst [vmem:[%s201 + $0x2000] sm:$0xff] %v3028
        %4229 = vst [vmem:[%s201 + $0x2008] sm:$0xff] %v3029
        %4230 = vst [vmem:[%s201 + $0x2010] sm:$0xff] %v3030
        %4231 = vst [vmem:[%s201 + $0x2018] sm:$0xff] %v3031
        %4232 = vst [vmem:[%s201 + $0x2020] sm:$0xff] %v3032
        %4233 = vst [vmem:[%s201 + $0x2028] sm:$0xff] %v3033
        %4234 = vst [vmem:[%s201 + $0x2030] sm:$0xff] %v3034
        %4235 = vst [vmem:[%s201 + $0x2038] sm:$0xff] %v3035
        %4236 = vst [vmem:[%s201 + $0x2040] sm:$0xff] %v3036
        %4237 = vst [vmem:[%s201 + $0x2048] sm:$0xff] %v3037
        %4238 = vst [vmem:[%s201 + $0x2050] sm:$0xff] %v3038
        %4239 = vst [vmem:[%s201 + $0x2058] sm:$0xff] %v3039
        %4240 = vst [vmem:[%s201 + $0x2060] sm:$0xff] %v3040
        %4241 = vst [vmem:[%s201 + $0x2068] sm:$0xff] %v3041
        %4242 = vst [vmem:[%s201 + $0x2070] sm:$0xff] %v3042
        %4243 = vst [vmem:[%s201 + $0x2078] sm:$0xff] %v3043
        %4244 = vst [vmem:[%s201 + $0x2080] sm:$0xff] %v3044
        %4245 = vst [vmem:[%s201 + $0x2088] sm:$0xff] %v3045
        %4246 = vst [vmem:[%s201 + $0x2090] sm:$0xff] %v3046
        %4247 = vst [vmem:[%s201 + $0x2098] sm:$0xff] %v3047
        %4248 = vst [vmem:[%s201 + $0x20a0] sm:$0xff] %v3048
        %4249 = vst [vmem:[%s201 + $0x20a8] sm:$0xff] %v3049
        %4250 = vst [vmem:[%s201 + $0x20b0] sm:$0xff] %v3050
        %4251 = vst [vmem:[%s201 + $0x20b8] sm:$0xff] %v3051
        %4252 = vst [vmem:[%s201 + $0x20c0] sm:$0xff] %v3052
        %4253 = vst [vmem:[%s201 + $0x20c8] sm:$0xff] %v3053
        %4254 = vst [vmem:[%s201 + $0x20d0] sm:$0xff] %v3054
        %4255 = vst [vmem:[%s201 + $0x20d8] sm:$0xff] %v3055
        %4256 = vst [vmem:[%s201 + $0x20e0] sm:$0xff] %v3056
        %4257 = vst [vmem:[%s201 + $0x20e8] sm:$0xff] %v3057
        %4258 = vst [vmem:[%s201 + $0x20f0] sm:$0xff] %v3058
        %4259 = vst [vmem:[%s201 + $0x20f8] sm:$0xff] %v3059
        %4260 = vst [vmem:[%s201 + $0x2100] sm:$0xff] %v3060
        %4261 = vst [vmem:[%s201 + $0x2108] sm:$0xff] %v3061
        %4262 = vst [vmem:[%s201 + $0x2110] sm:$0xff] %v3062
        %4263 = vst [vmem:[%s201 + $0x2118] sm:$0xff] %v3063
        %4264 = vst [vmem:[%s201 + $0x2120] sm:$0xff] %v3064
        %4265 = vst [vmem:[%s201 + $0x2128] sm:$0xff] %v3065
        %4266 = vst [vmem:[%s201 + $0x2130] sm:$0xff] %v3066
        %4267 = vst [vmem:[%s201 + $0x2138] sm:$0xff] %v3067
        %4268 = vst [vmem:[%s201 + $0x2140] sm:$0xff] %v3068
        %4269 = vst [vmem:[%s201 + $0x2148] sm:$0xff] %v3069
        %4270 = vst [vmem:[%s201 + $0x2150] sm:$0xff] %v3070
        %4271 = vst [vmem:[%s201 + $0x2158] sm:$0xff] %v3071
        %4272 = vst [vmem:[%s201 + $0x2160] sm:$0xff] %v3072
        %4273 = vst [vmem:[%s201 + $0x2168] sm:$0xff] %v3073
        %4274 = vst [vmem:[%s201 + $0x2170] sm:$0xff] %v3074
        %4275 = vst [vmem:[%s201 + $0x2178] sm:$0xff] %v3075
        %4276 = vst [vmem:[%s201 + $0x2180] sm:$0xff] %v3076
        %4277 = vst [vmem:[%s201 + $0x2188] sm:$0xff] %v3077
        %4278 = vst [vmem:[%s201 + $0x2190] sm:$0xff] %v3078
        %4279 = vst [vmem:[%s201 + $0x2198] sm:$0xff] %v3079
        %4280 = vst [vmem:[%s201 + $0x21a0] sm:$0xff] %v3080
        %4281 = vst [vmem:[%s201 + $0x21a8] sm:$0xff] %v3081
        %4282 = vst [vmem:[%s201 + $0x21b0] sm:$0xff] %v3082
        %4283 = vst [vmem:[%s201 + $0x21b8] sm:$0xff] %v3083
        %4284 = vst [vmem:[%s201 + $0x21c0] sm:$0xff] %v3084
        %4285 = vst [vmem:[%s201 + $0x21c8] sm:$0xff] %v3085
        %4286 = vst [vmem:[%s201 + $0x21d0] sm:$0xff] %v3086
        %4287 = vst [vmem:[%s201 + $0x21d8] sm:$0xff] %v3087
        %4288 = vst [vmem:[%s201 + $0x21e0] sm:$0xff] %v3088
        %4289 = vst [vmem:[%s201 + $0x21e8] sm:$0xff] %v3089
        %4290 = vst [vmem:[%s201 + $0x21f0] sm:$0xff] %v3090
        %4291 = vst [vmem:[%s201 + $0x21f8] sm:$0xff] %v3091
        %4292 = vst [vmem:[%s201 + $0x2200] sm:$0xff] %v3092
        %4293 = vst [vmem:[%s201 + $0x2208] sm:$0xff] %v3093
        %4294 = vst [vmem:[%s201 + $0x2210] sm:$0xff] %v3094
        %4295 = vst [vmem:[%s201 + $0x2218] sm:$0xff] %v3095
        %4296 = vst [vmem:[%s201 + $0x2220] sm:$0xff] %v3096
        %4297 = vst [vmem:[%s201 + $0x2228] sm:$0xff] %v3097
        %4298 = vst [vmem:[%s201 + $0x2230] sm:$0xff] %v3098
        %4299 = vst [vmem:[%s201 + $0x2238] sm:$0xff] %v3099
        %4300 = vst [vmem:[%s201 + $0x2240] sm:$0xff] %v3100
        %4301 = vst [vmem:[%s201 + $0x2248] sm:$0xff] %v3101
        %4302 = vst [vmem:[%s201 + $0x2250] sm:$0xff] %v3102
        %4303 = vst [vmem:[%s201 + $0x2258] sm:$0xff] %v3103
        %4304 = vst [vmem:[%s201 + $0x2260] sm:$0xff] %v3104
        %4305 = vst [vmem:[%s201 + $0x2268] sm:$0xff] %v3105
        %4306 = vst [vmem:[%s201 + $0x2270] sm:$0xff] %v3106
        %4307 = vst [vmem:[%s201 + $0x2278] sm:$0xff] %v3107
        %4308 = vst [vmem:[%s201 + $0x2280] sm:$0xff] %v3108
        %4309 = vst [vmem:[%s201 + $0x2288] sm:$0xff] %v3109
        %4310 = vst [vmem:[%s201 + $0x2290] sm:$0xff] %v3110
        %4311 = vst [vmem:[%s201 + $0x2298] sm:$0xff] %v3111
        %4312 = vst [vmem:[%s201 + $0x22a0] sm:$0xff] %v3112
        %4313 = vst [vmem:[%s201 + $0x22a8] sm:$0xff] %v3113
        %4314 = vst [vmem:[%s201 + $0x22b0] sm:$0xff] %v3114
        %4315 = vst [vmem:[%s201 + $0x22b8] sm:$0xff] %v3115
        %4316 = vst [vmem:[%s201 + $0x22c0] sm:$0xff] %v3116
        %4317 = vst [vmem:[%s201 + $0x22c8] sm:$0xff] %v3117
        %4318 = vst [vmem:[%s201 + $0x22d0] sm:$0xff] %v3118
        %4319 = vst [vmem:[%s201 + $0x22d8] sm:$0xff] %v3119
        %4320 = vst [vmem:[%s201 + $0x22e0] sm:$0xff] %v3120
        %4321 = vst [vmem:[%s201 + $0x22e8] sm:$0xff] %v3121
        %4322 = vst [vmem:[%s201 + $0x22f0] sm:$0xff] %v3122
        %4323 = vst [vmem:[%s201 + $0x22f8] sm:$0xff] %v3123
        %4324 = vst [vmem:[%s201 + $0x2300] sm:$0xff] %v3124
        %4325 = vst [vmem:[%s201 + $0x2308] sm:$0xff] %v3125
        %4326 = vst [vmem:[%s201 + $0x2310] sm:$0xff] %v3126
        %4327 = vst [vmem:[%s201 + $0x2318] sm:$0xff] %v3127
        %4328 = vst [vmem:[%s201 + $0x2320] sm:$0xff] %v3128
        %4329 = vst [vmem:[%s201 + $0x2328] sm:$0xff] %v3129
        %4330 = vst [vmem:[%s201 + $0x2330] sm:$0xff] %v3130
        %4331 = vst [vmem:[%s201 + $0x2338] sm:$0xff] %v3131
        %4332 = vst [vmem:[%s201 + $0x2340] sm:$0xff] %v3132
        %4333 = vst [vmem:[%s201 + $0x2348] sm:$0xff] %v3133
        %4334 = vst [vmem:[%s201 + $0x2350] sm:$0xff] %v3134
        %4335 = vst [vmem:[%s201 + $0x2358] sm:$0xff] %v3135
        %4336 = vst [vmem:[%s201 + $0x2360] sm:$0xff] %v3136
        %4337 = vst [vmem:[%s201 + $0x2368] sm:$0xff] %v3137
        %4338 = vst [vmem:[%s201 + $0x2370] sm:$0xff] %v3138
        %4339 = vst [vmem:[%s201 + $0x2378] sm:$0xff] %v3139
        %4340 = vst [vmem:[%s201 + $0x2380] sm:$0xff] %v3140
        %4341 = vst [vmem:[%s201 + $0x2388] sm:$0xff] %v3141
        %4342 = vst [vmem:[%s201 + $0x2390] sm:$0xff] %v3142
        %4343 = vst [vmem:[%s201 + $0x2398] sm:$0xff] %v3143
        %4344 = vst [vmem:[%s201 + $0x23a0] sm:$0xff] %v3144
        %4345 = vst [vmem:[%s201 + $0x23a8] sm:$0xff] %v3145
        %4346 = vst [vmem:[%s201 + $0x23b0] sm:$0xff] %v3146
        %4347 = vst [vmem:[%s201 + $0x23b8] sm:$0xff] %v3147
        %4348 = vst [vmem:[%s201 + $0x23c0] sm:$0xff] %v3148
        %4349 = vst [vmem:[%s201 + $0x23c8] sm:$0xff] %v3149
        %4350 = vst [vmem:[%s201 + $0x23d0] sm:$0xff] %v3150
        %4351 = vst [vmem:[%s201 + $0x23d8] sm:$0xff] %v3151
        %4352 = vst [vmem:[%s201 + $0x23e0] sm:$0xff] %v3152
        %4353 = vst [vmem:[%s201 + $0x23e8] sm:$0xff] %v3153
        %4354 = vst [vmem:[%s201 + $0x23f0] sm:$0xff] %v3154
        %4355 = vst [vmem:[%s201 + $0x23f8] sm:$0xff] %v3155
        %4356 = vst [vmem:[%s201 + $0x2400] sm:$0xff] %v3156
        %4357 = vst [vmem:[%s201 + $0x2408] sm:$0xff] %v3157
        %4358 = vst [vmem:[%s201 + $0x2410] sm:$0xff] %v3158
        %4359 = vst [vmem:[%s201 + $0x2418] sm:$0xff] %v3159
        %4360 = vst [vmem:[%s201 + $0x2420] sm:$0xff] %v3160
        %4361 = vst [vmem:[%s201 + $0x2428] sm:$0xff] %v3161
        %4362 = vst [vmem:[%s201 + $0x2430] sm:$0xff] %v3162
        %4363 = vst [vmem:[%s201 + $0x2438] sm:$0xff] %v3163
        %4364 = vst [vmem:[%s201 + $0x2440] sm:$0xff] %v3164
        %4365 = vst [vmem:[%s201 + $0x2448] sm:$0xff] %v3165
        %4366 = vst [vmem:[%s201 + $0x2450] sm:$0xff] %v3166
        %4367 = vst [vmem:[%s201 + $0x2458] sm:$0xff] %v3167
        %4368 = vst [vmem:[%s201 + $0x2460] sm:$0xff] %v3168
        %4369 = vst [vmem:[%s201 + $0x2468] sm:$0xff] %v3169
        %4370 = vst [vmem:[%s201 + $0x2470] sm:$0xff] %v3170
        %4371 = vst [vmem:[%s201 + $0x2478] sm:$0xff] %v3171
        %4372 = vst [vmem:[%s201 + $0x2480] sm:$0xff] %v3172
        %4373 = vst [vmem:[%s201 + $0x2488] sm:$0xff] %v3173
        %4374 = vst [vmem:[%s201 + $0x2490] sm:$0xff] %v3174
        %4375 = vst [vmem:[%s201 + $0x2498] sm:$0xff] %v3175
        %4376 = vst [vmem:[%s201 + $0x24a0] sm:$0xff] %v3176
        %4377 = vst [vmem:[%s201 + $0x24a8] sm:$0xff] %v3177
        %4378 = vst [vmem:[%s201 + $0x24b0] sm:$0xff] %v3178
        %4379 = vst [vmem:[%s201 + $0x24b8] sm:$0xff] %v3179
        %4380 = vst [vmem:[%s201 + $0x24c0] sm:$0xff] %v3180
        %4381 = vst [vmem:[%s201 + $0x24c8] sm:$0xff] %v3181
        %4382 = vst [vmem:[%s201 + $0x24d0] sm:$0xff] %v3182
        %4383 = vst [vmem:[%s201 + $0x24d8] sm:$0xff] %v3183
        %4384 = vst [vmem:[%s201 + $0x24e0] sm:$0xff] %v3184
        %4385 = vst [vmem:[%s201 + $0x24e8] sm:$0xff] %v3185
        %4386 = vst [vmem:[%s201 + $0x24f0] sm:$0xff] %v3186
        %4387 = vst [vmem:[%s201 + $0x24f8] sm:$0xff] %v3187
        %4388 = vst [vmem:[%s201 + $0x2500] sm:$0xff] %v3188
        %4389 = vst [vmem:[%s201 + $0x2508] sm:$0xff] %v3189
        %4390 = vst [vmem:[%s201 + $0x2510] sm:$0xff] %v3190
        %4391 = vst [vmem:[%s201 + $0x2518] sm:$0xff] %v3191
        %4392 = vst [vmem:[%s201 + $0x2520] sm:$0xff] %v3192
        %4393 = vst [vmem:[%s201 + $0x2528] sm:$0xff] %v3193
        %4394 = vst [vmem:[%s201 + $0x2530] sm:$0xff] %v3194
        %4395 = vst [vmem:[%s201 + $0x2538] sm:$0xff] %v3195
        %4396 = vst [vmem:[%s201 + $0x2540] sm:$0xff] %v3196
        %4397 = vst [vmem:[%s201 + $0x2548] sm:$0xff] %v3197
        %4398 = vst [vmem:[%s201 + $0x2550] sm:$0xff] %v3198
        %4399 = vst [vmem:[%s201 + $0x2558] sm:$0xff] %v3199
        %4400 = vst [vmem:[%s201 + $0x2560] sm:$0xff] %v3200
        %4401 = vst [vmem:[%s201 + $0x2568] sm:$0xff] %v3201
        %4402 = vst [vmem:[%s201 + $0x2570] sm:$0xff] %v3202
        %4403 = vst [vmem:[%s201 + $0x2578] sm:$0xff] %v3203
        %s4404 = sand.u32 %s114, 1
        %s4405 = scalar_lea.sflag [#allocation3], %s4404
        %s4406 = sand.u32 %s114, 1
        %s4407 = smul.addr %s4406, 9600
        %s4408 = scalar_lea.vmem [#allocation2], %s4407
        // Predicated region
        $region33: #{encode_net_forward.5} parent=31 // pred_check
          %p4409 = pneg %p124
        $region34: #{encode_net_forward.5} parent=31 // pred_check_branch
          %4411 = sbr.rel (%p4409) target = $region36
        $region35: #{encode_net_forward.5} parent=31 // pred_region
          %s4412 = smul.u32 75, %s22
          %s4414 = ssub.s32 153600, 153600
          %4415 = vsyncadd %s4405, %s4414
          %s4416 = smul.addr %s21, 7200
          %s4417 = sadd.s32 %s4412, %s4416
          %s4418 = smul.addr %s4417, 128
          %s4419 = scalar_lea.hbm %s3, %s4418
          %s4420 = sshll.u32 %s4408, 4
          %s4421 = int_to_ptr.vmem [resolvable:$true] %s4420
          %4426 = dma.vmem_to_hbm [thread:$0]  %s4421, 153600, %s4419, %s4405, 9600, 57600, 600
        $region36: #{encode_net_forward.5} parent=31 // pred_fallthru
          _
      $region32: #{encode_net_forward.5} parent=5 // pred_fallthru
        _
      %p4427 = scmp.le.s32.totalorder 2, %s12
      // Predicated region
      $region37: #{encode_net_forward.5} parent=5 // pred_check
        %p4428 = pneg %p4427
      $region38: #{encode_net_forward.5} parent=5 // pred_check_branch
        %4430 = sbr.rel (%p4428) target = $region40
      $region39: #{encode_net_forward.5} parent=5 // pred_region
        %s4431 = ssub.s32 %s12, 2
        // Predicated region
        $region41: #{encode_net_forward.5} parent=39 // pred_check
          %p4432 = pneg %p130
        $region42: #{encode_net_forward.5} parent=39 // pred_check_branch
          %4434 = sbr.rel (%p4432) target = $region44
        $region43: #{encode_net_forward.5} parent=39 // pred_region
          %s4435 = sand.u32 %s115, 1
          %s4436 = scalar_lea.sflag [#allocation3], %s4435
          %s4437 = sand.u32 %s115, 1
          %s4438 = smul.addr %s4437, 9600
          %s4439 = scalar_lea.vmem [#allocation2], %s4438
          %4440 = dma.done %s4436, 153600
        $region44: #{encode_net_forward.5} parent=39 // pred_fallthru
          _
      $region40: #{encode_net_forward.5} parent=5 // pred_fallthru
        _
    $region6: #{encode_net_forward.5} parent=1 // loop_footer
      %s16 = sadd.s32 1, %s12
    $region7: #{encode_net_forward.5} parent=1 // loop_footer_branch
      %11 = sbr.rel target = $region3
    $region8: #{encode_net_forward.5} parent=1 // loop_exit
      _
    %4441 = vsyncpa [#allocation3], 1
    %s4442 = scalar_lea.sflag [#allocation3], 1
    %4443 = vsyncpa %s4442, 1

</llo_original>
